<compile_context>
chip_gen: v7x
topology: tpu7x:2x2x1
jax: 0.10.0
libtpu: 0.0.40
codegen_flags: <defaults>
</compile_context>

<pallas_src>
import functools

import jax
import jax.numpy as jnp
from jax.experimental import pallas as pl
from jax.experimental.pallas import tpu as pltpu


def _round_up(x, m):
    return (x + m - 1) // m * m


# ----------------------------------------------------------------- fused multi-layer bi-LSTM
def _fused_bilstm_kernel(x_ref, w_ref, u_ref, b_ref, len_ref, hN_ref,
                         ybuf0_ref, ybuf1_ref, gx_ref):
    """One grid step == one LSTM layer (both directions), whole sequence resident in VMEM.

    x_ref   : (T*Bp, INp) f32   layer-0 input (embeddings), rows [t*Bp,(t+1)*Bp) = timestep t
    w_ref   : (INp, 2G)   f32   this layer's [W_fwd | W_bwd] (gate cols padded jointly to G)
    u_ref   : (2H, 2G)    f32   this layer's block-diagonal [[U_fwd, 0], [0, U_bwd]]
    b_ref   : (1, 2G)     f32   this layer's [b_fwd | b_bwd] (b_ih + b_hh)
    len_ref : (Bp, 1)     i32   sequence lengths (packed-sequence mask)
    hN_ref  : (Bp, 2H)    f32   final hidden [h_fwd | h_bwd]; last layer's value persists
    ybuf0/1 : (T*Bp, INp) f32   ping-pong activation buffers (next layer's input)
    gx_ref  : (T*Bp, 2G)  f32   hoisted input projection x @ [Wf|Wb] + b for all timesteps
    """
    layer = pl.program_id(0)
    TB, _ = x_ref.shape
    Bp = len_ref.shape[0]
    T = TB // Bp
    H2, G2 = u_ref.shape          # 2H, 2G
    H = H2 // 2
    G = G2 // 2

    def run_layer(x_src_ref, y_dst_ref):
        # Hoisted input projection: one MXU matmul for all T timesteps & both directions.
        gx_ref[...] = (jnp.dot(x_src_ref[...], w_ref[...],
                               preferred_element_type=jnp.float32) + b_ref[...])

        lengths = len_ref[...]                       # (Bp, 1) int32
        u_bd = u_ref[...]                            # held in vregs across the time loop

        def step(s, carry):
            h_f, c_f, h_b, c_b = carry               # (Bp, H) each
            t_f = s                                  # forward walks t = s
            t_b = T - 1 - s                          # backward walks t = T-1-s (no reversal)
            row_f = pl.multiple_of(t_f * Bp, 8)      # Bp is a multiple of 8 by construction
            row_b = pl.multiple_of(t_b * Bp, 8)
            gx_f = gx_ref[pl.ds(row_f, Bp), :]       # (Bp, 2G); fwd gates live in [:, :G]
            gx_b = gx_ref[pl.ds(row_b, Bp), :]       # bwd gates live in [:, G:]
            # One MXU push feeds both direction recurrences (block-diagonal U).
            gh = jnp.dot(jnp.concatenate([h_f, h_b], axis=1), u_bd,
                         preferred_element_type=jnp.float32)      # (Bp, 2G)
            gates_f = gx_f[:, :G] + gh[:, :G]
            gates_b = gx_b[:, G:] + gh[:, G:]

            def cell(g, c):
                # PyTorch gate order: input, forget, cell(g), output (sub-vreg lane slices).
                i = jax.nn.sigmoid(g[:, 0 * H:1 * H])
                f = jax.nn.sigmoid(g[:, 1 * H:2 * H])
                gg = jnp.tanh(g[:, 2 * H:3 * H])
                o = jax.nn.sigmoid(g[:, 3 * H:4 * H])
                c_new = f * c + i * gg
                return o * jnp.tanh(c_new), c_new

            hf_new, cf_new = cell(gates_f, c_f)
            hb_new, cb_new = cell(gates_b, c_b)

            valid_f = t_f < lengths                  # (Bp, 1) packed-sequence masks
            valid_b = t_b < lengths
            # Per-step outputs become the next layer's input; zeros at padded positions,
            # matching pad_packed_sequence.
            y_dst_ref[pl.ds(row_f, Bp), pl.ds(0, H)] = jnp.where(valid_f, hf_new, 0.0)
            y_dst_ref[pl.ds(row_b, Bp), pl.ds(H, H)] = jnp.where(valid_b, hb_new, 0.0)
            # State only advances on valid timesteps (== packing semantics).
            return (jnp.where(valid_f, hf_new, h_f), jnp.where(valid_f, cf_new, c_f),
                    jnp.where(valid_b, hb_new, h_b), jnp.where(valid_b, cb_new, c_b))

        z = jnp.zeros((Bp, H), jnp.float32)
        unroll = T if T <= 16 else 8                 # cap unroll for long sequences
        h_f, _, h_b, _ = jax.lax.fori_loop(0, T, step, (z, z, z, z), unroll=unroll)
        # hidden[-2] ++ hidden[-1] of this layer; the last layer's write is what persists.
        hN_ref[...] = jnp.concatenate([h_f, h_b], axis=1)

    is_odd = (layer % 2) == 1

    @pl.when(layer == 0)
    def _():
        # Zero the ping-pong buffers once so any padding columns read by deeper layers are 0.
        ybuf0_ref[...] = jnp.zeros_like(ybuf0_ref)
        ybuf1_ref[...] = jnp.zeros_like(ybuf1_ref)
        run_layer(x_ref, ybuf0_ref)

    @pl.when(jnp.logical_and(layer > 0, is_odd))
    def _():
        run_layer(ybuf0_ref, ybuf1_ref)

    @pl.when(jnp.logical_and(layer > 0, jnp.logical_not(is_odd)))
    def _():
        run_layer(ybuf1_ref, ybuf0_ref)


def bilstm_stack_pallas(x2d, W_all, U_all, b_all, lengths_col, *, n_layers):
    """All LSTM layers (both directions each) in a single pallas_call.

    x2d:        (T*Bp, INp) layer-0 input.
    W_all:      (n_layers, INp, 2G)   [W_fwd | W_bwd] per layer.
    U_all:      (n_layers, 2H, 2G)    block-diagonal [[Uf,0],[0,Ub]] per layer.
    b_all:      (n_layers, 1, 2G)     [b_fwd | b_bwd] per layer.
    lengths_col:(Bp, 1) int32.
    Returns (Bp, 2H) final hidden [h_fwd | h_bwd] of the last layer.
    """
    TB, INp = x2d.shape
    _, H2, G2 = U_all.shape
    Bp = lengths_col.shape[0]

    grid_spec = pltpu.PrefetchScalarGridSpec(
        num_scalar_prefetch=0,
        grid=(n_layers,),                                    # sequential layer axis
        in_specs=[
            pl.BlockSpec((TB, INp), lambda l: (0, 0)),       # embeddings, resident once
            pl.BlockSpec((None, INp, G2), lambda l: (l, 0, 0)),
            pl.BlockSpec((None, H2, G2), lambda l: (l, 0, 0)),
            pl.BlockSpec((None, 1, G2), lambda l: (l, 0, 0)),
            pl.BlockSpec((Bp, 1), lambda l: (0, 0)),
        ],
        out_specs=pl.BlockSpec((Bp, H2), lambda l: (0, 0)),  # resident; last layer wins
        scratch_shapes=[
            pltpu.VMEM((TB, INp), jnp.float32),              # ping-pong activation buf 0
            pltpu.VMEM((TB, INp), jnp.float32),              # ping-pong activation buf 1
            pltpu.VMEM((TB, G2), jnp.float32),               # hoisted x@W + b
        ],
    )
    return pl.pallas_call(
        _fused_bilstm_kernel,
        out_shape=jax.ShapeDtypeStruct((Bp, H2), jnp.float32),
        grid_spec=grid_spec,
        compiler_params=pltpu.CompilerParams(
            # Layers depend on each other through the VMEM scratch -> must run in order.
            dimension_semantics=("arbitrary",),
            # Safe on v5e/v6e/v7x; resident footprint here is ~0.2 MiB.  For long sequences
            # one would add a time-chunk grid axis instead of growing this further.
            vmem_limit_bytes=32 * 1024 * 1024,
        ),
    )(x2d, W_all, U_all, b_all, lengths_col)


# --------------------------------------------------------------------------- model forward
def model_forward_pallas(params, text, text_lengths, *, n_layers):
    H = params["lstm"][0]["fwd"]["u"].shape[0]
    G = _round_up(4 * H, 128)      # gates padded JOINTLY to a 128 multiple (no per-gate pad)
    G2 = 2 * G                     # [fwd gates | bwd gates]
    T, B = text.shape
    Bp = _round_up(B, 8)           # sublane-align batch
    E = params["embedding"].shape[1]
    INp = _round_up(max(E, 2 * H), 8)   # common input width for all layers

    # Embedding lookup (glue: plain JAX gather). padding_idx row of the table is zero.
    emb = params["embedding"][text]                          # (T, B, E) f32
    # TODO(synk): nn.Dropout treated as identity (eval-mode forward).

    # Pad batch; padded rows get length 0 so they never update state and stay zero.
    x = jnp.zeros((T, Bp, INp), jnp.float32).at[:, :B, :E].set(emb)
    x2d = x.reshape(T * Bp, INp)                             # time-major rows
    lengths = jnp.zeros((Bp, 1), jnp.int32).at[:B, 0].set(text_lengths.astype(jnp.int32))

    # Stack per-layer weights into the fused-kernel layout.
    Ws, Us, bs = [], [], []
    for layer in range(n_layers):
        pf, pb = params["lstm"][layer]["fwd"], params["lstm"][layer]["bwd"]
        in_size = pf["w"].shape[0]                           # E for layer 0, 2H for deeper
        W = jnp.zeros((INp, G2), jnp.float32)
        W = W.at[:in_size, :4 * H].set(pf["w"]).at[:in_size, G:G + 4 * H].set(pb["w"])
        U = jnp.zeros((2 * H, G2), jnp.float32)              # block-diagonal [[Uf,0],[0,Ub]]
        U = U.at[:H, :4 * H].set(pf["u"]).at[H:, G:G + 4 * H].set(pb["u"])
        b = jnp.zeros((1, G2), jnp.float32)
        b = b.at[:, :4 * H].set(pf["b"]).at[:, G:G + 4 * H].set(pb["b"])
        Ws.append(W); Us.append(U); bs.append(b)
    W_all = jnp.stack(Ws)                                    # (n_layers, INp, 2G)
    U_all = jnp.stack(Us)                                    # (n_layers, 2H, 2G)
    b_all = jnp.stack(bs)                                    # (n_layers, 1, 2G)

    h_final = bilstm_stack_pallas(x2d, W_all, U_all, b_all, lengths, n_layers=n_layers)

    # hidden[-2] (last-layer forward final) ++ hidden[-1] (last-layer backward final)
    hidden = h_final[:B, :]                                  # (B, 2H)
    # Final dropout: identity.  Final Linear left to plain XLA: a (B,2H)x(2H,O) matmul is
    # far below one pallas_call's fixed overhead.
    return hidden @ params["fc_w"] + params["fc_b"]


# --------------------------------------------------------------------------- pure-JAX reference
def _lstm_layer_ref(x, w, u, b, valid_from, valid_to):
    T, B, _ = x.shape
    H = u.shape[0]

    def step(carry, inp):
        h, c = carry
        x_t, t = inp
        gates = x_t @ w + h @ u + b
        i = jax.nn.sigmoid(gates[:, :H])
        f = jax.nn.sigmoid(gates[:, H:2 * H])
        g = jnp.tanh(gates[:, 2 * H:3 * H])
        o = jax.nn.sigmoid(gates[:, 3 * H:])
        c_new = f * c + i * g
        h_new = o * jnp.tanh(c_new)
        valid = jnp.logical_and(t >= valid_from, t < valid_to)
        c = jnp.where(valid, c_new, c)
        h = jnp.where(valid, h_new, h)
        return (h, c), h

    (h, _), ys = jax.lax.scan(step,
                              (jnp.zeros((B, H), jnp.float32), jnp.zeros((B, H), jnp.float32)),
                              (x, jnp.arange(T, dtype=jnp.int32)))
    return ys, h


def model_forward_ref(params, text, text_lengths, *, n_layers):
    emb = params["embedding"][text]
    T, B, _ = emb.shape
    lengths = text_lengths.astype(jnp.int32)
    x = emb
    h_f = h_b = None
    for layer in range(n_layers):
        pf, pb = params["lstm"][layer]["fwd"], params["lstm"][layer]["bwd"]
        vf = jnp.zeros((B, 1), jnp.int32)
        vt = lengths.reshape(B, 1)
        y_f, h_f = _lstm_layer_ref(x, pf["w"], pf["u"], pf["b"], vf, vt)
        x_rev = x[::-1]
        vf_b = (T - lengths).reshape(B, 1)
        vt_b = jnp.full((B, 1), T, jnp.int32)
        y_b_rev, h_b = _lstm_layer_ref(x_rev, pb["w"], pb["u"], pb["b"], vf_b, vt_b)
        y_b = y_b_rev[::-1]
        x = jnp.concatenate([y_f, y_b], axis=-1)
    hidden = jnp.concatenate([h_f, h_b], axis=1)
    return hidden @ params["fc_w"] + params["fc_b"]


# --------------------------------------------------------------------------- params
def init_params(key, vocab_size, emb_size, hidden_size, output_size, n_layers, pad_ix):
    k_iter = iter(jax.random.split(key, 4 + 8 * n_layers))

    emb = jax.random.normal(next(k_iter), (vocab_size, emb_size), jnp.float32)
    emb = emb.at[pad_ix].set(0.0)                            # padding_idx embedding is zero

    bound = 1.0 / (hidden_size ** 0.5)

    def uni(k, shape, bnd):
        return jax.random.uniform(k, shape, jnp.float32, -bnd, bnd)

    lstm = []
    for layer in range(n_layers):
        in_size = emb_size if layer == 0 else 2 * hidden_size
        layer_p = {}
        for d in ("fwd", "bwd"):
            w = uni(next(k_iter), (in_size, 4 * hidden_size), bound)
            u = uni(next(k_iter), (hidden_size, 4 * hidden_size), bound)
            b_ih = uni(next(k_iter), (1, 4 * hidden_size), bound)
            b_hh = uni(next(k_iter), (1, 4 * hidden_size), bound)
            layer_p[d] = {"w": w, "u": u, "b": b_ih + b_hh}
        lstm.append(layer_p)

    fc_bound = 1.0 / ((2 * hidden_size) ** 0.5)
    fc_w = uni(next(k_iter), (2 * hidden_size, output_size), fc_bound)
    fc_b = uni(next(k_iter), (1, output_size), fc_bound)
    return {"embedding": emb, "lstm": lstm, "fc_w": fc_w, "fc_b": fc_b}


# --------------------------------------------------------------------------- main
if __name__ == "__main__":
    vocab_size, emb_size, hidden_size, output_size = 50, 16, 32, 3
    n_layers, pad_ix = 2, 0
    T, B = 10, 4

    key = jax.random.PRNGKey(0)
    k_param, k_text = jax.random.split(key)
    params = init_params(k_param, vocab_size, emb_size, hidden_size, output_size,
                         n_layers, pad_ix)

    # lengths sorted descending, as pack_padded_sequence(enforce_sorted=True) requires
    text_lengths = jnp.array([10, 7, 5, 3], jnp.int32)
    tokens = jax.random.randint(k_text, (T, B), 1, vocab_size, jnp.int32)
    pos = jnp.arange(T)[:, None]
    text = jnp.where(pos < text_lengths[None, :], tokens, pad_ix)      # (T, B)

    fwd = jax.jit(functools.partial(model_forward_pallas, n_layers=n_layers))
    out = fwd(params, text, text_lengths)
    out = jax.block_until_ready(out)

    # pure-JAX reference check (unpadded shapes)
    ref = model_forward_ref(params, text, text_lengths, n_layers=n_layers)
    assert out.shape == (B, output_size), out.shape
    assert jnp.allclose(out, ref, atol=1e-4, rtol=1e-4), (out, ref)

    print("KERNEL_OK")
</pallas_src>

<mosaic_0001>
module attributes {stable_mosaic.version = 11 : i64} {
  func.func @_fused_bilstm_kernel(%arg0: i32, %arg1: memref<80x64xf32, #tpu.memory_space<vmem>>, %arg2: memref<1x64x256xf32, #tpu.memory_space<vmem>>, %arg3: memref<1x64x256xf32, #tpu.memory_space<vmem>>, %arg4: memref<1x1x256xf32, #tpu.memory_space<vmem>>, %arg5: memref<8x1xi32, #tpu.memory_space<vmem>>, %arg6: memref<8x64xf32, #tpu.memory_space<vmem>>, %arg7: memref<80x64xf32, #tpu.memory_space<vmem>>, %arg8: memref<80x64xf32, #tpu.memory_space<vmem>>, %arg9: memref<80x256xf32, #tpu.memory_space<vmem>>) attributes {dimension_semantics = [#tpu.dimension_semantics<arbitrary>], iteration_bounds = array<i64: 2>, scalar_prefetch = 0 : i64, scratch_operands = 3 : i64, tpu.core_type = #tpu.core_type<tc>, window_params = [{pipeline_mode = #tpu.pipeline_mode<synchronous>, transform_indices = @transform_0, window_bounds = array<i64: 80, 64>}, {transform_indices = @transform_1, window_bounds = array<i64: 1, 64, 256>}, {transform_indices = @transform_2, window_bounds = array<i64: 1, 64, 256>}, {transform_indices = @transform_3, window_bounds = array<i64: 1, 1, 256>}, {pipeline_mode = #tpu.pipeline_mode<synchronous>, transform_indices = @transform_4, window_bounds = array<i64: 8, 1>}, {pipeline_mode = #tpu.pipeline_mode<synchronous>, transform_indices = @transform_5, window_bounds = array<i64: 8, 64>}]} {
    %c2_i32 = arith.constant 2 : i32
    %c0_i32 = arith.constant 0 : i32
    %0 = arith.cmpi eq, %c2_i32, %c0_i32 : i32
    %c1_i32 = arith.constant 1 : i32
    %1 = arith.select %0, %c1_i32, %c2_i32 : i32
    %2 = arith.remsi %arg0, %1 : i32
    %c0_i32_0 = arith.constant 0 : i32
    %3 = arith.cmpi ne, %2, %c0_i32_0 : i32
    %c0_i32_1 = arith.constant 0 : i32
    %4 = arith.cmpi slt, %2, %c0_i32_1 : i32
    %c0_i32_2 = arith.constant 0 : i32
    %5 = arith.cmpi slt, %1, %c0_i32_2 : i32
    %6 = arith.xori %4, %5 : i1
    %7 = arith.andi %6, %3 : i1
    %8 = arith.addi %2, %1 : i32
    %9 = arith.select %7, %8, %2 : i32
    %c1_i32_3 = arith.constant 1 : i32
    %10 = arith.cmpi eq, %9, %c1_i32_3 : i32
    %c0_i32_4 = arith.constant 0 : i32
    %11 = arith.cmpi eq, %arg0, %c0_i32_4 : i32
    %12 = arith.extui %11 : i1 to i32
    %c0_i32_5 = arith.constant 0 : i32
    %13 = arith.cmpi ne, %12, %c0_i32_5 : i32
    scf.if %13 {
      %cst = arith.constant 0.000000e+00 : f32
      %23 = vector.broadcast %cst : f32 to vector<80x64xf32>
      %c0 = arith.constant 0 : index
      %c0_10 = arith.constant 0 : index
      %24 = vector.load %arg7[%c0, %c0_10] : memref<80x64xf32, #tpu.memory_space<vmem>>, vector<80x64xf32>
      tpu.vector_store %arg7[%c0, %c0_10], %23 {strides = array<i32>} : memref<80x64xf32, #tpu.memory_space<vmem>>, vector<80x64xf32>,
      %cst_11 = arith.constant 0.000000e+00 : f32
      %25 = vector.broadcast %cst_11 : f32 to vector<80x64xf32>
      %c0_12 = arith.constant 0 : index
      %c0_13 = arith.constant 0 : index
      %26 = vector.load %arg8[%c0_12, %c0_13] : memref<80x64xf32, #tpu.memory_space<vmem>>, vector<80x64xf32>
      tpu.vector_store %arg8[%c0_12, %c0_13], %25 {strides = array<i32>} : memref<80x64xf32, #tpu.memory_space<vmem>>, vector<80x64xf32>,
      %c0_14 = arith.constant 0 : index
      %c0_15 = arith.constant 0 : index
      %27 = vector.load %arg1[%c0_14, %c0_15] : memref<80x64xf32, #tpu.memory_space<vmem>>, vector<80x64xf32>
      %c0_16 = arith.constant 0 : index
      %c0_17 = arith.constant 0 : index
      %c0_18 = arith.constant 0 : index
      %28 = vector.load %arg2[%c0_16, %c0_17, %c0_18] : memref<1x64x256xf32, #tpu.memory_space<vmem>>, vector<1x64x256xf32>
      %29 = vector.shape_cast %28 : vector<1x64x256xf32> to vector<64x256xf32>
      %cst_19 = arith.constant dense<0.000000e+00> : vector<80x256xf32>
      %30 = tpu.matmul %27, %29, %cst_19 {dimension_numbers = #tpu.dot_dimension_numbers<[1], [0], [0], [1], [0, 0, 1, 1], [], []>} : vector<80x64xf32>, vector<64x256xf32>, vector<80x256xf32> -> vector<80x256xf32>
      %c0_20 = arith.constant 0 : index
      %c0_21 = arith.constant 0 : index
      %c0_22 = arith.constant 0 : index
      %31 = vector.load %arg4[%c0_20, %c0_21, %c0_22] : memref<1x1x256xf32, #tpu.memory_space<vmem>>, vector<1x1x256xf32>
      %32 = vector.shape_cast %31 : vector<1x1x256xf32> to vector<1x256xf32>
      %33 = vector.broadcast %32 : vector<1x256xf32> to vector<80x256xf32>
      %34 = arith.addf %30, %33 : vector<80x256xf32>
      %c0_23 = arith.constant 0 : index
      %c0_24 = arith.constant 0 : index
      %35 = vector.load %arg9[%c0_23, %c0_24] : memref<80x256xf32, #tpu.memory_space<vmem>>, vector<80x256xf32>
      tpu.vector_store %arg9[%c0_23, %c0_24], %34 {strides = array<i32>} : memref<80x256xf32, #tpu.memory_space<vmem>>, vector<80x256xf32>,
      %c0_25 = arith.constant 0 : index
      %c0_26 = arith.constant 0 : index
      %36 = vector.load %arg5[%c0_25, %c0_26] : memref<8x1xi32, #tpu.memory_space<vmem>>, vector<8x1xi32>
      %c0_27 = arith.constant 0 : index
      %c0_28 = arith.constant 0 : index
      %c0_29 = arith.constant 0 : index
      %37 = vector.load %arg3[%c0_27, %c0_28, %c0_29] : memref<1x64x256xf32, #tpu.memory_space<vmem>>, vector<1x64x256xf32>
      %38 = vector.shape_cast %37 : vector<1x64x256xf32> to vector<64x256xf32>
      %cst_30 = arith.constant 0.000000e+00 : f32
      %39 = vector.broadcast %cst_30 : f32 to vector<8x32xf32>
      %c0_i32_31 = arith.constant 0 : i32
      %c9_i32 = arith.constant 9 : i32
      %40 = arith.subi %c9_i32, %c0_i32_31 : i32
      %c8_i32 = arith.constant 8 : i32
      %41 = arith.muli %c0_i32_31, %c8_i32 : i32
      %42 = tpu.assume_multiple %41, 8 : i32
      %c8_i32_32 = arith.constant 8 : i32
      %43 = arith.muli %40, %c8_i32_32 : i32
      %44 = tpu.assume_multiple %43, 8 : i32
      %45 = arith.index_cast %42 : i32 to index
      %c0_33 = arith.constant 0 : index
      %46 = vector.load %arg9[%45, %c0_33] : memref<80x256xf32, #tpu.memory_space<vmem>>, vector<8x256xf32>
      %47 = arith.index_cast %44 : i32 to index
      %c0_34 = arith.constant 0 : index
      %48 = vector.load %arg9[%47, %c0_34] : memref<80x256xf32, #tpu.memory_space<vmem>>, vector<8x256xf32>
      %49 = tpu.concatenate %39, %39 in 1 : vector<8x32xf32>, vector<8x32xf32> -> vector<8x64xf32>
      %cst_35 = arith.constant dense<0.000000e+00> : vector<8x256xf32>
      %50 = tpu.matmul %49, %38, %cst_35 {dimension_numbers = #tpu.dot_dimension_numbers<[1], [0], [0], [1], [0, 0, 1, 1], [], []>} : vector<8x64xf32>, vector<64x256xf32>, vector<8x256xf32> -> vector<8x256xf32>
      %51 = vector.extract_strided_slice %46 {offsets = [0, 0], sizes = [8, 128], strides = [1, 1]} : vector<8x256xf32> to vector<8x128xf32>
      %52 = vector.extract_strided_slice %50 {offsets = [0, 0], sizes = [8, 128], strides = [1, 1]} : vector<8x256xf32> to vector<8x128xf32>
      %53 = arith.addf %51, %52 : vector<8x128xf32>
      %54 = vector.extract_strided_slice %48 {offsets = [0, 128], sizes = [8, 128], strides = [1, 1]} : vector<8x256xf32> to vector<8x128xf32>
      %55 = vector.extract_strided_slice %50 {offsets = [0, 128], sizes = [8, 128], strides = [1, 1]} : vector<8x256xf32> to vector<8x128xf32>
      %56 = arith.addf %54, %55 : vector<8x128xf32>
      %57 = vector.extract_strided_slice %53 {offsets = [0, 0], sizes = [8, 32], strides = [1, 1]} : vector<8x128xf32> to vector<8x32xf32>
      %58 = arith.negf %57 : vector<8x32xf32>
      %59 = math.exp %58 : vector<8x32xf32>
      %cst_36 = arith.constant 1.000000e+00 : f32
      %60 = vector.broadcast %cst_36 : f32 to vector<8x32xf32>
      %61 = arith.addf %60, %59 : vector<8x32xf32>
      %62 = arith.divf %60, %61 : vector<8x32xf32>
      %63 = vector.extract_strided_slice %53 {offsets = [0, 32], sizes = [8, 32], strides = [1, 1]} : vector<8x128xf32> to vector<8x32xf32>
      %64 = arith.negf %63 : vector<8x32xf32>
      %65 = math.exp %64 : vector<8x32xf32>
      %cst_37 = arith.constant 1.000000e+00 : f32
      %66 = vector.broadcast %cst_37 : f32 to vector<8x32xf32>
      %67 = arith.addf %66, %65 : vector<8x32xf32>
      %68 = arith.divf %66, %67 : vector<8x32xf32>
      %69 = vector.extract_strided_slice %53 {offsets = [0, 64], sizes = [8, 32], strides = [1, 1]} : vector<8x128xf32> to vector<8x32xf32>
      %70 = math.tanh %69 : vector<8x32xf32>
      %71 = vector.extract_strided_slice %53 {offsets = [0, 96], sizes = [8, 32], strides = [1, 1]} : vector<8x128xf32> to vector<8x32xf32>
      %72 = arith.negf %71 : vector<8x32xf32>
      %73 = math.exp %72 : vector<8x32xf32>
      %cst_38 = arith.constant 1.000000e+00 : f32
      %74 = vector.broadcast %cst_38 : f32 to vector<8x32xf32>
      %75 = arith.addf %74, %73 : vector<8x32xf32>
      %76 = arith.divf %74, %75 : vector<8x32xf32>
      %77 = arith.mulf %68, %39 : vector<8x32xf32>
      %78 = arith.mulf %62, %70 : vector<8x32xf32>
      %79 = arith.addf %77, %78 : vector<8x32xf32>
      %80 = math.tanh %79 : vector<8x32xf32>
      %81 = arith.mulf %76, %80 : vector<8x32xf32>
      %82 = vector.extract_strided_slice %56 {offsets = [0, 0], sizes = [8, 32], strides = [1, 1]} : vector<8x128xf32> to vector<8x32xf32>
      %83 = arith.negf %82 : vector<8x32xf32>
      %84 = math.exp %83 : vector<8x32xf32>
      %cst_39 = arith.constant 1.000000e+00 : f32
      %85 = vector.broadcast %cst_39 : f32 to vector<8x32xf32>
      %86 = arith.addf %85, %84 : vector<8x32xf32>
      %87 = arith.divf %85, %86 : vector<8x32xf32>
      %88 = vector.extract_strided_slice %56 {offsets = [0, 32], sizes = [8, 32], strides = [1, 1]} : vector<8x128xf32> to vector<8x32xf32>
      %89 = arith.negf %88 : vector<8x32xf32>
      %90 = math.exp %89 : vector<8x32xf32>
      %cst_40 = arith.constant 1.000000e+00 : f32
      %91 = vector.broadcast %cst_40 : f32 to vector<8x32xf32>
      %92 = arith.addf %91, %90 : vector<8x32xf32>
      %93 = arith.divf %91, %92 : vector<8x32xf32>
      %94 = vector.extract_strided_slice %56 {offsets = [0, 64], sizes = [8, 32], strides = [1, 1]} : vector<8x128xf32> to vector<8x32xf32>
      %95 = math.tanh %94 : vector<8x32xf32>
      %96 = vector.extract_strided_slice %56 {offsets = [0, 96], sizes = [8, 32], strides = [1, 1]} : vector<8x128xf32> to vector<8x32xf32>
      %97 = arith.negf %96 : vector<8x32xf32>
      %98 = math.exp %97 : vector<8x32xf32>
      %cst_41 = arith.constant 1.000000e+00 : f32
      %99 = vector.broadcast %cst_41 : f32 to vector<8x32xf32>
      %100 = arith.addf %99, %98 : vector<8x32xf32>
      %101 = arith.divf %99, %100 : vector<8x32xf32>
      %102 = arith.mulf %93, %39 : vector<8x32xf32>
      %103 = arith.mulf %87, %95 : vector<8x32xf32>
      %104 = arith.addf %102, %103 : vector<8x32xf32>
      %105 = math.tanh %104 : vector<8x32xf32>
      %106 = arith.mulf %101, %105 : vector<8x32xf32>
      %107 = vector.broadcast %c0_i32_31 : i32 to vector<8x1xi32>
      %108 = arith.cmpi slt, %107, %36 : vector<8x1xi32>
      %109 = vector.broadcast %40 : i32 to vector<8x1xi32>
      %110 = arith.cmpi slt, %109, %36 : vector<8x1xi32>
      %cst_42 = arith.constant 0.000000e+00 : f32
      %111 = vector.shape_cast %108 : vector<8x1xi1> to vector<8x1xi1>
      %112 = vector.broadcast %111 : vector<8x1xi1> to vector<8x32xi1>
      %113 = vector.broadcast %cst_42 : f32 to vector<8x32xf32>
      %114 = arith.select %112, %81, %113 : vector<8x32xi1>, vector<8x32xf32>
      %115 = arith.index_cast %42 : i32 to index
      %c0_43 = arith.constant 0 : index
      %116 = vector.load %arg7[%115, %c0_43] : memref<80x64xf32, #tpu.memory_space<vmem>>, vector<8x32xf32>
      tpu.vector_store %arg7[%115, %c0_43], %114 {strides = array<i32>} : memref<80x64xf32, #tpu.memory_space<vmem>>, vector<8x32xf32>,
      %cst_44 = arith.constant 0.000000e+00 : f32
      %117 = vector.shape_cast %110 : vector<8x1xi1> to vector<8x1xi1>
      %118 = vector.broadcast %117 : vector<8x1xi1> to vector<8x32xi1>
      %119 = vector.broadcast %cst_44 : f32 to vector<8x32xf32>
      %120 = arith.select %118, %106, %119 : vector<8x32xi1>, vector<8x32xf32>
      %121 = arith.index_cast %44 : i32 to index
      %c32 = arith.constant 32 : index
      %122 = vector.load %arg7[%121, %c32] : memref<80x64xf32, #tpu.memory_space<vmem>>, vector<8x32xf32>
      tpu.vector_store %arg7[%121, %c32], %120 {strides = array<i32>} : memref<80x64xf32, #tpu.memory_space<vmem>>, vector<8x32xf32>,
      %123 = vector.shape_cast %108 : vector<8x1xi1> to vector<8x1xi1>
      %124 = vector.broadcast %123 : vector<8x1xi1> to vector<8x32xi1>
      %125 = arith.select %124, %81, %39 : vector<8x32xi1>, vector<8x32xf32>
      %126 = vector.shape_cast %108 : vector<8x1xi1> to vector<8x1xi1>
      %127 = vector.broadcast %126 : vector<8x1xi1> to vector<8x32xi1>
      %128 = arith.select %127, %79, %39 : vector<8x32xi1>, vector<8x32xf32>
      %129 = vector.shape_cast %110 : vector<8x1xi1> to vector<8x1xi1>
      %130 = vector.broadcast %129 : vector<8x1xi1> to vector<8x32xi1>
      %131 = arith.select %130, %106, %39 : vector<8x32xi1>, vector<8x32xf32>
      %132 = vector.shape_cast %110 : vector<8x1xi1> to vector<8x1xi1>
      %133 = vector.broadcast %132 : vector<8x1xi1> to vector<8x32xi1>
      %134 = arith.select %133, %104, %39 : vector<8x32xi1>, vector<8x32xf32>
      %c1_i32_45 = arith.constant 1 : i32
      %c9_i32_46 = arith.constant 9 : i32
      %135 = arith.subi %c9_i32_46, %c1_i32_45 : i32
      %c8_i32_47 = arith.constant 8 : i32
      %136 = arith.muli %c1_i32_45, %c8_i32_47 : i32
      %137 = tpu.assume_multiple %136, 8 : i32
      %c8_i32_48 = arith.constant 8 : i32
      %138 = arith.muli %135, %c8_i32_48 : i32
      %139 = tpu.assume_multiple %138, 8 : i32
      %140 = arith.index_cast %137 : i32 to index
      %c0_49 = arith.constant 0 : index
      %141 = vector.load %arg9[%140, %c0_49] : memref<80x256xf32, #tpu.memory_space<vmem>>, vector<8x256xf32>
      %142 = arith.index_cast %139 : i32 to index
      %c0_50 = arith.constant 0 : index
      %143 = vector.load %arg9[%142, %c0_50] : memref<80x256xf32, #tpu.memory_space<vmem>>, vector<8x256xf32>
      %144 = tpu.concatenate %125, %131 in 1 : vector<8x32xf32>, vector<8x32xf32> -> vector<8x64xf32>
      %cst_51 = arith.constant dense<0.000000e+00> : vector<8x256xf32>
      %145 = tpu.matmul %144, %38, %cst_51 {dimension_numbers = #tpu.dot_dimension_numbers<[1], [0], [0], [1], [0, 0, 1, 1], [], []>} : vector<8x64xf32>, vector<64x256xf32>, vector<8x256xf32> -> vector<8x256xf32>
      %146 = vector.extract_strided_slice %141 {offsets = [0, 0], sizes = [8, 128], strides = [1, 1]} : vector<8x256xf32> to vector<8x128xf32>
      %147 = vector.extract_strided_slice %145 {offsets = [0, 0], sizes = [8, 128], strides = [1, 1]} : vector<8x256xf32> to vector<8x128xf32>
      %148 = arith.addf %146, %147 : vector<8x128xf32>
      %149 = vector.extract_strided_slice %143 {offsets = [0, 128], sizes = [8, 128], strides = [1, 1]} : vector<8x256xf32> to vector<8x128xf32>
      %150 = vector.extract_strided_slice %145 {offsets = [0, 128], sizes = [8, 128], strides = [1, 1]} : vector<8x256xf32> to vector<8x128xf32>
      %151 = arith.addf %149, %150 : vector<8x128xf32>
      %152 = vector.extract_strided_slice %148 {offsets = [0, 0], sizes = [8, 32], strides = [1, 1]} : vector<8x128xf32> to vector<8x32xf32>
      %153 = arith.negf %152 : vector<8x32xf32>
      %154 = math.exp %153 : vector<8x32xf32>
      %cst_52 = arith.constant 1.000000e+00 : f32
      %155 = vector.broadcast %cst_52 : f32 to vector<8x32xf32>
      %156 = arith.addf %155, %154 : vector<8x32xf32>
      %157 = arith.divf %155, %156 : vector<8x32xf32>
      %158 = vector.extract_strided_slice %148 {offsets = [0, 32], sizes = [8, 32], strides = [1, 1]} : vector<8x128xf32> to vector<8x32xf32>
      %159 = arith.negf %158 : vector<8x32xf32>
      %160 = math.exp %159 : vector<8x32xf32>
      %cst_53 = arith.constant 1.000000e+00 : f32
      %161 = vector.broadcast %cst_53 : f32 to vector<8x32xf32>
      %162 = arith.addf %161, %160 : vector<8x32xf32>
      %163 = arith.divf %161, %162 : vector<8x32xf32>
      %164 = vector.extract_strided_slice %148 {offsets = [0, 64], sizes = [8, 32], strides = [1, 1]} : vector<8x128xf32> to vector<8x32xf32>
      %165 = math.tanh %164 : vector<8x32xf32>
      %166 = vector.extract_strided_slice %148 {offsets = [0, 96], sizes = [8, 32], strides = [1, 1]} : vector<8x128xf32> to vector<8x32xf32>
      %167 = arith.negf %166 : vector<8x32xf32>
      %168 = math.exp %167 : vector<8x32xf32>
      %cst_54 = arith.constant 1.000000e+00 : f32
      %169 = vector.broadcast %cst_54 : f32 to vector<8x32xf32>
      %170 = arith.addf %169, %168 : vector<8x32xf32>
      %171 = arith.divf %169, %170 : vector<8x32xf32>
      %172 = arith.mulf %163, %128 : vector<8x32xf32>
      %173 = arith.mulf %157, %165 : vector<8x32xf32>
      %174 = arith.addf %172, %173 : vector<8x32xf32>
      %175 = math.tanh %174 : vector<8x32xf32>
      %176 = arith.mulf %171, %175 : vector<8x32xf32>
      %177 = vector.extract_strided_slice %151 {offsets = [0, 0], sizes = [8, 32], strides = [1, 1]} : vector<8x128xf32> to vector<8x32xf32>
      %178 = arith.negf %177 : vector<8x32xf32>
      %179 = math.exp %178 : vector<8x32xf32>
      %cst_55 = arith.constant 1.000000e+00 : f32
      %180 = vector.broadcast %cst_55 : f32 to vector<8x32xf32>
      %181 = arith.addf %180, %179 : vector<8x32xf32>
      %182 = arith.divf %180, %181 : vector<8x32xf32>
      %183 = vector.extract_strided_slice %151 {offsets = [0, 32], sizes = [8, 32], strides = [1, 1]} : vector<8x128xf32> to vector<8x32xf32>
      %184 = arith.negf %183 : vector<8x32xf32>
      %185 = math.exp %184 : vector<8x32xf32>
      %cst_56 = arith.constant 1.000000e+00 : f32
      %186 = vector.broadcast %cst_56 : f32 to vector<8x32xf32>
      %187 = arith.addf %186, %185 : vector<8x32xf32>
      %188 = arith.divf %186, %187 : vector<8x32xf32>
      %189 = vector.extract_strided_slice %151 {offsets = [0, 64], sizes = [8, 32], strides = [1, 1]} : vector<8x128xf32> to vector<8x32xf32>
      %190 = math.tanh %189 : vector<8x32xf32>
      %191 = vector.extract_strided_slice %151 {offsets = [0, 96], sizes = [8, 32], strides = [1, 1]} : vector<8x128xf32> to vector<8x32xf32>
      %192 = arith.negf %191 : vector<8x32xf32>
      %193 = math.exp %192 : vector<8x32xf32>
      %cst_57 = arith.constant 1.000000e+00 : f32
      %194 = vector.broadcast %cst_57 : f32 to vector<8x32xf32>
      %195 = arith.addf %194, %193 : vector<8x32xf32>
      %196 = arith.divf %194, %195 : vector<8x32xf32>
      %197 = arith.mulf %188, %134 : vector<8x32xf32>
      %198 = arith.mulf %182, %190 : vector<8x32xf32>
      %199 = arith.addf %197, %198 : vector<8x32xf32>
      %200 = math.tanh %199 : vector<8x32xf32>
      %201 = arith.mulf %196, %200 : vector<8x32xf32>
      %202 = vector.broadcast %c1_i32_45 : i32 to vector<8x1xi32>
      %203 = arith.cmpi slt, %202, %36 : vector<8x1xi32>
      %204 = vector.broadcast %135 : i32 to vector<8x1xi32>
      %205 = arith.cmpi slt, %204, %36 : vector<8x1xi32>
      %cst_58 = arith.constant 0.000000e+00 : f32
      %206 = vector.shape_cast %203 : vector<8x1xi1> to vector<8x1xi1>
      %207 = vector.broadcast %206 : vector<8x1xi1> to vector<8x32xi1>
      %208 = vector.broadcast %cst_58 : f32 to vector<8x32xf32>
      %209 = arith.select %207, %176, %208 : vector<8x32xi1>, vector<8x32xf32>
      %210 = arith.index_cast %137 : i32 to index
      %c0_59 = arith.constant 0 : index
      %211 = vector.load %arg7[%210, %c0_59] : memref<80x64xf32, #tpu.memory_space<vmem>>, vector<8x32xf32>
      tpu.vector_store %arg7[%210, %c0_59], %209 {strides = array<i32>} : memref<80x64xf32, #tpu.memory_space<vmem>>, vector<8x32xf32>,
      %cst_60 = arith.constant 0.000000e+00 : f32
      %212 = vector.shape_cast %205 : vector<8x1xi1> to vector<8x1xi1>
      %213 = vector.broadcast %212 : vector<8x1xi1> to vector<8x32xi1>
      %214 = vector.broadcast %cst_60 : f32 to vector<8x32xf32>
      %215 = arith.select %213, %201, %214 : vector<8x32xi1>, vector<8x32xf32>
      %216 = arith.index_cast %139 : i32 to index
      %c32_61 = arith.constant 32 : index
      %217 = vector.load %arg7[%216, %c32_61] : memref<80x64xf32, #tpu.memory_space<vmem>>, vector<8x32xf32>
      tpu.vector_store %arg7[%216, %c32_61], %215 {strides = array<i32>} : memref<80x64xf32, #tpu.memory_space<vmem>>, vector<8x32xf32>,
      %218 = vector.shape_cast %203 : vector<8x1xi1> to vector<8x1xi1>
      %219 = vector.broadcast %218 : vector<8x1xi1> to vector<8x32xi1>
      %220 = arith.select %219, %176, %125 : vector<8x32xi1>, vector<8x32xf32>
      %221 = vector.shape_cast %203 : vector<8x1xi1> to vector<8x1xi1>
      %222 = vector.broadcast %221 : vector<8x1xi1> to vector<8x32xi1>
      %223 = arith.select %222, %174, %128 : vector<8x32xi1>, vector<8x32xf32>
      %224 = vector.shape_cast %205 : vector<8x1xi1> to vector<8x1xi1>
      %225 = vector.broadcast %224 : vector<8x1xi1> to vector<8x32xi1>
      %226 = arith.select %225, %201, %131 : vector<8x32xi1>, vector<8x32xf32>
      %227 = vector.shape_cast %205 : vector<8x1xi1> to vector<8x1xi1>
      %228 = vector.broadcast %227 : vector<8x1xi1> to vector<8x32xi1>
      %229 = arith.select %228, %199, %134 : vector<8x32xi1>, vector<8x32xf32>
      %c2_i32_62 = arith.constant 2 : i32
      %c9_i32_63 = arith.constant 9 : i32
      %230 = arith.subi %c9_i32_63, %c2_i32_62 : i32
      %c8_i32_64 = arith.constant 8 : i32
      %231 = arith.muli %c2_i32_62, %c8_i32_64 : i32
      %232 = tpu.assume_multiple %231, 8 : i32
      %c8_i32_65 = arith.constant 8 : i32
      %233 = arith.muli %230, %c8_i32_65 : i32
      %234 = tpu.assume_multiple %233, 8 : i32
      %235 = arith.index_cast %232 : i32 to index
      %c0_66 = arith.constant 0 : index
      %236 = vector.load %arg9[%235, %c0_66] : memref<80x256xf32, #tpu.memory_space<vmem>>, vector<8x256xf32>
      %237 = arith.index_cast %234 : i32 to index
      %c0_67 = arith.constant 0 : index
      %238 = vector.load %arg9[%237, %c0_67] : memref<80x256xf32, #tpu.memory_space<vmem>>, vector<8x256xf32>
      %239 = tpu.concatenate %220, %226 in 1 : vector<8x32xf32>, vector<8x32xf32> -> vector<8x64xf32>
      %cst_68 = arith.constant dense<0.000000e+00> : vector<8x256xf32>
      %240 = tpu.matmul %239, %38, %cst_68 {dimension_numbers = #tpu.dot_dimension_numbers<[1], [0], [0], [1], [0, 0, 1, 1], [], []>} : vector<8x64xf32>, vector<64x256xf32>, vector<8x256xf32> -> vector<8x256xf32>
      %241 = vector.extract_strided_slice %236 {offsets = [0, 0], sizes = [8, 128], strides = [1, 1]} : vector<8x256xf32> to vector<8x128xf32>
      %242 = vector.extract_strided_slice %240 {offsets = [0, 0], sizes = [8, 128], strides = [1, 1]} : vector<8x256xf32> to vector<8x128xf32>
      %243 = arith.addf %241, %242 : vector<8x128xf32>
      %244 = vector.extract_strided_slice %238 {offsets = [0, 128], sizes = [8, 128], strides = [1, 1]} : vector<8x256xf32> to vector<8x128xf32>
      %245 = vector.extract_strided_slice %240 {offsets = [0, 128], sizes = [8, 128], strides = [1, 1]} : vector<8x256xf32> to vector<8x128xf32>
      %246 = arith.addf %244, %245 : vector<8x128xf32>
      %247 = vector.extract_strided_slice %243 {offsets = [0, 0], sizes = [8, 32], strides = [1, 1]} : vector<8x128xf32> to vector<8x32xf32>
      %248 = arith.negf %247 : vector<8x32xf32>
      %249 = math.exp %248 : vector<8x32xf32>
      %cst_69 = arith.constant 1.000000e+00 : f32
      %250 = vector.broadcast %cst_69 : f32 to vector<8x32xf32>
      %251 = arith.addf %250, %249 : vector<8x32xf32>
      %252 = arith.divf %250, %251 : vector<8x32xf32>
      %253 = vector.extract_strided_slice %243 {offsets = [0, 32], sizes = [8, 32], strides = [1, 1]} : vector<8x128xf32> to vector<8x32xf32>
      %254 = arith.negf %253 : vector<8x32xf32>
      %255 = math.exp %254 : vector<8x32xf32>
      %cst_70 = arith.constant 1.000000e+00 : f32
      %256 = vector.broadcast %cst_70 : f32 to vector<8x32xf32>
      %257 = arith.addf %256, %255 : vector<8x32xf32>
      %258 = arith.divf %256, %257 : vector<8x32xf32>
      %259 = vector.extract_strided_slice %243 {offsets = [0, 64], sizes = [8, 32], strides = [1, 1]} : vector<8x128xf32> to vector<8x32xf32>
      %260 = math.tanh %259 : vector<8x32xf32>
      %261 = vector.extract_strided_slice %243 {offsets = [0, 96], sizes = [8, 32], strides = [1, 1]} : vector<8x128xf32> to vector<8x32xf32>
      %262 = arith.negf %261 : vector<8x32xf32>
      %263 = math.exp %262 : vector<8x32xf32>
      %cst_71 = arith.constant 1.000000e+00 : f32
      %264 = vector.broadcast %cst_71 : f32 to vector<8x32xf32>
      %265 = arith.addf %264, %263 : vector<8x32xf32>
      %266 = arith.divf %264, %265 : vector<8x32xf32>
      %267 = arith.mulf %258, %223 : vector<8x32xf32>
      %268 = arith.mulf %252, %260 : vector<8x32xf32>
      %269 = arith.addf %267, %268 : vector<8x32xf32>
      %270 = math.tanh %269 : vector<8x32xf32>
      %271 = arith.mulf %266, %270 : vector<8x32xf32>
      %272 = vector.extract_strided_slice %246 {offsets = [0, 0], sizes = [8, 32], strides = [1, 1]} : vector<8x128xf32> to vector<8x32xf32>
      %273 = arith.negf %272 : vector<8x32xf32>
      %274 = math.exp %273 : vector<8x32xf32>
      %cst_72 = arith.constant 1.000000e+00 : f32
      %275 = vector.broadcast %cst_72 : f32 to vector<8x32xf32>
      %276 = arith.addf %275, %274 : vector<8x32xf32>
      %277 = arith.divf %275, %276 : vector<8x32xf32>
      %278 = vector.extract_strided_slice %246 {offsets = [0, 32], sizes = [8, 32], strides = [1, 1]} : vector<8x128xf32> to vector<8x32xf32>
      %279 = arith.negf %278 : vector<8x32xf32>
      %280 = math.exp %279 : vector<8x32xf32>
      %cst_73 = arith.constant 1.000000e+00 : f32
      %281 = vector.broadcast %cst_73 : f32 to vector<8x32xf32>
      %282 = arith.addf %281, %280 : vector<8x32xf32>
      %283 = arith.divf %281, %282 : vector<8x32xf32>
      %284 = vector.extract_strided_slice %246 {offsets = [0, 64], sizes = [8, 32], strides = [1, 1]} : vector<8x128xf32> to vector<8x32xf32>
      %285 = math.tanh %284 : vector<8x32xf32>
      %286 = vector.extract_strided_slice %246 {offsets = [0, 96], sizes = [8, 32], strides = [1, 1]} : vector<8x128xf32> to vector<8x32xf32>
      %287 = arith.negf %286 : vector<8x32xf32>
      %288 = math.exp %287 : vector<8x32xf32>
      %cst_74 = arith.constant 1.000000e+00 : f32
      %289 = vector.broadcast %cst_74 : f32 to vector<8x32xf32>
      %290 = arith.addf %289, %288 : vector<8x32xf32>
      %291 = arith.divf %289, %290 : vector<8x32xf32>
      %292 = arith.mulf %283, %229 : vector<8x32xf32>
      %293 = arith.mulf %277, %285 : vector<8x32xf32>
      %294 = arith.addf %292, %293 : vector<8x32xf32>
      %295 = math.tanh %294 : vector<8x32xf32>
      %296 = arith.mulf %291, %295 : vector<8x32xf32>
      %297 = vector.broadcast %c2_i32_62 : i32 to vector<8x1xi32>
      %298 = arith.cmpi slt, %297, %36 : vector<8x1xi32>
      %299 = vector.broadcast %230 : i32 to vector<8x1xi32>
      %300 = arith.cmpi slt, %299, %36 : vector<8x1xi32>
      %cst_75 = arith.constant 0.000000e+00 : f32
      %301 = vector.shape_cast %298 : vector<8x1xi1> to vector<8x1xi1>
      %302 = vector.broadcast %301 : vector<8x1xi1> to vector<8x32xi1>
      %303 = vector.broadcast %cst_75 : f32 to vector<8x32xf32>
      %304 = arith.select %302, %271, %303 : vector<8x32xi1>, vector<8x32xf32>
      %305 = arith.index_cast %232 : i32 to index
      %c0_76 = arith.constant 0 : index
      %306 = vector.load %arg7[%305, %c0_76] : memref<80x64xf32, #tpu.memory_space<vmem>>, vector<8x32xf32>
      tpu.vector_store %arg7[%305, %c0_76], %304 {strides = array<i32>} : memref<80x64xf32, #tpu.memory_space<vmem>>, vector<8x32xf32>,
      %cst_77 = arith.constant 0.000000e+00 : f32
      %307 = vector.shape_cast %300 : vector<8x1xi1> to vector<8x1xi1>
      %308 = vector.broadcast %307 : vector<8x1xi1> to vector<8x32xi1>
      %309 = vector.broadcast %cst_77 : f32 to vector<8x32xf32>
      %310 = arith.select %308, %296, %309 : vector<8x32xi1>, vector<8x32xf32>
      %311 = arith.index_cast %234 : i32 to index
      %c32_78 = arith.constant 32 : index
      %312 = vector.load %arg7[%311, %c32_78] : memref<80x64xf32, #tpu.memory_space<vmem>>, vector<8x32xf32>
      tpu.vector_store %arg7[%311, %c32_78], %310 {strides = array<i32>} : memref<80x64xf32, #tpu.memory_space<vmem>>, vector<8x32xf32>,
      %313 = vector.shape_cast %298 : vector<8x1xi1> to vector<8x1xi1>
      %314 = vector.broadcast %313 : vector<8x1xi1> to vector<8x32xi1>
      %315 = arith.select %314, %271, %220 : vector<8x32xi1>, vector<8x32xf32>
      %316 = vector.shape_cast %298 : vector<8x1xi1> to vector<8x1xi1>
      %317 = vector.broadcast %316 : vector<8x1xi1> to vector<8x32xi1>
      %318 = arith.select %317, %269, %223 : vector<8x32xi1>, vector<8x32xf32>
      %319 = vector.shape_cast %300 : vector<8x1xi1> to vector<8x1xi1>
      %320 = vector.broadcast %319 : vector<8x1xi1> to vector<8x32xi1>
      %321 = arith.select %320, %296, %226 : vector<8x32xi1>, vector<8x32xf32>
      %322 = vector.shape_cast %300 : vector<8x1xi1> to vector<8x1xi1>
      %323 = vector.broadcast %322 : vector<8x1xi1> to vector<8x32xi1>
      %324 = arith.select %323, %294, %229 : vector<8x32xi1>, vector<8x32xf32>
      %c3_i32 = arith.constant 3 : i32
      %c9_i32_79 = arith.constant 9 : i32
      %325 = arith.subi %c9_i32_79, %c3_i32 : i32
      %c8_i32_80 = arith.constant 8 : i32
      %326 = arith.muli %c3_i32, %c8_i32_80 : i32
      %327 = tpu.assume_multiple %326, 8 : i32
      %c8_i32_81 = arith.constant 8 : i32
      %328 = arith.muli %325, %c8_i32_81 : i32
      %329 = tpu.assume_multiple %328, 8 : i32
      %330 = arith.index_cast %327 : i32 to index
      %c0_82 = arith.constant 0 : index
      %331 = vector.load %arg9[%330, %c0_82] : memref<80x256xf32, #tpu.memory_space<vmem>>, vector<8x256xf32>
      %332 = arith.index_cast %329 : i32 to index
      %c0_83 = arith.constant 0 : index
      %333 = vector.load %arg9[%332, %c0_83] : memref<80x256xf32, #tpu.memory_space<vmem>>, vector<8x256xf32>
      %334 = tpu.concatenate %315, %321 in 1 : vector<8x32xf32>, vector<8x32xf32> -> vector<8x64xf32>
      %cst_84 = arith.constant dense<0.000000e+00> : vector<8x256xf32>
      %335 = tpu.matmul %334, %38, %cst_84 {dimension_numbers = #tpu.dot_dimension_numbers<[1], [0], [0], [1], [0, 0, 1, 1], [], []>} : vector<8x64xf32>, vector<64x256xf32>, vector<8x256xf32> -> vector<8x256xf32>
      %336 = vector.extract_strided_slice %331 {offsets = [0, 0], sizes = [8, 128], strides = [1, 1]} : vector<8x256xf32> to vector<8x128xf32>
      %337 = vector.extract_strided_slice %335 {offsets = [0, 0], sizes = [8, 128], strides = [1, 1]} : vector<8x256xf32> to vector<8x128xf32>
      %338 = arith.addf %336, %337 : vector<8x128xf32>
      %339 = vector.extract_strided_slice %333 {offsets = [0, 128], sizes = [8, 128], strides = [1, 1]} : vector<8x256xf32> to vector<8x128xf32>
      %340 = vector.extract_strided_slice %335 {offsets = [0, 128], sizes = [8, 128], strides = [1, 1]} : vector<8x256xf32> to vector<8x128xf32>
      %341 = arith.addf %339, %340 : vector<8x128xf32>
      %342 = vector.extract_strided_slice %338 {offsets = [0, 0], sizes = [8, 32], strides = [1, 1]} : vector<8x128xf32> to vector<8x32xf32>
      %343 = arith.negf %342 : vector<8x32xf32>
      %344 = math.exp %343 : vector<8x32xf32>
      %cst_85 = arith.constant 1.000000e+00 : f32
      %345 = vector.broadcast %cst_85 : f32 to vector<8x32xf32>
      %346 = arith.addf %345, %344 : vector<8x32xf32>
      %347 = arith.divf %345, %346 : vector<8x32xf32>
      %348 = vector.extract_strided_slice %338 {offsets = [0, 32], sizes = [8, 32], strides = [1, 1]} : vector<8x128xf32> to vector<8x32xf32>
      %349 = arith.negf %348 : vector<8x32xf32>
      %350 = math.exp %349 : vector<8x32xf32>
      %cst_86 = arith.constant 1.000000e+00 : f32
      %351 = vector.broadcast %cst_86 : f32 to vector<8x32xf32>
      %352 = arith.addf %351, %350 : vector<8x32xf32>
      %353 = arith.divf %351, %352 : vector<8x32xf32>
      %354 = vector.extract_strided_slice %338 {offsets = [0, 64], sizes = [8, 32], strides = [1, 1]} : vector<8x128xf32> to vector<8x32xf32>
      %355 = math.tanh %354 : vector<8x32xf32>
      %356 = vector.extract_strided_slice %338 {offsets = [0, 96], sizes = [8, 32], strides = [1, 1]} : vector<8x128xf32> to vector<8x32xf32>
      %357 = arith.negf %356 : vector<8x32xf32>
      %358 = math.exp %357 : vector<8x32xf32>
      %cst_87 = arith.constant 1.000000e+00 : f32
      %359 = vector.broadcast %cst_87 : f32 to vector<8x32xf32>
      %360 = arith.addf %359, %358 : vector<8x32xf32>
      %361 = arith.divf %359, %360 : vector<8x32xf32>
      %362 = arith.mulf %353, %318 : vector<8x32xf32>
      %363 = arith.mulf %347, %355 : vector<8x32xf32>
      %364 = arith.addf %362, %363 : vector<8x32xf32>
      %365 = math.tanh %364 : vector<8x32xf32>
      %366 = arith.mulf %361, %365 : vector<8x32xf32>
      %367 = vector.extract_strided_slice %341 {offsets = [0, 0], sizes = [8, 32], strides = [1, 1]} : vector<8x128xf32> to vector<8x32xf32>
      %368 = arith.negf %367 : vector<8x32xf32>
      %369 = math.exp %368 : vector<8x32xf32>
      %cst_88 = arith.constant 1.000000e+00 : f32
      %370 = vector.broadcast %cst_88 : f32 to vector<8x32xf32>
      %371 = arith.addf %370, %369 : vector<8x32xf32>
      %372 = arith.divf %370, %371 : vector<8x32xf32>
      %373 = vector.extract_strided_slice %341 {offsets = [0, 32], sizes = [8, 32], strides = [1, 1]} : vector<8x128xf32> to vector<8x32xf32>
      %374 = arith.negf %373 : vector<8x32xf32>
      %375 = math.exp %374 : vector<8x32xf32>
      %cst_89 = arith.constant 1.000000e+00 : f32
      %376 = vector.broadcast %cst_89 : f32 to vector<8x32xf32>
      %377 = arith.addf %376, %375 : vector<8x32xf32>
      %378 = arith.divf %376, %377 : vector<8x32xf32>
      %379 = vector.extract_strided_slice %341 {offsets = [0, 64], sizes = [8, 32], strides = [1, 1]} : vector<8x128xf32> to vector<8x32xf32>
      %380 = math.tanh %379 : vector<8x32xf32>
      %381 = vector.extract_strided_slice %341 {offsets = [0, 96], sizes = [8, 32], strides = [1, 1]} : vector<8x128xf32> to vector<8x32xf32>
      %382 = arith.negf %381 : vector<8x32xf32>
      %383 = math.exp %382 : vector<8x32xf32>
      %cst_90 = arith.constant 1.000000e+00 : f32
      %384 = vector.broadcast %cst_90 : f32 to vector<8x32xf32>
      %385 = arith.addf %384, %383 : vector<8x32xf32>
      %386 = arith.divf %384, %385 : vector<8x32xf32>
      %387 = arith.mulf %378, %324 : vector<8x32xf32>
      %388 = arith.mulf %372, %380 : vector<8x32xf32>
      %389 = arith.addf %387, %388 : vector<8x32xf32>
      %390 = math.tanh %389 : vector<8x32xf32>
      %391 = arith.mulf %386, %390 : vector<8x32xf32>
      %392 = vector.broadcast %c3_i32 : i32 to vector<8x1xi32>
      %393 = arith.cmpi slt, %392, %36 : vector<8x1xi32>
      %394 = vector.broadcast %325 : i32 to vector<8x1xi32>
      %395 = arith.cmpi slt, %394, %36 : vector<8x1xi32>
      %cst_91 = arith.constant 0.000000e+00 : f32
      %396 = vector.shape_cast %393 : vector<8x1xi1> to vector<8x1xi1>
      %397 = vector.broadcast %396 : vector<8x1xi1> to vector<8x32xi1>
      %398 = vector.broadcast %cst_91 : f32 to vector<8x32xf32>
      %399 = arith.select %397, %366, %398 : vector<8x32xi1>, vector<8x32xf32>
      %400 = arith.index_cast %327 : i32 to index
      %c0_92 = arith.constant 0 : index
      %401 = vector.load %arg7[%400, %c0_92] : memref<80x64xf32, #tpu.memory_space<vmem>>, vector<8x32xf32>
      tpu.vector_store %arg7[%400, %c0_92], %399 {strides = array<i32>} : memref<80x64xf32, #tpu.memory_space<vmem>>, vector<8x32xf32>,
      %cst_93 = arith.constant 0.000000e+00 : f32
      %402 = vector.shape_cast %395 : vector<8x1xi1> to vector<8x1xi1>
      %403 = vector.broadcast %402 : vector<8x1xi1> to vector<8x32xi1>
      %404 = vector.broadcast %cst_93 : f32 to vector<8x32xf32>
      %405 = arith.select %403, %391, %404 : vector<8x32xi1>, vector<8x32xf32>
      %406 = arith.index_cast %329 : i32 to index
      %c32_94 = arith.constant 32 : index
      %407 = vector.load %arg7[%406, %c32_94] : memref<80x64xf32, #tpu.memory_space<vmem>>, vector<8x32xf32>
      tpu.vector_store %arg7[%406, %c32_94], %405 {strides = array<i32>} : memref<80x64xf32, #tpu.memory_space<vmem>>, vector<8x32xf32>,
      %408 = vector.shape_cast %393 : vector<8x1xi1> to vector<8x1xi1>
      %409 = vector.broadcast %408 : vector<8x1xi1> to vector<8x32xi1>
      %410 = arith.select %409, %366, %315 : vector<8x32xi1>, vector<8x32xf32>
      %411 = vector.shape_cast %393 : vector<8x1xi1> to vector<8x1xi1>
      %412 = vector.broadcast %411 : vector<8x1xi1> to vector<8x32xi1>
      %413 = arith.select %412, %364, %318 : vector<8x32xi1>, vector<8x32xf32>
      %414 = vector.shape_cast %395 : vector<8x1xi1> to vector<8x1xi1>
      %415 = vector.broadcast %414 : vector<8x1xi1> to vector<8x32xi1>
      %416 = arith.select %415, %391, %321 : vector<8x32xi1>, vector<8x32xf32>
      %417 = vector.shape_cast %395 : vector<8x1xi1> to vector<8x1xi1>
      %418 = vector.broadcast %417 : vector<8x1xi1> to vector<8x32xi1>
      %419 = arith.select %418, %389, %324 : vector<8x32xi1>, vector<8x32xf32>
      %c4_i32 = arith.constant 4 : i32
      %c9_i32_95 = arith.constant 9 : i32
      %420 = arith.subi %c9_i32_95, %c4_i32 : i32
      %c8_i32_96 = arith.constant 8 : i32
      %421 = arith.muli %c4_i32, %c8_i32_96 : i32
      %422 = tpu.assume_multiple %421, 8 : i32
      %c8_i32_97 = arith.constant 8 : i32
      %423 = arith.muli %420, %c8_i32_97 : i32
      %424 = tpu.assume_multiple %423, 8 : i32
      %425 = arith.index_cast %422 : i32 to index
      %c0_98 = arith.constant 0 : index
      %426 = vector.load %arg9[%425, %c0_98] : memref<80x256xf32, #tpu.memory_space<vmem>>, vector<8x256xf32>
      %427 = arith.index_cast %424 : i32 to index
      %c0_99 = arith.constant 0 : index
      %428 = vector.load %arg9[%427, %c0_99] : memref<80x256xf32, #tpu.memory_space<vmem>>, vector<8x256xf32>
      %429 = tpu.concatenate %410, %416 in 1 : vector<8x32xf32>, vector<8x32xf32> -> vector<8x64xf32>
      %cst_100 = arith.constant dense<0.000000e+00> : vector<8x256xf32>
      %430 = tpu.matmul %429, %38, %cst_100 {dimension_numbers = #tpu.dot_dimension_numbers<[1], [0], [0], [1], [0, 0, 1, 1], [], []>} : vector<8x64xf32>, vector<64x256xf32>, vector<8x256xf32> -> vector<8x256xf32>
      %431 = vector.extract_strided_slice %426 {offsets = [0, 0], sizes = [8, 128], strides = [1, 1]} : vector<8x256xf32> to vector<8x128xf32>
      %432 = vector.extract_strided_slice %430 {offsets = [0, 0], sizes = [8, 128], strides = [1, 1]} : vector<8x256xf32> to vector<8x128xf32>
      %433 = arith.addf %431, %432 : vector<8x128xf32>
      %434 = vector.extract_strided_slice %428 {offsets = [0, 128], sizes = [8, 128], strides = [1, 1]} : vector<8x256xf32> to vector<8x128xf32>
      %435 = vector.extract_strided_slice %430 {offsets = [0, 128], sizes = [8, 128], strides = [1, 1]} : vector<8x256xf32> to vector<8x128xf32>
      %436 = arith.addf %434, %435 : vector<8x128xf32>
      %437 = vector.extract_strided_slice %433 {offsets = [0, 0], sizes = [8, 32], strides = [1, 1]} : vector<8x128xf32> to vector<8x32xf32>
      %438 = arith.negf %437 : vector<8x32xf32>
      %439 = math.exp %438 : vector<8x32xf32>
      %cst_101 = arith.constant 1.000000e+00 : f32
      %440 = vector.broadcast %cst_101 : f32 to vector<8x32xf32>
      %441 = arith.addf %440, %439 : vector<8x32xf32>
      %442 = arith.divf %440, %441 : vector<8x32xf32>
      %443 = vector.extract_strided_slice %433 {offsets = [0, 32], sizes = [8, 32], strides = [1, 1]} : vector<8x128xf32> to vector<8x32xf32>
      %444 = arith.negf %443 : vector<8x32xf32>
      %445 = math.exp %444 : vector<8x32xf32>
      %cst_102 = arith.constant 1.000000e+00 : f32
      %446 = vector.broadcast %cst_102 : f32 to vector<8x32xf32>
      %447 = arith.addf %446, %445 : vector<8x32xf32>
      %448 = arith.divf %446, %447 : vector<8x32xf32>
      %449 = vector.extract_strided_slice %433 {offsets = [0, 64], sizes = [8, 32], strides = [1, 1]} : vector<8x128xf32> to vector<8x32xf32>
      %450 = math.tanh %449 : vector<8x32xf32>
      %451 = vector.extract_strided_slice %433 {offsets = [0, 96], sizes = [8, 32], strides = [1, 1]} : vector<8x128xf32> to vector<8x32xf32>
      %452 = arith.negf %451 : vector<8x32xf32>
      %453 = math.exp %452 : vector<8x32xf32>
      %cst_103 = arith.constant 1.000000e+00 : f32
      %454 = vector.broadcast %cst_103 : f32 to vector<8x32xf32>
      %455 = arith.addf %454, %453 : vector<8x32xf32>
      %456 = arith.divf %454, %455 : vector<8x32xf32>
      %457 = arith.mulf %448, %413 : vector<8x32xf32>
      %458 = arith.mulf %442, %450 : vector<8x32xf32>
      %459 = arith.addf %457, %458 : vector<8x32xf32>
      %460 = math.tanh %459 : vector<8x32xf32>
      %461 = arith.mulf %456, %460 : vector<8x32xf32>
      %462 = vector.extract_strided_slice %436 {offsets = [0, 0], sizes = [8, 32], strides = [1, 1]} : vector<8x128xf32> to vector<8x32xf32>
      %463 = arith.negf %462 : vector<8x32xf32>
      %464 = math.exp %463 : vector<8x32xf32>
      %cst_104 = arith.constant 1.000000e+00 : f32
      %465 = vector.broadcast %cst_104 : f32 to vector<8x32xf32>
      %466 = arith.addf %465, %464 : vector<8x32xf32>
      %467 = arith.divf %465, %466 : vector<8x32xf32>
      %468 = vector.extract_strided_slice %436 {offsets = [0, 32], sizes = [8, 32], strides = [1, 1]} : vector<8x128xf32> to vector<8x32xf32>
      %469 = arith.negf %468 : vector<8x32xf32>
      %470 = math.exp %469 : vector<8x32xf32>
      %cst_105 = arith.constant 1.000000e+00 : f32
      %471 = vector.broadcast %cst_105 : f32 to vector<8x32xf32>
      %472 = arith.addf %471, %470 : vector<8x32xf32>
      %473 = arith.divf %471, %472 : vector<8x32xf32>
      %474 = vector.extract_strided_slice %436 {offsets = [0, 64], sizes = [8, 32], strides = [1, 1]} : vector<8x128xf32> to vector<8x32xf32>
      %475 = math.tanh %474 : vector<8x32xf32>
      %476 = vector.extract_strided_slice %436 {offsets = [0, 96], sizes = [8, 32], strides = [1, 1]} : vector<8x128xf32> to vector<8x32xf32>
      %477 = arith.negf %476 : vector<8x32xf32>
      %478 = math.exp %477 : vector<8x32xf32>
      %cst_106 = arith.constant 1.000000e+00 : f32
      %479 = vector.broadcast %cst_106 : f32 to vector<8x32xf32>
      %480 = arith.addf %479, %478 : vector<8x32xf32>
      %481 = arith.divf %479, %480 : vector<8x32xf32>
      %482 = arith.mulf %473, %419 : vector<8x32xf32>
      %483 = arith.mulf %467, %475 : vector<8x32xf32>
      %484 = arith.addf %482, %483 : vector<8x32xf32>
      %485 = math.tanh %484 : vector<8x32xf32>
      %486 = arith.mulf %481, %485 : vector<8x32xf32>
      %487 = vector.broadcast %c4_i32 : i32 to vector<8x1xi32>
      %488 = arith.cmpi slt, %487, %36 : vector<8x1xi32>
      %489 = vector.broadcast %420 : i32 to vector<8x1xi32>
      %490 = arith.cmpi slt, %489, %36 : vector<8x1xi32>
      %cst_107 = arith.constant 0.000000e+00 : f32
      %491 = vector.shape_cast %488 : vector<8x1xi1> to vector<8x1xi1>
      %492 = vector.broadcast %491 : vector<8x1xi1> to vector<8x32xi1>
      %493 = vector.broadcast %cst_107 : f32 to vector<8x32xf32>
      %494 = arith.select %492, %461, %493 : vector<8x32xi1>, vector<8x32xf32>
      %495 = arith.index_cast %422 : i32 to index
      %c0_108 = arith.constant 0 : index
      %496 = vector.load %arg7[%495, %c0_108] : memref<80x64xf32, #tpu.memory_space<vmem>>, vector<8x32xf32>
      tpu.vector_store %arg7[%495, %c0_108], %494 {strides = array<i32>} : memref<80x64xf32, #tpu.memory_space<vmem>>, vector<8x32xf32>,
      %cst_109 = arith.constant 0.000000e+00 : f32
      %497 = vector.shape_cast %490 : vector<8x1xi1> to vector<8x1xi1>
      %498 = vector.broadcast %497 : vector<8x1xi1> to vector<8x32xi1>
      %499 = vector.broadcast %cst_109 : f32 to vector<8x32xf32>
      %500 = arith.select %498, %486, %499 : vector<8x32xi1>, vector<8x32xf32>
      %501 = arith.index_cast %424 : i32 to index
      %c32_110 = arith.constant 32 : index
      %502 = vector.load %arg7[%501, %c32_110] : memref<80x64xf32, #tpu.memory_space<vmem>>, vector<8x32xf32>
      tpu.vector_store %arg7[%501, %c32_110], %500 {strides = array<i32>} : memref<80x64xf32, #tpu.memory_space<vmem>>, vector<8x32xf32>,
      %503 = vector.shape_cast %488 : vector<8x1xi1> to vector<8x1xi1>
      %504 = vector.broadcast %503 : vector<8x1xi1> to vector<8x32xi1>
      %505 = arith.select %504, %461, %410 : vector<8x32xi1>, vector<8x32xf32>
      %506 = vector.shape_cast %488 : vector<8x1xi1> to vector<8x1xi1>
      %507 = vector.broadcast %506 : vector<8x1xi1> to vector<8x32xi1>
      %508 = arith.select %507, %459, %413 : vector<8x32xi1>, vector<8x32xf32>
      %509 = vector.shape_cast %490 : vector<8x1xi1> to vector<8x1xi1>
      %510 = vector.broadcast %509 : vector<8x1xi1> to vector<8x32xi1>
      %511 = arith.select %510, %486, %416 : vector<8x32xi1>, vector<8x32xf32>
      %512 = vector.shape_cast %490 : vector<8x1xi1> to vector<8x1xi1>
      %513 = vector.broadcast %512 : vector<8x1xi1> to vector<8x32xi1>
      %514 = arith.select %513, %484, %419 : vector<8x32xi1>, vector<8x32xf32>
      %c5_i32 = arith.constant 5 : i32
      %c9_i32_111 = arith.constant 9 : i32
      %515 = arith.subi %c9_i32_111, %c5_i32 : i32
      %c8_i32_112 = arith.constant 8 : i32
      %516 = arith.muli %c5_i32, %c8_i32_112 : i32
      %517 = tpu.assume_multiple %516, 8 : i32
      %c8_i32_113 = arith.constant 8 : i32
      %518 = arith.muli %515, %c8_i32_113 : i32
      %519 = tpu.assume_multiple %518, 8 : i32
      %520 = arith.index_cast %517 : i32 to index
      %c0_114 = arith.constant 0 : index
      %521 = vector.load %arg9[%520, %c0_114] : memref<80x256xf32, #tpu.memory_space<vmem>>, vector<8x256xf32>
      %522 = arith.index_cast %519 : i32 to index
      %c0_115 = arith.constant 0 : index
      %523 = vector.load %arg9[%522, %c0_115] : memref<80x256xf32, #tpu.memory_space<vmem>>, vector<8x256xf32>
      %524 = tpu.concatenate %505, %511 in 1 : vector<8x32xf32>, vector<8x32xf32> -> vector<8x64xf32>
      %cst_116 = arith.constant dense<0.000000e+00> : vector<8x256xf32>
      %525 = tpu.matmul %524, %38, %cst_116 {dimension_numbers = #tpu.dot_dimension_numbers<[1], [0], [0], [1], [0, 0, 1, 1], [], []>} : vector<8x64xf32>, vector<64x256xf32>, vector<8x256xf32> -> vector<8x256xf32>
      %526 = vector.extract_strided_slice %521 {offsets = [0, 0], sizes = [8, 128], strides = [1, 1]} : vector<8x256xf32> to vector<8x128xf32>
      %527 = vector.extract_strided_slice %525 {offsets = [0, 0], sizes = [8, 128], strides = [1, 1]} : vector<8x256xf32> to vector<8x128xf32>
      %528 = arith.addf %526, %527 : vector<8x128xf32>
      %529 = vector.extract_strided_slice %523 {offsets = [0, 128], sizes = [8, 128], strides = [1, 1]} : vector<8x256xf32> to vector<8x128xf32>
      %530 = vector.extract_strided_slice %525 {offsets = [0, 128], sizes = [8, 128], strides = [1, 1]} : vector<8x256xf32> to vector<8x128xf32>
      %531 = arith.addf %529, %530 : vector<8x128xf32>
      %532 = vector.extract_strided_slice %528 {offsets = [0, 0], sizes = [8, 32], strides = [1, 1]} : vector<8x128xf32> to vector<8x32xf32>
      %533 = arith.negf %532 : vector<8x32xf32>
      %534 = math.exp %533 : vector<8x32xf32>
      %cst_117 = arith.constant 1.000000e+00 : f32
      %535 = vector.broadcast %cst_117 : f32 to vector<8x32xf32>
      %536 = arith.addf %535, %534 : vector<8x32xf32>
      %537 = arith.divf %535, %536 : vector<8x32xf32>
      %538 = vector.extract_strided_slice %528 {offsets = [0, 32], sizes = [8, 32], strides = [1, 1]} : vector<8x128xf32> to vector<8x32xf32>
      %539 = arith.negf %538 : vector<8x32xf32>
      %540 = math.exp %539 : vector<8x32xf32>
      %cst_118 = arith.constant 1.000000e+00 : f32
      %541 = vector.broadcast %cst_118 : f32 to vector<8x32xf32>
      %542 = arith.addf %541, %540 : vector<8x32xf32>
      %543 = arith.divf %541, %542 : vector<8x32xf32>
      %544 = vector.extract_strided_slice %528 {offsets = [0, 64], sizes = [8, 32], strides = [1, 1]} : vector<8x128xf32> to vector<8x32xf32>
      %545 = math.tanh %544 : vector<8x32xf32>
      %546 = vector.extract_strided_slice %528 {offsets = [0, 96], sizes = [8, 32], strides = [1, 1]} : vector<8x128xf32> to vector<8x32xf32>
      %547 = arith.negf %546 : vector<8x32xf32>
      %548 = math.exp %547 : vector<8x32xf32>
      %cst_119 = arith.constant 1.000000e+00 : f32
      %549 = vector.broadcast %cst_119 : f32 to vector<8x32xf32>
      %550 = arith.addf %549, %548 : vector<8x32xf32>
      %551 = arith.divf %549, %550 : vector<8x32xf32>
      %552 = arith.mulf %543, %508 : vector<8x32xf32>
      %553 = arith.mulf %537, %545 : vector<8x32xf32>
      %554 = arith.addf %552, %553 : vector<8x32xf32>
      %555 = math.tanh %554 : vector<8x32xf32>
      %556 = arith.mulf %551, %555 : vector<8x32xf32>
      %557 = vector.extract_strided_slice %531 {offsets = [0, 0], sizes = [8, 32], strides = [1, 1]} : vector<8x128xf32> to vector<8x32xf32>
      %558 = arith.negf %557 : vector<8x32xf32>
      %559 = math.exp %558 : vector<8x32xf32>
      %cst_120 = arith.constant 1.000000e+00 : f32
      %560 = vector.broadcast %cst_120 : f32 to vector<8x32xf32>
      %561 = arith.addf %560, %559 : vector<8x32xf32>
      %562 = arith.divf %560, %561 : vector<8x32xf32>
      %563 = vector.extract_strided_slice %531 {offsets = [0, 32], sizes = [8, 32], strides = [1, 1]} : vector<8x128xf32> to vector<8x32xf32>
      %564 = arith.negf %563 : vector<8x32xf32>
      %565 = math.exp %564 : vector<8x32xf32>
      %cst_121 = arith.constant 1.000000e+00 : f32
      %566 = vector.broadcast %cst_121 : f32 to vector<8x32xf32>
      %567 = arith.addf %566, %565 : vector<8x32xf32>
      %568 = arith.divf %566, %567 : vector<8x32xf32>
      %569 = vector.extract_strided_slice %531 {offsets = [0, 64], sizes = [8, 32], strides = [1, 1]} : vector<8x128xf32> to vector<8x32xf32>
      %570 = math.tanh %569 : vector<8x32xf32>
      %571 = vector.extract_strided_slice %531 {offsets = [0, 96], sizes = [8, 32], strides = [1, 1]} : vector<8x128xf32> to vector<8x32xf32>
      %572 = arith.negf %571 : vector<8x32xf32>
      %573 = math.exp %572 : vector<8x32xf32>
      %cst_122 = arith.constant 1.000000e+00 : f32
      %574 = vector.broadcast %cst_122 : f32 to vector<8x32xf32>
      %575 = arith.addf %574, %573 : vector<8x32xf32>
      %576 = arith.divf %574, %575 : vector<8x32xf32>
      %577 = arith.mulf %568, %514 : vector<8x32xf32>
      %578 = arith.mulf %562, %570 : vector<8x32xf32>
      %579 = arith.addf %577, %578 : vector<8x32xf32>
      %580 = math.tanh %579 : vector<8x32xf32>
      %581 = arith.mulf %576, %580 : vector<8x32xf32>
      %582 = vector.broadcast %c5_i32 : i32 to vector<8x1xi32>
      %583 = arith.cmpi slt, %582, %36 : vector<8x1xi32>
      %584 = vector.broadcast %515 : i32 to vector<8x1xi32>
      %585 = arith.cmpi slt, %584, %36 : vector<8x1xi32>
      %cst_123 = arith.constant 0.000000e+00 : f32
      %586 = vector.shape_cast %583 : vector<8x1xi1> to vector<8x1xi1>
      %587 = vector.broadcast %586 : vector<8x1xi1> to vector<8x32xi1>
      %588 = vector.broadcast %cst_123 : f32 to vector<8x32xf32>
      %589 = arith.select %587, %556, %588 : vector<8x32xi1>, vector<8x32xf32>
      %590 = arith.index_cast %517 : i32 to index
      %c0_124 = arith.constant 0 : index
      %591 = vector.load %arg7[%590, %c0_124] : memref<80x64xf32, #tpu.memory_space<vmem>>, vector<8x32xf32>
      tpu.vector_store %arg7[%590, %c0_124], %589 {strides = array<i32>} : memref<80x64xf32, #tpu.memory_space<vmem>>, vector<8x32xf32>,
      %cst_125 = arith.constant 0.000000e+00 : f32
      %592 = vector.shape_cast %585 : vector<8x1xi1> to vector<8x1xi1>
      %593 = vector.broadcast %592 : vector<8x1xi1> to vector<8x32xi1>
      %594 = vector.broadcast %cst_125 : f32 to vector<8x32xf32>
      %595 = arith.select %593, %581, %594 : vector<8x32xi1>, vector<8x32xf32>
      %596 = arith.index_cast %519 : i32 to index
      %c32_126 = arith.constant 32 : index
      %597 = vector.load %arg7[%596, %c32_126] : memref<80x64xf32, #tpu.memory_space<vmem>>, vector<8x32xf32>
      tpu.vector_store %arg7[%596, %c32_126], %595 {strides = array<i32>} : memref<80x64xf32, #tpu.memory_space<vmem>>, vector<8x32xf32>,
      %598 = vector.shape_cast %583 : vector<8x1xi1> to vector<8x1xi1>
      %599 = vector.broadcast %598 : vector<8x1xi1> to vector<8x32xi1>
      %600 = arith.select %599, %556, %505 : vector<8x32xi1>, vector<8x32xf32>
      %601 = vector.shape_cast %583 : vector<8x1xi1> to vector<8x1xi1>
      %602 = vector.broadcast %601 : vector<8x1xi1> to vector<8x32xi1>
      %603 = arith.select %602, %554, %508 : vector<8x32xi1>, vector<8x32xf32>
      %604 = vector.shape_cast %585 : vector<8x1xi1> to vector<8x1xi1>
      %605 = vector.broadcast %604 : vector<8x1xi1> to vector<8x32xi1>
      %606 = arith.select %605, %581, %511 : vector<8x32xi1>, vector<8x32xf32>
      %607 = vector.shape_cast %585 : vector<8x1xi1> to vector<8x1xi1>
      %608 = vector.broadcast %607 : vector<8x1xi1> to vector<8x32xi1>
      %609 = arith.select %608, %579, %514 : vector<8x32xi1>, vector<8x32xf32>
      %c6_i32 = arith.constant 6 : i32
      %c9_i32_127 = arith.constant 9 : i32
      %610 = arith.subi %c9_i32_127, %c6_i32 : i32
      %c8_i32_128 = arith.constant 8 : i32
      %611 = arith.muli %c6_i32, %c8_i32_128 : i32
      %612 = tpu.assume_multiple %611, 8 : i32
      %c8_i32_129 = arith.constant 8 : i32
      %613 = arith.muli %610, %c8_i32_129 : i32
      %614 = tpu.assume_multiple %613, 8 : i32
      %615 = arith.index_cast %612 : i32 to index
      %c0_130 = arith.constant 0 : index
      %616 = vector.load %arg9[%615, %c0_130] : memref<80x256xf32, #tpu.memory_space<vmem>>, vector<8x256xf32>
      %617 = arith.index_cast %614 : i32 to index
      %c0_131 = arith.constant 0 : index
      %618 = vector.load %arg9[%617, %c0_131] : memref<80x256xf32, #tpu.memory_space<vmem>>, vector<8x256xf32>
      %619 = tpu.concatenate %600, %606 in 1 : vector<8x32xf32>, vector<8x32xf32> -> vector<8x64xf32>
      %cst_132 = arith.constant dense<0.000000e+00> : vector<8x256xf32>
      %620 = tpu.matmul %619, %38, %cst_132 {dimension_numbers = #tpu.dot_dimension_numbers<[1], [0], [0], [1], [0, 0, 1, 1], [], []>} : vector<8x64xf32>, vector<64x256xf32>, vector<8x256xf32> -> vector<8x256xf32>
      %621 = vector.extract_strided_slice %616 {offsets = [0, 0], sizes = [8, 128], strides = [1, 1]} : vector<8x256xf32> to vector<8x128xf32>
      %622 = vector.extract_strided_slice %620 {offsets = [0, 0], sizes = [8, 128], strides = [1, 1]} : vector<8x256xf32> to vector<8x128xf32>
      %623 = arith.addf %621, %622 : vector<8x128xf32>
      %624 = vector.extract_strided_slice %618 {offsets = [0, 128], sizes = [8, 128], strides = [1, 1]} : vector<8x256xf32> to vector<8x128xf32>
      %625 = vector.extract_strided_slice %620 {offsets = [0, 128], sizes = [8, 128], strides = [1, 1]} : vector<8x256xf32> to vector<8x128xf32>
      %626 = arith.addf %624, %625 : vector<8x128xf32>
      %627 = vector.extract_strided_slice %623 {offsets = [0, 0], sizes = [8, 32], strides = [1, 1]} : vector<8x128xf32> to vector<8x32xf32>
      %628 = arith.negf %627 : vector<8x32xf32>
      %629 = math.exp %628 : vector<8x32xf32>
      %cst_133 = arith.constant 1.000000e+00 : f32
      %630 = vector.broadcast %cst_133 : f32 to vector<8x32xf32>
      %631 = arith.addf %630, %629 : vector<8x32xf32>
      %632 = arith.divf %630, %631 : vector<8x32xf32>
      %633 = vector.extract_strided_slice %623 {offsets = [0, 32], sizes = [8, 32], strides = [1, 1]} : vector<8x128xf32> to vector<8x32xf32>
      %634 = arith.negf %633 : vector<8x32xf32>
      %635 = math.exp %634 : vector<8x32xf32>
      %cst_134 = arith.constant 1.000000e+00 : f32
      %636 = vector.broadcast %cst_134 : f32 to vector<8x32xf32>
      %637 = arith.addf %636, %635 : vector<8x32xf32>
      %638 = arith.divf %636, %637 : vector<8x32xf32>
      %639 = vector.extract_strided_slice %623 {offsets = [0, 64], sizes = [8, 32], strides = [1, 1]} : vector<8x128xf32> to vector<8x32xf32>
      %640 = math.tanh %639 : vector<8x32xf32>
      %641 = vector.extract_strided_slice %623 {offsets = [0, 96], sizes = [8, 32], strides = [1, 1]} : vector<8x128xf32> to vector<8x32xf32>
      %642 = arith.negf %641 : vector<8x32xf32>
      %643 = math.exp %642 : vector<8x32xf32>
      %cst_135 = arith.constant 1.000000e+00 : f32
      %644 = vector.broadcast %cst_135 : f32 to vector<8x32xf32>
      %645 = arith.addf %644, %643 : vector<8x32xf32>
      %646 = arith.divf %644, %645 : vector<8x32xf32>
      %647 = arith.mulf %638, %603 : vector<8x32xf32>
      %648 = arith.mulf %632, %640 : vector<8x32xf32>
      %649 = arith.addf %647, %648 : vector<8x32xf32>
      %650 = math.tanh %649 : vector<8x32xf32>
      %651 = arith.mulf %646, %650 : vector<8x32xf32>
      %652 = vector.extract_strided_slice %626 {offsets = [0, 0], sizes = [8, 32], strides = [1, 1]} : vector<8x128xf32> to vector<8x32xf32>
      %653 = arith.negf %652 : vector<8x32xf32>
      %654 = math.exp %653 : vector<8x32xf32>
      %cst_136 = arith.constant 1.000000e+00 : f32
      %655 = vector.broadcast %cst_136 : f32 to vector<8x32xf32>
      %656 = arith.addf %655, %654 : vector<8x32xf32>
      %657 = arith.divf %655, %656 : vector<8x32xf32>
      %658 = vector.extract_strided_slice %626 {offsets = [0, 32], sizes = [8, 32], strides = [1, 1]} : vector<8x128xf32> to vector<8x32xf32>
      %659 = arith.negf %658 : vector<8x32xf32>
      %660 = math.exp %659 : vector<8x32xf32>
      %cst_137 = arith.constant 1.000000e+00 : f32
      %661 = vector.broadcast %cst_137 : f32 to vector<8x32xf32>
      %662 = arith.addf %661, %660 : vector<8x32xf32>
      %663 = arith.divf %661, %662 : vector<8x32xf32>
      %664 = vector.extract_strided_slice %626 {offsets = [0, 64], sizes = [8, 32], strides = [1, 1]} : vector<8x128xf32> to vector<8x32xf32>
      %665 = math.tanh %664 : vector<8x32xf32>
      %666 = vector.extract_strided_slice %626 {offsets = [0, 96], sizes = [8, 32], strides = [1, 1]} : vector<8x128xf32> to vector<8x32xf32>
      %667 = arith.negf %666 : vector<8x32xf32>
      %668 = math.exp %667 : vector<8x32xf32>
      %cst_138 = arith.constant 1.000000e+00 : f32
      %669 = vector.broadcast %cst_138 : f32 to vector<8x32xf32>
      %670 = arith.addf %669, %668 : vector<8x32xf32>
      %671 = arith.divf %669, %670 : vector<8x32xf32>
      %672 = arith.mulf %663, %609 : vector<8x32xf32>
      %673 = arith.mulf %657, %665 : vector<8x32xf32>
      %674 = arith.addf %672, %673 : vector<8x32xf32>
      %675 = math.tanh %674 : vector<8x32xf32>
      %676 = arith.mulf %671, %675 : vector<8x32xf32>
      %677 = vector.broadcast %c6_i32 : i32 to vector<8x1xi32>
      %678 = arith.cmpi slt, %677, %36 : vector<8x1xi32>
      %679 = vector.broadcast %610 : i32 to vector<8x1xi32>
      %680 = arith.cmpi slt, %679, %36 : vector<8x1xi32>
      %cst_139 = arith.constant 0.000000e+00 : f32
      %681 = vector.shape_cast %678 : vector<8x1xi1> to vector<8x1xi1>
      %682 = vector.broadcast %681 : vector<8x1xi1> to vector<8x32xi1>
      %683 = vector.broadcast %cst_139 : f32 to vector<8x32xf32>
      %684 = arith.select %682, %651, %683 : vector<8x32xi1>, vector<8x32xf32>
      %685 = arith.index_cast %612 : i32 to index
      %c0_140 = arith.constant 0 : index
      %686 = vector.load %arg7[%685, %c0_140] : memref<80x64xf32, #tpu.memory_space<vmem>>, vector<8x32xf32>
      tpu.vector_store %arg7[%685, %c0_140], %684 {strides = array<i32>} : memref<80x64xf32, #tpu.memory_space<vmem>>, vector<8x32xf32>,
      %cst_141 = arith.constant 0.000000e+00 : f32
      %687 = vector.shape_cast %680 : vector<8x1xi1> to vector<8x1xi1>
      %688 = vector.broadcast %687 : vector<8x1xi1> to vector<8x32xi1>
      %689 = vector.broadcast %cst_141 : f32 to vector<8x32xf32>
      %690 = arith.select %688, %676, %689 : vector<8x32xi1>, vector<8x32xf32>
      %691 = arith.index_cast %614 : i32 to index
      %c32_142 = arith.constant 32 : index
      %692 = vector.load %arg7[%691, %c32_142] : memref<80x64xf32, #tpu.memory_space<vmem>>, vector<8x32xf32>
      tpu.vector_store %arg7[%691, %c32_142], %690 {strides = array<i32>} : memref<80x64xf32, #tpu.memory_space<vmem>>, vector<8x32xf32>,
      %693 = vector.shape_cast %678 : vector<8x1xi1> to vector<8x1xi1>
      %694 = vector.broadcast %693 : vector<8x1xi1> to vector<8x32xi1>
      %695 = arith.select %694, %651, %600 : vector<8x32xi1>, vector<8x32xf32>
      %696 = vector.shape_cast %678 : vector<8x1xi1> to vector<8x1xi1>
      %697 = vector.broadcast %696 : vector<8x1xi1> to vector<8x32xi1>
      %698 = arith.select %697, %649, %603 : vector<8x32xi1>, vector<8x32xf32>
      %699 = vector.shape_cast %680 : vector<8x1xi1> to vector<8x1xi1>
      %700 = vector.broadcast %699 : vector<8x1xi1> to vector<8x32xi1>
      %701 = arith.select %700, %676, %606 : vector<8x32xi1>, vector<8x32xf32>
      %702 = vector.shape_cast %680 : vector<8x1xi1> to vector<8x1xi1>
      %703 = vector.broadcast %702 : vector<8x1xi1> to vector<8x32xi1>
      %704 = arith.select %703, %674, %609 : vector<8x32xi1>, vector<8x32xf32>
      %c7_i32 = arith.constant 7 : i32
      %c9_i32_143 = arith.constant 9 : i32
      %705 = arith.subi %c9_i32_143, %c7_i32 : i32
      %c8_i32_144 = arith.constant 8 : i32
      %706 = arith.muli %c7_i32, %c8_i32_144 : i32
      %707 = tpu.assume_multiple %706, 8 : i32
      %c8_i32_145 = arith.constant 8 : i32
      %708 = arith.muli %705, %c8_i32_145 : i32
      %709 = tpu.assume_multiple %708, 8 : i32
      %710 = arith.index_cast %707 : i32 to index
      %c0_146 = arith.constant 0 : index
      %711 = vector.load %arg9[%710, %c0_146] : memref<80x256xf32, #tpu.memory_space<vmem>>, vector<8x256xf32>
      %712 = arith.index_cast %709 : i32 to index
      %c0_147 = arith.constant 0 : index
      %713 = vector.load %arg9[%712, %c0_147] : memref<80x256xf32, #tpu.memory_space<vmem>>, vector<8x256xf32>
      %714 = tpu.concatenate %695, %701 in 1 : vector<8x32xf32>, vector<8x32xf32> -> vector<8x64xf32>
      %cst_148 = arith.constant dense<0.000000e+00> : vector<8x256xf32>
      %715 = tpu.matmul %714, %38, %cst_148 {dimension_numbers = #tpu.dot_dimension_numbers<[1], [0], [0], [1], [0, 0, 1, 1], [], []>} : vector<8x64xf32>, vector<64x256xf32>, vector<8x256xf32> -> vector<8x256xf32>
      %716 = vector.extract_strided_slice %711 {offsets = [0, 0], sizes = [8, 128], strides = [1, 1]} : vector<8x256xf32> to vector<8x128xf32>
      %717 = vector.extract_strided_slice %715 {offsets = [0, 0], sizes = [8, 128], strides = [1, 1]} : vector<8x256xf32> to vector<8x128xf32>
      %718 = arith.addf %716, %717 : vector<8x128xf32>
      %719 = vector.extract_strided_slice %713 {offsets = [0, 128], sizes = [8, 128], strides = [1, 1]} : vector<8x256xf32> to vector<8x128xf32>
      %720 = vector.extract_strided_slice %715 {offsets = [0, 128], sizes = [8, 128], strides = [1, 1]} : vector<8x256xf32> to vector<8x128xf32>
      %721 = arith.addf %719, %720 : vector<8x128xf32>
      %722 = vector.extract_strided_slice %718 {offsets = [0, 0], sizes = [8, 32], strides = [1, 1]} : vector<8x128xf32> to vector<8x32xf32>
      %723 = arith.negf %722 : vector<8x32xf32>
      %724 = math.exp %723 : vector<8x32xf32>
      %cst_149 = arith.constant 1.000000e+00 : f32
      %725 = vector.broadcast %cst_149 : f32 to vector<8x32xf32>
      %726 = arith.addf %725, %724 : vector<8x32xf32>
      %727 = arith.divf %725, %726 : vector<8x32xf32>
      %728 = vector.extract_strided_slice %718 {offsets = [0, 32], sizes = [8, 32], strides = [1, 1]} : vector<8x128xf32> to vector<8x32xf32>
      %729 = arith.negf %728 : vector<8x32xf32>
      %730 = math.exp %729 : vector<8x32xf32>
      %cst_150 = arith.constant 1.000000e+00 : f32
      %731 = vector.broadcast %cst_150 : f32 to vector<8x32xf32>
      %732 = arith.addf %731, %730 : vector<8x32xf32>
      %733 = arith.divf %731, %732 : vector<8x32xf32>
      %734 = vector.extract_strided_slice %718 {offsets = [0, 64], sizes = [8, 32], strides = [1, 1]} : vector<8x128xf32> to vector<8x32xf32>
      %735 = math.tanh %734 : vector<8x32xf32>
      %736 = vector.extract_strided_slice %718 {offsets = [0, 96], sizes = [8, 32], strides = [1, 1]} : vector<8x128xf32> to vector<8x32xf32>
      %737 = arith.negf %736 : vector<8x32xf32>
      %738 = math.exp %737 : vector<8x32xf32>
      %cst_151 = arith.constant 1.000000e+00 : f32
      %739 = vector.broadcast %cst_151 : f32 to vector<8x32xf32>
      %740 = arith.addf %739, %738 : vector<8x32xf32>
      %741 = arith.divf %739, %740 : vector<8x32xf32>
      %742 = arith.mulf %733, %698 : vector<8x32xf32>
      %743 = arith.mulf %727, %735 : vector<8x32xf32>
      %744 = arith.addf %742, %743 : vector<8x32xf32>
      %745 = math.tanh %744 : vector<8x32xf32>
      %746 = arith.mulf %741, %745 : vector<8x32xf32>
      %747 = vector.extract_strided_slice %721 {offsets = [0, 0], sizes = [8, 32], strides = [1, 1]} : vector<8x128xf32> to vector<8x32xf32>
      %748 = arith.negf %747 : vector<8x32xf32>
      %749 = math.exp %748 : vector<8x32xf32>
      %cst_152 = arith.constant 1.000000e+00 : f32
      %750 = vector.broadcast %cst_152 : f32 to vector<8x32xf32>
      %751 = arith.addf %750, %749 : vector<8x32xf32>
      %752 = arith.divf %750, %751 : vector<8x32xf32>
      %753 = vector.extract_strided_slice %721 {offsets = [0, 32], sizes = [8, 32], strides = [1, 1]} : vector<8x128xf32> to vector<8x32xf32>
      %754 = arith.negf %753 : vector<8x32xf32>
      %755 = math.exp %754 : vector<8x32xf32>
      %cst_153 = arith.constant 1.000000e+00 : f32
      %756 = vector.broadcast %cst_153 : f32 to vector<8x32xf32>
      %757 = arith.addf %756, %755 : vector<8x32xf32>
      %758 = arith.divf %756, %757 : vector<8x32xf32>
      %759 = vector.extract_strided_slice %721 {offsets = [0, 64], sizes = [8, 32], strides = [1, 1]} : vector<8x128xf32> to vector<8x32xf32>
      %760 = math.tanh %759 : vector<8x32xf32>
      %761 = vector.extract_strided_slice %721 {offsets = [0, 96], sizes = [8, 32], strides = [1, 1]} : vector<8x128xf32> to vector<8x32xf32>
      %762 = arith.negf %761 : vector<8x32xf32>
      %763 = math.exp %762 : vector<8x32xf32>
      %cst_154 = arith.constant 1.000000e+00 : f32
      %764 = vector.broadcast %cst_154 : f32 to vector<8x32xf32>
      %765 = arith.addf %764, %763 : vector<8x32xf32>
      %766 = arith.divf %764, %765 : vector<8x32xf32>
      %767 = arith.mulf %758, %704 : vector<8x32xf32>
      %768 = arith.mulf %752, %760 : vector<8x32xf32>
      %769 = arith.addf %767, %768 : vector<8x32xf32>
      %770 = math.tanh %769 : vector<8x32xf32>
      %771 = arith.mulf %766, %770 : vector<8x32xf32>
      %772 = vector.broadcast %c7_i32 : i32 to vector<8x1xi32>
      %773 = arith.cmpi slt, %772, %36 : vector<8x1xi32>
      %774 = vector.broadcast %705 : i32 to vector<8x1xi32>
      %775 = arith.cmpi slt, %774, %36 : vector<8x1xi32>
      %cst_155 = arith.constant 0.000000e+00 : f32
      %776 = vector.shape_cast %773 : vector<8x1xi1> to vector<8x1xi1>
      %777 = vector.broadcast %776 : vector<8x1xi1> to vector<8x32xi1>
      %778 = vector.broadcast %cst_155 : f32 to vector<8x32xf32>
      %779 = arith.select %777, %746, %778 : vector<8x32xi1>, vector<8x32xf32>
      %780 = arith.index_cast %707 : i32 to index
      %c0_156 = arith.constant 0 : index
      %781 = vector.load %arg7[%780, %c0_156] : memref<80x64xf32, #tpu.memory_space<vmem>>, vector<8x32xf32>
      tpu.vector_store %arg7[%780, %c0_156], %779 {strides = array<i32>} : memref<80x64xf32, #tpu.memory_space<vmem>>, vector<8x32xf32>,
      %cst_157 = arith.constant 0.000000e+00 : f32
      %782 = vector.shape_cast %775 : vector<8x1xi1> to vector<8x1xi1>
      %783 = vector.broadcast %782 : vector<8x1xi1> to vector<8x32xi1>
      %784 = vector.broadcast %cst_157 : f32 to vector<8x32xf32>
      %785 = arith.select %783, %771, %784 : vector<8x32xi1>, vector<8x32xf32>
      %786 = arith.index_cast %709 : i32 to index
      %c32_158 = arith.constant 32 : index
      %787 = vector.load %arg7[%786, %c32_158] : memref<80x64xf32, #tpu.memory_space<vmem>>, vector<8x32xf32>
      tpu.vector_store %arg7[%786, %c32_158], %785 {strides = array<i32>} : memref<80x64xf32, #tpu.memory_space<vmem>>, vector<8x32xf32>,
      %788 = vector.shape_cast %773 : vector<8x1xi1> to vector<8x1xi1>
      %789 = vector.broadcast %788 : vector<8x1xi1> to vector<8x32xi1>
      %790 = arith.select %789, %746, %695 : vector<8x32xi1>, vector<8x32xf32>
      %791 = vector.shape_cast %773 : vector<8x1xi1> to vector<8x1xi1>
      %792 = vector.broadcast %791 : vector<8x1xi1> to vector<8x32xi1>
      %793 = arith.select %792, %744, %698 : vector<8x32xi1>, vector<8x32xf32>
      %794 = vector.shape_cast %775 : vector<8x1xi1> to vector<8x1xi1>
      %795 = vector.broadcast %794 : vector<8x1xi1> to vector<8x32xi1>
      %796 = arith.select %795, %771, %701 : vector<8x32xi1>, vector<8x32xf32>
      %797 = vector.shape_cast %775 : vector<8x1xi1> to vector<8x1xi1>
      %798 = vector.broadcast %797 : vector<8x1xi1> to vector<8x32xi1>
      %799 = arith.select %798, %769, %704 : vector<8x32xi1>, vector<8x32xf32>
      %c8_i32_159 = arith.constant 8 : i32
      %c9_i32_160 = arith.constant 9 : i32
      %800 = arith.subi %c9_i32_160, %c8_i32_159 : i32
      %c8_i32_161 = arith.constant 8 : i32
      %801 = arith.muli %c8_i32_159, %c8_i32_161 : i32
      %802 = tpu.assume_multiple %801, 8 : i32
      %c8_i32_162 = arith.constant 8 : i32
      %803 = arith.muli %800, %c8_i32_162 : i32
      %804 = tpu.assume_multiple %803, 8 : i32
      %805 = arith.index_cast %802 : i32 to index
      %c0_163 = arith.constant 0 : index
      %806 = vector.load %arg9[%805, %c0_163] : memref<80x256xf32, #tpu.memory_space<vmem>>, vector<8x256xf32>
      %807 = arith.index_cast %804 : i32 to index
      %c0_164 = arith.constant 0 : index
      %808 = vector.load %arg9[%807, %c0_164] : memref<80x256xf32, #tpu.memory_space<vmem>>, vector<8x256xf32>
      %809 = tpu.concatenate %790, %796 in 1 : vector<8x32xf32>, vector<8x32xf32> -> vector<8x64xf32>
      %cst_165 = arith.constant dense<0.000000e+00> : vector<8x256xf32>
      %810 = tpu.matmul %809, %38, %cst_165 {dimension_numbers = #tpu.dot_dimension_numbers<[1], [0], [0], [1], [0, 0, 1, 1], [], []>} : vector<8x64xf32>, vector<64x256xf32>, vector<8x256xf32> -> vector<8x256xf32>
      %811 = vector.extract_strided_slice %806 {offsets = [0, 0], sizes = [8, 128], strides = [1, 1]} : vector<8x256xf32> to vector<8x128xf32>
      %812 = vector.extract_strided_slice %810 {offsets = [0, 0], sizes = [8, 128], strides = [1, 1]} : vector<8x256xf32> to vector<8x128xf32>
      %813 = arith.addf %811, %812 : vector<8x128xf32>
      %814 = vector.extract_strided_slice %808 {offsets = [0, 128], sizes = [8, 128], strides = [1, 1]} : vector<8x256xf32> to vector<8x128xf32>
      %815 = vector.extract_strided_slice %810 {offsets = [0, 128], sizes = [8, 128], strides = [1, 1]} : vector<8x256xf32> to vector<8x128xf32>
      %816 = arith.addf %814, %815 : vector<8x128xf32>
      %817 = vector.extract_strided_slice %813 {offsets = [0, 0], sizes = [8, 32], strides = [1, 1]} : vector<8x128xf32> to vector<8x32xf32>
      %818 = arith.negf %817 : vector<8x32xf32>
      %819 = math.exp %818 : vector<8x32xf32>
      %cst_166 = arith.constant 1.000000e+00 : f32
      %820 = vector.broadcast %cst_166 : f32 to vector<8x32xf32>
      %821 = arith.addf %820, %819 : vector<8x32xf32>
      %822 = arith.divf %820, %821 : vector<8x32xf32>
      %823 = vector.extract_strided_slice %813 {offsets = [0, 32], sizes = [8, 32], strides = [1, 1]} : vector<8x128xf32> to vector<8x32xf32>
      %824 = arith.negf %823 : vector<8x32xf32>
      %825 = math.exp %824 : vector<8x32xf32>
      %cst_167 = arith.constant 1.000000e+00 : f32
      %826 = vector.broadcast %cst_167 : f32 to vector<8x32xf32>
      %827 = arith.addf %826, %825 : vector<8x32xf32>
      %828 = arith.divf %826, %827 : vector<8x32xf32>
      %829 = vector.extract_strided_slice %813 {offsets = [0, 64], sizes = [8, 32], strides = [1, 1]} : vector<8x128xf32> to vector<8x32xf32>
      %830 = math.tanh %829 : vector<8x32xf32>
      %831 = vector.extract_strided_slice %813 {offsets = [0, 96], sizes = [8, 32], strides = [1, 1]} : vector<8x128xf32> to vector<8x32xf32>
      %832 = arith.negf %831 : vector<8x32xf32>
      %833 = math.exp %832 : vector<8x32xf32>
      %cst_168 = arith.constant 1.000000e+00 : f32
      %834 = vector.broadcast %cst_168 : f32 to vector<8x32xf32>
      %835 = arith.addf %834, %833 : vector<8x32xf32>
      %836 = arith.divf %834, %835 : vector<8x32xf32>
      %837 = arith.mulf %828, %793 : vector<8x32xf32>
      %838 = arith.mulf %822, %830 : vector<8x32xf32>
      %839 = arith.addf %837, %838 : vector<8x32xf32>
      %840 = math.tanh %839 : vector<8x32xf32>
      %841 = arith.mulf %836, %840 : vector<8x32xf32>
      %842 = vector.extract_strided_slice %816 {offsets = [0, 0], sizes = [8, 32], strides = [1, 1]} : vector<8x128xf32> to vector<8x32xf32>
      %843 = arith.negf %842 : vector<8x32xf32>
      %844 = math.exp %843 : vector<8x32xf32>
      %cst_169 = arith.constant 1.000000e+00 : f32
      %845 = vector.broadcast %cst_169 : f32 to vector<8x32xf32>
      %846 = arith.addf %845, %844 : vector<8x32xf32>
      %847 = arith.divf %845, %846 : vector<8x32xf32>
      %848 = vector.extract_strided_slice %816 {offsets = [0, 32], sizes = [8, 32], strides = [1, 1]} : vector<8x128xf32> to vector<8x32xf32>
      %849 = arith.negf %848 : vector<8x32xf32>
      %850 = math.exp %849 : vector<8x32xf32>
      %cst_170 = arith.constant 1.000000e+00 : f32
      %851 = vector.broadcast %cst_170 : f32 to vector<8x32xf32>
      %852 = arith.addf %851, %850 : vector<8x32xf32>
      %853 = arith.divf %851, %852 : vector<8x32xf32>
      %854 = vector.extract_strided_slice %816 {offsets = [0, 64], sizes = [8, 32], strides = [1, 1]} : vector<8x128xf32> to vector<8x32xf32>
      %855 = math.tanh %854 : vector<8x32xf32>
      %856 = vector.extract_strided_slice %816 {offsets = [0, 96], sizes = [8, 32], strides = [1, 1]} : vector<8x128xf32> to vector<8x32xf32>
      %857 = arith.negf %856 : vector<8x32xf32>
      %858 = math.exp %857 : vector<8x32xf32>
      %cst_171 = arith.constant 1.000000e+00 : f32
      %859 = vector.broadcast %cst_171 : f32 to vector<8x32xf32>
      %860 = arith.addf %859, %858 : vector<8x32xf32>
      %861 = arith.divf %859, %860 : vector<8x32xf32>
      %862 = arith.mulf %853, %799 : vector<8x32xf32>
      %863 = arith.mulf %847, %855 : vector<8x32xf32>
      %864 = arith.addf %862, %863 : vector<8x32xf32>
      %865 = math.tanh %864 : vector<8x32xf32>
      %866 = arith.mulf %861, %865 : vector<8x32xf32>
      %867 = vector.broadcast %c8_i32_159 : i32 to vector<8x1xi32>
      %868 = arith.cmpi slt, %867, %36 : vector<8x1xi32>
      %869 = vector.broadcast %800 : i32 to vector<8x1xi32>
      %870 = arith.cmpi slt, %869, %36 : vector<8x1xi32>
      %cst_172 = arith.constant 0.000000e+00 : f32
      %871 = vector.shape_cast %868 : vector<8x1xi1> to vector<8x1xi1>
      %872 = vector.broadcast %871 : vector<8x1xi1> to vector<8x32xi1>
      %873 = vector.broadcast %cst_172 : f32 to vector<8x32xf32>
      %874 = arith.select %872, %841, %873 : vector<8x32xi1>, vector<8x32xf32>
      %875 = arith.index_cast %802 : i32 to index
      %c0_173 = arith.constant 0 : index
      %876 = vector.load %arg7[%875, %c0_173] : memref<80x64xf32, #tpu.memory_space<vmem>>, vector<8x32xf32>
      tpu.vector_store %arg7[%875, %c0_173], %874 {strides = array<i32>} : memref<80x64xf32, #tpu.memory_space<vmem>>, vector<8x32xf32>,
      %cst_174 = arith.constant 0.000000e+00 : f32
      %877 = vector.shape_cast %870 : vector<8x1xi1> to vector<8x1xi1>
      %878 = vector.broadcast %877 : vector<8x1xi1> to vector<8x32xi1>
      %879 = vector.broadcast %cst_174 : f32 to vector<8x32xf32>
      %880 = arith.select %878, %866, %879 : vector<8x32xi1>, vector<8x32xf32>
      %881 = arith.index_cast %804 : i32 to index
      %c32_175 = arith.constant 32 : index
      %882 = vector.load %arg7[%881, %c32_175] : memref<80x64xf32, #tpu.memory_space<vmem>>, vector<8x32xf32>
      tpu.vector_store %arg7[%881, %c32_175], %880 {strides = array<i32>} : memref<80x64xf32, #tpu.memory_space<vmem>>, vector<8x32xf32>,
      %883 = vector.shape_cast %868 : vector<8x1xi1> to vector<8x1xi1>
      %884 = vector.broadcast %883 : vector<8x1xi1> to vector<8x32xi1>
      %885 = arith.select %884, %841, %790 : vector<8x32xi1>, vector<8x32xf32>
      %886 = vector.shape_cast %868 : vector<8x1xi1> to vector<8x1xi1>
      %887 = vector.broadcast %886 : vector<8x1xi1> to vector<8x32xi1>
      %888 = arith.select %887, %839, %793 : vector<8x32xi1>, vector<8x32xf32>
      %889 = vector.shape_cast %870 : vector<8x1xi1> to vector<8x1xi1>
      %890 = vector.broadcast %889 : vector<8x1xi1> to vector<8x32xi1>
      %891 = arith.select %890, %866, %796 : vector<8x32xi1>, vector<8x32xf32>
      %892 = vector.shape_cast %870 : vector<8x1xi1> to vector<8x1xi1>
      %893 = vector.broadcast %892 : vector<8x1xi1> to vector<8x32xi1>
      %894 = arith.select %893, %864, %799 : vector<8x32xi1>, vector<8x32xf32>
      %c9_i32_176 = arith.constant 9 : i32
      %c9_i32_177 = arith.constant 9 : i32
      %895 = arith.subi %c9_i32_177, %c9_i32_176 : i32
      %c8_i32_178 = arith.constant 8 : i32
      %896 = arith.muli %c9_i32_176, %c8_i32_178 : i32
      %897 = tpu.assume_multiple %896, 8 : i32
      %c8_i32_179 = arith.constant 8 : i32
      %898 = arith.muli %895, %c8_i32_179 : i32
      %899 = tpu.assume_multiple %898, 8 : i32
      %900 = arith.index_cast %897 : i32 to index
      %c0_180 = arith.constant 0 : index
      %901 = vector.load %arg9[%900, %c0_180] : memref<80x256xf32, #tpu.memory_space<vmem>>, vector<8x256xf32>
      %902 = arith.index_cast %899 : i32 to index
      %c0_181 = arith.constant 0 : index
      %903 = vector.load %arg9[%902, %c0_181] : memref<80x256xf32, #tpu.memory_space<vmem>>, vector<8x256xf32>
      %904 = tpu.concatenate %885, %891 in 1 : vector<8x32xf32>, vector<8x32xf32> -> vector<8x64xf32>
      %cst_182 = arith.constant dense<0.000000e+00> : vector<8x256xf32>
      %905 = tpu.matmul %904, %38, %cst_182 {dimension_numbers = #tpu.dot_dimension_numbers<[1], [0], [0], [1], [0, 0, 1, 1], [], []>} : vector<8x64xf32>, vector<64x256xf32>, vector<8x256xf32> -> vector<8x256xf32>
      %906 = vector.extract_strided_slice %901 {offsets = [0, 0], sizes = [8, 128], strides = [1, 1]} : vector<8x256xf32> to vector<8x128xf32>
      %907 = vector.extract_strided_slice %905 {offsets = [0, 0], sizes = [8, 128], strides = [1, 1]} : vector<8x256xf32> to vector<8x128xf32>
      %908 = arith.addf %906, %907 : vector<8x128xf32>
      %909 = vector.extract_strided_slice %903 {offsets = [0, 128], sizes = [8, 128], strides = [1, 1]} : vector<8x256xf32> to vector<8x128xf32>
      %910 = vector.extract_strided_slice %905 {offsets = [0, 128], sizes = [8, 128], strides = [1, 1]} : vector<8x256xf32> to vector<8x128xf32>
      %911 = arith.addf %909, %910 : vector<8x128xf32>
      %912 = vector.extract_strided_slice %908 {offsets = [0, 0], sizes = [8, 32], strides = [1, 1]} : vector<8x128xf32> to vector<8x32xf32>
      %913 = arith.negf %912 : vector<8x32xf32>
      %914 = math.exp %913 : vector<8x32xf32>
      %cst_183 = arith.constant 1.000000e+00 : f32
      %915 = vector.broadcast %cst_183 : f32 to vector<8x32xf32>
      %916 = arith.addf %915, %914 : vector<8x32xf32>
      %917 = arith.divf %915, %916 : vector<8x32xf32>
      %918 = vector.extract_strided_slice %908 {offsets = [0, 32], sizes = [8, 32], strides = [1, 1]} : vector<8x128xf32> to vector<8x32xf32>
      %919 = arith.negf %918 : vector<8x32xf32>
      %920 = math.exp %919 : vector<8x32xf32>
      %cst_184 = arith.constant 1.000000e+00 : f32
      %921 = vector.broadcast %cst_184 : f32 to vector<8x32xf32>
      %922 = arith.addf %921, %920 : vector<8x32xf32>
      %923 = arith.divf %921, %922 : vector<8x32xf32>
      %924 = vector.extract_strided_slice %908 {offsets = [0, 64], sizes = [8, 32], strides = [1, 1]} : vector<8x128xf32> to vector<8x32xf32>
      %925 = math.tanh %924 : vector<8x32xf32>
      %926 = vector.extract_strided_slice %908 {offsets = [0, 96], sizes = [8, 32], strides = [1, 1]} : vector<8x128xf32> to vector<8x32xf32>
      %927 = arith.negf %926 : vector<8x32xf32>
      %928 = math.exp %927 : vector<8x32xf32>
      %cst_185 = arith.constant 1.000000e+00 : f32
      %929 = vector.broadcast %cst_185 : f32 to vector<8x32xf32>
      %930 = arith.addf %929, %928 : vector<8x32xf32>
      %931 = arith.divf %929, %930 : vector<8x32xf32>
      %932 = arith.mulf %923, %888 : vector<8x32xf32>
      %933 = arith.mulf %917, %925 : vector<8x32xf32>
      %934 = arith.addf %932, %933 : vector<8x32xf32>
      %935 = math.tanh %934 : vector<8x32xf32>
      %936 = arith.mulf %931, %935 : vector<8x32xf32>
      %937 = vector.extract_strided_slice %911 {offsets = [0, 0], sizes = [8, 32], strides = [1, 1]} : vector<8x128xf32> to vector<8x32xf32>
      %938 = arith.negf %937 : vector<8x32xf32>
      %939 = math.exp %938 : vector<8x32xf32>
      %cst_186 = arith.constant 1.000000e+00 : f32
      %940 = vector.broadcast %cst_186 : f32 to vector<8x32xf32>
      %941 = arith.addf %940, %939 : vector<8x32xf32>
      %942 = arith.divf %940, %941 : vector<8x32xf32>
      %943 = vector.extract_strided_slice %911 {offsets = [0, 32], sizes = [8, 32], strides = [1, 1]} : vector<8x128xf32> to vector<8x32xf32>
      %944 = arith.negf %943 : vector<8x32xf32>
      %945 = math.exp %944 : vector<8x32xf32>
      %cst_187 = arith.constant 1.000000e+00 : f32
      %946 = vector.broadcast %cst_187 : f32 to vector<8x32xf32>
      %947 = arith.addf %946, %945 : vector<8x32xf32>
      %948 = arith.divf %946, %947 : vector<8x32xf32>
      %949 = vector.extract_strided_slice %911 {offsets = [0, 64], sizes = [8, 32], strides = [1, 1]} : vector<8x128xf32> to vector<8x32xf32>
      %950 = math.tanh %949 : vector<8x32xf32>
      %951 = vector.extract_strided_slice %911 {offsets = [0, 96], sizes = [8, 32], strides = [1, 1]} : vector<8x128xf32> to vector<8x32xf32>
      %952 = arith.negf %951 : vector<8x32xf32>
      %953 = math.exp %952 : vector<8x32xf32>
      %cst_188 = arith.constant 1.000000e+00 : f32
      %954 = vector.broadcast %cst_188 : f32 to vector<8x32xf32>
      %955 = arith.addf %954, %953 : vector<8x32xf32>
      %956 = arith.divf %954, %955 : vector<8x32xf32>
      %957 = arith.mulf %948, %894 : vector<8x32xf32>
      %958 = arith.mulf %942, %950 : vector<8x32xf32>
      %959 = arith.addf %957, %958 : vector<8x32xf32>
      %960 = math.tanh %959 : vector<8x32xf32>
      %961 = arith.mulf %956, %960 : vector<8x32xf32>
      %962 = vector.broadcast %c9_i32_176 : i32 to vector<8x1xi32>
      %963 = arith.cmpi slt, %962, %36 : vector<8x1xi32>
      %964 = vector.broadcast %895 : i32 to vector<8x1xi32>
      %965 = arith.cmpi slt, %964, %36 : vector<8x1xi32>
      %cst_189 = arith.constant 0.000000e+00 : f32
      %966 = vector.shape_cast %963 : vector<8x1xi1> to vector<8x1xi1>
      %967 = vector.broadcast %966 : vector<8x1xi1> to vector<8x32xi1>
      %968 = vector.broadcast %cst_189 : f32 to vector<8x32xf32>
      %969 = arith.select %967, %936, %968 : vector<8x32xi1>, vector<8x32xf32>
      %970 = arith.index_cast %897 : i32 to index
      %c0_190 = arith.constant 0 : index
      %971 = vector.load %arg7[%970, %c0_190] : memref<80x64xf32, #tpu.memory_space<vmem>>, vector<8x32xf32>
      tpu.vector_store %arg7[%970, %c0_190], %969 {strides = array<i32>} : memref<80x64xf32, #tpu.memory_space<vmem>>, vector<8x32xf32>,
      %cst_191 = arith.constant 0.000000e+00 : f32
      %972 = vector.shape_cast %965 : vector<8x1xi1> to vector<8x1xi1>
      %973 = vector.broadcast %972 : vector<8x1xi1> to vector<8x32xi1>
      %974 = vector.broadcast %cst_191 : f32 to vector<8x32xf32>
      %975 = arith.select %973, %961, %974 : vector<8x32xi1>, vector<8x32xf32>
      %976 = arith.index_cast %899 : i32 to index
      %c32_192 = arith.constant 32 : index
      %977 = vector.load %arg7[%976, %c32_192] : memref<80x64xf32, #tpu.memory_space<vmem>>, vector<8x32xf32>
      tpu.vector_store %arg7[%976, %c32_192], %975 {strides = array<i32>} : memref<80x64xf32, #tpu.memory_space<vmem>>, vector<8x32xf32>,
      %978 = vector.shape_cast %963 : vector<8x1xi1> to vector<8x1xi1>
      %979 = vector.broadcast %978 : vector<8x1xi1> to vector<8x32xi1>
      %980 = arith.select %979, %936, %885 : vector<8x32xi1>, vector<8x32xf32>
      %981 = vector.shape_cast %963 : vector<8x1xi1> to vector<8x1xi1>
      %982 = vector.broadcast %981 : vector<8x1xi1> to vector<8x32xi1>
      %983 = arith.select %982, %934, %888 : vector<8x32xi1>, vector<8x32xf32>
      %984 = vector.shape_cast %965 : vector<8x1xi1> to vector<8x1xi1>
      %985 = vector.broadcast %984 : vector<8x1xi1> to vector<8x32xi1>
      %986 = arith.select %985, %961, %891 : vector<8x32xi1>, vector<8x32xf32>
      %987 = vector.shape_cast %965 : vector<8x1xi1> to vector<8x1xi1>
      %988 = vector.broadcast %987 : vector<8x1xi1> to vector<8x32xi1>
      %989 = arith.select %988, %959, %894 : vector<8x32xi1>, vector<8x32xf32>
      %c10_i32 = arith.constant 10 : i32
      %990 = tpu.concatenate %980, %986 in 1 : vector<8x32xf32>, vector<8x32xf32> -> vector<8x64xf32>
      %c0_193 = arith.constant 0 : index
      %c0_194 = arith.constant 0 : index
      %991 = vector.load %arg6[%c0_193, %c0_194] : memref<8x64xf32, #tpu.memory_space<vmem>>, vector<8x64xf32>
      tpu.vector_store %arg6[%c0_193, %c0_194], %990 {strides = array<i32>} : memref<8x64xf32, #tpu.memory_space<vmem>>, vector<8x64xf32>,
    } else {
    }
    %c0_i32_6 = arith.constant 0 : i32
    %14 = arith.cmpi sgt, %arg0, %c0_i32_6 : i32
    %15 = arith.andi %14, %10 : i1
    %16 = arith.extui %15 : i1 to i32
    %c0_i32_7 = arith.constant 0 : i32
    %17 = arith.cmpi ne, %16, %c0_i32_7 : i32
    scf.if %17 {
      %c0 = arith.constant 0 : index
      %c0_10 = arith.constant 0 : index
      %23 = vector.load %arg7[%c0, %c0_10] : memref<80x64xf32, #tpu.memory_space<vmem>>, vector<80x64xf32>
      %c0_11 = arith.constant 0 : index
      %c0_12 = arith.constant 0 : index
      %c0_13 = arith.constant 0 : index
      %24 = vector.load %arg2[%c0_11, %c0_12, %c0_13] : memref<1x64x256xf32, #tpu.memory_space<vmem>>, vector<1x64x256xf32>
      %25 = vector.shape_cast %24 : vector<1x64x256xf32> to vector<64x256xf32>
      %cst = arith.constant dense<0.000000e+00> : vector<80x256xf32>
      %26 = tpu.matmul %23, %25, %cst {dimension_numbers = #tpu.dot_dimension_numbers<[1], [0], [0], [1], [0, 0, 1, 1], [], []>} : vector<80x64xf32>, vector<64x256xf32>, vector<80x256xf32> -> vector<80x256xf32>
      %c0_14 = arith.constant 0 : index
      %c0_15 = arith.constant 0 : index
      %c0_16 = arith.constant 0 : index
      %27 = vector.load %arg4[%c0_14, %c0_15, %c0_16] : memref<1x1x256xf32, #tpu.memory_space<vmem>>, vector<1x1x256xf32>
      %28 = vector.shape_cast %27 : vector<1x1x256xf32> to vector<1x256xf32>
      %29 = vector.broadcast %28 : vector<1x256xf32> to vector<80x256xf32>
      %30 = arith.addf %26, %29 : vector<80x256xf32>
      %c0_17 = arith.constant 0 : index
      %c0_18 = arith.constant 0 : index
      %31 = vector.load %arg9[%c0_17, %c0_18] : memref<80x256xf32, #tpu.memory_space<vmem>>, vector<80x256xf32>
      tpu.vector_store %arg9[%c0_17, %c0_18], %30 {strides = array<i32>} : memref<80x256xf32, #tpu.memory_space<vmem>>, vector<80x256xf32>,
      %c0_19 = arith.constant 0 : index
      %c0_20 = arith.constant 0 : index
      %32 = vector.load %arg5[%c0_19, %c0_20] : memref<8x1xi32, #tpu.memory_space<vmem>>, vector<8x1xi32>
      %c0_21 = arith.constant 0 : index
      %c0_22 = arith.constant 0 : index
      %c0_23 = arith.constant 0 : index
      %33 = vector.load %arg3[%c0_21, %c0_22, %c0_23] : memref<1x64x256xf32, #tpu.memory_space<vmem>>, vector<1x64x256xf32>
      %34 = vector.shape_cast %33 : vector<1x64x256xf32> to vector<64x256xf32>
      %cst_24 = arith.constant 0.000000e+00 : f32
      %35 = vector.broadcast %cst_24 : f32 to vector<8x32xf32>
      %c0_i32_25 = arith.constant 0 : i32
      %c9_i32 = arith.constant 9 : i32
      %36 = arith.subi %c9_i32, %c0_i32_25 : i32
      %c8_i32 = arith.constant 8 : i32
      %37 = arith.muli %c0_i32_25, %c8_i32 : i32
      %38 = tpu.assume_multiple %37, 8 : i32
      %c8_i32_26 = arith.constant 8 : i32
      %39 = arith.muli %36, %c8_i32_26 : i32
      %40 = tpu.assume_multiple %39, 8 : i32
      %41 = arith.index_cast %38 : i32 to index
      %c0_27 = arith.constant 0 : index
      %42 = vector.load %arg9[%41, %c0_27] : memref<80x256xf32, #tpu.memory_space<vmem>>, vector<8x256xf32>
      %43 = arith.index_cast %40 : i32 to index
      %c0_28 = arith.constant 0 : index
      %44 = vector.load %arg9[%43, %c0_28] : memref<80x256xf32, #tpu.memory_space<vmem>>, vector<8x256xf32>
      %45 = tpu.concatenate %35, %35 in 1 : vector<8x32xf32>, vector<8x32xf32> -> vector<8x64xf32>
      %cst_29 = arith.constant dense<0.000000e+00> : vector<8x256xf32>
      %46 = tpu.matmul %45, %34, %cst_29 {dimension_numbers = #tpu.dot_dimension_numbers<[1], [0], [0], [1], [0, 0, 1, 1], [], []>} : vector<8x64xf32>, vector<64x256xf32>, vector<8x256xf32> -> vector<8x256xf32>
      %47 = vector.extract_strided_slice %42 {offsets = [0, 0], sizes = [8, 128], strides = [1, 1]} : vector<8x256xf32> to vector<8x128xf32>
      %48 = vector.extract_strided_slice %46 {offsets = [0, 0], sizes = [8, 128], strides = [1, 1]} : vector<8x256xf32> to vector<8x128xf32>
      %49 = arith.addf %47, %48 : vector<8x128xf32>
      %50 = vector.extract_strided_slice %44 {offsets = [0, 128], sizes = [8, 128], strides = [1, 1]} : vector<8x256xf32> to vector<8x128xf32>
      %51 = vector.extract_strided_slice %46 {offsets = [0, 128], sizes = [8, 128], strides = [1, 1]} : vector<8x256xf32> to vector<8x128xf32>
      %52 = arith.addf %50, %51 : vector<8x128xf32>
      %53 = vector.extract_strided_slice %49 {offsets = [0, 0], sizes = [8, 32], strides = [1, 1]} : vector<8x128xf32> to vector<8x32xf32>
      %54 = arith.negf %53 : vector<8x32xf32>
      %55 = math.exp %54 : vector<8x32xf32>
      %cst_30 = arith.constant 1.000000e+00 : f32
      %56 = vector.broadcast %cst_30 : f32 to vector<8x32xf32>
      %57 = arith.addf %56, %55 : vector<8x32xf32>
      %58 = arith.divf %56, %57 : vector<8x32xf32>
      %59 = vector.extract_strided_slice %49 {offsets = [0, 32], sizes = [8, 32], strides = [1, 1]} : vector<8x128xf32> to vector<8x32xf32>
      %60 = arith.negf %59 : vector<8x32xf32>
      %61 = math.exp %60 : vector<8x32xf32>
      %cst_31 = arith.constant 1.000000e+00 : f32
      %62 = vector.broadcast %cst_31 : f32 to vector<8x32xf32>
      %63 = arith.addf %62, %61 : vector<8x32xf32>
      %64 = arith.divf %62, %63 : vector<8x32xf32>
      %65 = vector.extract_strided_slice %49 {offsets = [0, 64], sizes = [8, 32], strides = [1, 1]} : vector<8x128xf32> to vector<8x32xf32>
      %66 = math.tanh %65 : vector<8x32xf32>
      %67 = vector.extract_strided_slice %49 {offsets = [0, 96], sizes = [8, 32], strides = [1, 1]} : vector<8x128xf32> to vector<8x32xf32>
      %68 = arith.negf %67 : vector<8x32xf32>
      %69 = math.exp %68 : vector<8x32xf32>
      %cst_32 = arith.constant 1.000000e+00 : f32
      %70 = vector.broadcast %cst_32 : f32 to vector<8x32xf32>
      %71 = arith.addf %70, %69 : vector<8x32xf32>
      %72 = arith.divf %70, %71 : vector<8x32xf32>
      %73 = arith.mulf %64, %35 : vector<8x32xf32>
      %74 = arith.mulf %58, %66 : vector<8x32xf32>
      %75 = arith.addf %73, %74 : vector<8x32xf32>
      %76 = math.tanh %75 : vector<8x32xf32>
      %77 = arith.mulf %72, %76 : vector<8x32xf32>
      %78 = vector.extract_strided_slice %52 {offsets = [0, 0], sizes = [8, 32], strides = [1, 1]} : vector<8x128xf32> to vector<8x32xf32>
      %79 = arith.negf %78 : vector<8x32xf32>
      %80 = math.exp %79 : vector<8x32xf32>
      %cst_33 = arith.constant 1.000000e+00 : f32
      %81 = vector.broadcast %cst_33 : f32 to vector<8x32xf32>
      %82 = arith.addf %81, %80 : vector<8x32xf32>
      %83 = arith.divf %81, %82 : vector<8x32xf32>
      %84 = vector.extract_strided_slice %52 {offsets = [0, 32], sizes = [8, 32], strides = [1, 1]} : vector<8x128xf32> to vector<8x32xf32>
      %85 = arith.negf %84 : vector<8x32xf32>
      %86 = math.exp %85 : vector<8x32xf32>
      %cst_34 = arith.constant 1.000000e+00 : f32
      %87 = vector.broadcast %cst_34 : f32 to vector<8x32xf32>
      %88 = arith.addf %87, %86 : vector<8x32xf32>
      %89 = arith.divf %87, %88 : vector<8x32xf32>
      %90 = vector.extract_strided_slice %52 {offsets = [0, 64], sizes = [8, 32], strides = [1, 1]} : vector<8x128xf32> to vector<8x32xf32>
      %91 = math.tanh %90 : vector<8x32xf32>
      %92 = vector.extract_strided_slice %52 {offsets = [0, 96], sizes = [8, 32], strides = [1, 1]} : vector<8x128xf32> to vector<8x32xf32>
      %93 = arith.negf %92 : vector<8x32xf32>
      %94 = math.exp %93 : vector<8x32xf32>
      %cst_35 = arith.constant 1.000000e+00 : f32
      %95 = vector.broadcast %cst_35 : f32 to vector<8x32xf32>
      %96 = arith.addf %95, %94 : vector<8x32xf32>
      %97 = arith.divf %95, %96 : vector<8x32xf32>
      %98 = arith.mulf %89, %35 : vector<8x32xf32>
      %99 = arith.mulf %83, %91 : vector<8x32xf32>
      %100 = arith.addf %98, %99 : vector<8x32xf32>
      %101 = math.tanh %100 : vector<8x32xf32>
      %102 = arith.mulf %97, %101 : vector<8x32xf32>
      %103 = vector.broadcast %c0_i32_25 : i32 to vector<8x1xi32>
      %104 = arith.cmpi slt, %103, %32 : vector<8x1xi32>
      %105 = vector.broadcast %36 : i32 to vector<8x1xi32>
      %106 = arith.cmpi slt, %105, %32 : vector<8x1xi32>
      %cst_36 = arith.constant 0.000000e+00 : f32
      %107 = vector.shape_cast %104 : vector<8x1xi1> to vector<8x1xi1>
      %108 = vector.broadcast %107 : vector<8x1xi1> to vector<8x32xi1>
      %109 = vector.broadcast %cst_36 : f32 to vector<8x32xf32>
      %110 = arith.select %108, %77, %109 : vector<8x32xi1>, vector<8x32xf32>
      %111 = arith.index_cast %38 : i32 to index
      %c0_37 = arith.constant 0 : index
      %112 = vector.load %arg8[%111, %c0_37] : memref<80x64xf32, #tpu.memory_space<vmem>>, vector<8x32xf32>
      tpu.vector_store %arg8[%111, %c0_37], %110 {strides = array<i32>} : memref<80x64xf32, #tpu.memory_space<vmem>>, vector<8x32xf32>,
      %cst_38 = arith.constant 0.000000e+00 : f32
      %113 = vector.shape_cast %106 : vector<8x1xi1> to vector<8x1xi1>
      %114 = vector.broadcast %113 : vector<8x1xi1> to vector<8x32xi1>
      %115 = vector.broadcast %cst_38 : f32 to vector<8x32xf32>
      %116 = arith.select %114, %102, %115 : vector<8x32xi1>, vector<8x32xf32>
      %117 = arith.index_cast %40 : i32 to index
      %c32 = arith.constant 32 : index
      %118 = vector.load %arg8[%117, %c32] : memref<80x64xf32, #tpu.memory_space<vmem>>, vector<8x32xf32>
      tpu.vector_store %arg8[%117, %c32], %116 {strides = array<i32>} : memref<80x64xf32, #tpu.memory_space<vmem>>, vector<8x32xf32>,
      %119 = vector.shape_cast %104 : vector<8x1xi1> to vector<8x1xi1>
      %120 = vector.broadcast %119 : vector<8x1xi1> to vector<8x32xi1>
      %121 = arith.select %120, %77, %35 : vector<8x32xi1>, vector<8x32xf32>
      %122 = vector.shape_cast %104 : vector<8x1xi1> to vector<8x1xi1>
      %123 = vector.broadcast %122 : vector<8x1xi1> to vector<8x32xi1>
      %124 = arith.select %123, %75, %35 : vector<8x32xi1>, vector<8x32xf32>
      %125 = vector.shape_cast %106 : vector<8x1xi1> to vector<8x1xi1>
      %126 = vector.broadcast %125 : vector<8x1xi1> to vector<8x32xi1>
      %127 = arith.select %126, %102, %35 : vector<8x32xi1>, vector<8x32xf32>
      %128 = vector.shape_cast %106 : vector<8x1xi1> to vector<8x1xi1>
      %129 = vector.broadcast %128 : vector<8x1xi1> to vector<8x32xi1>
      %130 = arith.select %129, %100, %35 : vector<8x32xi1>, vector<8x32xf32>
      %c1_i32_39 = arith.constant 1 : i32
      %c9_i32_40 = arith.constant 9 : i32
      %131 = arith.subi %c9_i32_40, %c1_i32_39 : i32
      %c8_i32_41 = arith.constant 8 : i32
      %132 = arith.muli %c1_i32_39, %c8_i32_41 : i32
      %133 = tpu.assume_multiple %132, 8 : i32
      %c8_i32_42 = arith.constant 8 : i32
      %134 = arith.muli %131, %c8_i32_42 : i32
      %135 = tpu.assume_multiple %134, 8 : i32
      %136 = arith.index_cast %133 : i32 to index
      %c0_43 = arith.constant 0 : index
      %137 = vector.load %arg9[%136, %c0_43] : memref<80x256xf32, #tpu.memory_space<vmem>>, vector<8x256xf32>
      %138 = arith.index_cast %135 : i32 to index
      %c0_44 = arith.constant 0 : index
      %139 = vector.load %arg9[%138, %c0_44] : memref<80x256xf32, #tpu.memory_space<vmem>>, vector<8x256xf32>
      %140 = tpu.concatenate %121, %127 in 1 : vector<8x32xf32>, vector<8x32xf32> -> vector<8x64xf32>
      %cst_45 = arith.constant dense<0.000000e+00> : vector<8x256xf32>
      %141 = tpu.matmul %140, %34, %cst_45 {dimension_numbers = #tpu.dot_dimension_numbers<[1], [0], [0], [1], [0, 0, 1, 1], [], []>} : vector<8x64xf32>, vector<64x256xf32>, vector<8x256xf32> -> vector<8x256xf32>
      %142 = vector.extract_strided_slice %137 {offsets = [0, 0], sizes = [8, 128], strides = [1, 1]} : vector<8x256xf32> to vector<8x128xf32>
      %143 = vector.extract_strided_slice %141 {offsets = [0, 0], sizes = [8, 128], strides = [1, 1]} : vector<8x256xf32> to vector<8x128xf32>
      %144 = arith.addf %142, %143 : vector<8x128xf32>
      %145 = vector.extract_strided_slice %139 {offsets = [0, 128], sizes = [8, 128], strides = [1, 1]} : vector<8x256xf32> to vector<8x128xf32>
      %146 = vector.extract_strided_slice %141 {offsets = [0, 128], sizes = [8, 128], strides = [1, 1]} : vector<8x256xf32> to vector<8x128xf32>
      %147 = arith.addf %145, %146 : vector<8x128xf32>
      %148 = vector.extract_strided_slice %144 {offsets = [0, 0], sizes = [8, 32], strides = [1, 1]} : vector<8x128xf32> to vector<8x32xf32>
      %149 = arith.negf %148 : vector<8x32xf32>
      %150 = math.exp %149 : vector<8x32xf32>
      %cst_46 = arith.constant 1.000000e+00 : f32
      %151 = vector.broadcast %cst_46 : f32 to vector<8x32xf32>
      %152 = arith.addf %151, %150 : vector<8x32xf32>
      %153 = arith.divf %151, %152 : vector<8x32xf32>
      %154 = vector.extract_strided_slice %144 {offsets = [0, 32], sizes = [8, 32], strides = [1, 1]} : vector<8x128xf32> to vector<8x32xf32>
      %155 = arith.negf %154 : vector<8x32xf32>
      %156 = math.exp %155 : vector<8x32xf32>
      %cst_47 = arith.constant 1.000000e+00 : f32
      %157 = vector.broadcast %cst_47 : f32 to vector<8x32xf32>
      %158 = arith.addf %157, %156 : vector<8x32xf32>
      %159 = arith.divf %157, %158 : vector<8x32xf32>
      %160 = vector.extract_strided_slice %144 {offsets = [0, 64], sizes = [8, 32], strides = [1, 1]} : vector<8x128xf32> to vector<8x32xf32>
      %161 = math.tanh %160 : vector<8x32xf32>
      %162 = vector.extract_strided_slice %144 {offsets = [0, 96], sizes = [8, 32], strides = [1, 1]} : vector<8x128xf32> to vector<8x32xf32>
      %163 = arith.negf %162 : vector<8x32xf32>
      %164 = math.exp %163 : vector<8x32xf32>
      %cst_48 = arith.constant 1.000000e+00 : f32
      %165 = vector.broadcast %cst_48 : f32 to vector<8x32xf32>
      %166 = arith.addf %165, %164 : vector<8x32xf32>
      %167 = arith.divf %165, %166 : vector<8x32xf32>
      %168 = arith.mulf %159, %124 : vector<8x32xf32>
      %169 = arith.mulf %153, %161 : vector<8x32xf32>
      %170 = arith.addf %168, %169 : vector<8x32xf32>
      %171 = math.tanh %170 : vector<8x32xf32>
      %172 = arith.mulf %167, %171 : vector<8x32xf32>
      %173 = vector.extract_strided_slice %147 {offsets = [0, 0], sizes = [8, 32], strides = [1, 1]} : vector<8x128xf32> to vector<8x32xf32>
      %174 = arith.negf %173 : vector<8x32xf32>
      %175 = math.exp %174 : vector<8x32xf32>
      %cst_49 = arith.constant 1.000000e+00 : f32
      %176 = vector.broadcast %cst_49 : f32 to vector<8x32xf32>
      %177 = arith.addf %176, %175 : vector<8x32xf32>
      %178 = arith.divf %176, %177 : vector<8x32xf32>
      %179 = vector.extract_strided_slice %147 {offsets = [0, 32], sizes = [8, 32], strides = [1, 1]} : vector<8x128xf32> to vector<8x32xf32>
      %180 = arith.negf %179 : vector<8x32xf32>
      %181 = math.exp %180 : vector<8x32xf32>
      %cst_50 = arith.constant 1.000000e+00 : f32
      %182 = vector.broadcast %cst_50 : f32 to vector<8x32xf32>
      %183 = arith.addf %182, %181 : vector<8x32xf32>
      %184 = arith.divf %182, %183 : vector<8x32xf32>
      %185 = vector.extract_strided_slice %147 {offsets = [0, 64], sizes = [8, 32], strides = [1, 1]} : vector<8x128xf32> to vector<8x32xf32>
      %186 = math.tanh %185 : vector<8x32xf32>
      %187 = vector.extract_strided_slice %147 {offsets = [0, 96], sizes = [8, 32], strides = [1, 1]} : vector<8x128xf32> to vector<8x32xf32>
      %188 = arith.negf %187 : vector<8x32xf32>
      %189 = math.exp %188 : vector<8x32xf32>
      %cst_51 = arith.constant 1.000000e+00 : f32
      %190 = vector.broadcast %cst_51 : f32 to vector<8x32xf32>
      %191 = arith.addf %190, %189 : vector<8x32xf32>
      %192 = arith.divf %190, %191 : vector<8x32xf32>
      %193 = arith.mulf %184, %130 : vector<8x32xf32>
      %194 = arith.mulf %178, %186 : vector<8x32xf32>
      %195 = arith.addf %193, %194 : vector<8x32xf32>
      %196 = math.tanh %195 : vector<8x32xf32>
      %197 = arith.mulf %192, %196 : vector<8x32xf32>
      %198 = vector.broadcast %c1_i32_39 : i32 to vector<8x1xi32>
      %199 = arith.cmpi slt, %198, %32 : vector<8x1xi32>
      %200 = vector.broadcast %131 : i32 to vector<8x1xi32>
      %201 = arith.cmpi slt, %200, %32 : vector<8x1xi32>
      %cst_52 = arith.constant 0.000000e+00 : f32
      %202 = vector.shape_cast %199 : vector<8x1xi1> to vector<8x1xi1>
      %203 = vector.broadcast %202 : vector<8x1xi1> to vector<8x32xi1>
      %204 = vector.broadcast %cst_52 : f32 to vector<8x32xf32>
      %205 = arith.select %203, %172, %204 : vector<8x32xi1>, vector<8x32xf32>
      %206 = arith.index_cast %133 : i32 to index
      %c0_53 = arith.constant 0 : index
      %207 = vector.load %arg8[%206, %c0_53] : memref<80x64xf32, #tpu.memory_space<vmem>>, vector<8x32xf32>
      tpu.vector_store %arg8[%206, %c0_53], %205 {strides = array<i32>} : memref<80x64xf32, #tpu.memory_space<vmem>>, vector<8x32xf32>,
      %cst_54 = arith.constant 0.000000e+00 : f32
      %208 = vector.shape_cast %201 : vector<8x1xi1> to vector<8x1xi1>
      %209 = vector.broadcast %208 : vector<8x1xi1> to vector<8x32xi1>
      %210 = vector.broadcast %cst_54 : f32 to vector<8x32xf32>
      %211 = arith.select %209, %197, %210 : vector<8x32xi1>, vector<8x32xf32>
      %212 = arith.index_cast %135 : i32 to index
      %c32_55 = arith.constant 32 : index
      %213 = vector.load %arg8[%212, %c32_55] : memref<80x64xf32, #tpu.memory_space<vmem>>, vector<8x32xf32>
      tpu.vector_store %arg8[%212, %c32_55], %211 {strides = array<i32>} : memref<80x64xf32, #tpu.memory_space<vmem>>, vector<8x32xf32>,
      %214 = vector.shape_cast %199 : vector<8x1xi1> to vector<8x1xi1>
      %215 = vector.broadcast %214 : vector<8x1xi1> to vector<8x32xi1>
      %216 = arith.select %215, %172, %121 : vector<8x32xi1>, vector<8x32xf32>
      %217 = vector.shape_cast %199 : vector<8x1xi1> to vector<8x1xi1>
      %218 = vector.broadcast %217 : vector<8x1xi1> to vector<8x32xi1>
      %219 = arith.select %218, %170, %124 : vector<8x32xi1>, vector<8x32xf32>
      %220 = vector.shape_cast %201 : vector<8x1xi1> to vector<8x1xi1>
      %221 = vector.broadcast %220 : vector<8x1xi1> to vector<8x32xi1>
      %222 = arith.select %221, %197, %127 : vector<8x32xi1>, vector<8x32xf32>
      %223 = vector.shape_cast %201 : vector<8x1xi1> to vector<8x1xi1>
      %224 = vector.broadcast %223 : vector<8x1xi1> to vector<8x32xi1>
      %225 = arith.select %224, %195, %130 : vector<8x32xi1>, vector<8x32xf32>
      %c2_i32_56 = arith.constant 2 : i32
      %c9_i32_57 = arith.constant 9 : i32
      %226 = arith.subi %c9_i32_57, %c2_i32_56 : i32
      %c8_i32_58 = arith.constant 8 : i32
      %227 = arith.muli %c2_i32_56, %c8_i32_58 : i32
      %228 = tpu.assume_multiple %227, 8 : i32
      %c8_i32_59 = arith.constant 8 : i32
      %229 = arith.muli %226, %c8_i32_59 : i32
      %230 = tpu.assume_multiple %229, 8 : i32
      %231 = arith.index_cast %228 : i32 to index
      %c0_60 = arith.constant 0 : index
      %232 = vector.load %arg9[%231, %c0_60] : memref<80x256xf32, #tpu.memory_space<vmem>>, vector<8x256xf32>
      %233 = arith.index_cast %230 : i32 to index
      %c0_61 = arith.constant 0 : index
      %234 = vector.load %arg9[%233, %c0_61] : memref<80x256xf32, #tpu.memory_space<vmem>>, vector<8x256xf32>
      %235 = tpu.concatenate %216, %222 in 1 : vector<8x32xf32>, vector<8x32xf32> -> vector<8x64xf32>
      %cst_62 = arith.constant dense<0.000000e+00> : vector<8x256xf32>
      %236 = tpu.matmul %235, %34, %cst_62 {dimension_numbers = #tpu.dot_dimension_numbers<[1], [0], [0], [1], [0, 0, 1, 1], [], []>} : vector<8x64xf32>, vector<64x256xf32>, vector<8x256xf32> -> vector<8x256xf32>
      %237 = vector.extract_strided_slice %232 {offsets = [0, 0], sizes = [8, 128], strides = [1, 1]} : vector<8x256xf32> to vector<8x128xf32>
      %238 = vector.extract_strided_slice %236 {offsets = [0, 0], sizes = [8, 128], strides = [1, 1]} : vector<8x256xf32> to vector<8x128xf32>
      %239 = arith.addf %237, %238 : vector<8x128xf32>
      %240 = vector.extract_strided_slice %234 {offsets = [0, 128], sizes = [8, 128], strides = [1, 1]} : vector<8x256xf32> to vector<8x128xf32>
      %241 = vector.extract_strided_slice %236 {offsets = [0, 128], sizes = [8, 128], strides = [1, 1]} : vector<8x256xf32> to vector<8x128xf32>
      %242 = arith.addf %240, %241 : vector<8x128xf32>
      %243 = vector.extract_strided_slice %239 {offsets = [0, 0], sizes = [8, 32], strides = [1, 1]} : vector<8x128xf32> to vector<8x32xf32>
      %244 = arith.negf %243 : vector<8x32xf32>
      %245 = math.exp %244 : vector<8x32xf32>
      %cst_63 = arith.constant 1.000000e+00 : f32
      %246 = vector.broadcast %cst_63 : f32 to vector<8x32xf32>
      %247 = arith.addf %246, %245 : vector<8x32xf32>
      %248 = arith.divf %246, %247 : vector<8x32xf32>
      %249 = vector.extract_strided_slice %239 {offsets = [0, 32], sizes = [8, 32], strides = [1, 1]} : vector<8x128xf32> to vector<8x32xf32>
      %250 = arith.negf %249 : vector<8x32xf32>
      %251 = math.exp %250 : vector<8x32xf32>
      %cst_64 = arith.constant 1.000000e+00 : f32
      %252 = vector.broadcast %cst_64 : f32 to vector<8x32xf32>
      %253 = arith.addf %252, %251 : vector<8x32xf32>
      %254 = arith.divf %252, %253 : vector<8x32xf32>
      %255 = vector.extract_strided_slice %239 {offsets = [0, 64], sizes = [8, 32], strides = [1, 1]} : vector<8x128xf32> to vector<8x32xf32>
      %256 = math.tanh %255 : vector<8x32xf32>
      %257 = vector.extract_strided_slice %239 {offsets = [0, 96], sizes = [8, 32], strides = [1, 1]} : vector<8x128xf32> to vector<8x32xf32>
      %258 = arith.negf %257 : vector<8x32xf32>
      %259 = math.exp %258 : vector<8x32xf32>
      %cst_65 = arith.constant 1.000000e+00 : f32
      %260 = vector.broadcast %cst_65 : f32 to vector<8x32xf32>
      %261 = arith.addf %260, %259 : vector<8x32xf32>
      %262 = arith.divf %260, %261 : vector<8x32xf32>
      %263 = arith.mulf %254, %219 : vector<8x32xf32>
      %264 = arith.mulf %248, %256 : vector<8x32xf32>
      %265 = arith.addf %263, %264 : vector<8x32xf32>
      %266 = math.tanh %265 : vector<8x32xf32>
      %267 = arith.mulf %262, %266 : vector<8x32xf32>
      %268 = vector.extract_strided_slice %242 {offsets = [0, 0], sizes = [8, 32], strides = [1, 1]} : vector<8x128xf32> to vector<8x32xf32>
      %269 = arith.negf %268 : vector<8x32xf32>
      %270 = math.exp %269 : vector<8x32xf32>
      %cst_66 = arith.constant 1.000000e+00 : f32
      %271 = vector.broadcast %cst_66 : f32 to vector<8x32xf32>
      %272 = arith.addf %271, %270 : vector<8x32xf32>
      %273 = arith.divf %271, %272 : vector<8x32xf32>
      %274 = vector.extract_strided_slice %242 {offsets = [0, 32], sizes = [8, 32], strides = [1, 1]} : vector<8x128xf32> to vector<8x32xf32>
      %275 = arith.negf %274 : vector<8x32xf32>
      %276 = math.exp %275 : vector<8x32xf32>
      %cst_67 = arith.constant 1.000000e+00 : f32
      %277 = vector.broadcast %cst_67 : f32 to vector<8x32xf32>
      %278 = arith.addf %277, %276 : vector<8x32xf32>
      %279 = arith.divf %277, %278 : vector<8x32xf32>
      %280 = vector.extract_strided_slice %242 {offsets = [0, 64], sizes = [8, 32], strides = [1, 1]} : vector<8x128xf32> to vector<8x32xf32>
      %281 = math.tanh %280 : vector<8x32xf32>
      %282 = vector.extract_strided_slice %242 {offsets = [0, 96], sizes = [8, 32], strides = [1, 1]} : vector<8x128xf32> to vector<8x32xf32>
      %283 = arith.negf %282 : vector<8x32xf32>
      %284 = math.exp %283 : vector<8x32xf32>
      %cst_68 = arith.constant 1.000000e+00 : f32
      %285 = vector.broadcast %cst_68 : f32 to vector<8x32xf32>
      %286 = arith.addf %285, %284 : vector<8x32xf32>
      %287 = arith.divf %285, %286 : vector<8x32xf32>
      %288 = arith.mulf %279, %225 : vector<8x32xf32>
      %289 = arith.mulf %273, %281 : vector<8x32xf32>
      %290 = arith.addf %288, %289 : vector<8x32xf32>
      %291 = math.tanh %290 : vector<8x32xf32>
      %292 = arith.mulf %287, %291 : vector<8x32xf32>
      %293 = vector.broadcast %c2_i32_56 : i32 to vector<8x1xi32>
      %294 = arith.cmpi slt, %293, %32 : vector<8x1xi32>
      %295 = vector.broadcast %226 : i32 to vector<8x1xi32>
      %296 = arith.cmpi slt, %295, %32 : vector<8x1xi32>
      %cst_69 = arith.constant 0.000000e+00 : f32
      %297 = vector.shape_cast %294 : vector<8x1xi1> to vector<8x1xi1>
      %298 = vector.broadcast %297 : vector<8x1xi1> to vector<8x32xi1>
      %299 = vector.broadcast %cst_69 : f32 to vector<8x32xf32>
      %300 = arith.select %298, %267, %299 : vector<8x32xi1>, vector<8x32xf32>
      %301 = arith.index_cast %228 : i32 to index
      %c0_70 = arith.constant 0 : index
      %302 = vector.load %arg8[%301, %c0_70] : memref<80x64xf32, #tpu.memory_space<vmem>>, vector<8x32xf32>
      tpu.vector_store %arg8[%301, %c0_70], %300 {strides = array<i32>} : memref<80x64xf32, #tpu.memory_space<vmem>>, vector<8x32xf32>,
      %cst_71 = arith.constant 0.000000e+00 : f32
      %303 = vector.shape_cast %296 : vector<8x1xi1> to vector<8x1xi1>
      %304 = vector.broadcast %303 : vector<8x1xi1> to vector<8x32xi1>
      %305 = vector.broadcast %cst_71 : f32 to vector<8x32xf32>
      %306 = arith.select %304, %292, %305 : vector<8x32xi1>, vector<8x32xf32>
      %307 = arith.index_cast %230 : i32 to index
      %c32_72 = arith.constant 32 : index
      %308 = vector.load %arg8[%307, %c32_72] : memref<80x64xf32, #tpu.memory_space<vmem>>, vector<8x32xf32>
      tpu.vector_store %arg8[%307, %c32_72], %306 {strides = array<i32>} : memref<80x64xf32, #tpu.memory_space<vmem>>, vector<8x32xf32>,
      %309 = vector.shape_cast %294 : vector<8x1xi1> to vector<8x1xi1>
      %310 = vector.broadcast %309 : vector<8x1xi1> to vector<8x32xi1>
      %311 = arith.select %310, %267, %216 : vector<8x32xi1>, vector<8x32xf32>
      %312 = vector.shape_cast %294 : vector<8x1xi1> to vector<8x1xi1>
      %313 = vector.broadcast %312 : vector<8x1xi1> to vector<8x32xi1>
      %314 = arith.select %313, %265, %219 : vector<8x32xi1>, vector<8x32xf32>
      %315 = vector.shape_cast %296 : vector<8x1xi1> to vector<8x1xi1>
      %316 = vector.broadcast %315 : vector<8x1xi1> to vector<8x32xi1>
      %317 = arith.select %316, %292, %222 : vector<8x32xi1>, vector<8x32xf32>
      %318 = vector.shape_cast %296 : vector<8x1xi1> to vector<8x1xi1>
      %319 = vector.broadcast %318 : vector<8x1xi1> to vector<8x32xi1>
      %320 = arith.select %319, %290, %225 : vector<8x32xi1>, vector<8x32xf32>
      %c3_i32 = arith.constant 3 : i32
      %c9_i32_73 = arith.constant 9 : i32
      %321 = arith.subi %c9_i32_73, %c3_i32 : i32
      %c8_i32_74 = arith.constant 8 : i32
      %322 = arith.muli %c3_i32, %c8_i32_74 : i32
      %323 = tpu.assume_multiple %322, 8 : i32
      %c8_i32_75 = arith.constant 8 : i32
      %324 = arith.muli %321, %c8_i32_75 : i32
      %325 = tpu.assume_multiple %324, 8 : i32
      %326 = arith.index_cast %323 : i32 to index
      %c0_76 = arith.constant 0 : index
      %327 = vector.load %arg9[%326, %c0_76] : memref<80x256xf32, #tpu.memory_space<vmem>>, vector<8x256xf32>
      %328 = arith.index_cast %325 : i32 to index
      %c0_77 = arith.constant 0 : index
      %329 = vector.load %arg9[%328, %c0_77] : memref<80x256xf32, #tpu.memory_space<vmem>>, vector<8x256xf32>
      %330 = tpu.concatenate %311, %317 in 1 : vector<8x32xf32>, vector<8x32xf32> -> vector<8x64xf32>
      %cst_78 = arith.constant dense<0.000000e+00> : vector<8x256xf32>
      %331 = tpu.matmul %330, %34, %cst_78 {dimension_numbers = #tpu.dot_dimension_numbers<[1], [0], [0], [1], [0, 0, 1, 1], [], []>} : vector<8x64xf32>, vector<64x256xf32>, vector<8x256xf32> -> vector<8x256xf32>
      %332 = vector.extract_strided_slice %327 {offsets = [0, 0], sizes = [8, 128], strides = [1, 1]} : vector<8x256xf32> to vector<8x128xf32>
      %333 = vector.extract_strided_slice %331 {offsets = [0, 0], sizes = [8, 128], strides = [1, 1]} : vector<8x256xf32> to vector<8x128xf32>
      %334 = arith.addf %332, %333 : vector<8x128xf32>
      %335 = vector.extract_strided_slice %329 {offsets = [0, 128], sizes = [8, 128], strides = [1, 1]} : vector<8x256xf32> to vector<8x128xf32>
      %336 = vector.extract_strided_slice %331 {offsets = [0, 128], sizes = [8, 128], strides = [1, 1]} : vector<8x256xf32> to vector<8x128xf32>
      %337 = arith.addf %335, %336 : vector<8x128xf32>
      %338 = vector.extract_strided_slice %334 {offsets = [0, 0], sizes = [8, 32], strides = [1, 1]} : vector<8x128xf32> to vector<8x32xf32>
      %339 = arith.negf %338 : vector<8x32xf32>
      %340 = math.exp %339 : vector<8x32xf32>
      %cst_79 = arith.constant 1.000000e+00 : f32
      %341 = vector.broadcast %cst_79 : f32 to vector<8x32xf32>
      %342 = arith.addf %341, %340 : vector<8x32xf32>
      %343 = arith.divf %341, %342 : vector<8x32xf32>
      %344 = vector.extract_strided_slice %334 {offsets = [0, 32], sizes = [8, 32], strides = [1, 1]} : vector<8x128xf32> to vector<8x32xf32>
      %345 = arith.negf %344 : vector<8x32xf32>
      %346 = math.exp %345 : vector<8x32xf32>
      %cst_80 = arith.constant 1.000000e+00 : f32
      %347 = vector.broadcast %cst_80 : f32 to vector<8x32xf32>
      %348 = arith.addf %347, %346 : vector<8x32xf32>
      %349 = arith.divf %347, %348 : vector<8x32xf32>
      %350 = vector.extract_strided_slice %334 {offsets = [0, 64], sizes = [8, 32], strides = [1, 1]} : vector<8x128xf32> to vector<8x32xf32>
      %351 = math.tanh %350 : vector<8x32xf32>
      %352 = vector.extract_strided_slice %334 {offsets = [0, 96], sizes = [8, 32], strides = [1, 1]} : vector<8x128xf32> to vector<8x32xf32>
      %353 = arith.negf %352 : vector<8x32xf32>
      %354 = math.exp %353 : vector<8x32xf32>
      %cst_81 = arith.constant 1.000000e+00 : f32
      %355 = vector.broadcast %cst_81 : f32 to vector<8x32xf32>
      %356 = arith.addf %355, %354 : vector<8x32xf32>
      %357 = arith.divf %355, %356 : vector<8x32xf32>
      %358 = arith.mulf %349, %314 : vector<8x32xf32>
      %359 = arith.mulf %343, %351 : vector<8x32xf32>
      %360 = arith.addf %358, %359 : vector<8x32xf32>
      %361 = math.tanh %360 : vector<8x32xf32>
      %362 = arith.mulf %357, %361 : vector<8x32xf32>
      %363 = vector.extract_strided_slice %337 {offsets = [0, 0], sizes = [8, 32], strides = [1, 1]} : vector<8x128xf32> to vector<8x32xf32>
      %364 = arith.negf %363 : vector<8x32xf32>
      %365 = math.exp %364 : vector<8x32xf32>
      %cst_82 = arith.constant 1.000000e+00 : f32
      %366 = vector.broadcast %cst_82 : f32 to vector<8x32xf32>
      %367 = arith.addf %366, %365 : vector<8x32xf32>
      %368 = arith.divf %366, %367 : vector<8x32xf32>
      %369 = vector.extract_strided_slice %337 {offsets = [0, 32], sizes = [8, 32], strides = [1, 1]} : vector<8x128xf32> to vector<8x32xf32>
      %370 = arith.negf %369 : vector<8x32xf32>
      %371 = math.exp %370 : vector<8x32xf32>
      %cst_83 = arith.constant 1.000000e+00 : f32
      %372 = vector.broadcast %cst_83 : f32 to vector<8x32xf32>
      %373 = arith.addf %372, %371 : vector<8x32xf32>
      %374 = arith.divf %372, %373 : vector<8x32xf32>
      %375 = vector.extract_strided_slice %337 {offsets = [0, 64], sizes = [8, 32], strides = [1, 1]} : vector<8x128xf32> to vector<8x32xf32>
      %376 = math.tanh %375 : vector<8x32xf32>
      %377 = vector.extract_strided_slice %337 {offsets = [0, 96], sizes = [8, 32], strides = [1, 1]} : vector<8x128xf32> to vector<8x32xf32>
      %378 = arith.negf %377 : vector<8x32xf32>
      %379 = math.exp %378 : vector<8x32xf32>
      %cst_84 = arith.constant 1.000000e+00 : f32
      %380 = vector.broadcast %cst_84 : f32 to vector<8x32xf32>
      %381 = arith.addf %380, %379 : vector<8x32xf32>
      %382 = arith.divf %380, %381 : vector<8x32xf32>
      %383 = arith.mulf %374, %320 : vector<8x32xf32>
      %384 = arith.mulf %368, %376 : vector<8x32xf32>
      %385 = arith.addf %383, %384 : vector<8x32xf32>
      %386 = math.tanh %385 : vector<8x32xf32>
      %387 = arith.mulf %382, %386 : vector<8x32xf32>
      %388 = vector.broadcast %c3_i32 : i32 to vector<8x1xi32>
      %389 = arith.cmpi slt, %388, %32 : vector<8x1xi32>
      %390 = vector.broadcast %321 : i32 to vector<8x1xi32>
      %391 = arith.cmpi slt, %390, %32 : vector<8x1xi32>
      %cst_85 = arith.constant 0.000000e+00 : f32
      %392 = vector.shape_cast %389 : vector<8x1xi1> to vector<8x1xi1>
      %393 = vector.broadcast %392 : vector<8x1xi1> to vector<8x32xi1>
      %394 = vector.broadcast %cst_85 : f32 to vector<8x32xf32>
      %395 = arith.select %393, %362, %394 : vector<8x32xi1>, vector<8x32xf32>
      %396 = arith.index_cast %323 : i32 to index
      %c0_86 = arith.constant 0 : index
      %397 = vector.load %arg8[%396, %c0_86] : memref<80x64xf32, #tpu.memory_space<vmem>>, vector<8x32xf32>
      tpu.vector_store %arg8[%396, %c0_86], %395 {strides = array<i32>} : memref<80x64xf32, #tpu.memory_space<vmem>>, vector<8x32xf32>,
      %cst_87 = arith.constant 0.000000e+00 : f32
      %398 = vector.shape_cast %391 : vector<8x1xi1> to vector<8x1xi1>
      %399 = vector.broadcast %398 : vector<8x1xi1> to vector<8x32xi1>
      %400 = vector.broadcast %cst_87 : f32 to vector<8x32xf32>
      %401 = arith.select %399, %387, %400 : vector<8x32xi1>, vector<8x32xf32>
      %402 = arith.index_cast %325 : i32 to index
      %c32_88 = arith.constant 32 : index
      %403 = vector.load %arg8[%402, %c32_88] : memref<80x64xf32, #tpu.memory_space<vmem>>, vector<8x32xf32>
      tpu.vector_store %arg8[%402, %c32_88], %401 {strides = array<i32>} : memref<80x64xf32, #tpu.memory_space<vmem>>, vector<8x32xf32>,
      %404 = vector.shape_cast %389 : vector<8x1xi1> to vector<8x1xi1>
      %405 = vector.broadcast %404 : vector<8x1xi1> to vector<8x32xi1>
      %406 = arith.select %405, %362, %311 : vector<8x32xi1>, vector<8x32xf32>
      %407 = vector.shape_cast %389 : vector<8x1xi1> to vector<8x1xi1>
      %408 = vector.broadcast %407 : vector<8x1xi1> to vector<8x32xi1>
      %409 = arith.select %408, %360, %314 : vector<8x32xi1>, vector<8x32xf32>
      %410 = vector.shape_cast %391 : vector<8x1xi1> to vector<8x1xi1>
      %411 = vector.broadcast %410 : vector<8x1xi1> to vector<8x32xi1>
      %412 = arith.select %411, %387, %317 : vector<8x32xi1>, vector<8x32xf32>
      %413 = vector.shape_cast %391 : vector<8x1xi1> to vector<8x1xi1>
      %414 = vector.broadcast %413 : vector<8x1xi1> to vector<8x32xi1>
      %415 = arith.select %414, %385, %320 : vector<8x32xi1>, vector<8x32xf32>
      %c4_i32 = arith.constant 4 : i32
      %c9_i32_89 = arith.constant 9 : i32
      %416 = arith.subi %c9_i32_89, %c4_i32 : i32
      %c8_i32_90 = arith.constant 8 : i32
      %417 = arith.muli %c4_i32, %c8_i32_90 : i32
      %418 = tpu.assume_multiple %417, 8 : i32
      %c8_i32_91 = arith.constant 8 : i32
      %419 = arith.muli %416, %c8_i32_91 : i32
      %420 = tpu.assume_multiple %419, 8 : i32
      %421 = arith.index_cast %418 : i32 to index
      %c0_92 = arith.constant 0 : index
      %422 = vector.load %arg9[%421, %c0_92] : memref<80x256xf32, #tpu.memory_space<vmem>>, vector<8x256xf32>
      %423 = arith.index_cast %420 : i32 to index
      %c0_93 = arith.constant 0 : index
      %424 = vector.load %arg9[%423, %c0_93] : memref<80x256xf32, #tpu.memory_space<vmem>>, vector<8x256xf32>
      %425 = tpu.concatenate %406, %412 in 1 : vector<8x32xf32>, vector<8x32xf32> -> vector<8x64xf32>
      %cst_94 = arith.constant dense<0.000000e+00> : vector<8x256xf32>
      %426 = tpu.matmul %425, %34, %cst_94 {dimension_numbers = #tpu.dot_dimension_numbers<[1], [0], [0], [1], [0, 0, 1, 1], [], []>} : vector<8x64xf32>, vector<64x256xf32>, vector<8x256xf32> -> vector<8x256xf32>
      %427 = vector.extract_strided_slice %422 {offsets = [0, 0], sizes = [8, 128], strides = [1, 1]} : vector<8x256xf32> to vector<8x128xf32>
      %428 = vector.extract_strided_slice %426 {offsets = [0, 0], sizes = [8, 128], strides = [1, 1]} : vector<8x256xf32> to vector<8x128xf32>
      %429 = arith.addf %427, %428 : vector<8x128xf32>
      %430 = vector.extract_strided_slice %424 {offsets = [0, 128], sizes = [8, 128], strides = [1, 1]} : vector<8x256xf32> to vector<8x128xf32>
      %431 = vector.extract_strided_slice %426 {offsets = [0, 128], sizes = [8, 128], strides = [1, 1]} : vector<8x256xf32> to vector<8x128xf32>
      %432 = arith.addf %430, %431 : vector<8x128xf32>
      %433 = vector.extract_strided_slice %429 {offsets = [0, 0], sizes = [8, 32], strides = [1, 1]} : vector<8x128xf32> to vector<8x32xf32>
      %434 = arith.negf %433 : vector<8x32xf32>
      %435 = math.exp %434 : vector<8x32xf32>
      %cst_95 = arith.constant 1.000000e+00 : f32
      %436 = vector.broadcast %cst_95 : f32 to vector<8x32xf32>
      %437 = arith.addf %436, %435 : vector<8x32xf32>
      %438 = arith.divf %436, %437 : vector<8x32xf32>
      %439 = vector.extract_strided_slice %429 {offsets = [0, 32], sizes = [8, 32], strides = [1, 1]} : vector<8x128xf32> to vector<8x32xf32>
      %440 = arith.negf %439 : vector<8x32xf32>
      %441 = math.exp %440 : vector<8x32xf32>
      %cst_96 = arith.constant 1.000000e+00 : f32
      %442 = vector.broadcast %cst_96 : f32 to vector<8x32xf32>
      %443 = arith.addf %442, %441 : vector<8x32xf32>
      %444 = arith.divf %442, %443 : vector<8x32xf32>
      %445 = vector.extract_strided_slice %429 {offsets = [0, 64], sizes = [8, 32], strides = [1, 1]} : vector<8x128xf32> to vector<8x32xf32>
      %446 = math.tanh %445 : vector<8x32xf32>
      %447 = vector.extract_strided_slice %429 {offsets = [0, 96], sizes = [8, 32], strides = [1, 1]} : vector<8x128xf32> to vector<8x32xf32>
      %448 = arith.negf %447 : vector<8x32xf32>
      %449 = math.exp %448 : vector<8x32xf32>
      %cst_97 = arith.constant 1.000000e+00 : f32
      %450 = vector.broadcast %cst_97 : f32 to vector<8x32xf32>
      %451 = arith.addf %450, %449 : vector<8x32xf32>
      %452 = arith.divf %450, %451 : vector<8x32xf32>
      %453 = arith.mulf %444, %409 : vector<8x32xf32>
      %454 = arith.mulf %438, %446 : vector<8x32xf32>
      %455 = arith.addf %453, %454 : vector<8x32xf32>
      %456 = math.tanh %455 : vector<8x32xf32>
      %457 = arith.mulf %452, %456 : vector<8x32xf32>
      %458 = vector.extract_strided_slice %432 {offsets = [0, 0], sizes = [8, 32], strides = [1, 1]} : vector<8x128xf32> to vector<8x32xf32>
      %459 = arith.negf %458 : vector<8x32xf32>
      %460 = math.exp %459 : vector<8x32xf32>
      %cst_98 = arith.constant 1.000000e+00 : f32
      %461 = vector.broadcast %cst_98 : f32 to vector<8x32xf32>
      %462 = arith.addf %461, %460 : vector<8x32xf32>
      %463 = arith.divf %461, %462 : vector<8x32xf32>
      %464 = vector.extract_strided_slice %432 {offsets = [0, 32], sizes = [8, 32], strides = [1, 1]} : vector<8x128xf32> to vector<8x32xf32>
      %465 = arith.negf %464 : vector<8x32xf32>
      %466 = math.exp %465 : vector<8x32xf32>
      %cst_99 = arith.constant 1.000000e+00 : f32
      %467 = vector.broadcast %cst_99 : f32 to vector<8x32xf32>
      %468 = arith.addf %467, %466 : vector<8x32xf32>
      %469 = arith.divf %467, %468 : vector<8x32xf32>
      %470 = vector.extract_strided_slice %432 {offsets = [0, 64], sizes = [8, 32], strides = [1, 1]} : vector<8x128xf32> to vector<8x32xf32>
      %471 = math.tanh %470 : vector<8x32xf32>
      %472 = vector.extract_strided_slice %432 {offsets = [0, 96], sizes = [8, 32], strides = [1, 1]} : vector<8x128xf32> to vector<8x32xf32>
      %473 = arith.negf %472 : vector<8x32xf32>
      %474 = math.exp %473 : vector<8x32xf32>
      %cst_100 = arith.constant 1.000000e+00 : f32
      %475 = vector.broadcast %cst_100 : f32 to vector<8x32xf32>
      %476 = arith.addf %475, %474 : vector<8x32xf32>
      %477 = arith.divf %475, %476 : vector<8x32xf32>
      %478 = arith.mulf %469, %415 : vector<8x32xf32>
      %479 = arith.mulf %463, %471 : vector<8x32xf32>
      %480 = arith.addf %478, %479 : vector<8x32xf32>
      %481 = math.tanh %480 : vector<8x32xf32>
      %482 = arith.mulf %477, %481 : vector<8x32xf32>
      %483 = vector.broadcast %c4_i32 : i32 to vector<8x1xi32>
      %484 = arith.cmpi slt, %483, %32 : vector<8x1xi32>
      %485 = vector.broadcast %416 : i32 to vector<8x1xi32>
      %486 = arith.cmpi slt, %485, %32 : vector<8x1xi32>
      %cst_101 = arith.constant 0.000000e+00 : f32
      %487 = vector.shape_cast %484 : vector<8x1xi1> to vector<8x1xi1>
      %488 = vector.broadcast %487 : vector<8x1xi1> to vector<8x32xi1>
      %489 = vector.broadcast %cst_101 : f32 to vector<8x32xf32>
      %490 = arith.select %488, %457, %489 : vector<8x32xi1>, vector<8x32xf32>
      %491 = arith.index_cast %418 : i32 to index
      %c0_102 = arith.constant 0 : index
      %492 = vector.load %arg8[%491, %c0_102] : memref<80x64xf32, #tpu.memory_space<vmem>>, vector<8x32xf32>
      tpu.vector_store %arg8[%491, %c0_102], %490 {strides = array<i32>} : memref<80x64xf32, #tpu.memory_space<vmem>>, vector<8x32xf32>,
      %cst_103 = arith.constant 0.000000e+00 : f32
      %493 = vector.shape_cast %486 : vector<8x1xi1> to vector<8x1xi1>
      %494 = vector.broadcast %493 : vector<8x1xi1> to vector<8x32xi1>
      %495 = vector.broadcast %cst_103 : f32 to vector<8x32xf32>
      %496 = arith.select %494, %482, %495 : vector<8x32xi1>, vector<8x32xf32>
      %497 = arith.index_cast %420 : i32 to index
      %c32_104 = arith.constant 32 : index
      %498 = vector.load %arg8[%497, %c32_104] : memref<80x64xf32, #tpu.memory_space<vmem>>, vector<8x32xf32>
      tpu.vector_store %arg8[%497, %c32_104], %496 {strides = array<i32>} : memref<80x64xf32, #tpu.memory_space<vmem>>, vector<8x32xf32>,
      %499 = vector.shape_cast %484 : vector<8x1xi1> to vector<8x1xi1>
      %500 = vector.broadcast %499 : vector<8x1xi1> to vector<8x32xi1>
      %501 = arith.select %500, %457, %406 : vector<8x32xi1>, vector<8x32xf32>
      %502 = vector.shape_cast %484 : vector<8x1xi1> to vector<8x1xi1>
      %503 = vector.broadcast %502 : vector<8x1xi1> to vector<8x32xi1>
      %504 = arith.select %503, %455, %409 : vector<8x32xi1>, vector<8x32xf32>
      %505 = vector.shape_cast %486 : vector<8x1xi1> to vector<8x1xi1>
      %506 = vector.broadcast %505 : vector<8x1xi1> to vector<8x32xi1>
      %507 = arith.select %506, %482, %412 : vector<8x32xi1>, vector<8x32xf32>
      %508 = vector.shape_cast %486 : vector<8x1xi1> to vector<8x1xi1>
      %509 = vector.broadcast %508 : vector<8x1xi1> to vector<8x32xi1>
      %510 = arith.select %509, %480, %415 : vector<8x32xi1>, vector<8x32xf32>
      %c5_i32 = arith.constant 5 : i32
      %c9_i32_105 = arith.constant 9 : i32
      %511 = arith.subi %c9_i32_105, %c5_i32 : i32
      %c8_i32_106 = arith.constant 8 : i32
      %512 = arith.muli %c5_i32, %c8_i32_106 : i32
      %513 = tpu.assume_multiple %512, 8 : i32
      %c8_i32_107 = arith.constant 8 : i32
      %514 = arith.muli %511, %c8_i32_107 : i32
      %515 = tpu.assume_multiple %514, 8 : i32
      %516 = arith.index_cast %513 : i32 to index
      %c0_108 = arith.constant 0 : index
      %517 = vector.load %arg9[%516, %c0_108] : memref<80x256xf32, #tpu.memory_space<vmem>>, vector<8x256xf32>
      %518 = arith.index_cast %515 : i32 to index
      %c0_109 = arith.constant 0 : index
      %519 = vector.load %arg9[%518, %c0_109] : memref<80x256xf32, #tpu.memory_space<vmem>>, vector<8x256xf32>
      %520 = tpu.concatenate %501, %507 in 1 : vector<8x32xf32>, vector<8x32xf32> -> vector<8x64xf32>
      %cst_110 = arith.constant dense<0.000000e+00> : vector<8x256xf32>
      %521 = tpu.matmul %520, %34, %cst_110 {dimension_numbers = #tpu.dot_dimension_numbers<[1], [0], [0], [1], [0, 0, 1, 1], [], []>} : vector<8x64xf32>, vector<64x256xf32>, vector<8x256xf32> -> vector<8x256xf32>
      %522 = vector.extract_strided_slice %517 {offsets = [0, 0], sizes = [8, 128], strides = [1, 1]} : vector<8x256xf32> to vector<8x128xf32>
      %523 = vector.extract_strided_slice %521 {offsets = [0, 0], sizes = [8, 128], strides = [1, 1]} : vector<8x256xf32> to vector<8x128xf32>
      %524 = arith.addf %522, %523 : vector<8x128xf32>
      %525 = vector.extract_strided_slice %519 {offsets = [0, 128], sizes = [8, 128], strides = [1, 1]} : vector<8x256xf32> to vector<8x128xf32>
      %526 = vector.extract_strided_slice %521 {offsets = [0, 128], sizes = [8, 128], strides = [1, 1]} : vector<8x256xf32> to vector<8x128xf32>
      %527 = arith.addf %525, %526 : vector<8x128xf32>
      %528 = vector.extract_strided_slice %524 {offsets = [0, 0], sizes = [8, 32], strides = [1, 1]} : vector<8x128xf32> to vector<8x32xf32>
      %529 = arith.negf %528 : vector<8x32xf32>
      %530 = math.exp %529 : vector<8x32xf32>
      %cst_111 = arith.constant 1.000000e+00 : f32
      %531 = vector.broadcast %cst_111 : f32 to vector<8x32xf32>
      %532 = arith.addf %531, %530 : vector<8x32xf32>
      %533 = arith.divf %531, %532 : vector<8x32xf32>
      %534 = vector.extract_strided_slice %524 {offsets = [0, 32], sizes = [8, 32], strides = [1, 1]} : vector<8x128xf32> to vector<8x32xf32>
      %535 = arith.negf %534 : vector<8x32xf32>
      %536 = math.exp %535 : vector<8x32xf32>
      %cst_112 = arith.constant 1.000000e+00 : f32
      %537 = vector.broadcast %cst_112 : f32 to vector<8x32xf32>
      %538 = arith.addf %537, %536 : vector<8x32xf32>
      %539 = arith.divf %537, %538 : vector<8x32xf32>
      %540 = vector.extract_strided_slice %524 {offsets = [0, 64], sizes = [8, 32], strides = [1, 1]} : vector<8x128xf32> to vector<8x32xf32>
      %541 = math.tanh %540 : vector<8x32xf32>
      %542 = vector.extract_strided_slice %524 {offsets = [0, 96], sizes = [8, 32], strides = [1, 1]} : vector<8x128xf32> to vector<8x32xf32>
      %543 = arith.negf %542 : vector<8x32xf32>
      %544 = math.exp %543 : vector<8x32xf32>
      %cst_113 = arith.constant 1.000000e+00 : f32
      %545 = vector.broadcast %cst_113 : f32 to vector<8x32xf32>
      %546 = arith.addf %545, %544 : vector<8x32xf32>
      %547 = arith.divf %545, %546 : vector<8x32xf32>
      %548 = arith.mulf %539, %504 : vector<8x32xf32>
      %549 = arith.mulf %533, %541 : vector<8x32xf32>
      %550 = arith.addf %548, %549 : vector<8x32xf32>
      %551 = math.tanh %550 : vector<8x32xf32>
      %552 = arith.mulf %547, %551 : vector<8x32xf32>
      %553 = vector.extract_strided_slice %527 {offsets = [0, 0], sizes = [8, 32], strides = [1, 1]} : vector<8x128xf32> to vector<8x32xf32>
      %554 = arith.negf %553 : vector<8x32xf32>
      %555 = math.exp %554 : vector<8x32xf32>
      %cst_114 = arith.constant 1.000000e+00 : f32
      %556 = vector.broadcast %cst_114 : f32 to vector<8x32xf32>
      %557 = arith.addf %556, %555 : vector<8x32xf32>
      %558 = arith.divf %556, %557 : vector<8x32xf32>
      %559 = vector.extract_strided_slice %527 {offsets = [0, 32], sizes = [8, 32], strides = [1, 1]} : vector<8x128xf32> to vector<8x32xf32>
      %560 = arith.negf %559 : vector<8x32xf32>
      %561 = math.exp %560 : vector<8x32xf32>
      %cst_115 = arith.constant 1.000000e+00 : f32
      %562 = vector.broadcast %cst_115 : f32 to vector<8x32xf32>
      %563 = arith.addf %562, %561 : vector<8x32xf32>
      %564 = arith.divf %562, %563 : vector<8x32xf32>
      %565 = vector.extract_strided_slice %527 {offsets = [0, 64], sizes = [8, 32], strides = [1, 1]} : vector<8x128xf32> to vector<8x32xf32>
      %566 = math.tanh %565 : vector<8x32xf32>
      %567 = vector.extract_strided_slice %527 {offsets = [0, 96], sizes = [8, 32], strides = [1, 1]} : vector<8x128xf32> to vector<8x32xf32>
      %568 = arith.negf %567 : vector<8x32xf32>
      %569 = math.exp %568 : vector<8x32xf32>
      %cst_116 = arith.constant 1.000000e+00 : f32
      %570 = vector.broadcast %cst_116 : f32 to vector<8x32xf32>
      %571 = arith.addf %570, %569 : vector<8x32xf32>
      %572 = arith.divf %570, %571 : vector<8x32xf32>
      %573 = arith.mulf %564, %510 : vector<8x32xf32>
      %574 = arith.mulf %558, %566 : vector<8x32xf32>
      %575 = arith.addf %573, %574 : vector<8x32xf32>
      %576 = math.tanh %575 : vector<8x32xf32>
      %577 = arith.mulf %572, %576 : vector<8x32xf32>
      %578 = vector.broadcast %c5_i32 : i32 to vector<8x1xi32>
      %579 = arith.cmpi slt, %578, %32 : vector<8x1xi32>
      %580 = vector.broadcast %511 : i32 to vector<8x1xi32>
      %581 = arith.cmpi slt, %580, %32 : vector<8x1xi32>
      %cst_117 = arith.constant 0.000000e+00 : f32
      %582 = vector.shape_cast %579 : vector<8x1xi1> to vector<8x1xi1>
      %583 = vector.broadcast %582 : vector<8x1xi1> to vector<8x32xi1>
      %584 = vector.broadcast %cst_117 : f32 to vector<8x32xf32>
      %585 = arith.select %583, %552, %584 : vector<8x32xi1>, vector<8x32xf32>
      %586 = arith.index_cast %513 : i32 to index
      %c0_118 = arith.constant 0 : index
      %587 = vector.load %arg8[%586, %c0_118] : memref<80x64xf32, #tpu.memory_space<vmem>>, vector<8x32xf32>
      tpu.vector_store %arg8[%586, %c0_118], %585 {strides = array<i32>} : memref<80x64xf32, #tpu.memory_space<vmem>>, vector<8x32xf32>,
      %cst_119 = arith.constant 0.000000e+00 : f32
      %588 = vector.shape_cast %581 : vector<8x1xi1> to vector<8x1xi1>
      %589 = vector.broadcast %588 : vector<8x1xi1> to vector<8x32xi1>
      %590 = vector.broadcast %cst_119 : f32 to vector<8x32xf32>
      %591 = arith.select %589, %577, %590 : vector<8x32xi1>, vector<8x32xf32>
      %592 = arith.index_cast %515 : i32 to index
      %c32_120 = arith.constant 32 : index
      %593 = vector.load %arg8[%592, %c32_120] : memref<80x64xf32, #tpu.memory_space<vmem>>, vector<8x32xf32>
      tpu.vector_store %arg8[%592, %c32_120], %591 {strides = array<i32>} : memref<80x64xf32, #tpu.memory_space<vmem>>, vector<8x32xf32>,
      %594 = vector.shape_cast %579 : vector<8x1xi1> to vector<8x1xi1>
      %595 = vector.broadcast %594 : vector<8x1xi1> to vector<8x32xi1>
      %596 = arith.select %595, %552, %501 : vector<8x32xi1>, vector<8x32xf32>
      %597 = vector.shape_cast %579 : vector<8x1xi1> to vector<8x1xi1>
      %598 = vector.broadcast %597 : vector<8x1xi1> to vector<8x32xi1>
      %599 = arith.select %598, %550, %504 : vector<8x32xi1>, vector<8x32xf32>
      %600 = vector.shape_cast %581 : vector<8x1xi1> to vector<8x1xi1>
      %601 = vector.broadcast %600 : vector<8x1xi1> to vector<8x32xi1>
      %602 = arith.select %601, %577, %507 : vector<8x32xi1>, vector<8x32xf32>
      %603 = vector.shape_cast %581 : vector<8x1xi1> to vector<8x1xi1>
      %604 = vector.broadcast %603 : vector<8x1xi1> to vector<8x32xi1>
      %605 = arith.select %604, %575, %510 : vector<8x32xi1>, vector<8x32xf32>
      %c6_i32 = arith.constant 6 : i32
      %c9_i32_121 = arith.constant 9 : i32
      %606 = arith.subi %c9_i32_121, %c6_i32 : i32
      %c8_i32_122 = arith.constant 8 : i32
      %607 = arith.muli %c6_i32, %c8_i32_122 : i32
      %608 = tpu.assume_multiple %607, 8 : i32
      %c8_i32_123 = arith.constant 8 : i32
      %609 = arith.muli %606, %c8_i32_123 : i32
      %610 = tpu.assume_multiple %609, 8 : i32
      %611 = arith.index_cast %608 : i32 to index
      %c0_124 = arith.constant 0 : index
      %612 = vector.load %arg9[%611, %c0_124] : memref<80x256xf32, #tpu.memory_space<vmem>>, vector<8x256xf32>
      %613 = arith.index_cast %610 : i32 to index
      %c0_125 = arith.constant 0 : index
      %614 = vector.load %arg9[%613, %c0_125] : memref<80x256xf32, #tpu.memory_space<vmem>>, vector<8x256xf32>
      %615 = tpu.concatenate %596, %602 in 1 : vector<8x32xf32>, vector<8x32xf32> -> vector<8x64xf32>
      %cst_126 = arith.constant dense<0.000000e+00> : vector<8x256xf32>
      %616 = tpu.matmul %615, %34, %cst_126 {dimension_numbers = #tpu.dot_dimension_numbers<[1], [0], [0], [1], [0, 0, 1, 1], [], []>} : vector<8x64xf32>, vector<64x256xf32>, vector<8x256xf32> -> vector<8x256xf32>
      %617 = vector.extract_strided_slice %612 {offsets = [0, 0], sizes = [8, 128], strides = [1, 1]} : vector<8x256xf32> to vector<8x128xf32>
      %618 = vector.extract_strided_slice %616 {offsets = [0, 0], sizes = [8, 128], strides = [1, 1]} : vector<8x256xf32> to vector<8x128xf32>
      %619 = arith.addf %617, %618 : vector<8x128xf32>
      %620 = vector.extract_strided_slice %614 {offsets = [0, 128], sizes = [8, 128], strides = [1, 1]} : vector<8x256xf32> to vector<8x128xf32>
      %621 = vector.extract_strided_slice %616 {offsets = [0, 128], sizes = [8, 128], strides = [1, 1]} : vector<8x256xf32> to vector<8x128xf32>
      %622 = arith.addf %620, %621 : vector<8x128xf32>
      %623 = vector.extract_strided_slice %619 {offsets = [0, 0], sizes = [8, 32], strides = [1, 1]} : vector<8x128xf32> to vector<8x32xf32>
      %624 = arith.negf %623 : vector<8x32xf32>
      %625 = math.exp %624 : vector<8x32xf32>
      %cst_127 = arith.constant 1.000000e+00 : f32
      %626 = vector.broadcast %cst_127 : f32 to vector<8x32xf32>
      %627 = arith.addf %626, %625 : vector<8x32xf32>
      %628 = arith.divf %626, %627 : vector<8x32xf32>
      %629 = vector.extract_strided_slice %619 {offsets = [0, 32], sizes = [8, 32], strides = [1, 1]} : vector<8x128xf32> to vector<8x32xf32>
      %630 = arith.negf %629 : vector<8x32xf32>
      %631 = math.exp %630 : vector<8x32xf32>
      %cst_128 = arith.constant 1.000000e+00 : f32
      %632 = vector.broadcast %cst_128 : f32 to vector<8x32xf32>
      %633 = arith.addf %632, %631 : vector<8x32xf32>
      %634 = arith.divf %632, %633 : vector<8x32xf32>
      %635 = vector.extract_strided_slice %619 {offsets = [0, 64], sizes = [8, 32], strides = [1, 1]} : vector<8x128xf32> to vector<8x32xf32>
      %636 = math.tanh %635 : vector<8x32xf32>
      %637 = vector.extract_strided_slice %619 {offsets = [0, 96], sizes = [8, 32], strides = [1, 1]} : vector<8x128xf32> to vector<8x32xf32>
      %638 = arith.negf %637 : vector<8x32xf32>
      %639 = math.exp %638 : vector<8x32xf32>
      %cst_129 = arith.constant 1.000000e+00 : f32
      %640 = vector.broadcast %cst_129 : f32 to vector<8x32xf32>
      %641 = arith.addf %640, %639 : vector<8x32xf32>
      %642 = arith.divf %640, %641 : vector<8x32xf32>
      %643 = arith.mulf %634, %599 : vector<8x32xf32>
      %644 = arith.mulf %628, %636 : vector<8x32xf32>
      %645 = arith.addf %643, %644 : vector<8x32xf32>
      %646 = math.tanh %645 : vector<8x32xf32>
      %647 = arith.mulf %642, %646 : vector<8x32xf32>
      %648 = vector.extract_strided_slice %622 {offsets = [0, 0], sizes = [8, 32], strides = [1, 1]} : vector<8x128xf32> to vector<8x32xf32>
      %649 = arith.negf %648 : vector<8x32xf32>
      %650 = math.exp %649 : vector<8x32xf32>
      %cst_130 = arith.constant 1.000000e+00 : f32
      %651 = vector.broadcast %cst_130 : f32 to vector<8x32xf32>
      %652 = arith.addf %651, %650 : vector<8x32xf32>
      %653 = arith.divf %651, %652 : vector<8x32xf32>
      %654 = vector.extract_strided_slice %622 {offsets = [0, 32], sizes = [8, 32], strides = [1, 1]} : vector<8x128xf32> to vector<8x32xf32>
      %655 = arith.negf %654 : vector<8x32xf32>
      %656 = math.exp %655 : vector<8x32xf32>
      %cst_131 = arith.constant 1.000000e+00 : f32
      %657 = vector.broadcast %cst_131 : f32 to vector<8x32xf32>
      %658 = arith.addf %657, %656 : vector<8x32xf32>
      %659 = arith.divf %657, %658 : vector<8x32xf32>
      %660 = vector.extract_strided_slice %622 {offsets = [0, 64], sizes = [8, 32], strides = [1, 1]} : vector<8x128xf32> to vector<8x32xf32>
      %661 = math.tanh %660 : vector<8x32xf32>
      %662 = vector.extract_strided_slice %622 {offsets = [0, 96], sizes = [8, 32], strides = [1, 1]} : vector<8x128xf32> to vector<8x32xf32>
      %663 = arith.negf %662 : vector<8x32xf32>
      %664 = math.exp %663 : vector<8x32xf32>
      %cst_132 = arith.constant 1.000000e+00 : f32
      %665 = vector.broadcast %cst_132 : f32 to vector<8x32xf32>
      %666 = arith.addf %665, %664 : vector<8x32xf32>
      %667 = arith.divf %665, %666 : vector<8x32xf32>
      %668 = arith.mulf %659, %605 : vector<8x32xf32>
      %669 = arith.mulf %653, %661 : vector<8x32xf32>
      %670 = arith.addf %668, %669 : vector<8x32xf32>
      %671 = math.tanh %670 : vector<8x32xf32>
      %672 = arith.mulf %667, %671 : vector<8x32xf32>
      %673 = vector.broadcast %c6_i32 : i32 to vector<8x1xi32>
      %674 = arith.cmpi slt, %673, %32 : vector<8x1xi32>
      %675 = vector.broadcast %606 : i32 to vector<8x1xi32>
      %676 = arith.cmpi slt, %675, %32 : vector<8x1xi32>
      %cst_133 = arith.constant 0.000000e+00 : f32
      %677 = vector.shape_cast %674 : vector<8x1xi1> to vector<8x1xi1>
      %678 = vector.broadcast %677 : vector<8x1xi1> to vector<8x32xi1>
      %679 = vector.broadcast %cst_133 : f32 to vector<8x32xf32>
      %680 = arith.select %678, %647, %679 : vector<8x32xi1>, vector<8x32xf32>
      %681 = arith.index_cast %608 : i32 to index
      %c0_134 = arith.constant 0 : index
      %682 = vector.load %arg8[%681, %c0_134] : memref<80x64xf32, #tpu.memory_space<vmem>>, vector<8x32xf32>
      tpu.vector_store %arg8[%681, %c0_134], %680 {strides = array<i32>} : memref<80x64xf32, #tpu.memory_space<vmem>>, vector<8x32xf32>,
      %cst_135 = arith.constant 0.000000e+00 : f32
      %683 = vector.shape_cast %676 : vector<8x1xi1> to vector<8x1xi1>
      %684 = vector.broadcast %683 : vector<8x1xi1> to vector<8x32xi1>
      %685 = vector.broadcast %cst_135 : f32 to vector<8x32xf32>
      %686 = arith.select %684, %672, %685 : vector<8x32xi1>, vector<8x32xf32>
      %687 = arith.index_cast %610 : i32 to index
      %c32_136 = arith.constant 32 : index
      %688 = vector.load %arg8[%687, %c32_136] : memref<80x64xf32, #tpu.memory_space<vmem>>, vector<8x32xf32>
      tpu.vector_store %arg8[%687, %c32_136], %686 {strides = array<i32>} : memref<80x64xf32, #tpu.memory_space<vmem>>, vector<8x32xf32>,
      %689 = vector.shape_cast %674 : vector<8x1xi1> to vector<8x1xi1>
      %690 = vector.broadcast %689 : vector<8x1xi1> to vector<8x32xi1>
      %691 = arith.select %690, %647, %596 : vector<8x32xi1>, vector<8x32xf32>
      %692 = vector.shape_cast %674 : vector<8x1xi1> to vector<8x1xi1>
      %693 = vector.broadcast %692 : vector<8x1xi1> to vector<8x32xi1>
      %694 = arith.select %693, %645, %599 : vector<8x32xi1>, vector<8x32xf32>
      %695 = vector.shape_cast %676 : vector<8x1xi1> to vector<8x1xi1>
      %696 = vector.broadcast %695 : vector<8x1xi1> to vector<8x32xi1>
      %697 = arith.select %696, %672, %602 : vector<8x32xi1>, vector<8x32xf32>
      %698 = vector.shape_cast %676 : vector<8x1xi1> to vector<8x1xi1>
      %699 = vector.broadcast %698 : vector<8x1xi1> to vector<8x32xi1>
      %700 = arith.select %699, %670, %605 : vector<8x32xi1>, vector<8x32xf32>
      %c7_i32 = arith.constant 7 : i32
      %c9_i32_137 = arith.constant 9 : i32
      %701 = arith.subi %c9_i32_137, %c7_i32 : i32
      %c8_i32_138 = arith.constant 8 : i32
      %702 = arith.muli %c7_i32, %c8_i32_138 : i32
      %703 = tpu.assume_multiple %702, 8 : i32
      %c8_i32_139 = arith.constant 8 : i32
      %704 = arith.muli %701, %c8_i32_139 : i32
      %705 = tpu.assume_multiple %704, 8 : i32
      %706 = arith.index_cast %703 : i32 to index
      %c0_140 = arith.constant 0 : index
      %707 = vector.load %arg9[%706, %c0_140] : memref<80x256xf32, #tpu.memory_space<vmem>>, vector<8x256xf32>
      %708 = arith.index_cast %705 : i32 to index
      %c0_141 = arith.constant 0 : index
      %709 = vector.load %arg9[%708, %c0_141] : memref<80x256xf32, #tpu.memory_space<vmem>>, vector<8x256xf32>
      %710 = tpu.concatenate %691, %697 in 1 : vector<8x32xf32>, vector<8x32xf32> -> vector<8x64xf32>
      %cst_142 = arith.constant dense<0.000000e+00> : vector<8x256xf32>
      %711 = tpu.matmul %710, %34, %cst_142 {dimension_numbers = #tpu.dot_dimension_numbers<[1], [0], [0], [1], [0, 0, 1, 1], [], []>} : vector<8x64xf32>, vector<64x256xf32>, vector<8x256xf32> -> vector<8x256xf32>
      %712 = vector.extract_strided_slice %707 {offsets = [0, 0], sizes = [8, 128], strides = [1, 1]} : vector<8x256xf32> to vector<8x128xf32>
      %713 = vector.extract_strided_slice %711 {offsets = [0, 0], sizes = [8, 128], strides = [1, 1]} : vector<8x256xf32> to vector<8x128xf32>
      %714 = arith.addf %712, %713 : vector<8x128xf32>
      %715 = vector.extract_strided_slice %709 {offsets = [0, 128], sizes = [8, 128], strides = [1, 1]} : vector<8x256xf32> to vector<8x128xf32>
      %716 = vector.extract_strided_slice %711 {offsets = [0, 128], sizes = [8, 128], strides = [1, 1]} : vector<8x256xf32> to vector<8x128xf32>
      %717 = arith.addf %715, %716 : vector<8x128xf32>
      %718 = vector.extract_strided_slice %714 {offsets = [0, 0], sizes = [8, 32], strides = [1, 1]} : vector<8x128xf32> to vector<8x32xf32>
      %719 = arith.negf %718 : vector<8x32xf32>
      %720 = math.exp %719 : vector<8x32xf32>
      %cst_143 = arith.constant 1.000000e+00 : f32
      %721 = vector.broadcast %cst_143 : f32 to vector<8x32xf32>
      %722 = arith.addf %721, %720 : vector<8x32xf32>
      %723 = arith.divf %721, %722 : vector<8x32xf32>
      %724 = vector.extract_strided_slice %714 {offsets = [0, 32], sizes = [8, 32], strides = [1, 1]} : vector<8x128xf32> to vector<8x32xf32>
      %725 = arith.negf %724 : vector<8x32xf32>
      %726 = math.exp %725 : vector<8x32xf32>
      %cst_144 = arith.constant 1.000000e+00 : f32
      %727 = vector.broadcast %cst_144 : f32 to vector<8x32xf32>
      %728 = arith.addf %727, %726 : vector<8x32xf32>
      %729 = arith.divf %727, %728 : vector<8x32xf32>
      %730 = vector.extract_strided_slice %714 {offsets = [0, 64], sizes = [8, 32], strides = [1, 1]} : vector<8x128xf32> to vector<8x32xf32>
      %731 = math.tanh %730 : vector<8x32xf32>
      %732 = vector.extract_strided_slice %714 {offsets = [0, 96], sizes = [8, 32], strides = [1, 1]} : vector<8x128xf32> to vector<8x32xf32>
      %733 = arith.negf %732 : vector<8x32xf32>
      %734 = math.exp %733 : vector<8x32xf32>
      %cst_145 = arith.constant 1.000000e+00 : f32
      %735 = vector.broadcast %cst_145 : f32 to vector<8x32xf32>
      %736 = arith.addf %735, %734 : vector<8x32xf32>
      %737 = arith.divf %735, %736 : vector<8x32xf32>
      %738 = arith.mulf %729, %694 : vector<8x32xf32>
      %739 = arith.mulf %723, %731 : vector<8x32xf32>
      %740 = arith.addf %738, %739 : vector<8x32xf32>
      %741 = math.tanh %740 : vector<8x32xf32>
      %742 = arith.mulf %737, %741 : vector<8x32xf32>
      %743 = vector.extract_strided_slice %717 {offsets = [0, 0], sizes = [8, 32], strides = [1, 1]} : vector<8x128xf32> to vector<8x32xf32>
      %744 = arith.negf %743 : vector<8x32xf32>
      %745 = math.exp %744 : vector<8x32xf32>
      %cst_146 = arith.constant 1.000000e+00 : f32
      %746 = vector.broadcast %cst_146 : f32 to vector<8x32xf32>
      %747 = arith.addf %746, %745 : vector<8x32xf32>
      %748 = arith.divf %746, %747 : vector<8x32xf32>
      %749 = vector.extract_strided_slice %717 {offsets = [0, 32], sizes = [8, 32], strides = [1, 1]} : vector<8x128xf32> to vector<8x32xf32>
      %750 = arith.negf %749 : vector<8x32xf32>
      %751 = math.exp %750 : vector<8x32xf32>
      %cst_147 = arith.constant 1.000000e+00 : f32
      %752 = vector.broadcast %cst_147 : f32 to vector<8x32xf32>
      %753 = arith.addf %752, %751 : vector<8x32xf32>
      %754 = arith.divf %752, %753 : vector<8x32xf32>
      %755 = vector.extract_strided_slice %717 {offsets = [0, 64], sizes = [8, 32], strides = [1, 1]} : vector<8x128xf32> to vector<8x32xf32>
      %756 = math.tanh %755 : vector<8x32xf32>
      %757 = vector.extract_strided_slice %717 {offsets = [0, 96], sizes = [8, 32], strides = [1, 1]} : vector<8x128xf32> to vector<8x32xf32>
      %758 = arith.negf %757 : vector<8x32xf32>
      %759 = math.exp %758 : vector<8x32xf32>
      %cst_148 = arith.constant 1.000000e+00 : f32
      %760 = vector.broadcast %cst_148 : f32 to vector<8x32xf32>
      %761 = arith.addf %760, %759 : vector<8x32xf32>
      %762 = arith.divf %760, %761 : vector<8x32xf32>
      %763 = arith.mulf %754, %700 : vector<8x32xf32>
      %764 = arith.mulf %748, %756 : vector<8x32xf32>
      %765 = arith.addf %763, %764 : vector<8x32xf32>
      %766 = math.tanh %765 : vector<8x32xf32>
      %767 = arith.mulf %762, %766 : vector<8x32xf32>
      %768 = vector.broadcast %c7_i32 : i32 to vector<8x1xi32>
      %769 = arith.cmpi slt, %768, %32 : vector<8x1xi32>
      %770 = vector.broadcast %701 : i32 to vector<8x1xi32>
      %771 = arith.cmpi slt, %770, %32 : vector<8x1xi32>
      %cst_149 = arith.constant 0.000000e+00 : f32
      %772 = vector.shape_cast %769 : vector<8x1xi1> to vector<8x1xi1>
      %773 = vector.broadcast %772 : vector<8x1xi1> to vector<8x32xi1>
      %774 = vector.broadcast %cst_149 : f32 to vector<8x32xf32>
      %775 = arith.select %773, %742, %774 : vector<8x32xi1>, vector<8x32xf32>
      %776 = arith.index_cast %703 : i32 to index
      %c0_150 = arith.constant 0 : index
      %777 = vector.load %arg8[%776, %c0_150] : memref<80x64xf32, #tpu.memory_space<vmem>>, vector<8x32xf32>
      tpu.vector_store %arg8[%776, %c0_150], %775 {strides = array<i32>} : memref<80x64xf32, #tpu.memory_space<vmem>>, vector<8x32xf32>,
      %cst_151 = arith.constant 0.000000e+00 : f32
      %778 = vector.shape_cast %771 : vector<8x1xi1> to vector<8x1xi1>
      %779 = vector.broadcast %778 : vector<8x1xi1> to vector<8x32xi1>
      %780 = vector.broadcast %cst_151 : f32 to vector<8x32xf32>
      %781 = arith.select %779, %767, %780 : vector<8x32xi1>, vector<8x32xf32>
      %782 = arith.index_cast %705 : i32 to index
      %c32_152 = arith.constant 32 : index
      %783 = vector.load %arg8[%782, %c32_152] : memref<80x64xf32, #tpu.memory_space<vmem>>, vector<8x32xf32>
      tpu.vector_store %arg8[%782, %c32_152], %781 {strides = array<i32>} : memref<80x64xf32, #tpu.memory_space<vmem>>, vector<8x32xf32>,
      %784 = vector.shape_cast %769 : vector<8x1xi1> to vector<8x1xi1>
      %785 = vector.broadcast %784 : vector<8x1xi1> to vector<8x32xi1>
      %786 = arith.select %785, %742, %691 : vector<8x32xi1>, vector<8x32xf32>
      %787 = vector.shape_cast %769 : vector<8x1xi1> to vector<8x1xi1>
      %788 = vector.broadcast %787 : vector<8x1xi1> to vector<8x32xi1>
      %789 = arith.select %788, %740, %694 : vector<8x32xi1>, vector<8x32xf32>
      %790 = vector.shape_cast %771 : vector<8x1xi1> to vector<8x1xi1>
      %791 = vector.broadcast %790 : vector<8x1xi1> to vector<8x32xi1>
      %792 = arith.select %791, %767, %697 : vector<8x32xi1>, vector<8x32xf32>
      %793 = vector.shape_cast %771 : vector<8x1xi1> to vector<8x1xi1>
      %794 = vector.broadcast %793 : vector<8x1xi1> to vector<8x32xi1>
      %795 = arith.select %794, %765, %700 : vector<8x32xi1>, vector<8x32xf32>
      %c8_i32_153 = arith.constant 8 : i32
      %c9_i32_154 = arith.constant 9 : i32
      %796 = arith.subi %c9_i32_154, %c8_i32_153 : i32
      %c8_i32_155 = arith.constant 8 : i32
      %797 = arith.muli %c8_i32_153, %c8_i32_155 : i32
      %798 = tpu.assume_multiple %797, 8 : i32
      %c8_i32_156 = arith.constant 8 : i32
      %799 = arith.muli %796, %c8_i32_156 : i32
      %800 = tpu.assume_multiple %799, 8 : i32
      %801 = arith.index_cast %798 : i32 to index
      %c0_157 = arith.constant 0 : index
      %802 = vector.load %arg9[%801, %c0_157] : memref<80x256xf32, #tpu.memory_space<vmem>>, vector<8x256xf32>
      %803 = arith.index_cast %800 : i32 to index
      %c0_158 = arith.constant 0 : index
      %804 = vector.load %arg9[%803, %c0_158] : memref<80x256xf32, #tpu.memory_space<vmem>>, vector<8x256xf32>
      %805 = tpu.concatenate %786, %792 in 1 : vector<8x32xf32>, vector<8x32xf32> -> vector<8x64xf32>
      %cst_159 = arith.constant dense<0.000000e+00> : vector<8x256xf32>
      %806 = tpu.matmul %805, %34, %cst_159 {dimension_numbers = #tpu.dot_dimension_numbers<[1], [0], [0], [1], [0, 0, 1, 1], [], []>} : vector<8x64xf32>, vector<64x256xf32>, vector<8x256xf32> -> vector<8x256xf32>
      %807 = vector.extract_strided_slice %802 {offsets = [0, 0], sizes = [8, 128], strides = [1, 1]} : vector<8x256xf32> to vector<8x128xf32>
      %808 = vector.extract_strided_slice %806 {offsets = [0, 0], sizes = [8, 128], strides = [1, 1]} : vector<8x256xf32> to vector<8x128xf32>
      %809 = arith.addf %807, %808 : vector<8x128xf32>
      %810 = vector.extract_strided_slice %804 {offsets = [0, 128], sizes = [8, 128], strides = [1, 1]} : vector<8x256xf32> to vector<8x128xf32>
      %811 = vector.extract_strided_slice %806 {offsets = [0, 128], sizes = [8, 128], strides = [1, 1]} : vector<8x256xf32> to vector<8x128xf32>
      %812 = arith.addf %810, %811 : vector<8x128xf32>
      %813 = vector.extract_strided_slice %809 {offsets = [0, 0], sizes = [8, 32], strides = [1, 1]} : vector<8x128xf32> to vector<8x32xf32>
      %814 = arith.negf %813 : vector<8x32xf32>
      %815 = math.exp %814 : vector<8x32xf32>
      %cst_160 = arith.constant 1.000000e+00 : f32
      %816 = vector.broadcast %cst_160 : f32 to vector<8x32xf32>
      %817 = arith.addf %816, %815 : vector<8x32xf32>
      %818 = arith.divf %816, %817 : vector<8x32xf32>
      %819 = vector.extract_strided_slice %809 {offsets = [0, 32], sizes = [8, 32], strides = [1, 1]} : vector<8x128xf32> to vector<8x32xf32>
      %820 = arith.negf %819 : vector<8x32xf32>
      %821 = math.exp %820 : vector<8x32xf32>
      %cst_161 = arith.constant 1.000000e+00 : f32
      %822 = vector.broadcast %cst_161 : f32 to vector<8x32xf32>
      %823 = arith.addf %822, %821 : vector<8x32xf32>
      %824 = arith.divf %822, %823 : vector<8x32xf32>
      %825 = vector.extract_strided_slice %809 {offsets = [0, 64], sizes = [8, 32], strides = [1, 1]} : vector<8x128xf32> to vector<8x32xf32>
      %826 = math.tanh %825 : vector<8x32xf32>
      %827 = vector.extract_strided_slice %809 {offsets = [0, 96], sizes = [8, 32], strides = [1, 1]} : vector<8x128xf32> to vector<8x32xf32>
      %828 = arith.negf %827 : vector<8x32xf32>
      %829 = math.exp %828 : vector<8x32xf32>
      %cst_162 = arith.constant 1.000000e+00 : f32
      %830 = vector.broadcast %cst_162 : f32 to vector<8x32xf32>
      %831 = arith.addf %830, %829 : vector<8x32xf32>
      %832 = arith.divf %830, %831 : vector<8x32xf32>
      %833 = arith.mulf %824, %789 : vector<8x32xf32>
      %834 = arith.mulf %818, %826 : vector<8x32xf32>
      %835 = arith.addf %833, %834 : vector<8x32xf32>
      %836 = math.tanh %835 : vector<8x32xf32>
      %837 = arith.mulf %832, %836 : vector<8x32xf32>
      %838 = vector.extract_strided_slice %812 {offsets = [0, 0], sizes = [8, 32], strides = [1, 1]} : vector<8x128xf32> to vector<8x32xf32>
      %839 = arith.negf %838 : vector<8x32xf32>
      %840 = math.exp %839 : vector<8x32xf32>
      %cst_163 = arith.constant 1.000000e+00 : f32
      %841 = vector.broadcast %cst_163 : f32 to vector<8x32xf32>
      %842 = arith.addf %841, %840 : vector<8x32xf32>
      %843 = arith.divf %841, %842 : vector<8x32xf32>
      %844 = vector.extract_strided_slice %812 {offsets = [0, 32], sizes = [8, 32], strides = [1, 1]} : vector<8x128xf32> to vector<8x32xf32>
      %845 = arith.negf %844 : vector<8x32xf32>
      %846 = math.exp %845 : vector<8x32xf32>
      %cst_164 = arith.constant 1.000000e+00 : f32
      %847 = vector.broadcast %cst_164 : f32 to vector<8x32xf32>
      %848 = arith.addf %847, %846 : vector<8x32xf32>
      %849 = arith.divf %847, %848 : vector<8x32xf32>
      %850 = vector.extract_strided_slice %812 {offsets = [0, 64], sizes = [8, 32], strides = [1, 1]} : vector<8x128xf32> to vector<8x32xf32>
      %851 = math.tanh %850 : vector<8x32xf32>
      %852 = vector.extract_strided_slice %812 {offsets = [0, 96], sizes = [8, 32], strides = [1, 1]} : vector<8x128xf32> to vector<8x32xf32>
      %853 = arith.negf %852 : vector<8x32xf32>
      %854 = math.exp %853 : vector<8x32xf32>
      %cst_165 = arith.constant 1.000000e+00 : f32
      %855 = vector.broadcast %cst_165 : f32 to vector<8x32xf32>
      %856 = arith.addf %855, %854 : vector<8x32xf32>
      %857 = arith.divf %855, %856 : vector<8x32xf32>
      %858 = arith.mulf %849, %795 : vector<8x32xf32>
      %859 = arith.mulf %843, %851 : vector<8x32xf32>
      %860 = arith.addf %858, %859 : vector<8x32xf32>
      %861 = math.tanh %860 : vector<8x32xf32>
      %862 = arith.mulf %857, %861 : vector<8x32xf32>
      %863 = vector.broadcast %c8_i32_153 : i32 to vector<8x1xi32>
      %864 = arith.cmpi slt, %863, %32 : vector<8x1xi32>
      %865 = vector.broadcast %796 : i32 to vector<8x1xi32>
      %866 = arith.cmpi slt, %865, %32 : vector<8x1xi32>
      %cst_166 = arith.constant 0.000000e+00 : f32
      %867 = vector.shape_cast %864 : vector<8x1xi1> to vector<8x1xi1>
      %868 = vector.broadcast %867 : vector<8x1xi1> to vector<8x32xi1>
      %869 = vector.broadcast %cst_166 : f32 to vector<8x32xf32>
      %870 = arith.select %868, %837, %869 : vector<8x32xi1>, vector<8x32xf32>
      %871 = arith.index_cast %798 : i32 to index
      %c0_167 = arith.constant 0 : index
      %872 = vector.load %arg8[%871, %c0_167] : memref<80x64xf32, #tpu.memory_space<vmem>>, vector<8x32xf32>
      tpu.vector_store %arg8[%871, %c0_167], %870 {strides = array<i32>} : memref<80x64xf32, #tpu.memory_space<vmem>>, vector<8x32xf32>,
      %cst_168 = arith.constant 0.000000e+00 : f32
      %873 = vector.shape_cast %866 : vector<8x1xi1> to vector<8x1xi1>
      %874 = vector.broadcast %873 : vector<8x1xi1> to vector<8x32xi1>
      %875 = vector.broadcast %cst_168 : f32 to vector<8x32xf32>
      %876 = arith.select %874, %862, %875 : vector<8x32xi1>, vector<8x32xf32>
      %877 = arith.index_cast %800 : i32 to index
      %c32_169 = arith.constant 32 : index
      %878 = vector.load %arg8[%877, %c32_169] : memref<80x64xf32, #tpu.memory_space<vmem>>, vector<8x32xf32>
      tpu.vector_store %arg8[%877, %c32_169], %876 {strides = array<i32>} : memref<80x64xf32, #tpu.memory_space<vmem>>, vector<8x32xf32>,
      %879 = vector.shape_cast %864 : vector<8x1xi1> to vector<8x1xi1>
      %880 = vector.broadcast %879 : vector<8x1xi1> to vector<8x32xi1>
      %881 = arith.select %880, %837, %786 : vector<8x32xi1>, vector<8x32xf32>
      %882 = vector.shape_cast %864 : vector<8x1xi1> to vector<8x1xi1>
      %883 = vector.broadcast %882 : vector<8x1xi1> to vector<8x32xi1>
      %884 = arith.select %883, %835, %789 : vector<8x32xi1>, vector<8x32xf32>
      %885 = vector.shape_cast %866 : vector<8x1xi1> to vector<8x1xi1>
      %886 = vector.broadcast %885 : vector<8x1xi1> to vector<8x32xi1>
      %887 = arith.select %886, %862, %792 : vector<8x32xi1>, vector<8x32xf32>
      %888 = vector.shape_cast %866 : vector<8x1xi1> to vector<8x1xi1>
      %889 = vector.broadcast %888 : vector<8x1xi1> to vector<8x32xi1>
      %890 = arith.select %889, %860, %795 : vector<8x32xi1>, vector<8x32xf32>
      %c9_i32_170 = arith.constant 9 : i32
      %c9_i32_171 = arith.constant 9 : i32
      %891 = arith.subi %c9_i32_171, %c9_i32_170 : i32
      %c8_i32_172 = arith.constant 8 : i32
      %892 = arith.muli %c9_i32_170, %c8_i32_172 : i32
      %893 = tpu.assume_multiple %892, 8 : i32
      %c8_i32_173 = arith.constant 8 : i32
      %894 = arith.muli %891, %c8_i32_173 : i32
      %895 = tpu.assume_multiple %894, 8 : i32
      %896 = arith.index_cast %893 : i32 to index
      %c0_174 = arith.constant 0 : index
      %897 = vector.load %arg9[%896, %c0_174] : memref<80x256xf32, #tpu.memory_space<vmem>>, vector<8x256xf32>
      %898 = arith.index_cast %895 : i32 to index
      %c0_175 = arith.constant 0 : index
      %899 = vector.load %arg9[%898, %c0_175] : memref<80x256xf32, #tpu.memory_space<vmem>>, vector<8x256xf32>
      %900 = tpu.concatenate %881, %887 in 1 : vector<8x32xf32>, vector<8x32xf32> -> vector<8x64xf32>
      %cst_176 = arith.constant dense<0.000000e+00> : vector<8x256xf32>
      %901 = tpu.matmul %900, %34, %cst_176 {dimension_numbers = #tpu.dot_dimension_numbers<[1], [0], [0], [1], [0, 0, 1, 1], [], []>} : vector<8x64xf32>, vector<64x256xf32>, vector<8x256xf32> -> vector<8x256xf32>
      %902 = vector.extract_strided_slice %897 {offsets = [0, 0], sizes = [8, 128], strides = [1, 1]} : vector<8x256xf32> to vector<8x128xf32>
      %903 = vector.extract_strided_slice %901 {offsets = [0, 0], sizes = [8, 128], strides = [1, 1]} : vector<8x256xf32> to vector<8x128xf32>
      %904 = arith.addf %902, %903 : vector<8x128xf32>
      %905 = vector.extract_strided_slice %899 {offsets = [0, 128], sizes = [8, 128], strides = [1, 1]} : vector<8x256xf32> to vector<8x128xf32>
      %906 = vector.extract_strided_slice %901 {offsets = [0, 128], sizes = [8, 128], strides = [1, 1]} : vector<8x256xf32> to vector<8x128xf32>
      %907 = arith.addf %905, %906 : vector<8x128xf32>
      %908 = vector.extract_strided_slice %904 {offsets = [0, 0], sizes = [8, 32], strides = [1, 1]} : vector<8x128xf32> to vector<8x32xf32>
      %909 = arith.negf %908 : vector<8x32xf32>
      %910 = math.exp %909 : vector<8x32xf32>
      %cst_177 = arith.constant 1.000000e+00 : f32
      %911 = vector.broadcast %cst_177 : f32 to vector<8x32xf32>
      %912 = arith.addf %911, %910 : vector<8x32xf32>
      %913 = arith.divf %911, %912 : vector<8x32xf32>
      %914 = vector.extract_strided_slice %904 {offsets = [0, 32], sizes = [8, 32], strides = [1, 1]} : vector<8x128xf32> to vector<8x32xf32>
      %915 = arith.negf %914 : vector<8x32xf32>
      %916 = math.exp %915 : vector<8x32xf32>
      %cst_178 = arith.constant 1.000000e+00 : f32
      %917 = vector.broadcast %cst_178 : f32 to vector<8x32xf32>
      %918 = arith.addf %917, %916 : vector<8x32xf32>
      %919 = arith.divf %917, %918 : vector<8x32xf32>
      %920 = vector.extract_strided_slice %904 {offsets = [0, 64], sizes = [8, 32], strides = [1, 1]} : vector<8x128xf32> to vector<8x32xf32>
      %921 = math.tanh %920 : vector<8x32xf32>
      %922 = vector.extract_strided_slice %904 {offsets = [0, 96], sizes = [8, 32], strides = [1, 1]} : vector<8x128xf32> to vector<8x32xf32>
      %923 = arith.negf %922 : vector<8x32xf32>
      %924 = math.exp %923 : vector<8x32xf32>
      %cst_179 = arith.constant 1.000000e+00 : f32
      %925 = vector.broadcast %cst_179 : f32 to vector<8x32xf32>
      %926 = arith.addf %925, %924 : vector<8x32xf32>
      %927 = arith.divf %925, %926 : vector<8x32xf32>
      %928 = arith.mulf %919, %884 : vector<8x32xf32>
      %929 = arith.mulf %913, %921 : vector<8x32xf32>
      %930 = arith.addf %928, %929 : vector<8x32xf32>
      %931 = math.tanh %930 : vector<8x32xf32>
      %932 = arith.mulf %927, %931 : vector<8x32xf32>
      %933 = vector.extract_strided_slice %907 {offsets = [0, 0], sizes = [8, 32], strides = [1, 1]} : vector<8x128xf32> to vector<8x32xf32>
      %934 = arith.negf %933 : vector<8x32xf32>
      %935 = math.exp %934 : vector<8x32xf32>
      %cst_180 = arith.constant 1.000000e+00 : f32
      %936 = vector.broadcast %cst_180 : f32 to vector<8x32xf32>
      %937 = arith.addf %936, %935 : vector<8x32xf32>
      %938 = arith.divf %936, %937 : vector<8x32xf32>
      %939 = vector.extract_strided_slice %907 {offsets = [0, 32], sizes = [8, 32], strides = [1, 1]} : vector<8x128xf32> to vector<8x32xf32>
      %940 = arith.negf %939 : vector<8x32xf32>
      %941 = math.exp %940 : vector<8x32xf32>
      %cst_181 = arith.constant 1.000000e+00 : f32
      %942 = vector.broadcast %cst_181 : f32 to vector<8x32xf32>
      %943 = arith.addf %942, %941 : vector<8x32xf32>
      %944 = arith.divf %942, %943 : vector<8x32xf32>
      %945 = vector.extract_strided_slice %907 {offsets = [0, 64], sizes = [8, 32], strides = [1, 1]} : vector<8x128xf32> to vector<8x32xf32>
      %946 = math.tanh %945 : vector<8x32xf32>
      %947 = vector.extract_strided_slice %907 {offsets = [0, 96], sizes = [8, 32], strides = [1, 1]} : vector<8x128xf32> to vector<8x32xf32>
      %948 = arith.negf %947 : vector<8x32xf32>
      %949 = math.exp %948 : vector<8x32xf32>
      %cst_182 = arith.constant 1.000000e+00 : f32
      %950 = vector.broadcast %cst_182 : f32 to vector<8x32xf32>
      %951 = arith.addf %950, %949 : vector<8x32xf32>
      %952 = arith.divf %950, %951 : vector<8x32xf32>
      %953 = arith.mulf %944, %890 : vector<8x32xf32>
      %954 = arith.mulf %938, %946 : vector<8x32xf32>
      %955 = arith.addf %953, %954 : vector<8x32xf32>
      %956 = math.tanh %955 : vector<8x32xf32>
      %957 = arith.mulf %952, %956 : vector<8x32xf32>
      %958 = vector.broadcast %c9_i32_170 : i32 to vector<8x1xi32>
      %959 = arith.cmpi slt, %958, %32 : vector<8x1xi32>
      %960 = vector.broadcast %891 : i32 to vector<8x1xi32>
      %961 = arith.cmpi slt, %960, %32 : vector<8x1xi32>
      %cst_183 = arith.constant 0.000000e+00 : f32
      %962 = vector.shape_cast %959 : vector<8x1xi1> to vector<8x1xi1>
      %963 = vector.broadcast %962 : vector<8x1xi1> to vector<8x32xi1>
      %964 = vector.broadcast %cst_183 : f32 to vector<8x32xf32>
      %965 = arith.select %963, %932, %964 : vector<8x32xi1>, vector<8x32xf32>
      %966 = arith.index_cast %893 : i32 to index
      %c0_184 = arith.constant 0 : index
      %967 = vector.load %arg8[%966, %c0_184] : memref<80x64xf32, #tpu.memory_space<vmem>>, vector<8x32xf32>
      tpu.vector_store %arg8[%966, %c0_184], %965 {strides = array<i32>} : memref<80x64xf32, #tpu.memory_space<vmem>>, vector<8x32xf32>,
      %cst_185 = arith.constant 0.000000e+00 : f32
      %968 = vector.shape_cast %961 : vector<8x1xi1> to vector<8x1xi1>
      %969 = vector.broadcast %968 : vector<8x1xi1> to vector<8x32xi1>
      %970 = vector.broadcast %cst_185 : f32 to vector<8x32xf32>
      %971 = arith.select %969, %957, %970 : vector<8x32xi1>, vector<8x32xf32>
      %972 = arith.index_cast %895 : i32 to index
      %c32_186 = arith.constant 32 : index
      %973 = vector.load %arg8[%972, %c32_186] : memref<80x64xf32, #tpu.memory_space<vmem>>, vector<8x32xf32>
      tpu.vector_store %arg8[%972, %c32_186], %971 {strides = array<i32>} : memref<80x64xf32, #tpu.memory_space<vmem>>, vector<8x32xf32>,
      %974 = vector.shape_cast %959 : vector<8x1xi1> to vector<8x1xi1>
      %975 = vector.broadcast %974 : vector<8x1xi1> to vector<8x32xi1>
      %976 = arith.select %975, %932, %881 : vector<8x32xi1>, vector<8x32xf32>
      %977 = vector.shape_cast %959 : vector<8x1xi1> to vector<8x1xi1>
      %978 = vector.broadcast %977 : vector<8x1xi1> to vector<8x32xi1>
      %979 = arith.select %978, %930, %884 : vector<8x32xi1>, vector<8x32xf32>
      %980 = vector.shape_cast %961 : vector<8x1xi1> to vector<8x1xi1>
      %981 = vector.broadcast %980 : vector<8x1xi1> to vector<8x32xi1>
      %982 = arith.select %981, %957, %887 : vector<8x32xi1>, vector<8x32xf32>
      %983 = vector.shape_cast %961 : vector<8x1xi1> to vector<8x1xi1>
      %984 = vector.broadcast %983 : vector<8x1xi1> to vector<8x32xi1>
      %985 = arith.select %984, %955, %890 : vector<8x32xi1>, vector<8x32xf32>
      %c10_i32 = arith.constant 10 : i32
      %986 = tpu.concatenate %976, %982 in 1 : vector<8x32xf32>, vector<8x32xf32> -> vector<8x64xf32>
      %c0_187 = arith.constant 0 : index
      %c0_188 = arith.constant 0 : index
      %987 = vector.load %arg6[%c0_187, %c0_188] : memref<8x64xf32, #tpu.memory_space<vmem>>, vector<8x64xf32>
      tpu.vector_store %arg6[%c0_187, %c0_188], %986 {strides = array<i32>} : memref<8x64xf32, #tpu.memory_space<vmem>>, vector<8x64xf32>,
    } else {
    }
    %c0_i32_8 = arith.constant 0 : i32
    %18 = arith.cmpi sgt, %arg0, %c0_i32_8 : i32
    %true = arith.constant true
    %19 = arith.xori %10, %true : i1
    %20 = arith.andi %18, %19 : i1
    %21 = arith.extui %20 : i1 to i32
    %c0_i32_9 = arith.constant 0 : i32
    %22 = arith.cmpi ne, %21, %c0_i32_9 : i32
    scf.if %22 {
      %c0 = arith.constant 0 : index
      %c0_10 = arith.constant 0 : index
      %23 = vector.load %arg8[%c0, %c0_10] : memref<80x64xf32, #tpu.memory_space<vmem>>, vector<80x64xf32>
      %c0_11 = arith.constant 0 : index
      %c0_12 = arith.constant 0 : index
      %c0_13 = arith.constant 0 : index
      %24 = vector.load %arg2[%c0_11, %c0_12, %c0_13] : memref<1x64x256xf32, #tpu.memory_space<vmem>>, vector<1x64x256xf32>
      %25 = vector.shape_cast %24 : vector<1x64x256xf32> to vector<64x256xf32>
      %cst = arith.constant dense<0.000000e+00> : vector<80x256xf32>
      %26 = tpu.matmul %23, %25, %cst {dimension_numbers = #tpu.dot_dimension_numbers<[1], [0], [0], [1], [0, 0, 1, 1], [], []>} : vector<80x64xf32>, vector<64x256xf32>, vector<80x256xf32> -> vector<80x256xf32>
      %c0_14 = arith.constant 0 : index
      %c0_15 = arith.constant 0 : index
      %c0_16 = arith.constant 0 : index
      %27 = vector.load %arg4[%c0_14, %c0_15, %c0_16] : memref<1x1x256xf32, #tpu.memory_space<vmem>>, vector<1x1x256xf32>
      %28 = vector.shape_cast %27 : vector<1x1x256xf32> to vector<1x256xf32>
      %29 = vector.broadcast %28 : vector<1x256xf32> to vector<80x256xf32>
      %30 = arith.addf %26, %29 : vector<80x256xf32>
      %c0_17 = arith.constant 0 : index
      %c0_18 = arith.constant 0 : index
      %31 = vector.load %arg9[%c0_17, %c0_18] : memref<80x256xf32, #tpu.memory_space<vmem>>, vector<80x256xf32>
      tpu.vector_store %arg9[%c0_17, %c0_18], %30 {strides = array<i32>} : memref<80x256xf32, #tpu.memory_space<vmem>>, vector<80x256xf32>,
      %c0_19 = arith.constant 0 : index
      %c0_20 = arith.constant 0 : index
      %32 = vector.load %arg5[%c0_19, %c0_20] : memref<8x1xi32, #tpu.memory_space<vmem>>, vector<8x1xi32>
      %c0_21 = arith.constant 0 : index
      %c0_22 = arith.constant 0 : index
      %c0_23 = arith.constant 0 : index
      %33 = vector.load %arg3[%c0_21, %c0_22, %c0_23] : memref<1x64x256xf32, #tpu.memory_space<vmem>>, vector<1x64x256xf32>
      %34 = vector.shape_cast %33 : vector<1x64x256xf32> to vector<64x256xf32>
      %cst_24 = arith.constant 0.000000e+00 : f32
      %35 = vector.broadcast %cst_24 : f32 to vector<8x32xf32>
      %c0_i32_25 = arith.constant 0 : i32
      %c9_i32 = arith.constant 9 : i32
      %36 = arith.subi %c9_i32, %c0_i32_25 : i32
      %c8_i32 = arith.constant 8 : i32
      %37 = arith.muli %c0_i32_25, %c8_i32 : i32
      %38 = tpu.assume_multiple %37, 8 : i32
      %c8_i32_26 = arith.constant 8 : i32
      %39 = arith.muli %36, %c8_i32_26 : i32
      %40 = tpu.assume_multiple %39, 8 : i32
      %41 = arith.index_cast %38 : i32 to index
      %c0_27 = arith.constant 0 : index
      %42 = vector.load %arg9[%41, %c0_27] : memref<80x256xf32, #tpu.memory_space<vmem>>, vector<8x256xf32>
      %43 = arith.index_cast %40 : i32 to index
      %c0_28 = arith.constant 0 : index
      %44 = vector.load %arg9[%43, %c0_28] : memref<80x256xf32, #tpu.memory_space<vmem>>, vector<8x256xf32>
      %45 = tpu.concatenate %35, %35 in 1 : vector<8x32xf32>, vector<8x32xf32> -> vector<8x64xf32>
      %cst_29 = arith.constant dense<0.000000e+00> : vector<8x256xf32>
      %46 = tpu.matmul %45, %34, %cst_29 {dimension_numbers = #tpu.dot_dimension_numbers<[1], [0], [0], [1], [0, 0, 1, 1], [], []>} : vector<8x64xf32>, vector<64x256xf32>, vector<8x256xf32> -> vector<8x256xf32>
      %47 = vector.extract_strided_slice %42 {offsets = [0, 0], sizes = [8, 128], strides = [1, 1]} : vector<8x256xf32> to vector<8x128xf32>
      %48 = vector.extract_strided_slice %46 {offsets = [0, 0], sizes = [8, 128], strides = [1, 1]} : vector<8x256xf32> to vector<8x128xf32>
      %49 = arith.addf %47, %48 : vector<8x128xf32>
      %50 = vector.extract_strided_slice %44 {offsets = [0, 128], sizes = [8, 128], strides = [1, 1]} : vector<8x256xf32> to vector<8x128xf32>
      %51 = vector.extract_strided_slice %46 {offsets = [0, 128], sizes = [8, 128], strides = [1, 1]} : vector<8x256xf32> to vector<8x128xf32>
      %52 = arith.addf %50, %51 : vector<8x128xf32>
      %53 = vector.extract_strided_slice %49 {offsets = [0, 0], sizes = [8, 32], strides = [1, 1]} : vector<8x128xf32> to vector<8x32xf32>
      %54 = arith.negf %53 : vector<8x32xf32>
      %55 = math.exp %54 : vector<8x32xf32>
      %cst_30 = arith.constant 1.000000e+00 : f32
      %56 = vector.broadcast %cst_30 : f32 to vector<8x32xf32>
      %57 = arith.addf %56, %55 : vector<8x32xf32>
      %58 = arith.divf %56, %57 : vector<8x32xf32>
      %59 = vector.extract_strided_slice %49 {offsets = [0, 32], sizes = [8, 32], strides = [1, 1]} : vector<8x128xf32> to vector<8x32xf32>
      %60 = arith.negf %59 : vector<8x32xf32>
      %61 = math.exp %60 : vector<8x32xf32>
      %cst_31 = arith.constant 1.000000e+00 : f32
      %62 = vector.broadcast %cst_31 : f32 to vector<8x32xf32>
      %63 = arith.addf %62, %61 : vector<8x32xf32>
      %64 = arith.divf %62, %63 : vector<8x32xf32>
      %65 = vector.extract_strided_slice %49 {offsets = [0, 64], sizes = [8, 32], strides = [1, 1]} : vector<8x128xf32> to vector<8x32xf32>
      %66 = math.tanh %65 : vector<8x32xf32>
      %67 = vector.extract_strided_slice %49 {offsets = [0, 96], sizes = [8, 32], strides = [1, 1]} : vector<8x128xf32> to vector<8x32xf32>
      %68 = arith.negf %67 : vector<8x32xf32>
      %69 = math.exp %68 : vector<8x32xf32>
      %cst_32 = arith.constant 1.000000e+00 : f32
      %70 = vector.broadcast %cst_32 : f32 to vector<8x32xf32>
      %71 = arith.addf %70, %69 : vector<8x32xf32>
      %72 = arith.divf %70, %71 : vector<8x32xf32>
      %73 = arith.mulf %64, %35 : vector<8x32xf32>
      %74 = arith.mulf %58, %66 : vector<8x32xf32>
      %75 = arith.addf %73, %74 : vector<8x32xf32>
      %76 = math.tanh %75 : vector<8x32xf32>
      %77 = arith.mulf %72, %76 : vector<8x32xf32>
      %78 = vector.extract_strided_slice %52 {offsets = [0, 0], sizes = [8, 32], strides = [1, 1]} : vector<8x128xf32> to vector<8x32xf32>
      %79 = arith.negf %78 : vector<8x32xf32>
      %80 = math.exp %79 : vector<8x32xf32>
      %cst_33 = arith.constant 1.000000e+00 : f32
      %81 = vector.broadcast %cst_33 : f32 to vector<8x32xf32>
      %82 = arith.addf %81, %80 : vector<8x32xf32>
      %83 = arith.divf %81, %82 : vector<8x32xf32>
      %84 = vector.extract_strided_slice %52 {offsets = [0, 32], sizes = [8, 32], strides = [1, 1]} : vector<8x128xf32> to vector<8x32xf32>
      %85 = arith.negf %84 : vector<8x32xf32>
      %86 = math.exp %85 : vector<8x32xf32>
      %cst_34 = arith.constant 1.000000e+00 : f32
      %87 = vector.broadcast %cst_34 : f32 to vector<8x32xf32>
      %88 = arith.addf %87, %86 : vector<8x32xf32>
      %89 = arith.divf %87, %88 : vector<8x32xf32>
      %90 = vector.extract_strided_slice %52 {offsets = [0, 64], sizes = [8, 32], strides = [1, 1]} : vector<8x128xf32> to vector<8x32xf32>
      %91 = math.tanh %90 : vector<8x32xf32>
      %92 = vector.extract_strided_slice %52 {offsets = [0, 96], sizes = [8, 32], strides = [1, 1]} : vector<8x128xf32> to vector<8x32xf32>
      %93 = arith.negf %92 : vector<8x32xf32>
      %94 = math.exp %93 : vector<8x32xf32>
      %cst_35 = arith.constant 1.000000e+00 : f32
      %95 = vector.broadcast %cst_35 : f32 to vector<8x32xf32>
      %96 = arith.addf %95, %94 : vector<8x32xf32>
      %97 = arith.divf %95, %96 : vector<8x32xf32>
      %98 = arith.mulf %89, %35 : vector<8x32xf32>
      %99 = arith.mulf %83, %91 : vector<8x32xf32>
      %100 = arith.addf %98, %99 : vector<8x32xf32>
      %101 = math.tanh %100 : vector<8x32xf32>
      %102 = arith.mulf %97, %101 : vector<8x32xf32>
      %103 = vector.broadcast %c0_i32_25 : i32 to vector<8x1xi32>
      %104 = arith.cmpi slt, %103, %32 : vector<8x1xi32>
      %105 = vector.broadcast %36 : i32 to vector<8x1xi32>
      %106 = arith.cmpi slt, %105, %32 : vector<8x1xi32>
      %cst_36 = arith.constant 0.000000e+00 : f32
      %107 = vector.shape_cast %104 : vector<8x1xi1> to vector<8x1xi1>
      %108 = vector.broadcast %107 : vector<8x1xi1> to vector<8x32xi1>
      %109 = vector.broadcast %cst_36 : f32 to vector<8x32xf32>
      %110 = arith.select %108, %77, %109 : vector<8x32xi1>, vector<8x32xf32>
      %111 = arith.index_cast %38 : i32 to index
      %c0_37 = arith.constant 0 : index
      %112 = vector.load %arg7[%111, %c0_37] : memref<80x64xf32, #tpu.memory_space<vmem>>, vector<8x32xf32>
      tpu.vector_store %arg7[%111, %c0_37], %110 {strides = array<i32>} : memref<80x64xf32, #tpu.memory_space<vmem>>, vector<8x32xf32>,
      %cst_38 = arith.constant 0.000000e+00 : f32
      %113 = vector.shape_cast %106 : vector<8x1xi1> to vector<8x1xi1>
      %114 = vector.broadcast %113 : vector<8x1xi1> to vector<8x32xi1>
      %115 = vector.broadcast %cst_38 : f32 to vector<8x32xf32>
      %116 = arith.select %114, %102, %115 : vector<8x32xi1>, vector<8x32xf32>
      %117 = arith.index_cast %40 : i32 to index
      %c32 = arith.constant 32 : index
      %118 = vector.load %arg7[%117, %c32] : memref<80x64xf32, #tpu.memory_space<vmem>>, vector<8x32xf32>
      tpu.vector_store %arg7[%117, %c32], %116 {strides = array<i32>} : memref<80x64xf32, #tpu.memory_space<vmem>>, vector<8x32xf32>,
      %119 = vector.shape_cast %104 : vector<8x1xi1> to vector<8x1xi1>
      %120 = vector.broadcast %119 : vector<8x1xi1> to vector<8x32xi1>
      %121 = arith.select %120, %77, %35 : vector<8x32xi1>, vector<8x32xf32>
      %122 = vector.shape_cast %104 : vector<8x1xi1> to vector<8x1xi1>
      %123 = vector.broadcast %122 : vector<8x1xi1> to vector<8x32xi1>
      %124 = arith.select %123, %75, %35 : vector<8x32xi1>, vector<8x32xf32>
      %125 = vector.shape_cast %106 : vector<8x1xi1> to vector<8x1xi1>
      %126 = vector.broadcast %125 : vector<8x1xi1> to vector<8x32xi1>
      %127 = arith.select %126, %102, %35 : vector<8x32xi1>, vector<8x32xf32>
      %128 = vector.shape_cast %106 : vector<8x1xi1> to vector<8x1xi1>
      %129 = vector.broadcast %128 : vector<8x1xi1> to vector<8x32xi1>
      %130 = arith.select %129, %100, %35 : vector<8x32xi1>, vector<8x32xf32>
      %c1_i32_39 = arith.constant 1 : i32
      %c9_i32_40 = arith.constant 9 : i32
      %131 = arith.subi %c9_i32_40, %c1_i32_39 : i32
      %c8_i32_41 = arith.constant 8 : i32
      %132 = arith.muli %c1_i32_39, %c8_i32_41 : i32
      %133 = tpu.assume_multiple %132, 8 : i32
      %c8_i32_42 = arith.constant 8 : i32
      %134 = arith.muli %131, %c8_i32_42 : i32
      %135 = tpu.assume_multiple %134, 8 : i32
      %136 = arith.index_cast %133 : i32 to index
      %c0_43 = arith.constant 0 : index
      %137 = vector.load %arg9[%136, %c0_43] : memref<80x256xf32, #tpu.memory_space<vmem>>, vector<8x256xf32>
      %138 = arith.index_cast %135 : i32 to index
      %c0_44 = arith.constant 0 : index
      %139 = vector.load %arg9[%138, %c0_44] : memref<80x256xf32, #tpu.memory_space<vmem>>, vector<8x256xf32>
      %140 = tpu.concatenate %121, %127 in 1 : vector<8x32xf32>, vector<8x32xf32> -> vector<8x64xf32>
      %cst_45 = arith.constant dense<0.000000e+00> : vector<8x256xf32>
      %141 = tpu.matmul %140, %34, %cst_45 {dimension_numbers = #tpu.dot_dimension_numbers<[1], [0], [0], [1], [0, 0, 1, 1], [], []>} : vector<8x64xf32>, vector<64x256xf32>, vector<8x256xf32> -> vector<8x256xf32>
      %142 = vector.extract_strided_slice %137 {offsets = [0, 0], sizes = [8, 128], strides = [1, 1]} : vector<8x256xf32> to vector<8x128xf32>
      %143 = vector.extract_strided_slice %141 {offsets = [0, 0], sizes = [8, 128], strides = [1, 1]} : vector<8x256xf32> to vector<8x128xf32>
      %144 = arith.addf %142, %143 : vector<8x128xf32>
      %145 = vector.extract_strided_slice %139 {offsets = [0, 128], sizes = [8, 128], strides = [1, 1]} : vector<8x256xf32> to vector<8x128xf32>
      %146 = vector.extract_strided_slice %141 {offsets = [0, 128], sizes = [8, 128], strides = [1, 1]} : vector<8x256xf32> to vector<8x128xf32>
      %147 = arith.addf %145, %146 : vector<8x128xf32>
      %148 = vector.extract_strided_slice %144 {offsets = [0, 0], sizes = [8, 32], strides = [1, 1]} : vector<8x128xf32> to vector<8x32xf32>
      %149 = arith.negf %148 : vector<8x32xf32>
      %150 = math.exp %149 : vector<8x32xf32>
      %cst_46 = arith.constant 1.000000e+00 : f32
      %151 = vector.broadcast %cst_46 : f32 to vector<8x32xf32>
      %152 = arith.addf %151, %150 : vector<8x32xf32>
      %153 = arith.divf %151, %152 : vector<8x32xf32>
      %154 = vector.extract_strided_slice %144 {offsets = [0, 32], sizes = [8, 32], strides = [1, 1]} : vector<8x128xf32> to vector<8x32xf32>
      %155 = arith.negf %154 : vector<8x32xf32>
      %156 = math.exp %155 : vector<8x32xf32>
      %cst_47 = arith.constant 1.000000e+00 : f32
      %157 = vector.broadcast %cst_47 : f32 to vector<8x32xf32>
      %158 = arith.addf %157, %156 : vector<8x32xf32>
      %159 = arith.divf %157, %158 : vector<8x32xf32>
      %160 = vector.extract_strided_slice %144 {offsets = [0, 64], sizes = [8, 32], strides = [1, 1]} : vector<8x128xf32> to vector<8x32xf32>
      %161 = math.tanh %160 : vector<8x32xf32>
      %162 = vector.extract_strided_slice %144 {offsets = [0, 96], sizes = [8, 32], strides = [1, 1]} : vector<8x128xf32> to vector<8x32xf32>
      %163 = arith.negf %162 : vector<8x32xf32>
      %164 = math.exp %163 : vector<8x32xf32>
      %cst_48 = arith.constant 1.000000e+00 : f32
      %165 = vector.broadcast %cst_48 : f32 to vector<8x32xf32>
      %166 = arith.addf %165, %164 : vector<8x32xf32>
      %167 = arith.divf %165, %166 : vector<8x32xf32>
      %168 = arith.mulf %159, %124 : vector<8x32xf32>
      %169 = arith.mulf %153, %161 : vector<8x32xf32>
      %170 = arith.addf %168, %169 : vector<8x32xf32>
      %171 = math.tanh %170 : vector<8x32xf32>
      %172 = arith.mulf %167, %171 : vector<8x32xf32>
      %173 = vector.extract_strided_slice %147 {offsets = [0, 0], sizes = [8, 32], strides = [1, 1]} : vector<8x128xf32> to vector<8x32xf32>
      %174 = arith.negf %173 : vector<8x32xf32>
      %175 = math.exp %174 : vector<8x32xf32>
      %cst_49 = arith.constant 1.000000e+00 : f32
      %176 = vector.broadcast %cst_49 : f32 to vector<8x32xf32>
      %177 = arith.addf %176, %175 : vector<8x32xf32>
      %178 = arith.divf %176, %177 : vector<8x32xf32>
      %179 = vector.extract_strided_slice %147 {offsets = [0, 32], sizes = [8, 32], strides = [1, 1]} : vector<8x128xf32> to vector<8x32xf32>
      %180 = arith.negf %179 : vector<8x32xf32>
      %181 = math.exp %180 : vector<8x32xf32>
      %cst_50 = arith.constant 1.000000e+00 : f32
      %182 = vector.broadcast %cst_50 : f32 to vector<8x32xf32>
      %183 = arith.addf %182, %181 : vector<8x32xf32>
      %184 = arith.divf %182, %183 : vector<8x32xf32>
      %185 = vector.extract_strided_slice %147 {offsets = [0, 64], sizes = [8, 32], strides = [1, 1]} : vector<8x128xf32> to vector<8x32xf32>
      %186 = math.tanh %185 : vector<8x32xf32>
      %187 = vector.extract_strided_slice %147 {offsets = [0, 96], sizes = [8, 32], strides = [1, 1]} : vector<8x128xf32> to vector<8x32xf32>
      %188 = arith.negf %187 : vector<8x32xf32>
      %189 = math.exp %188 : vector<8x32xf32>
      %cst_51 = arith.constant 1.000000e+00 : f32
      %190 = vector.broadcast %cst_51 : f32 to vector<8x32xf32>
      %191 = arith.addf %190, %189 : vector<8x32xf32>
      %192 = arith.divf %190, %191 : vector<8x32xf32>
      %193 = arith.mulf %184, %130 : vector<8x32xf32>
      %194 = arith.mulf %178, %186 : vector<8x32xf32>
      %195 = arith.addf %193, %194 : vector<8x32xf32>
      %196 = math.tanh %195 : vector<8x32xf32>
      %197 = arith.mulf %192, %196 : vector<8x32xf32>
      %198 = vector.broadcast %c1_i32_39 : i32 to vector<8x1xi32>
      %199 = arith.cmpi slt, %198, %32 : vector<8x1xi32>
      %200 = vector.broadcast %131 : i32 to vector<8x1xi32>
      %201 = arith.cmpi slt, %200, %32 : vector<8x1xi32>
      %cst_52 = arith.constant 0.000000e+00 : f32
      %202 = vector.shape_cast %199 : vector<8x1xi1> to vector<8x1xi1>
      %203 = vector.broadcast %202 : vector<8x1xi1> to vector<8x32xi1>
      %204 = vector.broadcast %cst_52 : f32 to vector<8x32xf32>
      %205 = arith.select %203, %172, %204 : vector<8x32xi1>, vector<8x32xf32>
      %206 = arith.index_cast %133 : i32 to index
      %c0_53 = arith.constant 0 : index
      %207 = vector.load %arg7[%206, %c0_53] : memref<80x64xf32, #tpu.memory_space<vmem>>, vector<8x32xf32>
      tpu.vector_store %arg7[%206, %c0_53], %205 {strides = array<i32>} : memref<80x64xf32, #tpu.memory_space<vmem>>, vector<8x32xf32>,
      %cst_54 = arith.constant 0.000000e+00 : f32
      %208 = vector.shape_cast %201 : vector<8x1xi1> to vector<8x1xi1>
      %209 = vector.broadcast %208 : vector<8x1xi1> to vector<8x32xi1>
      %210 = vector.broadcast %cst_54 : f32 to vector<8x32xf32>
      %211 = arith.select %209, %197, %210 : vector<8x32xi1>, vector<8x32xf32>
      %212 = arith.index_cast %135 : i32 to index
      %c32_55 = arith.constant 32 : index
      %213 = vector.load %arg7[%212, %c32_55] : memref<80x64xf32, #tpu.memory_space<vmem>>, vector<8x32xf32>
      tpu.vector_store %arg7[%212, %c32_55], %211 {strides = array<i32>} : memref<80x64xf32, #tpu.memory_space<vmem>>, vector<8x32xf32>,
      %214 = vector.shape_cast %199 : vector<8x1xi1> to vector<8x1xi1>
      %215 = vector.broadcast %214 : vector<8x1xi1> to vector<8x32xi1>
      %216 = arith.select %215, %172, %121 : vector<8x32xi1>, vector<8x32xf32>
      %217 = vector.shape_cast %199 : vector<8x1xi1> to vector<8x1xi1>
      %218 = vector.broadcast %217 : vector<8x1xi1> to vector<8x32xi1>
      %219 = arith.select %218, %170, %124 : vector<8x32xi1>, vector<8x32xf32>
      %220 = vector.shape_cast %201 : vector<8x1xi1> to vector<8x1xi1>
      %221 = vector.broadcast %220 : vector<8x1xi1> to vector<8x32xi1>
      %222 = arith.select %221, %197, %127 : vector<8x32xi1>, vector<8x32xf32>
      %223 = vector.shape_cast %201 : vector<8x1xi1> to vector<8x1xi1>
      %224 = vector.broadcast %223 : vector<8x1xi1> to vector<8x32xi1>
      %225 = arith.select %224, %195, %130 : vector<8x32xi1>, vector<8x32xf32>
      %c2_i32_56 = arith.constant 2 : i32
      %c9_i32_57 = arith.constant 9 : i32
      %226 = arith.subi %c9_i32_57, %c2_i32_56 : i32
      %c8_i32_58 = arith.constant 8 : i32
      %227 = arith.muli %c2_i32_56, %c8_i32_58 : i32
      %228 = tpu.assume_multiple %227, 8 : i32
      %c8_i32_59 = arith.constant 8 : i32
      %229 = arith.muli %226, %c8_i32_59 : i32
      %230 = tpu.assume_multiple %229, 8 : i32
      %231 = arith.index_cast %228 : i32 to index
      %c0_60 = arith.constant 0 : index
      %232 = vector.load %arg9[%231, %c0_60] : memref<80x256xf32, #tpu.memory_space<vmem>>, vector<8x256xf32>
      %233 = arith.index_cast %230 : i32 to index
      %c0_61 = arith.constant 0 : index
      %234 = vector.load %arg9[%233, %c0_61] : memref<80x256xf32, #tpu.memory_space<vmem>>, vector<8x256xf32>
      %235 = tpu.concatenate %216, %222 in 1 : vector<8x32xf32>, vector<8x32xf32> -> vector<8x64xf32>
      %cst_62 = arith.constant dense<0.000000e+00> : vector<8x256xf32>
      %236 = tpu.matmul %235, %34, %cst_62 {dimension_numbers = #tpu.dot_dimension_numbers<[1], [0], [0], [1], [0, 0, 1, 1], [], []>} : vector<8x64xf32>, vector<64x256xf32>, vector<8x256xf32> -> vector<8x256xf32>
      %237 = vector.extract_strided_slice %232 {offsets = [0, 0], sizes = [8, 128], strides = [1, 1]} : vector<8x256xf32> to vector<8x128xf32>
      %238 = vector.extract_strided_slice %236 {offsets = [0, 0], sizes = [8, 128], strides = [1, 1]} : vector<8x256xf32> to vector<8x128xf32>
      %239 = arith.addf %237, %238 : vector<8x128xf32>
      %240 = vector.extract_strided_slice %234 {offsets = [0, 128], sizes = [8, 128], strides = [1, 1]} : vector<8x256xf32> to vector<8x128xf32>
      %241 = vector.extract_strided_slice %236 {offsets = [0, 128], sizes = [8, 128], strides = [1, 1]} : vector<8x256xf32> to vector<8x128xf32>
      %242 = arith.addf %240, %241 : vector<8x128xf32>
      %243 = vector.extract_strided_slice %239 {offsets = [0, 0], sizes = [8, 32], strides = [1, 1]} : vector<8x128xf32> to vector<8x32xf32>
      %244 = arith.negf %243 : vector<8x32xf32>
      %245 = math.exp %244 : vector<8x32xf32>
      %cst_63 = arith.constant 1.000000e+00 : f32
      %246 = vector.broadcast %cst_63 : f32 to vector<8x32xf32>
      %247 = arith.addf %246, %245 : vector<8x32xf32>
      %248 = arith.divf %246, %247 : vector<8x32xf32>
      %249 = vector.extract_strided_slice %239 {offsets = [0, 32], sizes = [8, 32], strides = [1, 1]} : vector<8x128xf32> to vector<8x32xf32>
      %250 = arith.negf %249 : vector<8x32xf32>
      %251 = math.exp %250 : vector<8x32xf32>
      %cst_64 = arith.constant 1.000000e+00 : f32
      %252 = vector.broadcast %cst_64 : f32 to vector<8x32xf32>
      %253 = arith.addf %252, %251 : vector<8x32xf32>
      %254 = arith.divf %252, %253 : vector<8x32xf32>
      %255 = vector.extract_strided_slice %239 {offsets = [0, 64], sizes = [8, 32], strides = [1, 1]} : vector<8x128xf32> to vector<8x32xf32>
      %256 = math.tanh %255 : vector<8x32xf32>
      %257 = vector.extract_strided_slice %239 {offsets = [0, 96], sizes = [8, 32], strides = [1, 1]} : vector<8x128xf32> to vector<8x32xf32>
      %258 = arith.negf %257 : vector<8x32xf32>
      %259 = math.exp %258 : vector<8x32xf32>
      %cst_65 = arith.constant 1.000000e+00 : f32
      %260 = vector.broadcast %cst_65 : f32 to vector<8x32xf32>
      %261 = arith.addf %260, %259 : vector<8x32xf32>
      %262 = arith.divf %260, %261 : vector<8x32xf32>
      %263 = arith.mulf %254, %219 : vector<8x32xf32>
      %264 = arith.mulf %248, %256 : vector<8x32xf32>
      %265 = arith.addf %263, %264 : vector<8x32xf32>
      %266 = math.tanh %265 : vector<8x32xf32>
      %267 = arith.mulf %262, %266 : vector<8x32xf32>
      %268 = vector.extract_strided_slice %242 {offsets = [0, 0], sizes = [8, 32], strides = [1, 1]} : vector<8x128xf32> to vector<8x32xf32>
      %269 = arith.negf %268 : vector<8x32xf32>
      %270 = math.exp %269 : vector<8x32xf32>
      %cst_66 = arith.constant 1.000000e+00 : f32
      %271 = vector.broadcast %cst_66 : f32 to vector<8x32xf32>
      %272 = arith.addf %271, %270 : vector<8x32xf32>
      %273 = arith.divf %271, %272 : vector<8x32xf32>
      %274 = vector.extract_strided_slice %242 {offsets = [0, 32], sizes = [8, 32], strides = [1, 1]} : vector<8x128xf32> to vector<8x32xf32>
      %275 = arith.negf %274 : vector<8x32xf32>
      %276 = math.exp %275 : vector<8x32xf32>
      %cst_67 = arith.constant 1.000000e+00 : f32
      %277 = vector.broadcast %cst_67 : f32 to vector<8x32xf32>
      %278 = arith.addf %277, %276 : vector<8x32xf32>
      %279 = arith.divf %277, %278 : vector<8x32xf32>
      %280 = vector.extract_strided_slice %242 {offsets = [0, 64], sizes = [8, 32], strides = [1, 1]} : vector<8x128xf32> to vector<8x32xf32>
      %281 = math.tanh %280 : vector<8x32xf32>
      %282 = vector.extract_strided_slice %242 {offsets = [0, 96], sizes = [8, 32], strides = [1, 1]} : vector<8x128xf32> to vector<8x32xf32>
      %283 = arith.negf %282 : vector<8x32xf32>
      %284 = math.exp %283 : vector<8x32xf32>
      %cst_68 = arith.constant 1.000000e+00 : f32
      %285 = vector.broadcast %cst_68 : f32 to vector<8x32xf32>
      %286 = arith.addf %285, %284 : vector<8x32xf32>
      %287 = arith.divf %285, %286 : vector<8x32xf32>
      %288 = arith.mulf %279, %225 : vector<8x32xf32>
      %289 = arith.mulf %273, %281 : vector<8x32xf32>
      %290 = arith.addf %288, %289 : vector<8x32xf32>
      %291 = math.tanh %290 : vector<8x32xf32>
      %292 = arith.mulf %287, %291 : vector<8x32xf32>
      %293 = vector.broadcast %c2_i32_56 : i32 to vector<8x1xi32>
      %294 = arith.cmpi slt, %293, %32 : vector<8x1xi32>
      %295 = vector.broadcast %226 : i32 to vector<8x1xi32>
      %296 = arith.cmpi slt, %295, %32 : vector<8x1xi32>
      %cst_69 = arith.constant 0.000000e+00 : f32
      %297 = vector.shape_cast %294 : vector<8x1xi1> to vector<8x1xi1>
      %298 = vector.broadcast %297 : vector<8x1xi1> to vector<8x32xi1>
      %299 = vector.broadcast %cst_69 : f32 to vector<8x32xf32>
      %300 = arith.select %298, %267, %299 : vector<8x32xi1>, vector<8x32xf32>
      %301 = arith.index_cast %228 : i32 to index
      %c0_70 = arith.constant 0 : index
      %302 = vector.load %arg7[%301, %c0_70] : memref<80x64xf32, #tpu.memory_space<vmem>>, vector<8x32xf32>
      tpu.vector_store %arg7[%301, %c0_70], %300 {strides = array<i32>} : memref<80x64xf32, #tpu.memory_space<vmem>>, vector<8x32xf32>,
      %cst_71 = arith.constant 0.000000e+00 : f32
      %303 = vector.shape_cast %296 : vector<8x1xi1> to vector<8x1xi1>
      %304 = vector.broadcast %303 : vector<8x1xi1> to vector<8x32xi1>
      %305 = vector.broadcast %cst_71 : f32 to vector<8x32xf32>
      %306 = arith.select %304, %292, %305 : vector<8x32xi1>, vector<8x32xf32>
      %307 = arith.index_cast %230 : i32 to index
      %c32_72 = arith.constant 32 : index
      %308 = vector.load %arg7[%307, %c32_72] : memref<80x64xf32, #tpu.memory_space<vmem>>, vector<8x32xf32>
      tpu.vector_store %arg7[%307, %c32_72], %306 {strides = array<i32>} : memref<80x64xf32, #tpu.memory_space<vmem>>, vector<8x32xf32>,
      %309 = vector.shape_cast %294 : vector<8x1xi1> to vector<8x1xi1>
      %310 = vector.broadcast %309 : vector<8x1xi1> to vector<8x32xi1>
      %311 = arith.select %310, %267, %216 : vector<8x32xi1>, vector<8x32xf32>
      %312 = vector.shape_cast %294 : vector<8x1xi1> to vector<8x1xi1>
      %313 = vector.broadcast %312 : vector<8x1xi1> to vector<8x32xi1>
      %314 = arith.select %313, %265, %219 : vector<8x32xi1>, vector<8x32xf32>
      %315 = vector.shape_cast %296 : vector<8x1xi1> to vector<8x1xi1>
      %316 = vector.broadcast %315 : vector<8x1xi1> to vector<8x32xi1>
      %317 = arith.select %316, %292, %222 : vector<8x32xi1>, vector<8x32xf32>
      %318 = vector.shape_cast %296 : vector<8x1xi1> to vector<8x1xi1>
      %319 = vector.broadcast %318 : vector<8x1xi1> to vector<8x32xi1>
      %320 = arith.select %319, %290, %225 : vector<8x32xi1>, vector<8x32xf32>
      %c3_i32 = arith.constant 3 : i32
      %c9_i32_73 = arith.constant 9 : i32
      %321 = arith.subi %c9_i32_73, %c3_i32 : i32
      %c8_i32_74 = arith.constant 8 : i32
      %322 = arith.muli %c3_i32, %c8_i32_74 : i32
      %323 = tpu.assume_multiple %322, 8 : i32
      %c8_i32_75 = arith.constant 8 : i32
      %324 = arith.muli %321, %c8_i32_75 : i32
      %325 = tpu.assume_multiple %324, 8 : i32
      %326 = arith.index_cast %323 : i32 to index
      %c0_76 = arith.constant 0 : index
      %327 = vector.load %arg9[%326, %c0_76] : memref<80x256xf32, #tpu.memory_space<vmem>>, vector<8x256xf32>
      %328 = arith.index_cast %325 : i32 to index
      %c0_77 = arith.constant 0 : index
      %329 = vector.load %arg9[%328, %c0_77] : memref<80x256xf32, #tpu.memory_space<vmem>>, vector<8x256xf32>
      %330 = tpu.concatenate %311, %317 in 1 : vector<8x32xf32>, vector<8x32xf32> -> vector<8x64xf32>
      %cst_78 = arith.constant dense<0.000000e+00> : vector<8x256xf32>
      %331 = tpu.matmul %330, %34, %cst_78 {dimension_numbers = #tpu.dot_dimension_numbers<[1], [0], [0], [1], [0, 0, 1, 1], [], []>} : vector<8x64xf32>, vector<64x256xf32>, vector<8x256xf32> -> vector<8x256xf32>
      %332 = vector.extract_strided_slice %327 {offsets = [0, 0], sizes = [8, 128], strides = [1, 1]} : vector<8x256xf32> to vector<8x128xf32>
      %333 = vector.extract_strided_slice %331 {offsets = [0, 0], sizes = [8, 128], strides = [1, 1]} : vector<8x256xf32> to vector<8x128xf32>
      %334 = arith.addf %332, %333 : vector<8x128xf32>
      %335 = vector.extract_strided_slice %329 {offsets = [0, 128], sizes = [8, 128], strides = [1, 1]} : vector<8x256xf32> to vector<8x128xf32>
      %336 = vector.extract_strided_slice %331 {offsets = [0, 128], sizes = [8, 128], strides = [1, 1]} : vector<8x256xf32> to vector<8x128xf32>
      %337 = arith.addf %335, %336 : vector<8x128xf32>
      %338 = vector.extract_strided_slice %334 {offsets = [0, 0], sizes = [8, 32], strides = [1, 1]} : vector<8x128xf32> to vector<8x32xf32>
      %339 = arith.negf %338 : vector<8x32xf32>
      %340 = math.exp %339 : vector<8x32xf32>
      %cst_79 = arith.constant 1.000000e+00 : f32
      %341 = vector.broadcast %cst_79 : f32 to vector<8x32xf32>
      %342 = arith.addf %341, %340 : vector<8x32xf32>
      %343 = arith.divf %341, %342 : vector<8x32xf32>
      %344 = vector.extract_strided_slice %334 {offsets = [0, 32], sizes = [8, 32], strides = [1, 1]} : vector<8x128xf32> to vector<8x32xf32>
      %345 = arith.negf %344 : vector<8x32xf32>
      %346 = math.exp %345 : vector<8x32xf32>
      %cst_80 = arith.constant 1.000000e+00 : f32
      %347 = vector.broadcast %cst_80 : f32 to vector<8x32xf32>
      %348 = arith.addf %347, %346 : vector<8x32xf32>
      %349 = arith.divf %347, %348 : vector<8x32xf32>
      %350 = vector.extract_strided_slice %334 {offsets = [0, 64], sizes = [8, 32], strides = [1, 1]} : vector<8x128xf32> to vector<8x32xf32>
      %351 = math.tanh %350 : vector<8x32xf32>
      %352 = vector.extract_strided_slice %334 {offsets = [0, 96], sizes = [8, 32], strides = [1, 1]} : vector<8x128xf32> to vector<8x32xf32>
      %353 = arith.negf %352 : vector<8x32xf32>
      %354 = math.exp %353 : vector<8x32xf32>
      %cst_81 = arith.constant 1.000000e+00 : f32
      %355 = vector.broadcast %cst_81 : f32 to vector<8x32xf32>
      %356 = arith.addf %355, %354 : vector<8x32xf32>
      %357 = arith.divf %355, %356 : vector<8x32xf32>
      %358 = arith.mulf %349, %314 : vector<8x32xf32>
      %359 = arith.mulf %343, %351 : vector<8x32xf32>
      %360 = arith.addf %358, %359 : vector<8x32xf32>
      %361 = math.tanh %360 : vector<8x32xf32>
      %362 = arith.mulf %357, %361 : vector<8x32xf32>
      %363 = vector.extract_strided_slice %337 {offsets = [0, 0], sizes = [8, 32], strides = [1, 1]} : vector<8x128xf32> to vector<8x32xf32>
      %364 = arith.negf %363 : vector<8x32xf32>
      %365 = math.exp %364 : vector<8x32xf32>
      %cst_82 = arith.constant 1.000000e+00 : f32
      %366 = vector.broadcast %cst_82 : f32 to vector<8x32xf32>
      %367 = arith.addf %366, %365 : vector<8x32xf32>
      %368 = arith.divf %366, %367 : vector<8x32xf32>
      %369 = vector.extract_strided_slice %337 {offsets = [0, 32], sizes = [8, 32], strides = [1, 1]} : vector<8x128xf32> to vector<8x32xf32>
      %370 = arith.negf %369 : vector<8x32xf32>
      %371 = math.exp %370 : vector<8x32xf32>
      %cst_83 = arith.constant 1.000000e+00 : f32
      %372 = vector.broadcast %cst_83 : f32 to vector<8x32xf32>
      %373 = arith.addf %372, %371 : vector<8x32xf32>
      %374 = arith.divf %372, %373 : vector<8x32xf32>
      %375 = vector.extract_strided_slice %337 {offsets = [0, 64], sizes = [8, 32], strides = [1, 1]} : vector<8x128xf32> to vector<8x32xf32>
      %376 = math.tanh %375 : vector<8x32xf32>
      %377 = vector.extract_strided_slice %337 {offsets = [0, 96], sizes = [8, 32], strides = [1, 1]} : vector<8x128xf32> to vector<8x32xf32>
      %378 = arith.negf %377 : vector<8x32xf32>
      %379 = math.exp %378 : vector<8x32xf32>
      %cst_84 = arith.constant 1.000000e+00 : f32
      %380 = vector.broadcast %cst_84 : f32 to vector<8x32xf32>
      %381 = arith.addf %380, %379 : vector<8x32xf32>
      %382 = arith.divf %380, %381 : vector<8x32xf32>
      %383 = arith.mulf %374, %320 : vector<8x32xf32>
      %384 = arith.mulf %368, %376 : vector<8x32xf32>
      %385 = arith.addf %383, %384 : vector<8x32xf32>
      %386 = math.tanh %385 : vector<8x32xf32>
      %387 = arith.mulf %382, %386 : vector<8x32xf32>
      %388 = vector.broadcast %c3_i32 : i32 to vector<8x1xi32>
      %389 = arith.cmpi slt, %388, %32 : vector<8x1xi32>
      %390 = vector.broadcast %321 : i32 to vector<8x1xi32>
      %391 = arith.cmpi slt, %390, %32 : vector<8x1xi32>
      %cst_85 = arith.constant 0.000000e+00 : f32
      %392 = vector.shape_cast %389 : vector<8x1xi1> to vector<8x1xi1>
      %393 = vector.broadcast %392 : vector<8x1xi1> to vector<8x32xi1>
      %394 = vector.broadcast %cst_85 : f32 to vector<8x32xf32>
      %395 = arith.select %393, %362, %394 : vector<8x32xi1>, vector<8x32xf32>
      %396 = arith.index_cast %323 : i32 to index
      %c0_86 = arith.constant 0 : index
      %397 = vector.load %arg7[%396, %c0_86] : memref<80x64xf32, #tpu.memory_space<vmem>>, vector<8x32xf32>
      tpu.vector_store %arg7[%396, %c0_86], %395 {strides = array<i32>} : memref<80x64xf32, #tpu.memory_space<vmem>>, vector<8x32xf32>,
      %cst_87 = arith.constant 0.000000e+00 : f32
      %398 = vector.shape_cast %391 : vector<8x1xi1> to vector<8x1xi1>
      %399 = vector.broadcast %398 : vector<8x1xi1> to vector<8x32xi1>
      %400 = vector.broadcast %cst_87 : f32 to vector<8x32xf32>
      %401 = arith.select %399, %387, %400 : vector<8x32xi1>, vector<8x32xf32>
      %402 = arith.index_cast %325 : i32 to index
      %c32_88 = arith.constant 32 : index
      %403 = vector.load %arg7[%402, %c32_88] : memref<80x64xf32, #tpu.memory_space<vmem>>, vector<8x32xf32>
      tpu.vector_store %arg7[%402, %c32_88], %401 {strides = array<i32>} : memref<80x64xf32, #tpu.memory_space<vmem>>, vector<8x32xf32>,
      %404 = vector.shape_cast %389 : vector<8x1xi1> to vector<8x1xi1>
      %405 = vector.broadcast %404 : vector<8x1xi1> to vector<8x32xi1>
      %406 = arith.select %405, %362, %311 : vector<8x32xi1>, vector<8x32xf32>
      %407 = vector.shape_cast %389 : vector<8x1xi1> to vector<8x1xi1>
      %408 = vector.broadcast %407 : vector<8x1xi1> to vector<8x32xi1>
      %409 = arith.select %408, %360, %314 : vector<8x32xi1>, vector<8x32xf32>
      %410 = vector.shape_cast %391 : vector<8x1xi1> to vector<8x1xi1>
      %411 = vector.broadcast %410 : vector<8x1xi1> to vector<8x32xi1>
      %412 = arith.select %411, %387, %317 : vector<8x32xi1>, vector<8x32xf32>
      %413 = vector.shape_cast %391 : vector<8x1xi1> to vector<8x1xi1>
      %414 = vector.broadcast %413 : vector<8x1xi1> to vector<8x32xi1>
      %415 = arith.select %414, %385, %320 : vector<8x32xi1>, vector<8x32xf32>
      %c4_i32 = arith.constant 4 : i32
      %c9_i32_89 = arith.constant 9 : i32
      %416 = arith.subi %c9_i32_89, %c4_i32 : i32
      %c8_i32_90 = arith.constant 8 : i32
      %417 = arith.muli %c4_i32, %c8_i32_90 : i32
      %418 = tpu.assume_multiple %417, 8 : i32
      %c8_i32_91 = arith.constant 8 : i32
      %419 = arith.muli %416, %c8_i32_91 : i32
      %420 = tpu.assume_multiple %419, 8 : i32
      %421 = arith.index_cast %418 : i32 to index
      %c0_92 = arith.constant 0 : index
      %422 = vector.load %arg9[%421, %c0_92] : memref<80x256xf32, #tpu.memory_space<vmem>>, vector<8x256xf32>
      %423 = arith.index_cast %420 : i32 to index
      %c0_93 = arith.constant 0 : index
      %424 = vector.load %arg9[%423, %c0_93] : memref<80x256xf32, #tpu.memory_space<vmem>>, vector<8x256xf32>
      %425 = tpu.concatenate %406, %412 in 1 : vector<8x32xf32>, vector<8x32xf32> -> vector<8x64xf32>
      %cst_94 = arith.constant dense<0.000000e+00> : vector<8x256xf32>
      %426 = tpu.matmul %425, %34, %cst_94 {dimension_numbers = #tpu.dot_dimension_numbers<[1], [0], [0], [1], [0, 0, 1, 1], [], []>} : vector<8x64xf32>, vector<64x256xf32>, vector<8x256xf32> -> vector<8x256xf32>
      %427 = vector.extract_strided_slice %422 {offsets = [0, 0], sizes = [8, 128], strides = [1, 1]} : vector<8x256xf32> to vector<8x128xf32>
      %428 = vector.extract_strided_slice %426 {offsets = [0, 0], sizes = [8, 128], strides = [1, 1]} : vector<8x256xf32> to vector<8x128xf32>
      %429 = arith.addf %427, %428 : vector<8x128xf32>
      %430 = vector.extract_strided_slice %424 {offsets = [0, 128], sizes = [8, 128], strides = [1, 1]} : vector<8x256xf32> to vector<8x128xf32>
      %431 = vector.extract_strided_slice %426 {offsets = [0, 128], sizes = [8, 128], strides = [1, 1]} : vector<8x256xf32> to vector<8x128xf32>
      %432 = arith.addf %430, %431 : vector<8x128xf32>
      %433 = vector.extract_strided_slice %429 {offsets = [0, 0], sizes = [8, 32], strides = [1, 1]} : vector<8x128xf32> to vector<8x32xf32>
      %434 = arith.negf %433 : vector<8x32xf32>
      %435 = math.exp %434 : vector<8x32xf32>
      %cst_95 = arith.constant 1.000000e+00 : f32
      %436 = vector.broadcast %cst_95 : f32 to vector<8x32xf32>
      %437 = arith.addf %436, %435 : vector<8x32xf32>
      %438 = arith.divf %436, %437 : vector<8x32xf32>
      %439 = vector.extract_strided_slice %429 {offsets = [0, 32], sizes = [8, 32], strides = [1, 1]} : vector<8x128xf32> to vector<8x32xf32>
      %440 = arith.negf %439 : vector<8x32xf32>
      %441 = math.exp %440 : vector<8x32xf32>
      %cst_96 = arith.constant 1.000000e+00 : f32
      %442 = vector.broadcast %cst_96 : f32 to vector<8x32xf32>
      %443 = arith.addf %442, %441 : vector<8x32xf32>
      %444 = arith.divf %442, %443 : vector<8x32xf32>
      %445 = vector.extract_strided_slice %429 {offsets = [0, 64], sizes = [8, 32], strides = [1, 1]} : vector<8x128xf32> to vector<8x32xf32>
      %446 = math.tanh %445 : vector<8x32xf32>
      %447 = vector.extract_strided_slice %429 {offsets = [0, 96], sizes = [8, 32], strides = [1, 1]} : vector<8x128xf32> to vector<8x32xf32>
      %448 = arith.negf %447 : vector<8x32xf32>
      %449 = math.exp %448 : vector<8x32xf32>
      %cst_97 = arith.constant 1.000000e+00 : f32
      %450 = vector.broadcast %cst_97 : f32 to vector<8x32xf32>
      %451 = arith.addf %450, %449 : vector<8x32xf32>
      %452 = arith.divf %450, %451 : vector<8x32xf32>
      %453 = arith.mulf %444, %409 : vector<8x32xf32>
      %454 = arith.mulf %438, %446 : vector<8x32xf32>
      %455 = arith.addf %453, %454 : vector<8x32xf32>
      %456 = math.tanh %455 : vector<8x32xf32>
      %457 = arith.mulf %452, %456 : vector<8x32xf32>
      %458 = vector.extract_strided_slice %432 {offsets = [0, 0], sizes = [8, 32], strides = [1, 1]} : vector<8x128xf32> to vector<8x32xf32>
      %459 = arith.negf %458 : vector<8x32xf32>
      %460 = math.exp %459 : vector<8x32xf32>
      %cst_98 = arith.constant 1.000000e+00 : f32
      %461 = vector.broadcast %cst_98 : f32 to vector<8x32xf32>
      %462 = arith.addf %461, %460 : vector<8x32xf32>
      %463 = arith.divf %461, %462 : vector<8x32xf32>
      %464 = vector.extract_strided_slice %432 {offsets = [0, 32], sizes = [8, 32], strides = [1, 1]} : vector<8x128xf32> to vector<8x32xf32>
      %465 = arith.negf %464 : vector<8x32xf32>
      %466 = math.exp %465 : vector<8x32xf32>
      %cst_99 = arith.constant 1.000000e+00 : f32
      %467 = vector.broadcast %cst_99 : f32 to vector<8x32xf32>
      %468 = arith.addf %467, %466 : vector<8x32xf32>
      %469 = arith.divf %467, %468 : vector<8x32xf32>
      %470 = vector.extract_strided_slice %432 {offsets = [0, 64], sizes = [8, 32], strides = [1, 1]} : vector<8x128xf32> to vector<8x32xf32>
      %471 = math.tanh %470 : vector<8x32xf32>
      %472 = vector.extract_strided_slice %432 {offsets = [0, 96], sizes = [8, 32], strides = [1, 1]} : vector<8x128xf32> to vector<8x32xf32>
      %473 = arith.negf %472 : vector<8x32xf32>
      %474 = math.exp %473 : vector<8x32xf32>
      %cst_100 = arith.constant 1.000000e+00 : f32
      %475 = vector.broadcast %cst_100 : f32 to vector<8x32xf32>
      %476 = arith.addf %475, %474 : vector<8x32xf32>
      %477 = arith.divf %475, %476 : vector<8x32xf32>
      %478 = arith.mulf %469, %415 : vector<8x32xf32>
      %479 = arith.mulf %463, %471 : vector<8x32xf32>
      %480 = arith.addf %478, %479 : vector<8x32xf32>
      %481 = math.tanh %480 : vector<8x32xf32>
      %482 = arith.mulf %477, %481 : vector<8x32xf32>
      %483 = vector.broadcast %c4_i32 : i32 to vector<8x1xi32>
      %484 = arith.cmpi slt, %483, %32 : vector<8x1xi32>
      %485 = vector.broadcast %416 : i32 to vector<8x1xi32>
      %486 = arith.cmpi slt, %485, %32 : vector<8x1xi32>
      %cst_101 = arith.constant 0.000000e+00 : f32
      %487 = vector.shape_cast %484 : vector<8x1xi1> to vector<8x1xi1>
      %488 = vector.broadcast %487 : vector<8x1xi1> to vector<8x32xi1>
      %489 = vector.broadcast %cst_101 : f32 to vector<8x32xf32>
      %490 = arith.select %488, %457, %489 : vector<8x32xi1>, vector<8x32xf32>
      %491 = arith.index_cast %418 : i32 to index
      %c0_102 = arith.constant 0 : index
      %492 = vector.load %arg7[%491, %c0_102] : memref<80x64xf32, #tpu.memory_space<vmem>>, vector<8x32xf32>
      tpu.vector_store %arg7[%491, %c0_102], %490 {strides = array<i32>} : memref<80x64xf32, #tpu.memory_space<vmem>>, vector<8x32xf32>,
      %cst_103 = arith.constant 0.000000e+00 : f32
      %493 = vector.shape_cast %486 : vector<8x1xi1> to vector<8x1xi1>
      %494 = vector.broadcast %493 : vector<8x1xi1> to vector<8x32xi1>
      %495 = vector.broadcast %cst_103 : f32 to vector<8x32xf32>
      %496 = arith.select %494, %482, %495 : vector<8x32xi1>, vector<8x32xf32>
      %497 = arith.index_cast %420 : i32 to index
      %c32_104 = arith.constant 32 : index
      %498 = vector.load %arg7[%497, %c32_104] : memref<80x64xf32, #tpu.memory_space<vmem>>, vector<8x32xf32>
      tpu.vector_store %arg7[%497, %c32_104], %496 {strides = array<i32>} : memref<80x64xf32, #tpu.memory_space<vmem>>, vector<8x32xf32>,
      %499 = vector.shape_cast %484 : vector<8x1xi1> to vector<8x1xi1>
      %500 = vector.broadcast %499 : vector<8x1xi1> to vector<8x32xi1>
      %501 = arith.select %500, %457, %406 : vector<8x32xi1>, vector<8x32xf32>
      %502 = vector.shape_cast %484 : vector<8x1xi1> to vector<8x1xi1>
      %503 = vector.broadcast %502 : vector<8x1xi1> to vector<8x32xi1>
      %504 = arith.select %503, %455, %409 : vector<8x32xi1>, vector<8x32xf32>
      %505 = vector.shape_cast %486 : vector<8x1xi1> to vector<8x1xi1>
      %506 = vector.broadcast %505 : vector<8x1xi1> to vector<8x32xi1>
      %507 = arith.select %506, %482, %412 : vector<8x32xi1>, vector<8x32xf32>
      %508 = vector.shape_cast %486 : vector<8x1xi1> to vector<8x1xi1>
      %509 = vector.broadcast %508 : vector<8x1xi1> to vector<8x32xi1>
      %510 = arith.select %509, %480, %415 : vector<8x32xi1>, vector<8x32xf32>
      %c5_i32 = arith.constant 5 : i32
      %c9_i32_105 = arith.constant 9 : i32
      %511 = arith.subi %c9_i32_105, %c5_i32 : i32
      %c8_i32_106 = arith.constant 8 : i32
      %512 = arith.muli %c5_i32, %c8_i32_106 : i32
      %513 = tpu.assume_multiple %512, 8 : i32
      %c8_i32_107 = arith.constant 8 : i32
      %514 = arith.muli %511, %c8_i32_107 : i32
      %515 = tpu.assume_multiple %514, 8 : i32
      %516 = arith.index_cast %513 : i32 to index
      %c0_108 = arith.constant 0 : index
      %517 = vector.load %arg9[%516, %c0_108] : memref<80x256xf32, #tpu.memory_space<vmem>>, vector<8x256xf32>
      %518 = arith.index_cast %515 : i32 to index
      %c0_109 = arith.constant 0 : index
      %519 = vector.load %arg9[%518, %c0_109] : memref<80x256xf32, #tpu.memory_space<vmem>>, vector<8x256xf32>
      %520 = tpu.concatenate %501, %507 in 1 : vector<8x32xf32>, vector<8x32xf32> -> vector<8x64xf32>
      %cst_110 = arith.constant dense<0.000000e+00> : vector<8x256xf32>
      %521 = tpu.matmul %520, %34, %cst_110 {dimension_numbers = #tpu.dot_dimension_numbers<[1], [0], [0], [1], [0, 0, 1, 1], [], []>} : vector<8x64xf32>, vector<64x256xf32>, vector<8x256xf32> -> vector<8x256xf32>
      %522 = vector.extract_strided_slice %517 {offsets = [0, 0], sizes = [8, 128], strides = [1, 1]} : vector<8x256xf32> to vector<8x128xf32>
      %523 = vector.extract_strided_slice %521 {offsets = [0, 0], sizes = [8, 128], strides = [1, 1]} : vector<8x256xf32> to vector<8x128xf32>
      %524 = arith.addf %522, %523 : vector<8x128xf32>
      %525 = vector.extract_strided_slice %519 {offsets = [0, 128], sizes = [8, 128], strides = [1, 1]} : vector<8x256xf32> to vector<8x128xf32>
      %526 = vector.extract_strided_slice %521 {offsets = [0, 128], sizes = [8, 128], strides = [1, 1]} : vector<8x256xf32> to vector<8x128xf32>
      %527 = arith.addf %525, %526 : vector<8x128xf32>
      %528 = vector.extract_strided_slice %524 {offsets = [0, 0], sizes = [8, 32], strides = [1, 1]} : vector<8x128xf32> to vector<8x32xf32>
      %529 = arith.negf %528 : vector<8x32xf32>
      %530 = math.exp %529 : vector<8x32xf32>
      %cst_111 = arith.constant 1.000000e+00 : f32
      %531 = vector.broadcast %cst_111 : f32 to vector<8x32xf32>
      %532 = arith.addf %531, %530 : vector<8x32xf32>
      %533 = arith.divf %531, %532 : vector<8x32xf32>
      %534 = vector.extract_strided_slice %524 {offsets = [0, 32], sizes = [8, 32], strides = [1, 1]} : vector<8x128xf32> to vector<8x32xf32>
      %535 = arith.negf %534 : vector<8x32xf32>
      %536 = math.exp %535 : vector<8x32xf32>
      %cst_112 = arith.constant 1.000000e+00 : f32
      %537 = vector.broadcast %cst_112 : f32 to vector<8x32xf32>
      %538 = arith.addf %537, %536 : vector<8x32xf32>
      %539 = arith.divf %537, %538 : vector<8x32xf32>
      %540 = vector.extract_strided_slice %524 {offsets = [0, 64], sizes = [8, 32], strides = [1, 1]} : vector<8x128xf32> to vector<8x32xf32>
      %541 = math.tanh %540 : vector<8x32xf32>
      %542 = vector.extract_strided_slice %524 {offsets = [0, 96], sizes = [8, 32], strides = [1, 1]} : vector<8x128xf32> to vector<8x32xf32>
      %543 = arith.negf %542 : vector<8x32xf32>
      %544 = math.exp %543 : vector<8x32xf32>
      %cst_113 = arith.constant 1.000000e+00 : f32
      %545 = vector.broadcast %cst_113 : f32 to vector<8x32xf32>
      %546 = arith.addf %545, %544 : vector<8x32xf32>
      %547 = arith.divf %545, %546 : vector<8x32xf32>
      %548 = arith.mulf %539, %504 : vector<8x32xf32>
      %549 = arith.mulf %533, %541 : vector<8x32xf32>
      %550 = arith.addf %548, %549 : vector<8x32xf32>
      %551 = math.tanh %550 : vector<8x32xf32>
      %552 = arith.mulf %547, %551 : vector<8x32xf32>
      %553 = vector.extract_strided_slice %527 {offsets = [0, 0], sizes = [8, 32], strides = [1, 1]} : vector<8x128xf32> to vector<8x32xf32>
      %554 = arith.negf %553 : vector<8x32xf32>
      %555 = math.exp %554 : vector<8x32xf32>
      %cst_114 = arith.constant 1.000000e+00 : f32
      %556 = vector.broadcast %cst_114 : f32 to vector<8x32xf32>
      %557 = arith.addf %556, %555 : vector<8x32xf32>
      %558 = arith.divf %556, %557 : vector<8x32xf32>
      %559 = vector.extract_strided_slice %527 {offsets = [0, 32], sizes = [8, 32], strides = [1, 1]} : vector<8x128xf32> to vector<8x32xf32>
      %560 = arith.negf %559 : vector<8x32xf32>
      %561 = math.exp %560 : vector<8x32xf32>
      %cst_115 = arith.constant 1.000000e+00 : f32
      %562 = vector.broadcast %cst_115 : f32 to vector<8x32xf32>
      %563 = arith.addf %562, %561 : vector<8x32xf32>
      %564 = arith.divf %562, %563 : vector<8x32xf32>
      %565 = vector.extract_strided_slice %527 {offsets = [0, 64], sizes = [8, 32], strides = [1, 1]} : vector<8x128xf32> to vector<8x32xf32>
      %566 = math.tanh %565 : vector<8x32xf32>
      %567 = vector.extract_strided_slice %527 {offsets = [0, 96], sizes = [8, 32], strides = [1, 1]} : vector<8x128xf32> to vector<8x32xf32>
      %568 = arith.negf %567 : vector<8x32xf32>
      %569 = math.exp %568 : vector<8x32xf32>
      %cst_116 = arith.constant 1.000000e+00 : f32
      %570 = vector.broadcast %cst_116 : f32 to vector<8x32xf32>
      %571 = arith.addf %570, %569 : vector<8x32xf32>
      %572 = arith.divf %570, %571 : vector<8x32xf32>
      %573 = arith.mulf %564, %510 : vector<8x32xf32>
      %574 = arith.mulf %558, %566 : vector<8x32xf32>
      %575 = arith.addf %573, %574 : vector<8x32xf32>
      %576 = math.tanh %575 : vector<8x32xf32>
      %577 = arith.mulf %572, %576 : vector<8x32xf32>
      %578 = vector.broadcast %c5_i32 : i32 to vector<8x1xi32>
      %579 = arith.cmpi slt, %578, %32 : vector<8x1xi32>
      %580 = vector.broadcast %511 : i32 to vector<8x1xi32>
      %581 = arith.cmpi slt, %580, %32 : vector<8x1xi32>
      %cst_117 = arith.constant 0.000000e+00 : f32
      %582 = vector.shape_cast %579 : vector<8x1xi1> to vector<8x1xi1>
      %583 = vector.broadcast %582 : vector<8x1xi1> to vector<8x32xi1>
      %584 = vector.broadcast %cst_117 : f32 to vector<8x32xf32>
      %585 = arith.select %583, %552, %584 : vector<8x32xi1>, vector<8x32xf32>
      %586 = arith.index_cast %513 : i32 to index
      %c0_118 = arith.constant 0 : index
      %587 = vector.load %arg7[%586, %c0_118] : memref<80x64xf32, #tpu.memory_space<vmem>>, vector<8x32xf32>
      tpu.vector_store %arg7[%586, %c0_118], %585 {strides = array<i32>} : memref<80x64xf32, #tpu.memory_space<vmem>>, vector<8x32xf32>,
      %cst_119 = arith.constant 0.000000e+00 : f32
      %588 = vector.shape_cast %581 : vector<8x1xi1> to vector<8x1xi1>
      %589 = vector.broadcast %588 : vector<8x1xi1> to vector<8x32xi1>
      %590 = vector.broadcast %cst_119 : f32 to vector<8x32xf32>
      %591 = arith.select %589, %577, %590 : vector<8x32xi1>, vector<8x32xf32>
      %592 = arith.index_cast %515 : i32 to index
      %c32_120 = arith.constant 32 : index
      %593 = vector.load %arg7[%592, %c32_120] : memref<80x64xf32, #tpu.memory_space<vmem>>, vector<8x32xf32>
      tpu.vector_store %arg7[%592, %c32_120], %591 {strides = array<i32>} : memref<80x64xf32, #tpu.memory_space<vmem>>, vector<8x32xf32>,
      %594 = vector.shape_cast %579 : vector<8x1xi1> to vector<8x1xi1>
      %595 = vector.broadcast %594 : vector<8x1xi1> to vector<8x32xi1>
      %596 = arith.select %595, %552, %501 : vector<8x32xi1>, vector<8x32xf32>
      %597 = vector.shape_cast %579 : vector<8x1xi1> to vector<8x1xi1>
      %598 = vector.broadcast %597 : vector<8x1xi1> to vector<8x32xi1>
      %599 = arith.select %598, %550, %504 : vector<8x32xi1>, vector<8x32xf32>
      %600 = vector.shape_cast %581 : vector<8x1xi1> to vector<8x1xi1>
      %601 = vector.broadcast %600 : vector<8x1xi1> to vector<8x32xi1>
      %602 = arith.select %601, %577, %507 : vector<8x32xi1>, vector<8x32xf32>
      %603 = vector.shape_cast %581 : vector<8x1xi1> to vector<8x1xi1>
      %604 = vector.broadcast %603 : vector<8x1xi1> to vector<8x32xi1>
      %605 = arith.select %604, %575, %510 : vector<8x32xi1>, vector<8x32xf32>
      %c6_i32 = arith.constant 6 : i32
      %c9_i32_121 = arith.constant 9 : i32
      %606 = arith.subi %c9_i32_121, %c6_i32 : i32
      %c8_i32_122 = arith.constant 8 : i32
      %607 = arith.muli %c6_i32, %c8_i32_122 : i32
      %608 = tpu.assume_multiple %607, 8 : i32
      %c8_i32_123 = arith.constant 8 : i32
      %609 = arith.muli %606, %c8_i32_123 : i32
      %610 = tpu.assume_multiple %609, 8 : i32
      %611 = arith.index_cast %608 : i32 to index
      %c0_124 = arith.constant 0 : index
      %612 = vector.load %arg9[%611, %c0_124] : memref<80x256xf32, #tpu.memory_space<vmem>>, vector<8x256xf32>
      %613 = arith.index_cast %610 : i32 to index
      %c0_125 = arith.constant 0 : index
      %614 = vector.load %arg9[%613, %c0_125] : memref<80x256xf32, #tpu.memory_space<vmem>>, vector<8x256xf32>
      %615 = tpu.concatenate %596, %602 in 1 : vector<8x32xf32>, vector<8x32xf32> -> vector<8x64xf32>
      %cst_126 = arith.constant dense<0.000000e+00> : vector<8x256xf32>
      %616 = tpu.matmul %615, %34, %cst_126 {dimension_numbers = #tpu.dot_dimension_numbers<[1], [0], [0], [1], [0, 0, 1, 1], [], []>} : vector<8x64xf32>, vector<64x256xf32>, vector<8x256xf32> -> vector<8x256xf32>
      %617 = vector.extract_strided_slice %612 {offsets = [0, 0], sizes = [8, 128], strides = [1, 1]} : vector<8x256xf32> to vector<8x128xf32>
      %618 = vector.extract_strided_slice %616 {offsets = [0, 0], sizes = [8, 128], strides = [1, 1]} : vector<8x256xf32> to vector<8x128xf32>
      %619 = arith.addf %617, %618 : vector<8x128xf32>
      %620 = vector.extract_strided_slice %614 {offsets = [0, 128], sizes = [8, 128], strides = [1, 1]} : vector<8x256xf32> to vector<8x128xf32>
      %621 = vector.extract_strided_slice %616 {offsets = [0, 128], sizes = [8, 128], strides = [1, 1]} : vector<8x256xf32> to vector<8x128xf32>
      %622 = arith.addf %620, %621 : vector<8x128xf32>
      %623 = vector.extract_strided_slice %619 {offsets = [0, 0], sizes = [8, 32], strides = [1, 1]} : vector<8x128xf32> to vector<8x32xf32>
      %624 = arith.negf %623 : vector<8x32xf32>
      %625 = math.exp %624 : vector<8x32xf32>
      %cst_127 = arith.constant 1.000000e+00 : f32
      %626 = vector.broadcast %cst_127 : f32 to vector<8x32xf32>
      %627 = arith.addf %626, %625 : vector<8x32xf32>
      %628 = arith.divf %626, %627 : vector<8x32xf32>
      %629 = vector.extract_strided_slice %619 {offsets = [0, 32], sizes = [8, 32], strides = [1, 1]} : vector<8x128xf32> to vector<8x32xf32>
      %630 = arith.negf %629 : vector<8x32xf32>
      %631 = math.exp %630 : vector<8x32xf32>
      %cst_128 = arith.constant 1.000000e+00 : f32
      %632 = vector.broadcast %cst_128 : f32 to vector<8x32xf32>
      %633 = arith.addf %632, %631 : vector<8x32xf32>
      %634 = arith.divf %632, %633 : vector<8x32xf32>
      %635 = vector.extract_strided_slice %619 {offsets = [0, 64], sizes = [8, 32], strides = [1, 1]} : vector<8x128xf32> to vector<8x32xf32>
      %636 = math.tanh %635 : vector<8x32xf32>
      %637 = vector.extract_strided_slice %619 {offsets = [0, 96], sizes = [8, 32], strides = [1, 1]} : vector<8x128xf32> to vector<8x32xf32>
      %638 = arith.negf %637 : vector<8x32xf32>
      %639 = math.exp %638 : vector<8x32xf32>
      %cst_129 = arith.constant 1.000000e+00 : f32
      %640 = vector.broadcast %cst_129 : f32 to vector<8x32xf32>
      %641 = arith.addf %640, %639 : vector<8x32xf32>
      %642 = arith.divf %640, %641 : vector<8x32xf32>
      %643 = arith.mulf %634, %599 : vector<8x32xf32>
      %644 = arith.mulf %628, %636 : vector<8x32xf32>
      %645 = arith.addf %643, %644 : vector<8x32xf32>
      %646 = math.tanh %645 : vector<8x32xf32>
      %647 = arith.mulf %642, %646 : vector<8x32xf32>
      %648 = vector.extract_strided_slice %622 {offsets = [0, 0], sizes = [8, 32], strides = [1, 1]} : vector<8x128xf32> to vector<8x32xf32>
      %649 = arith.negf %648 : vector<8x32xf32>
      %650 = math.exp %649 : vector<8x32xf32>
      %cst_130 = arith.constant 1.000000e+00 : f32
      %651 = vector.broadcast %cst_130 : f32 to vector<8x32xf32>
      %652 = arith.addf %651, %650 : vector<8x32xf32>
      %653 = arith.divf %651, %652 : vector<8x32xf32>
      %654 = vector.extract_strided_slice %622 {offsets = [0, 32], sizes = [8, 32], strides = [1, 1]} : vector<8x128xf32> to vector<8x32xf32>
      %655 = arith.negf %654 : vector<8x32xf32>
      %656 = math.exp %655 : vector<8x32xf32>
      %cst_131 = arith.constant 1.000000e+00 : f32
      %657 = vector.broadcast %cst_131 : f32 to vector<8x32xf32>
      %658 = arith.addf %657, %656 : vector<8x32xf32>
      %659 = arith.divf %657, %658 : vector<8x32xf32>
      %660 = vector.extract_strided_slice %622 {offsets = [0, 64], sizes = [8, 32], strides = [1, 1]} : vector<8x128xf32> to vector<8x32xf32>
      %661 = math.tanh %660 : vector<8x32xf32>
      %662 = vector.extract_strided_slice %622 {offsets = [0, 96], sizes = [8, 32], strides = [1, 1]} : vector<8x128xf32> to vector<8x32xf32>
      %663 = arith.negf %662 : vector<8x32xf32>
      %664 = math.exp %663 : vector<8x32xf32>
      %cst_132 = arith.constant 1.000000e+00 : f32
      %665 = vector.broadcast %cst_132 : f32 to vector<8x32xf32>
      %666 = arith.addf %665, %664 : vector<8x32xf32>
      %667 = arith.divf %665, %666 : vector<8x32xf32>
      %668 = arith.mulf %659, %605 : vector<8x32xf32>
      %669 = arith.mulf %653, %661 : vector<8x32xf32>
      %670 = arith.addf %668, %669 : vector<8x32xf32>
      %671 = math.tanh %670 : vector<8x32xf32>
      %672 = arith.mulf %667, %671 : vector<8x32xf32>
      %673 = vector.broadcast %c6_i32 : i32 to vector<8x1xi32>
      %674 = arith.cmpi slt, %673, %32 : vector<8x1xi32>
      %675 = vector.broadcast %606 : i32 to vector<8x1xi32>
      %676 = arith.cmpi slt, %675, %32 : vector<8x1xi32>
      %cst_133 = arith.constant 0.000000e+00 : f32
      %677 = vector.shape_cast %674 : vector<8x1xi1> to vector<8x1xi1>
      %678 = vector.broadcast %677 : vector<8x1xi1> to vector<8x32xi1>
      %679 = vector.broadcast %cst_133 : f32 to vector<8x32xf32>
      %680 = arith.select %678, %647, %679 : vector<8x32xi1>, vector<8x32xf32>
      %681 = arith.index_cast %608 : i32 to index
      %c0_134 = arith.constant 0 : index
      %682 = vector.load %arg7[%681, %c0_134] : memref<80x64xf32, #tpu.memory_space<vmem>>, vector<8x32xf32>
      tpu.vector_store %arg7[%681, %c0_134], %680 {strides = array<i32>} : memref<80x64xf32, #tpu.memory_space<vmem>>, vector<8x32xf32>,
      %cst_135 = arith.constant 0.000000e+00 : f32
      %683 = vector.shape_cast %676 : vector<8x1xi1> to vector<8x1xi1>
      %684 = vector.broadcast %683 : vector<8x1xi1> to vector<8x32xi1>
      %685 = vector.broadcast %cst_135 : f32 to vector<8x32xf32>
      %686 = arith.select %684, %672, %685 : vector<8x32xi1>, vector<8x32xf32>
      %687 = arith.index_cast %610 : i32 to index
      %c32_136 = arith.constant 32 : index
      %688 = vector.load %arg7[%687, %c32_136] : memref<80x64xf32, #tpu.memory_space<vmem>>, vector<8x32xf32>
      tpu.vector_store %arg7[%687, %c32_136], %686 {strides = array<i32>} : memref<80x64xf32, #tpu.memory_space<vmem>>, vector<8x32xf32>,
      %689 = vector.shape_cast %674 : vector<8x1xi1> to vector<8x1xi1>
      %690 = vector.broadcast %689 : vector<8x1xi1> to vector<8x32xi1>
      %691 = arith.select %690, %647, %596 : vector<8x32xi1>, vector<8x32xf32>
      %692 = vector.shape_cast %674 : vector<8x1xi1> to vector<8x1xi1>
      %693 = vector.broadcast %692 : vector<8x1xi1> to vector<8x32xi1>
      %694 = arith.select %693, %645, %599 : vector<8x32xi1>, vector<8x32xf32>
      %695 = vector.shape_cast %676 : vector<8x1xi1> to vector<8x1xi1>
      %696 = vector.broadcast %695 : vector<8x1xi1> to vector<8x32xi1>
      %697 = arith.select %696, %672, %602 : vector<8x32xi1>, vector<8x32xf32>
      %698 = vector.shape_cast %676 : vector<8x1xi1> to vector<8x1xi1>
      %699 = vector.broadcast %698 : vector<8x1xi1> to vector<8x32xi1>
      %700 = arith.select %699, %670, %605 : vector<8x32xi1>, vector<8x32xf32>
      %c7_i32 = arith.constant 7 : i32
      %c9_i32_137 = arith.constant 9 : i32
      %701 = arith.subi %c9_i32_137, %c7_i32 : i32
      %c8_i32_138 = arith.constant 8 : i32
      %702 = arith.muli %c7_i32, %c8_i32_138 : i32
      %703 = tpu.assume_multiple %702, 8 : i32
      %c8_i32_139 = arith.constant 8 : i32
      %704 = arith.muli %701, %c8_i32_139 : i32
      %705 = tpu.assume_multiple %704, 8 : i32
      %706 = arith.index_cast %703 : i32 to index
      %c0_140 = arith.constant 0 : index
      %707 = vector.load %arg9[%706, %c0_140] : memref<80x256xf32, #tpu.memory_space<vmem>>, vector<8x256xf32>
      %708 = arith.index_cast %705 : i32 to index
      %c0_141 = arith.constant 0 : index
      %709 = vector.load %arg9[%708, %c0_141] : memref<80x256xf32, #tpu.memory_space<vmem>>, vector<8x256xf32>
      %710 = tpu.concatenate %691, %697 in 1 : vector<8x32xf32>, vector<8x32xf32> -> vector<8x64xf32>
      %cst_142 = arith.constant dense<0.000000e+00> : vector<8x256xf32>
      %711 = tpu.matmul %710, %34, %cst_142 {dimension_numbers = #tpu.dot_dimension_numbers<[1], [0], [0], [1], [0, 0, 1, 1], [], []>} : vector<8x64xf32>, vector<64x256xf32>, vector<8x256xf32> -> vector<8x256xf32>
      %712 = vector.extract_strided_slice %707 {offsets = [0, 0], sizes = [8, 128], strides = [1, 1]} : vector<8x256xf32> to vector<8x128xf32>
      %713 = vector.extract_strided_slice %711 {offsets = [0, 0], sizes = [8, 128], strides = [1, 1]} : vector<8x256xf32> to vector<8x128xf32>
      %714 = arith.addf %712, %713 : vector<8x128xf32>
      %715 = vector.extract_strided_slice %709 {offsets = [0, 128], sizes = [8, 128], strides = [1, 1]} : vector<8x256xf32> to vector<8x128xf32>
      %716 = vector.extract_strided_slice %711 {offsets = [0, 128], sizes = [8, 128], strides = [1, 1]} : vector<8x256xf32> to vector<8x128xf32>
      %717 = arith.addf %715, %716 : vector<8x128xf32>
      %718 = vector.extract_strided_slice %714 {offsets = [0, 0], sizes = [8, 32], strides = [1, 1]} : vector<8x128xf32> to vector<8x32xf32>
      %719 = arith.negf %718 : vector<8x32xf32>
      %720 = math.exp %719 : vector<8x32xf32>
      %cst_143 = arith.constant 1.000000e+00 : f32
      %721 = vector.broadcast %cst_143 : f32 to vector<8x32xf32>
      %722 = arith.addf %721, %720 : vector<8x32xf32>
      %723 = arith.divf %721, %722 : vector<8x32xf32>
      %724 = vector.extract_strided_slice %714 {offsets = [0, 32], sizes = [8, 32], strides = [1, 1]} : vector<8x128xf32> to vector<8x32xf32>
      %725 = arith.negf %724 : vector<8x32xf32>
      %726 = math.exp %725 : vector<8x32xf32>
      %cst_144 = arith.constant 1.000000e+00 : f32
      %727 = vector.broadcast %cst_144 : f32 to vector<8x32xf32>
      %728 = arith.addf %727, %726 : vector<8x32xf32>
      %729 = arith.divf %727, %728 : vector<8x32xf32>
      %730 = vector.extract_strided_slice %714 {offsets = [0, 64], sizes = [8, 32], strides = [1, 1]} : vector<8x128xf32> to vector<8x32xf32>
      %731 = math.tanh %730 : vector<8x32xf32>
      %732 = vector.extract_strided_slice %714 {offsets = [0, 96], sizes = [8, 32], strides = [1, 1]} : vector<8x128xf32> to vector<8x32xf32>
      %733 = arith.negf %732 : vector<8x32xf32>
      %734 = math.exp %733 : vector<8x32xf32>
      %cst_145 = arith.constant 1.000000e+00 : f32
      %735 = vector.broadcast %cst_145 : f32 to vector<8x32xf32>
      %736 = arith.addf %735, %734 : vector<8x32xf32>
      %737 = arith.divf %735, %736 : vector<8x32xf32>
      %738 = arith.mulf %729, %694 : vector<8x32xf32>
      %739 = arith.mulf %723, %731 : vector<8x32xf32>
      %740 = arith.addf %738, %739 : vector<8x32xf32>
      %741 = math.tanh %740 : vector<8x32xf32>
      %742 = arith.mulf %737, %741 : vector<8x32xf32>
      %743 = vector.extract_strided_slice %717 {offsets = [0, 0], sizes = [8, 32], strides = [1, 1]} : vector<8x128xf32> to vector<8x32xf32>
      %744 = arith.negf %743 : vector<8x32xf32>
      %745 = math.exp %744 : vector<8x32xf32>
      %cst_146 = arith.constant 1.000000e+00 : f32
      %746 = vector.broadcast %cst_146 : f32 to vector<8x32xf32>
      %747 = arith.addf %746, %745 : vector<8x32xf32>
      %748 = arith.divf %746, %747 : vector<8x32xf32>
      %749 = vector.extract_strided_slice %717 {offsets = [0, 32], sizes = [8, 32], strides = [1, 1]} : vector<8x128xf32> to vector<8x32xf32>
      %750 = arith.negf %749 : vector<8x32xf32>
      %751 = math.exp %750 : vector<8x32xf32>
      %cst_147 = arith.constant 1.000000e+00 : f32
      %752 = vector.broadcast %cst_147 : f32 to vector<8x32xf32>
      %753 = arith.addf %752, %751 : vector<8x32xf32>
      %754 = arith.divf %752, %753 : vector<8x32xf32>
      %755 = vector.extract_strided_slice %717 {offsets = [0, 64], sizes = [8, 32], strides = [1, 1]} : vector<8x128xf32> to vector<8x32xf32>
      %756 = math.tanh %755 : vector<8x32xf32>
      %757 = vector.extract_strided_slice %717 {offsets = [0, 96], sizes = [8, 32], strides = [1, 1]} : vector<8x128xf32> to vector<8x32xf32>
      %758 = arith.negf %757 : vector<8x32xf32>
      %759 = math.exp %758 : vector<8x32xf32>
      %cst_148 = arith.constant 1.000000e+00 : f32
      %760 = vector.broadcast %cst_148 : f32 to vector<8x32xf32>
      %761 = arith.addf %760, %759 : vector<8x32xf32>
      %762 = arith.divf %760, %761 : vector<8x32xf32>
      %763 = arith.mulf %754, %700 : vector<8x32xf32>
      %764 = arith.mulf %748, %756 : vector<8x32xf32>
      %765 = arith.addf %763, %764 : vector<8x32xf32>
      %766 = math.tanh %765 : vector<8x32xf32>
      %767 = arith.mulf %762, %766 : vector<8x32xf32>
      %768 = vector.broadcast %c7_i32 : i32 to vector<8x1xi32>
      %769 = arith.cmpi slt, %768, %32 : vector<8x1xi32>
      %770 = vector.broadcast %701 : i32 to vector<8x1xi32>
      %771 = arith.cmpi slt, %770, %32 : vector<8x1xi32>
      %cst_149 = arith.constant 0.000000e+00 : f32
      %772 = vector.shape_cast %769 : vector<8x1xi1> to vector<8x1xi1>
      %773 = vector.broadcast %772 : vector<8x1xi1> to vector<8x32xi1>
      %774 = vector.broadcast %cst_149 : f32 to vector<8x32xf32>
      %775 = arith.select %773, %742, %774 : vector<8x32xi1>, vector<8x32xf32>
      %776 = arith.index_cast %703 : i32 to index
      %c0_150 = arith.constant 0 : index
      %777 = vector.load %arg7[%776, %c0_150] : memref<80x64xf32, #tpu.memory_space<vmem>>, vector<8x32xf32>
      tpu.vector_store %arg7[%776, %c0_150], %775 {strides = array<i32>} : memref<80x64xf32, #tpu.memory_space<vmem>>, vector<8x32xf32>,
      %cst_151 = arith.constant 0.000000e+00 : f32
      %778 = vector.shape_cast %771 : vector<8x1xi1> to vector<8x1xi1>
      %779 = vector.broadcast %778 : vector<8x1xi1> to vector<8x32xi1>
      %780 = vector.broadcast %cst_151 : f32 to vector<8x32xf32>
      %781 = arith.select %779, %767, %780 : vector<8x32xi1>, vector<8x32xf32>
      %782 = arith.index_cast %705 : i32 to index
      %c32_152 = arith.constant 32 : index
      %783 = vector.load %arg7[%782, %c32_152] : memref<80x64xf32, #tpu.memory_space<vmem>>, vector<8x32xf32>
      tpu.vector_store %arg7[%782, %c32_152], %781 {strides = array<i32>} : memref<80x64xf32, #tpu.memory_space<vmem>>, vector<8x32xf32>,
      %784 = vector.shape_cast %769 : vector<8x1xi1> to vector<8x1xi1>
      %785 = vector.broadcast %784 : vector<8x1xi1> to vector<8x32xi1>
      %786 = arith.select %785, %742, %691 : vector<8x32xi1>, vector<8x32xf32>
      %787 = vector.shape_cast %769 : vector<8x1xi1> to vector<8x1xi1>
      %788 = vector.broadcast %787 : vector<8x1xi1> to vector<8x32xi1>
      %789 = arith.select %788, %740, %694 : vector<8x32xi1>, vector<8x32xf32>
      %790 = vector.shape_cast %771 : vector<8x1xi1> to vector<8x1xi1>
      %791 = vector.broadcast %790 : vector<8x1xi1> to vector<8x32xi1>
      %792 = arith.select %791, %767, %697 : vector<8x32xi1>, vector<8x32xf32>
      %793 = vector.shape_cast %771 : vector<8x1xi1> to vector<8x1xi1>
      %794 = vector.broadcast %793 : vector<8x1xi1> to vector<8x32xi1>
      %795 = arith.select %794, %765, %700 : vector<8x32xi1>, vector<8x32xf32>
      %c8_i32_153 = arith.constant 8 : i32
      %c9_i32_154 = arith.constant 9 : i32
      %796 = arith.subi %c9_i32_154, %c8_i32_153 : i32
      %c8_i32_155 = arith.constant 8 : i32
      %797 = arith.muli %c8_i32_153, %c8_i32_155 : i32
      %798 = tpu.assume_multiple %797, 8 : i32
      %c8_i32_156 = arith.constant 8 : i32
      %799 = arith.muli %796, %c8_i32_156 : i32
      %800 = tpu.assume_multiple %799, 8 : i32
      %801 = arith.index_cast %798 : i32 to index
      %c0_157 = arith.constant 0 : index
      %802 = vector.load %arg9[%801, %c0_157] : memref<80x256xf32, #tpu.memory_space<vmem>>, vector<8x256xf32>
      %803 = arith.index_cast %800 : i32 to index
      %c0_158 = arith.constant 0 : index
      %804 = vector.load %arg9[%803, %c0_158] : memref<80x256xf32, #tpu.memory_space<vmem>>, vector<8x256xf32>
      %805 = tpu.concatenate %786, %792 in 1 : vector<8x32xf32>, vector<8x32xf32> -> vector<8x64xf32>
      %cst_159 = arith.constant dense<0.000000e+00> : vector<8x256xf32>
      %806 = tpu.matmul %805, %34, %cst_159 {dimension_numbers = #tpu.dot_dimension_numbers<[1], [0], [0], [1], [0, 0, 1, 1], [], []>} : vector<8x64xf32>, vector<64x256xf32>, vector<8x256xf32> -> vector<8x256xf32>
      %807 = vector.extract_strided_slice %802 {offsets = [0, 0], sizes = [8, 128], strides = [1, 1]} : vector<8x256xf32> to vector<8x128xf32>
      %808 = vector.extract_strided_slice %806 {offsets = [0, 0], sizes = [8, 128], strides = [1, 1]} : vector<8x256xf32> to vector<8x128xf32>
      %809 = arith.addf %807, %808 : vector<8x128xf32>
      %810 = vector.extract_strided_slice %804 {offsets = [0, 128], sizes = [8, 128], strides = [1, 1]} : vector<8x256xf32> to vector<8x128xf32>
      %811 = vector.extract_strided_slice %806 {offsets = [0, 128], sizes = [8, 128], strides = [1, 1]} : vector<8x256xf32> to vector<8x128xf32>
      %812 = arith.addf %810, %811 : vector<8x128xf32>
      %813 = vector.extract_strided_slice %809 {offsets = [0, 0], sizes = [8, 32], strides = [1, 1]} : vector<8x128xf32> to vector<8x32xf32>
      %814 = arith.negf %813 : vector<8x32xf32>
      %815 = math.exp %814 : vector<8x32xf32>
      %cst_160 = arith.constant 1.000000e+00 : f32
      %816 = vector.broadcast %cst_160 : f32 to vector<8x32xf32>
      %817 = arith.addf %816, %815 : vector<8x32xf32>
      %818 = arith.divf %816, %817 : vector<8x32xf32>
      %819 = vector.extract_strided_slice %809 {offsets = [0, 32], sizes = [8, 32], strides = [1, 1]} : vector<8x128xf32> to vector<8x32xf32>
      %820 = arith.negf %819 : vector<8x32xf32>
      %821 = math.exp %820 : vector<8x32xf32>
      %cst_161 = arith.constant 1.000000e+00 : f32
      %822 = vector.broadcast %cst_161 : f32 to vector<8x32xf32>
      %823 = arith.addf %822, %821 : vector<8x32xf32>
      %824 = arith.divf %822, %823 : vector<8x32xf32>
      %825 = vector.extract_strided_slice %809 {offsets = [0, 64], sizes = [8, 32], strides = [1, 1]} : vector<8x128xf32> to vector<8x32xf32>
      %826 = math.tanh %825 : vector<8x32xf32>
      %827 = vector.extract_strided_slice %809 {offsets = [0, 96], sizes = [8, 32], strides = [1, 1]} : vector<8x128xf32> to vector<8x32xf32>
      %828 = arith.negf %827 : vector<8x32xf32>
      %829 = math.exp %828 : vector<8x32xf32>
      %cst_162 = arith.constant 1.000000e+00 : f32
      %830 = vector.broadcast %cst_162 : f32 to vector<8x32xf32>
      %831 = arith.addf %830, %829 : vector<8x32xf32>
      %832 = arith.divf %830, %831 : vector<8x32xf32>
      %833 = arith.mulf %824, %789 : vector<8x32xf32>
      %834 = arith.mulf %818, %826 : vector<8x32xf32>
      %835 = arith.addf %833, %834 : vector<8x32xf32>
      %836 = math.tanh %835 : vector<8x32xf32>
      %837 = arith.mulf %832, %836 : vector<8x32xf32>
      %838 = vector.extract_strided_slice %812 {offsets = [0, 0], sizes = [8, 32], strides = [1, 1]} : vector<8x128xf32> to vector<8x32xf32>
      %839 = arith.negf %838 : vector<8x32xf32>
      %840 = math.exp %839 : vector<8x32xf32>
      %cst_163 = arith.constant 1.000000e+00 : f32
      %841 = vector.broadcast %cst_163 : f32 to vector<8x32xf32>
      %842 = arith.addf %841, %840 : vector<8x32xf32>
      %843 = arith.divf %841, %842 : vector<8x32xf32>
      %844 = vector.extract_strided_slice %812 {offsets = [0, 32], sizes = [8, 32], strides = [1, 1]} : vector<8x128xf32> to vector<8x32xf32>
      %845 = arith.negf %844 : vector<8x32xf32>
      %846 = math.exp %845 : vector<8x32xf32>
      %cst_164 = arith.constant 1.000000e+00 : f32
      %847 = vector.broadcast %cst_164 : f32 to vector<8x32xf32>
      %848 = arith.addf %847, %846 : vector<8x32xf32>
      %849 = arith.divf %847, %848 : vector<8x32xf32>
      %850 = vector.extract_strided_slice %812 {offsets = [0, 64], sizes = [8, 32], strides = [1, 1]} : vector<8x128xf32> to vector<8x32xf32>
      %851 = math.tanh %850 : vector<8x32xf32>
      %852 = vector.extract_strided_slice %812 {offsets = [0, 96], sizes = [8, 32], strides = [1, 1]} : vector<8x128xf32> to vector<8x32xf32>
      %853 = arith.negf %852 : vector<8x32xf32>
      %854 = math.exp %853 : vector<8x32xf32>
      %cst_165 = arith.constant 1.000000e+00 : f32
      %855 = vector.broadcast %cst_165 : f32 to vector<8x32xf32>
      %856 = arith.addf %855, %854 : vector<8x32xf32>
      %857 = arith.divf %855, %856 : vector<8x32xf32>
      %858 = arith.mulf %849, %795 : vector<8x32xf32>
      %859 = arith.mulf %843, %851 : vector<8x32xf32>
      %860 = arith.addf %858, %859 : vector<8x32xf32>
      %861 = math.tanh %860 : vector<8x32xf32>
      %862 = arith.mulf %857, %861 : vector<8x32xf32>
      %863 = vector.broadcast %c8_i32_153 : i32 to vector<8x1xi32>
      %864 = arith.cmpi slt, %863, %32 : vector<8x1xi32>
      %865 = vector.broadcast %796 : i32 to vector<8x1xi32>
      %866 = arith.cmpi slt, %865, %32 : vector<8x1xi32>
      %cst_166 = arith.constant 0.000000e+00 : f32
      %867 = vector.shape_cast %864 : vector<8x1xi1> to vector<8x1xi1>
      %868 = vector.broadcast %867 : vector<8x1xi1> to vector<8x32xi1>
      %869 = vector.broadcast %cst_166 : f32 to vector<8x32xf32>
      %870 = arith.select %868, %837, %869 : vector<8x32xi1>, vector<8x32xf32>
      %871 = arith.index_cast %798 : i32 to index
      %c0_167 = arith.constant 0 : index
      %872 = vector.load %arg7[%871, %c0_167] : memref<80x64xf32, #tpu.memory_space<vmem>>, vector<8x32xf32>
      tpu.vector_store %arg7[%871, %c0_167], %870 {strides = array<i32>} : memref<80x64xf32, #tpu.memory_space<vmem>>, vector<8x32xf32>,
      %cst_168 = arith.constant 0.000000e+00 : f32
      %873 = vector.shape_cast %866 : vector<8x1xi1> to vector<8x1xi1>
      %874 = vector.broadcast %873 : vector<8x1xi1> to vector<8x32xi1>
      %875 = vector.broadcast %cst_168 : f32 to vector<8x32xf32>
      %876 = arith.select %874, %862, %875 : vector<8x32xi1>, vector<8x32xf32>
      %877 = arith.index_cast %800 : i32 to index
      %c32_169 = arith.constant 32 : index
      %878 = vector.load %arg7[%877, %c32_169] : memref<80x64xf32, #tpu.memory_space<vmem>>, vector<8x32xf32>
      tpu.vector_store %arg7[%877, %c32_169], %876 {strides = array<i32>} : memref<80x64xf32, #tpu.memory_space<vmem>>, vector<8x32xf32>,
      %879 = vector.shape_cast %864 : vector<8x1xi1> to vector<8x1xi1>
      %880 = vector.broadcast %879 : vector<8x1xi1> to vector<8x32xi1>
      %881 = arith.select %880, %837, %786 : vector<8x32xi1>, vector<8x32xf32>
      %882 = vector.shape_cast %864 : vector<8x1xi1> to vector<8x1xi1>
      %883 = vector.broadcast %882 : vector<8x1xi1> to vector<8x32xi1>
      %884 = arith.select %883, %835, %789 : vector<8x32xi1>, vector<8x32xf32>
      %885 = vector.shape_cast %866 : vector<8x1xi1> to vector<8x1xi1>
      %886 = vector.broadcast %885 : vector<8x1xi1> to vector<8x32xi1>
      %887 = arith.select %886, %862, %792 : vector<8x32xi1>, vector<8x32xf32>
      %888 = vector.shape_cast %866 : vector<8x1xi1> to vector<8x1xi1>
      %889 = vector.broadcast %888 : vector<8x1xi1> to vector<8x32xi1>
      %890 = arith.select %889, %860, %795 : vector<8x32xi1>, vector<8x32xf32>
      %c9_i32_170 = arith.constant 9 : i32
      %c9_i32_171 = arith.constant 9 : i32
      %891 = arith.subi %c9_i32_171, %c9_i32_170 : i32
      %c8_i32_172 = arith.constant 8 : i32
      %892 = arith.muli %c9_i32_170, %c8_i32_172 : i32
      %893 = tpu.assume_multiple %892, 8 : i32
      %c8_i32_173 = arith.constant 8 : i32
      %894 = arith.muli %891, %c8_i32_173 : i32
      %895 = tpu.assume_multiple %894, 8 : i32
      %896 = arith.index_cast %893 : i32 to index
      %c0_174 = arith.constant 0 : index
      %897 = vector.load %arg9[%896, %c0_174] : memref<80x256xf32, #tpu.memory_space<vmem>>, vector<8x256xf32>
      %898 = arith.index_cast %895 : i32 to index
      %c0_175 = arith.constant 0 : index
      %899 = vector.load %arg9[%898, %c0_175] : memref<80x256xf32, #tpu.memory_space<vmem>>, vector<8x256xf32>
      %900 = tpu.concatenate %881, %887 in 1 : vector<8x32xf32>, vector<8x32xf32> -> vector<8x64xf32>
      %cst_176 = arith.constant dense<0.000000e+00> : vector<8x256xf32>
      %901 = tpu.matmul %900, %34, %cst_176 {dimension_numbers = #tpu.dot_dimension_numbers<[1], [0], [0], [1], [0, 0, 1, 1], [], []>} : vector<8x64xf32>, vector<64x256xf32>, vector<8x256xf32> -> vector<8x256xf32>
      %902 = vector.extract_strided_slice %897 {offsets = [0, 0], sizes = [8, 128], strides = [1, 1]} : vector<8x256xf32> to vector<8x128xf32>
      %903 = vector.extract_strided_slice %901 {offsets = [0, 0], sizes = [8, 128], strides = [1, 1]} : vector<8x256xf32> to vector<8x128xf32>
      %904 = arith.addf %902, %903 : vector<8x128xf32>
      %905 = vector.extract_strided_slice %899 {offsets = [0, 128], sizes = [8, 128], strides = [1, 1]} : vector<8x256xf32> to vector<8x128xf32>
      %906 = vector.extract_strided_slice %901 {offsets = [0, 128], sizes = [8, 128], strides = [1, 1]} : vector<8x256xf32> to vector<8x128xf32>
      %907 = arith.addf %905, %906 : vector<8x128xf32>
      %908 = vector.extract_strided_slice %904 {offsets = [0, 0], sizes = [8, 32], strides = [1, 1]} : vector<8x128xf32> to vector<8x32xf32>
      %909 = arith.negf %908 : vector<8x32xf32>
      %910 = math.exp %909 : vector<8x32xf32>
      %cst_177 = arith.constant 1.000000e+00 : f32
      %911 = vector.broadcast %cst_177 : f32 to vector<8x32xf32>
      %912 = arith.addf %911, %910 : vector<8x32xf32>
      %913 = arith.divf %911, %912 : vector<8x32xf32>
      %914 = vector.extract_strided_slice %904 {offsets = [0, 32], sizes = [8, 32], strides = [1, 1]} : vector<8x128xf32> to vector<8x32xf32>
      %915 = arith.negf %914 : vector<8x32xf32>
      %916 = math.exp %915 : vector<8x32xf32>
      %cst_178 = arith.constant 1.000000e+00 : f32
      %917 = vector.broadcast %cst_178 : f32 to vector<8x32xf32>
      %918 = arith.addf %917, %916 : vector<8x32xf32>
      %919 = arith.divf %917, %918 : vector<8x32xf32>
      %920 = vector.extract_strided_slice %904 {offsets = [0, 64], sizes = [8, 32], strides = [1, 1]} : vector<8x128xf32> to vector<8x32xf32>
      %921 = math.tanh %920 : vector<8x32xf32>
      %922 = vector.extract_strided_slice %904 {offsets = [0, 96], sizes = [8, 32], strides = [1, 1]} : vector<8x128xf32> to vector<8x32xf32>
      %923 = arith.negf %922 : vector<8x32xf32>
      %924 = math.exp %923 : vector<8x32xf32>
      %cst_179 = arith.constant 1.000000e+00 : f32
      %925 = vector.broadcast %cst_179 : f32 to vector<8x32xf32>
      %926 = arith.addf %925, %924 : vector<8x32xf32>
      %927 = arith.divf %925, %926 : vector<8x32xf32>
      %928 = arith.mulf %919, %884 : vector<8x32xf32>
      %929 = arith.mulf %913, %921 : vector<8x32xf32>
      %930 = arith.addf %928, %929 : vector<8x32xf32>
      %931 = math.tanh %930 : vector<8x32xf32>
      %932 = arith.mulf %927, %931 : vector<8x32xf32>
      %933 = vector.extract_strided_slice %907 {offsets = [0, 0], sizes = [8, 32], strides = [1, 1]} : vector<8x128xf32> to vector<8x32xf32>
      %934 = arith.negf %933 : vector<8x32xf32>
      %935 = math.exp %934 : vector<8x32xf32>
      %cst_180 = arith.constant 1.000000e+00 : f32
      %936 = vector.broadcast %cst_180 : f32 to vector<8x32xf32>
      %937 = arith.addf %936, %935 : vector<8x32xf32>
      %938 = arith.divf %936, %937 : vector<8x32xf32>
      %939 = vector.extract_strided_slice %907 {offsets = [0, 32], sizes = [8, 32], strides = [1, 1]} : vector<8x128xf32> to vector<8x32xf32>
      %940 = arith.negf %939 : vector<8x32xf32>
      %941 = math.exp %940 : vector<8x32xf32>
      %cst_181 = arith.constant 1.000000e+00 : f32
      %942 = vector.broadcast %cst_181 : f32 to vector<8x32xf32>
      %943 = arith.addf %942, %941 : vector<8x32xf32>
      %944 = arith.divf %942, %943 : vector<8x32xf32>
      %945 = vector.extract_strided_slice %907 {offsets = [0, 64], sizes = [8, 32], strides = [1, 1]} : vector<8x128xf32> to vector<8x32xf32>
      %946 = math.tanh %945 : vector<8x32xf32>
      %947 = vector.extract_strided_slice %907 {offsets = [0, 96], sizes = [8, 32], strides = [1, 1]} : vector<8x128xf32> to vector<8x32xf32>
      %948 = arith.negf %947 : vector<8x32xf32>
      %949 = math.exp %948 : vector<8x32xf32>
      %cst_182 = arith.constant 1.000000e+00 : f32
      %950 = vector.broadcast %cst_182 : f32 to vector<8x32xf32>
      %951 = arith.addf %950, %949 : vector<8x32xf32>
      %952 = arith.divf %950, %951 : vector<8x32xf32>
      %953 = arith.mulf %944, %890 : vector<8x32xf32>
      %954 = arith.mulf %938, %946 : vector<8x32xf32>
      %955 = arith.addf %953, %954 : vector<8x32xf32>
      %956 = math.tanh %955 : vector<8x32xf32>
      %957 = arith.mulf %952, %956 : vector<8x32xf32>
      %958 = vector.broadcast %c9_i32_170 : i32 to vector<8x1xi32>
      %959 = arith.cmpi slt, %958, %32 : vector<8x1xi32>
      %960 = vector.broadcast %891 : i32 to vector<8x1xi32>
      %961 = arith.cmpi slt, %960, %32 : vector<8x1xi32>
      %cst_183 = arith.constant 0.000000e+00 : f32
      %962 = vector.shape_cast %959 : vector<8x1xi1> to vector<8x1xi1>
      %963 = vector.broadcast %962 : vector<8x1xi1> to vector<8x32xi1>
      %964 = vector.broadcast %cst_183 : f32 to vector<8x32xf32>
      %965 = arith.select %963, %932, %964 : vector<8x32xi1>, vector<8x32xf32>
      %966 = arith.index_cast %893 : i32 to index
      %c0_184 = arith.constant 0 : index
      %967 = vector.load %arg7[%966, %c0_184] : memref<80x64xf32, #tpu.memory_space<vmem>>, vector<8x32xf32>
      tpu.vector_store %arg7[%966, %c0_184], %965 {strides = array<i32>} : memref<80x64xf32, #tpu.memory_space<vmem>>, vector<8x32xf32>,
      %cst_185 = arith.constant 0.000000e+00 : f32
      %968 = vector.shape_cast %961 : vector<8x1xi1> to vector<8x1xi1>
      %969 = vector.broadcast %968 : vector<8x1xi1> to vector<8x32xi1>
      %970 = vector.broadcast %cst_185 : f32 to vector<8x32xf32>
      %971 = arith.select %969, %957, %970 : vector<8x32xi1>, vector<8x32xf32>
      %972 = arith.index_cast %895 : i32 to index
      %c32_186 = arith.constant 32 : index
      %973 = vector.load %arg7[%972, %c32_186] : memref<80x64xf32, #tpu.memory_space<vmem>>, vector<8x32xf32>
      tpu.vector_store %arg7[%972, %c32_186], %971 {strides = array<i32>} : memref<80x64xf32, #tpu.memory_space<vmem>>, vector<8x32xf32>,
      %974 = vector.shape_cast %959 : vector<8x1xi1> to vector<8x1xi1>
      %975 = vector.broadcast %974 : vector<8x1xi1> to vector<8x32xi1>
      %976 = arith.select %975, %932, %881 : vector<8x32xi1>, vector<8x32xf32>
      %977 = vector.shape_cast %959 : vector<8x1xi1> to vector<8x1xi1>
      %978 = vector.broadcast %977 : vector<8x1xi1> to vector<8x32xi1>
      %979 = arith.select %978, %930, %884 : vector<8x32xi1>, vector<8x32xf32>
      %980 = vector.shape_cast %961 : vector<8x1xi1> to vector<8x1xi1>
      %981 = vector.broadcast %980 : vector<8x1xi1> to vector<8x32xi1>
      %982 = arith.select %981, %957, %887 : vector<8x32xi1>, vector<8x32xf32>
      %983 = vector.shape_cast %961 : vector<8x1xi1> to vector<8x1xi1>
      %984 = vector.broadcast %983 : vector<8x1xi1> to vector<8x32xi1>
      %985 = arith.select %984, %955, %890 : vector<8x32xi1>, vector<8x32xf32>
      %c10_i32 = arith.constant 10 : i32
      %986 = tpu.concatenate %976, %982 in 1 : vector<8x32xf32>, vector<8x32xf32> -> vector<8x64xf32>
      %c0_187 = arith.constant 0 : index
      %c0_188 = arith.constant 0 : index
      %987 = vector.load %arg6[%c0_187, %c0_188] : memref<8x64xf32, #tpu.memory_space<vmem>>, vector<8x64xf32>
      tpu.vector_store %arg6[%c0_187, %c0_188], %986 {strides = array<i32>} : memref<8x64xf32, #tpu.memory_space<vmem>>, vector<8x64xf32>,
    } else {
    }
    return
  }
  func.func @transform_0(%arg0: i32) -> (i32, i32) {
    %c0_i32 = arith.constant 0 : i32
    %c0_i32_0 = arith.constant 0 : i32
    %c0_i32_1 = arith.constant 0 : i32
    return %c0_i32, %c0_i32_0 : i32, i32
  }
  func.func @transform_1(%arg0: i32) -> (i32, i32, i32) {
    %c0_i32 = arith.constant 0 : i32
    %c0_i32_0 = arith.constant 0 : i32
    %c0_i32_1 = arith.constant 0 : i32
    return %arg0, %c0_i32, %c0_i32_0 : i32, i32, i32
  }
  func.func @transform_2(%arg0: i32) -> (i32, i32, i32) {
    %c0_i32 = arith.constant 0 : i32
    %c0_i32_0 = arith.constant 0 : i32
    %c0_i32_1 = arith.constant 0 : i32
    return %arg0, %c0_i32, %c0_i32_0 : i32, i32, i32
  }
  func.func @transform_3(%arg0: i32) -> (i32, i32, i32) {
    %c0_i32 = arith.constant 0 : i32
    %c0_i32_0 = arith.constant 0 : i32
    %c0_i32_1 = arith.constant 0 : i32
    return %arg0, %c0_i32, %c0_i32_0 : i32, i32, i32
  }
  func.func @transform_4(%arg0: i32) -> (i32, i32) {
    %c0_i32 = arith.constant 0 : i32
    %c0_i32_0 = arith.constant 0 : i32
    %c0_i32_1 = arith.constant 0 : i32
    return %c0_i32, %c0_i32_0 : i32, i32
  }
  func.func @transform_5(%arg0: i32) -> (i32, i32) {
    %c0_i32 = arith.constant 0 : i32
    %c0_i32_0 = arith.constant 0 : i32
    %c0_i32_1 = arith.constant 0 : i32
    return %c0_i32, %c0_i32_0 : i32, i32
  }
}

</mosaic_0001>

<llo_original>
// kernel: model_forward_pallas.1
$region0: #{model_forward_pallas.1}
  #allocation0 [shape = 'u32[]', space=smem, size = 0x4, offset = 0x4, fixed_abs, tag = 'smem constant byte address 0x4 - core index']
  #allocation1 [shape = 'u32[144,128]{1,0:T(1,128)}', space=vmem, size = 0x12000, scoped, tag = 'internal scratch']
  #allocation2 [shape = 'f32[80,64]{1,0:T(8,128)}', space=vmem, size = 0xa000, scoped, tag = 'scratch operand']
  #allocation3 [shape = 'f32[80,64]{1,0:T(8,128)}', space=vmem, size = 0xa000, scoped, tag = 'scratch operand']
  #allocation4 [shape = 'f32[80,256]{1,0:T(8,128)}', space=vmem, size = 0x14000, scoped, tag = 'scratch operand']
  %s0 = inlined_call_operand.vmem [shape: f32[80,64], index: 0, kind: input, shape index: {}]
  %s1 = inlined_call_operand.vmem [shape: f32[2,64,256], index: 1, kind: input, shape index: {}]
  %s2 = inlined_call_operand.vmem [shape: f32[2,64,256], index: 2, kind: input, shape index: {}]
  %s3 = inlined_call_operand.vmem [shape: f32[2,1,256], index: 3, kind: input, shape index: {}]
  %s4 = inlined_call_operand.vmem [shape: s32[8,1], index: 4, kind: input, shape index: {}]
  %s5 = inlined_call_operand.vmem [shape: f32[8,64], index: 5, kind: output, shape index: {}]
  %s6 = sld [smem:[#allocation0]]
  $region65: #{model_forward_pallas.1} parent=0
    _
  %s8 = ssub.s32 1, %s6
  %s9 = scalar_select 0, %s8, %s6
  loop: start=0, step=1, limit=4
  $region2: #{model_forward_pallas.1} parent=0 // loop_pre_header
    _
  $region3: #{model_forward_pallas.1} parent=0 // loop_header
    %s11 = sphi 0, %s15
    %p12 = scmp.ge.s32.totalorder %s11, 4
    %s19 = sphi 0, %s19
    %s21 = sphi 0, %s19
    %s22 = sphi 0, %s21
    %s36 = sphi 0, %s22
    %s42 = sphi 0, %s44
    %s45 = sphi 0, %s42
    %s46 = sphi 0, %s45
    %s62 = sphi 0, %s46
    %s68 = sphi 0, %s70
    %s71 = sphi 0, %s68
    %s72 = sphi 0, %s71
    %s88 = sphi 0, %s72
    %s94 = sphi 0, %s96
    %s97 = sphi 0, %s94
    %s98 = sphi 0, %s97
    %s114 = sphi 0, %s98
    %s118 = sphi 0, %s118
    %s120 = sphi 0, %s118
    %s121 = sphi 0, %s120
    %s135 = sphi 0, %s121
    %s139 = sphi 0, %s139
    %s141 = sphi 0, %s139
    %s142 = sphi 0, %s141
    %s156 = sphi 0, %s142
  $region4: #{model_forward_pallas.1} parent=0 // loop_header_branch
    %14 = sbr.rel (%p12) target = $region8
  $region5: #{model_forward_pallas.1} parent=0 // loop_body
    %s16 = ssub.s32 %s11, 1
    %s17 = ssub.s32 %s11, 2
    %s18 = sadd.s32 %s11, 1
    %s20 = sadd.s32 %s19, 1
    %p23 = scmp.eq.s32.totalorder %s11, 1
    %p24 = scmp.ne.s32.totalorder %s19, %s21
    %p25 = scmp.eq.s32.totalorder %s11, 0
    %p26 = por %p24, %p25
    %p27 = scmp.ne.s32.totalorder %s19, %s21
    %p28 = scmp.eq.s32.totalorder %s16, 1
    %p29 = por %p27, %p28
    %p30 = scmp.ne.s32.totalorder %s21, %s22
    %p31 = scmp.eq.s32.totalorder %s16, 0
    %p32 = por %p30, %p31
    %p33 = scmp.ne.s32.totalorder %s21, %s22
    %p34 = scmp.eq.s32.totalorder %s17, 1
    %p35 = por %p33, %p34
    %p37 = scmp.ne.s32.totalorder %s22, %s36
    %p38 = scmp.eq.s32.totalorder %s17, 0
    %p39 = por %p37, %p38
    %s40 = ssub.s32 %s11, %s18
    %p41 = scmp.eq.s32.totalorder %s40, 0
    %s43 = sadd.s32 %s42, 1
    %s44 = scalar_select %p41, %s42, %s43
    %p47 = pneg %p41
    %p48 = scmp.eq.s32.totalorder %s11, 1
    %p49 = por %p47, %p48
    %p50 = scmp.ne.s32.totalorder %s42, %s45
    %p51 = scmp.eq.s32.totalorder %s11, 0
    %p52 = por %p50, %p51
    %p53 = scmp.ne.s32.totalorder %s42, %s45
    %p54 = scmp.eq.s32.totalorder %s16, 1
    %p55 = por %p53, %p54
    %p56 = scmp.ne.s32.totalorder %s45, %s46
    %p57 = scmp.eq.s32.totalorder %s16, 0
    %p58 = por %p56, %p57
    %p59 = scmp.ne.s32.totalorder %s45, %s46
    %p60 = scmp.eq.s32.totalorder %s17, 1
    %p61 = por %p59, %p60
    %p63 = scmp.ne.s32.totalorder %s46, %s62
    %p64 = scmp.eq.s32.totalorder %s17, 0
    %p65 = por %p63, %p64
    %s66 = ssub.s32 %s11, %s18
    %p67 = scmp.eq.s32.totalorder %s66, 0
    %s69 = sadd.s32 %s68, 1
    %s70 = scalar_select %p67, %s68, %s69
    %p73 = pneg %p67
    %p74 = scmp.eq.s32.totalorder %s11, 1
    %p75 = por %p73, %p74
    %p76 = scmp.ne.s32.totalorder %s68, %s71
    %p77 = scmp.eq.s32.totalorder %s11, 0
    %p78 = por %p76, %p77
    %p79 = scmp.ne.s32.totalorder %s68, %s71
    %p80 = scmp.eq.s32.totalorder %s16, 1
    %p81 = por %p79, %p80
    %p82 = scmp.ne.s32.totalorder %s71, %s72
    %p83 = scmp.eq.s32.totalorder %s16, 0
    %p84 = por %p82, %p83
    %p85 = scmp.ne.s32.totalorder %s71, %s72
    %p86 = scmp.eq.s32.totalorder %s17, 1
    %p87 = por %p85, %p86
    %p89 = scmp.ne.s32.totalorder %s72, %s88
    %p90 = scmp.eq.s32.totalorder %s17, 0
    %p91 = por %p89, %p90
    %s92 = ssub.s32 %s11, %s18
    %p93 = scmp.eq.s32.totalorder %s92, 0
    %s95 = sadd.s32 %s94, 1
    %s96 = scalar_select %p93, %s94, %s95
    %p99 = pneg %p93
    %p100 = scmp.eq.s32.totalorder %s11, 1
    %p101 = por %p99, %p100
    %p102 = scmp.ne.s32.totalorder %s94, %s97
    %p103 = scmp.eq.s32.totalorder %s11, 0
    %p104 = por %p102, %p103
    %p105 = scmp.ne.s32.totalorder %s94, %s97
    %p106 = scmp.eq.s32.totalorder %s16, 1
    %p107 = por %p105, %p106
    %p108 = scmp.ne.s32.totalorder %s97, %s98
    %p109 = scmp.eq.s32.totalorder %s16, 0
    %p110 = por %p108, %p109
    %p111 = scmp.ne.s32.totalorder %s97, %s98
    %p112 = scmp.eq.s32.totalorder %s17, 1
    %p113 = por %p111, %p112
    %p115 = scmp.ne.s32.totalorder %s98, %s114
    %p116 = scmp.eq.s32.totalorder %s17, 0
    %p117 = por %p115, %p116
    %s119 = sadd.s32 %s118, 1
    %p122 = scmp.eq.s32.totalorder %s11, 1
    %p123 = scmp.ne.s32.totalorder %s118, %s120
    %p124 = scmp.eq.s32.totalorder %s11, 0
    %p125 = por %p123, %p124
    %p126 = scmp.ne.s32.totalorder %s118, %s120
    %p127 = scmp.eq.s32.totalorder %s16, 1
    %p128 = por %p126, %p127
    %p129 = scmp.ne.s32.totalorder %s120, %s121
    %p130 = scmp.eq.s32.totalorder %s16, 0
    %p131 = por %p129, %p130
    %p132 = scmp.ne.s32.totalorder %s120, %s121
    %p133 = scmp.eq.s32.totalorder %s17, 1
    %p134 = por %p132, %p133
    %p136 = scmp.ne.s32.totalorder %s121, %s135
    %p137 = scmp.eq.s32.totalorder %s17, 0
    %p138 = por %p136, %p137
    %s140 = sadd.s32 %s139, 1
    %p143 = scmp.eq.s32.totalorder %s11, 1
    %p144 = scmp.ne.s32.totalorder %s139, %s141
    %p145 = scmp.eq.s32.totalorder %s11, 0
    %p146 = por %p144, %p145
    %p147 = scmp.ne.s32.totalorder %s139, %s141
    %p148 = scmp.eq.s32.totalorder %s16, 1
    %p149 = por %p147, %p148
    %p150 = scmp.ne.s32.totalorder %s141, %s142
    %p151 = scmp.eq.s32.totalorder %s16, 0
    %p152 = por %p150, %p151
    %p153 = scmp.ne.s32.totalorder %s141, %s142
    %p154 = scmp.eq.s32.totalorder %s17, 1
    %p155 = por %p153, %p154
    %p157 = scmp.ne.s32.totalorder %s142, %s156
    %p158 = scmp.eq.s32.totalorder %s17, 0
    %p159 = por %p157, %p158
    %p160 = scmp.le.s32.totalorder 1, %s11
    %p161 = scmp.lt.s32.totalorder %s11, 3
    %p162 = pnand %p160, %p161
    %p163 = pneg %p162
    // Predicated region
    $region9: #{model_forward_pallas.1} parent=5 // pred_check
      _
    $region10: #{model_forward_pallas.1} parent=5 // pred_check_branch
      %165 = sbr.rel (%p162) target = $region12
    $region11: #{model_forward_pallas.1} parent=5 // pred_region
      %s166 = ssub.s32 %s11, 1
      // Predicated region
      $region13: #{model_forward_pallas.1} parent=11 // pred_check
        %p167 = pneg %p32
      $region14: #{model_forward_pallas.1} parent=11 // pred_check_branch
        %169 = sbr.rel (%p167) target = $region16
      $region15: #{model_forward_pallas.1} parent=11 // pred_region
        _
      $region16: #{model_forward_pallas.1} parent=11 // pred_fallthru
        _
      // Predicated region
      $region17: #{model_forward_pallas.1} parent=11 // pred_check
        %p170 = pneg %p131
      $region18: #{model_forward_pallas.1} parent=11 // pred_check_branch
        %172 = sbr.rel (%p170) target = $region20
      $region19: #{model_forward_pallas.1} parent=11 // pred_region
        _
      $region20: #{model_forward_pallas.1} parent=11 // pred_fallthru
        _
    $region12: #{model_forward_pallas.1} parent=5 // pred_fallthru
      _
    %p173 = scmp.lt.s32.totalorder %s11, 2
    // Predicated region
    $region21: #{model_forward_pallas.1} parent=5 // pred_check
      %p174 = pneg %p173
    $region22: #{model_forward_pallas.1} parent=5 // pred_check_branch
      %176 = sbr.rel (%p174) target = $region24
    $region23: #{model_forward_pallas.1} parent=5 // pred_region
      // Predicated region
      $region25: #{model_forward_pallas.1} parent=23 // pred_check
        %p177 = pneg %p52
      $region26: #{model_forward_pallas.1} parent=23 // pred_check_branch
        %179 = sbr.rel (%p177) target = $region28
      $region27: #{model_forward_pallas.1} parent=23 // pred_region
        %p180 = scmp.lt.s32.totalorder %s11, 1
        %s181 = scalar_select %p180, %s11, 1
        %s182 = smul.addr %s181, 16
        %s183 = smul.addr %s182, 8
        %s184 = scalar_lea.vmem %s1, %s183
      $region28: #{model_forward_pallas.1} parent=23 // pred_fallthru
        _
      // Predicated region
      $region29: #{model_forward_pallas.1} parent=23 // pred_check
        %p185 = pneg %p78
      $region30: #{model_forward_pallas.1} parent=23 // pred_check_branch
        %187 = sbr.rel (%p185) target = $region32
      $region31: #{model_forward_pallas.1} parent=23 // pred_region
        %p188 = scmp.lt.s32.totalorder %s11, 1
        %s189 = scalar_select %p188, %s11, 1
        %s190 = smul.addr %s189, 16
        %s191 = smul.addr %s190, 8
        %s192 = scalar_lea.vmem %s2, %s191
      $region32: #{model_forward_pallas.1} parent=23 // pred_fallthru
        _
      // Predicated region
      $region33: #{model_forward_pallas.1} parent=23 // pred_check
        %p193 = pneg %p104
      $region34: #{model_forward_pallas.1} parent=23 // pred_check_branch
        %195 = sbr.rel (%p193) target = $region36
      $region35: #{model_forward_pallas.1} parent=23 // pred_region
        %p196 = scmp.lt.s32.totalorder %s11, 1
        %s197 = scalar_select %p196, %s11, 1
        %s198 = smul.addr %s197, 2
        %s199 = scalar_lea.vmem %s3, %s198
      $region36: #{model_forward_pallas.1} parent=23 // pred_fallthru
        _
    $region24: #{model_forward_pallas.1} parent=5 // pred_fallthru
      _
    %p200 = scmp.le.s32.totalorder 1, %s11
    %p201 = scmp.lt.s32.totalorder %s11, 3
    %p202 = pnand %p200, %p201
    %p203 = pneg %p202
    // Predicated region
    $region37: #{model_forward_pallas.1} parent=5 // pred_check
      _
    $region38: #{model_forward_pallas.1} parent=5 // pred_check_branch
      %205 = sbr.rel (%p202) target = $region40
    $region39: #{model_forward_pallas.1} parent=5 // pred_region
      %s206 = ssub.s32 %s11, 1
      %p207 = pneg %p32
      %p208 = pneg %p29
      %p209 = scmp.lt.s32.totalorder %s16, 1
      %s210 = scalar_select %p209, %s16, 1
      %s211 = smul.addr %s210, 16
      %s212 = smul.addr %s211, 8
      %s213 = scalar_lea.vmem %s1, %s212
      %p214 = pneg %p58
      %p215 = pneg %p55
      %p216 = scmp.lt.s32.totalorder %s16, 1
      %s217 = scalar_select %p216, %s16, 1
      %s218 = smul.addr %s217, 16
      %s219 = smul.addr %s218, 8
      %s220 = scalar_lea.vmem %s2, %s219
      %p221 = pneg %p84
      %p222 = pneg %p81
      %p223 = scmp.lt.s32.totalorder %s16, 1
      %s224 = scalar_select %p223, %s16, 1
      %s225 = smul.addr %s224, 2
      %s226 = scalar_lea.vmem %s3, %s225
      %p227 = pneg %p110
      %p228 = pneg %p107
      %p229 = pneg %p131
      %p230 = pneg %p128
      %p231 = pneg %p152
      %p232 = pneg %p149
      %p233 = scmp.lt.s32.totalorder %s16, 1
      %s234 = scalar_select %p233, %s16, 1
      %s235 = smul.addr %s234, 16
      %s236 = smul.addr %s235, 8
      %s237 = scalar_lea.vmem %s1, %s236
      %p238 = scmp.lt.s32.totalorder %s16, 1
      %s239 = scalar_select %p238, %s16, 1
      %s240 = smul.addr %s239, 16
      %s241 = smul.addr %s240, 8
      %s242 = scalar_lea.vmem %s2, %s241
      %p243 = scmp.lt.s32.totalorder %s16, 1
      %s244 = scalar_select %p243, %s16, 1
      %s245 = smul.addr %s244, 2
      %s246 = scalar_lea.vmem %s3, %s245
      %p247 = scmp.lt.s32.totalorder %s16, 0
      %s248 = ssub.s32 0, %s16
      %s249 = scalar_select %p247, %s248, %s16
      %s250 = sand.u32 %s249, 1
      %s251 = ssub.s32 0, %s250
      %s252 = scalar_select %p247, %s251, %s250
      %p253 = scmp.ne.s32.totalorder %s252, 0
      %p254 = scmp.lt.s32.totalorder %s252, 0
      %p255 = pnand %p254, %p253
      %p256 = pneg %p255
      %s257 = sadd.s32 %s252, 2
      %s258 = scalar_select %p256, %s257, %s252
      %p259 = scmp.eq.s32.totalorder %s258, 1
      %p260 = scmp.eq.s32.totalorder %s16, 0
      // Predicated region
      $region41: #{model_forward_pallas.1} parent=39 // pred_check
        %p261 = pneg %p260
      $region42: #{model_forward_pallas.1} parent=39 // pred_check_branch
        %263 = sbr.rel (%p261) target = $region44
      $region43: #{model_forward_pallas.1} parent=39 // pred_region
        %vm264 = vcmask 523264
        %265 = vst.msk [vmem:[#allocation2] sm:$0xff] %vm264, 0.0
        %266 = vst.msk [vmem:[#allocation2 + $0x8] sm:$0xff] %vm264, 0.0
        %267 = vst.msk [vmem:[#allocation2 + $0x10] sm:$0xff] %vm264, 0.0
        %268 = vst.msk [vmem:[#allocation2 + $0x18] sm:$0xff] %vm264, 0.0
        %269 = vst.msk [vmem:[#allocation2 + $0x20] sm:$0xff] %vm264, 0.0
        %270 = vst.msk [vmem:[#allocation2 + $0x28] sm:$0xff] %vm264, 0.0
        %271 = vst.msk [vmem:[#allocation2 + $0x30] sm:$0xff] %vm264, 0.0
        %272 = vst.msk [vmem:[#allocation2 + $0x38] sm:$0xff] %vm264, 0.0
        %273 = vst.msk [vmem:[#allocation2 + $0x40] sm:$0xff] %vm264, 0.0
        %274 = vst.msk [vmem:[#allocation2 + $0x48] sm:$0xff] %vm264, 0.0
        %275 = vst.msk [vmem:[#allocation3] sm:$0xff] %vm264, 0.0
        %276 = vst.msk [vmem:[#allocation3 + $0x8] sm:$0xff] %vm264, 0.0
        %277 = vst.msk [vmem:[#allocation3 + $0x10] sm:$0xff] %vm264, 0.0
        %278 = vst.msk [vmem:[#allocation3 + $0x18] sm:$0xff] %vm264, 0.0
        %279 = vst.msk [vmem:[#allocation3 + $0x20] sm:$0xff] %vm264, 0.0
        %280 = vst.msk [vmem:[#allocation3 + $0x28] sm:$0xff] %vm264, 0.0
        %281 = vst.msk [vmem:[#allocation3 + $0x30] sm:$0xff] %vm264, 0.0
        %282 = vst.msk [vmem:[#allocation3 + $0x38] sm:$0xff] %vm264, 0.0
        %283 = vst.msk [vmem:[#allocation3 + $0x40] sm:$0xff] %vm264, 0.0
        %284 = vst.msk [vmem:[#allocation3 + $0x48] sm:$0xff] %vm264, 0.0
        %v285 = vld [vmem:[%s0] sm:$0xff]
        %v286 = vld [vmem:[%s0 + $0x8] sm:$0xff]
        %v287 = vld [vmem:[%s0 + $0x10] sm:$0xff]
        %v288 = vld [vmem:[%s0 + $0x18] sm:$0xff]
        %v289 = vld [vmem:[%s0 + $0x20] sm:$0xff]
        %v290 = vld [vmem:[%s0 + $0x28] sm:$0xff]
        %v291 = vld [vmem:[%s0 + $0x30] sm:$0xff]
        %v292 = vld [vmem:[%s0 + $0x38] sm:$0xff]
        %v293 = vld [vmem:[%s0 + $0x40] sm:$0xff]
        %v294 = vld [vmem:[%s0 + $0x48] sm:$0xff]
        %v295 = vld [vmem:[%s237] sm:$0xff]
        %v296 = vld [vmem:[%s237 + $0x8] sm:$0xff]
        %v297 = vld [vmem:[%s237 + $0x10] sm:$0xff]
        %v298 = vld [vmem:[%s237 + $0x18] sm:$0xff]
        %v299 = vld [vmem:[%s237 + $0x20] sm:$0xff]
        %v300 = vld [vmem:[%s237 + $0x28] sm:$0xff]
        %v301 = vld [vmem:[%s237 + $0x30] sm:$0xff]
        %v302 = vld [vmem:[%s237 + $0x38] sm:$0xff]
        %v303 = vld [vmem:[%s237 + $0x40] sm:$0xff]
        %v304 = vld [vmem:[%s237 + $0x48] sm:$0xff]
        %v305 = vld [vmem:[%s237 + $0x50] sm:$0xff]
        %v306 = vld [vmem:[%s237 + $0x58] sm:$0xff]
        %v307 = vld [vmem:[%s237 + $0x60] sm:$0xff]
        %v308 = vld [vmem:[%s237 + $0x68] sm:$0xff]
        %v309 = vld [vmem:[%s237 + $0x70] sm:$0xff]
        %v310 = vld [vmem:[%s237 + $0x78] sm:$0xff]
        %v311 = vld [vmem:[%s246] sm:$0x3]
        %v313 = vlaneseq
        %v314 = vshrl.u32 %v313, 7
        %v315 = vsub.s32 0, %v314
        %v316 = vrot.slane %v311, %v315
        %v317 = vlaneseq
        %v318 = vshrl.u32 %v317, 7
        %v319 = vsub.s32 1, %v318
        %v320 = vrot.slane %v311, %v319
        %v324 = vsel %vm264, %v285, 0
        %v327 = vsel %vm264, %v286, 0
        %v330 = vsel %vm264, %v287, 0
        %v333 = vsel %vm264, %v288, 0
        %v336 = vsel %vm264, %v289, 0
        %v339 = vsel %vm264, %v290, 0
        %v342 = vsel %vm264, %v291, 0
        %v345 = vsel %vm264, %v292, 0
        %v348 = vsel %vm264, %v293, 0
        %v351 = vsel %vm264, %v294, 0
        %353 = vmatprep.subr.mxu0 %v296
        %354 = vmatpush1.msra.mxu0 %v295
        %355 = vmatprep.subr.mxu0 %v298
        %356 = vmatpush1.msra.mxu0 %v297
        %357 = vmatprep.subr.mxu0 %v300
        %358 = vmatpush1.msra.mxu0 %v299
        %359 = vmatprep.subr.mxu0 %v302
        %360 = vmatpush1.msra.mxu0 %v301
        %361 = vmatprep.subr.mxu0 %v304
        %362 = vmatpush1.msra.mxu0 %v303
        %363 = vmatprep.subr.mxu0 %v306
        %364 = vmatpush1.msra.mxu0 %v305
        %365 = vmatprep.subr.mxu0 %v308
        %366 = vmatpush1.msra.mxu0 %v307
        %367 = vmatprep.subr.mxu0 %v310
        %368 = vmatpush1.msra.mxu0 %v309
        %369 = vmatprep.subr.mxu0 0.0
        %370 = vmatpush1.msra.mxu0 0.0
        %371 = vmatprep.subr.mxu0 0.0
        %372 = vmatpush1.msra.mxu0 0.0
        %373 = vmatprep.subr.mxu0 0.0
        %374 = vmatpush1.msra.mxu0 0.0
        %375 = vmatprep.subr.mxu0 0.0
        %376 = vmatpush1.msra.mxu0 0.0
        %377 = vmatprep.subr.mxu0 0.0
        %378 = vmatpush1.msra.mxu0 0.0
        %379 = vmatprep.subr.mxu0 0.0
        %380 = vmatpush1.msra.mxu0 0.0
        %381 = vmatprep.subr.mxu0 0.0
        %382 = vmatpush1.msra.mxu0 0.0
        %383 = vmatprep.subr.mxu0 0.0
        %384 = vmatpush1.msra.mxu0 0.0
        %385 = vmatprep.subr.mxu0 0.0
        %386 = vmatpush1.msra.mxu0 0.0
        %387 = vmatprep.subr.mxu0 0.0
        %388 = vmatpush1.msra.mxu0 0.0
        %389 = vmatprep.subr.mxu0 0.0
        %390 = vmatpush1.msra.mxu0 0.0
        %391 = vmatprep.subr.mxu0 0.0
        %392 = vmatpush1.msra.mxu0 0.0
        %393 = vmatprep.subr.mxu0 0.0
        %394 = vmatpush1.msra.mxu0 0.0
        %395 = vmatprep.subr.mxu0 0.0
        %396 = vmatpush1.msra.mxu0 0.0
        %397 = vmatprep.subr.mxu0 0.0
        %398 = vmatpush1.msra.mxu0 0.0
        %399 = vmatprep.subr.mxu0 0.0
        %400 = vmatpush1.msra.mxu0 0.0
        %401 = vmatprep.subr.mxu0 0.0
        %402 = vmatpush1.msra.mxu0 0.0
        %403 = vmatprep.subr.mxu0 0.0
        %404 = vmatpush1.msra.mxu0 0.0
        %405 = vmatprep.subr.mxu0 0.0
        %406 = vmatpush1.msra.mxu0 0.0
        %407 = vmatprep.subr.mxu0 0.0
        %408 = vmatpush1.msra.mxu0 0.0
        %409 = vmatprep.subr.mxu0 0.0
        %410 = vmatpush1.msra.mxu0 0.0
        %411 = vmatprep.subr.mxu0 0.0
        %412 = vmatpush1.msra.mxu0 0.0
        %413 = vmatprep.subr.mxu0 0.0
        %414 = vmatpush1.msra.mxu0 0.0
        %415 = vmatprep.subr.mxu0 0.0
        %416 = vmatpush1.msra.mxu0 0.0
        %417 = vmatprep.mubr.f32.mxu0 0.0
        %418 = vmatmul.mubr.f32.gmra.mrb[0].mxu0 %v324
        %v419 = vpop.f32.mrb[0].mxu0
        %v420 = vadd.f32 %v316, %v419
        %v421 = vpop.f32.mrb[0].mxu0
        %v422 = vadd.f32 %v320, %v421
        %423 = vmatprep.mubr.f32.mxu0 0.0
        %424 = vmatmul.mubr.f32.gmra.mrb[0].mxu0 %v327
        %v425 = vpop.f32.mrb[0].mxu0
        %v426 = vadd.f32 %v316, %v425
        %v427 = vpop.f32.mrb[0].mxu0
        %v428 = vadd.f32 %v320, %v427
        %429 = vmatprep.mubr.f32.mxu0 0.0
        %430 = vmatmul.mubr.f32.gmra.mrb[0].mxu0 %v330
        %v431 = vpop.f32.mrb[0].mxu0
        %v432 = vadd.f32 %v316, %v431
        %v433 = vpop.f32.mrb[0].mxu0
        %v434 = vadd.f32 %v320, %v433
        %435 = vmatprep.mubr.f32.mxu0 0.0
        %436 = vmatmul.mubr.f32.gmra.mrb[0].mxu0 %v333
        %v437 = vpop.f32.mrb[0].mxu0
        %v438 = vadd.f32 %v316, %v437
        %v439 = vpop.f32.mrb[0].mxu0
        %v440 = vadd.f32 %v320, %v439
        %441 = vmatprep.mubr.f32.mxu0 0.0
        %442 = vmatmul.mubr.f32.gmra.mrb[0].mxu0 %v336
        %v443 = vpop.f32.mrb[0].mxu0
        %v444 = vadd.f32 %v316, %v443
        %v445 = vpop.f32.mrb[0].mxu0
        %v446 = vadd.f32 %v320, %v445
        %447 = vmatprep.mubr.f32.mxu0 0.0
        %448 = vmatmul.mubr.f32.gmra.mrb[0].mxu0 %v339
        %v449 = vpop.f32.mrb[0].mxu0
        %v450 = vadd.f32 %v316, %v449
        %v451 = vpop.f32.mrb[0].mxu0
        %v452 = vadd.f32 %v320, %v451
        %453 = vmatprep.mubr.f32.mxu0 0.0
        %454 = vmatmul.mubr.f32.gmra.mrb[0].mxu0 %v342
        %v455 = vpop.f32.mrb[0].mxu0
        %v456 = vadd.f32 %v316, %v455
        %v457 = vpop.f32.mrb[0].mxu0
        %v458 = vadd.f32 %v320, %v457
        %459 = vmatprep.mubr.f32.mxu0 0.0
        %460 = vmatmul.mubr.f32.gmra.mrb[0].mxu0 %v345
        %v461 = vpop.f32.mrb[0].mxu0
        %v462 = vadd.f32 %v316, %v461
        %v463 = vpop.f32.mrb[0].mxu0
        %v464 = vadd.f32 %v320, %v463
        %465 = vmatprep.mubr.f32.mxu0 0.0
        %466 = vmatmul.mubr.f32.gmra.mrb[0].mxu0 %v348
        %v467 = vpop.f32.mrb[0].mxu0
        %v468 = vadd.f32 %v316, %v467
        %v469 = vpop.f32.mrb[0].mxu0
        %v470 = vadd.f32 %v320, %v469
        %471 = vmatprep.mubr.f32.mxu0 0.0
        %472 = vmatmul.mubr.f32.gmra.mrb[0].mxu0 %v351
        %v473 = vpop.f32.mrb[0].mxu0
        %v474 = vadd.f32 %v316, %v473
        %v475 = vpop.f32.mrb[0].mxu0
        %v476 = vadd.f32 %v320, %v475
        %477 = vdwg.mxu0
        %478 = vst [vmem:[#allocation4] sm:$0xff] %v420
        %479 = vst [vmem:[#allocation4 + $0x8] sm:$0xff] %v422
        %480 = vst [vmem:[#allocation4 + $0x10] sm:$0xff] %v426
        %481 = vst [vmem:[#allocation4 + $0x18] sm:$0xff] %v428
        %482 = vst [vmem:[#allocation4 + $0x20] sm:$0xff] %v432
        %483 = vst [vmem:[#allocation4 + $0x28] sm:$0xff] %v434
        %484 = vst [vmem:[#allocation4 + $0x30] sm:$0xff] %v438
        %485 = vst [vmem:[#allocation4 + $0x38] sm:$0xff] %v440
        %486 = vst [vmem:[#allocation4 + $0x40] sm:$0xff] %v444
        %487 = vst [vmem:[#allocation4 + $0x48] sm:$0xff] %v446
        %488 = vst [vmem:[#allocation4 + $0x50] sm:$0xff] %v450
        %489 = vst [vmem:[#allocation4 + $0x58] sm:$0xff] %v452
        %490 = vst [vmem:[#allocation4 + $0x60] sm:$0xff] %v456
        %491 = vst [vmem:[#allocation4 + $0x68] sm:$0xff] %v458
        %492 = vst [vmem:[#allocation4 + $0x70] sm:$0xff] %v462
        %493 = vst [vmem:[#allocation4 + $0x78] sm:$0xff] %v464
        %494 = vst [vmem:[#allocation4 + $0x80] sm:$0xff] %v468
        %495 = vst [vmem:[#allocation4 + $0x88] sm:$0xff] %v470
        %496 = vst [vmem:[#allocation4 + $0x90] sm:$0xff] %v474
        %497 = vst [vmem:[#allocation4 + $0x98] sm:$0xff] %v476
        %v498 = vld [vmem:[%s4] sm:$0xff]
        %v499 = vld [vmem:[%s242] sm:$0xff]
        %v500 = vld [vmem:[%s242 + $0x8] sm:$0xff]
        %v501 = vld [vmem:[%s242 + $0x10] sm:$0xff]
        %v502 = vld [vmem:[%s242 + $0x18] sm:$0xff]
        %v503 = vld [vmem:[%s242 + $0x20] sm:$0xff]
        %v504 = vld [vmem:[%s242 + $0x28] sm:$0xff]
        %v505 = vld [vmem:[%s242 + $0x30] sm:$0xff]
        %v506 = vld [vmem:[%s242 + $0x38] sm:$0xff]
        %v507 = vld [vmem:[%s242 + $0x40] sm:$0xff]
        %v508 = vld [vmem:[%s242 + $0x48] sm:$0xff]
        %v509 = vld [vmem:[%s242 + $0x50] sm:$0xff]
        %v510 = vld [vmem:[%s242 + $0x58] sm:$0xff]
        %v511 = vld [vmem:[%s242 + $0x60] sm:$0xff]
        %v512 = vld [vmem:[%s242 + $0x68] sm:$0xff]
        %v513 = vld [vmem:[%s242 + $0x70] sm:$0xff]
        %v514 = vld [vmem:[%s242 + $0x78] sm:$0xff]
        %s515 = smul.u32 0, 2
        %s516 = smul.addr %s515, 8
        %s517 = scalar_lea.vmem [#allocation4], %s516
        %v518 = vld [vmem:[%s517] sm:$0xff]
        %s519 = smul.u32 9, 2
        %s520 = smul.addr %s519, 8
        %s521 = scalar_lea.vmem [#allocation4], %s520
        %v522 = vld [vmem:[%s521 + $0x8] sm:$0xff]
        %v524 = vsel %vm264, 0.0, 0
        %526 = vmatprep.subr.mxu0 %v500
        %527 = vmatpush1.msra.mxu0 %v499
        %528 = vmatprep.subr.mxu0 %v502
        %529 = vmatpush1.msra.mxu0 %v501
        %530 = vmatprep.subr.mxu0 %v504
        %531 = vmatpush1.msra.mxu0 %v503
        %532 = vmatprep.subr.mxu0 %v506
        %533 = vmatpush1.msra.mxu0 %v505
        %534 = vmatprep.subr.mxu0 %v508
        %535 = vmatpush1.msra.mxu0 %v507
        %536 = vmatprep.subr.mxu0 %v510
        %537 = vmatpush1.msra.mxu0 %v509
        %538 = vmatprep.subr.mxu0 %v512
        %539 = vmatpush1.msra.mxu0 %v511
        %540 = vmatprep.subr.mxu0 %v514
        %541 = vmatpush1.msra.mxu0 %v513
        %542 = vmatprep.subr.mxu0 0.0
        %543 = vmatpush1.msra.mxu0 0.0
        %544 = vmatprep.subr.mxu0 0.0
        %545 = vmatpush1.msra.mxu0 0.0
        %546 = vmatprep.subr.mxu0 0.0
        %547 = vmatpush1.msra.mxu0 0.0
        %548 = vmatprep.subr.mxu0 0.0
        %549 = vmatpush1.msra.mxu0 0.0
        %550 = vmatprep.subr.mxu0 0.0
        %551 = vmatpush1.msra.mxu0 0.0
        %552 = vmatprep.subr.mxu0 0.0
        %553 = vmatpush1.msra.mxu0 0.0
        %554 = vmatprep.subr.mxu0 0.0
        %555 = vmatpush1.msra.mxu0 0.0
        %556 = vmatprep.subr.mxu0 0.0
        %557 = vmatpush1.msra.mxu0 0.0
        %558 = vmatprep.subr.mxu0 0.0
        %559 = vmatpush1.msra.mxu0 0.0
        %560 = vmatprep.subr.mxu0 0.0
        %561 = vmatpush1.msra.mxu0 0.0
        %562 = vmatprep.subr.mxu0 0.0
        %563 = vmatpush1.msra.mxu0 0.0
        %564 = vmatprep.subr.mxu0 0.0
        %565 = vmatpush1.msra.mxu0 0.0
        %566 = vmatprep.subr.mxu0 0.0
        %567 = vmatpush1.msra.mxu0 0.0
        %568 = vmatprep.subr.mxu0 0.0
        %569 = vmatpush1.msra.mxu0 0.0
        %570 = vmatprep.subr.mxu0 0.0
        %571 = vmatpush1.msra.mxu0 0.0
        %572 = vmatprep.subr.mxu0 0.0
        %573 = vmatpush1.msra.mxu0 0.0
        %574 = vmatprep.subr.mxu0 0.0
        %575 = vmatpush1.msra.mxu0 0.0
        %576 = vmatprep.subr.mxu0 0.0
        %577 = vmatpush1.msra.mxu0 0.0
        %578 = vmatprep.subr.mxu0 0.0
        %579 = vmatpush1.msra.mxu0 0.0
        %580 = vmatprep.subr.mxu0 0.0
        %581 = vmatpush1.msra.mxu0 0.0
        %582 = vmatprep.subr.mxu0 0.0
        %583 = vmatpush1.msra.mxu0 0.0
        %584 = vmatprep.subr.mxu0 0.0
        %585 = vmatpush1.msra.mxu0 0.0
        %586 = vmatprep.subr.mxu0 0.0
        %587 = vmatpush1.msra.mxu0 0.0
        %588 = vmatprep.subr.mxu0 0.0
        %589 = vmatpush1.msra.mxu0 0.0
        %590 = vmatprep.mubr.f32.mxu0 0.0
        %591 = vmatmul.mubr.f32.gmra.mrb[0].mxu0 %v524
        %v592 = vpop.f32.mrb[0].mxu0
        %v593 = vadd.f32 0.0, %v592
        %v594 = vpop.f32.mrb[0].mxu0
        %v595 = vadd.f32 0.0, %v594
        %596 = vdwg.mxu0
        %v597 = vadd.f32 %v518, %v593
        %v598 = vadd.f32 %v522, %v595
        %v599 = vxor.u32 %v597, 2147483648
        %v600 = vmul.f32 %v599, 1.442695
        %v601 = vpow.pop %v600
        %v602 = vadd.f32 %v601, 1.0
        %v603 = vrcp.pop %v602
        %v604 = vmul.f32 1.0, %v603
        %v605 = vtanh.pop %v597
        %v606 = vmul.f32 %v604, 0.0
        %608 = vrot.lane.b32.xlu0 %v605, 64
        %v609 = vpop.permute.xlu0 %608
        %v611 = vmul.f32 %v604, %v609
        %613 = vrot.lane.b32.xlu0 %v611, 32
        %v614 = vpop.permute.xlu0 %613
        %v616 = vadd.f32 %v606, %v614
        %v617 = vtanh.pop %v616
        %619 = vrot.lane.b32.xlu0 %v617, 64
        %v620 = vpop.permute.xlu0 %619
        %v622 = vmul.f32 %v604, %v620
        %v623 = vxor.u32 %v598, 2147483648
        %v624 = vmul.f32 %v623, 1.442695
        %v625 = vpow.pop %v624
        %v626 = vadd.f32 %v625, 1.0
        %v627 = vrcp.pop %v626
        %v628 = vmul.f32 1.0, %v627
        %v629 = vtanh.pop %v598
        %v630 = vmul.f32 %v628, 0.0
        %632 = vrot.lane.b32.xlu0 %v629, 64
        %v633 = vpop.permute.xlu0 %632
        %v635 = vmul.f32 %v628, %v633
        %637 = vrot.lane.b32.xlu0 %v635, 32
        %v638 = vpop.permute.xlu0 %637
        %v640 = vadd.f32 %v630, %v638
        %v641 = vtanh.pop %v640
        %643 = vrot.lane.b32.xlu0 %v641, 64
        %v644 = vpop.permute.xlu0 %643
        %v646 = vmul.f32 %v628, %v644
        %vm647 = vcmp.gt.s32.totalorder %v498, 0
        %vm648 = vcmp.gt.s32.totalorder %v498, 9
        %v649 = vsel %vm647, 1, 0
        %650 = vset.pattern.permute.xlu0 0
        %651 = vperm.xlu0 %650, %v649
        %v652 = vpop.permute.xlu0 %651
        %vm653 = vcmp.eq.s32.totalorder %v652, 1
        %v654 = vsel %vm653, %v622, 0.0
        %656 = vrot.lane.b32.xlu0 %v654, 32
        %v657 = vpop.permute.xlu0 %656
        %vm659 = vcmask 261120
        %660 = vst.msk [vmem:[#allocation2] sm:$0xff] %vm659, %v657
        %v661 = vsel %vm648, 1, 0
        %662 = vset.pattern.permute.xlu0 0
        %663 = vperm.xlu0 %662, %v661
        %v664 = vpop.permute.xlu0 %663
        %vm665 = vcmp.eq.s32.totalorder %v664, 1
        %v666 = vsel %vm665, %v646, 0.0
        %668 = vrot.lane.b32.xlu0 %v666, 64
        %v669 = vpop.permute.xlu0 %668
        %s671 = scalar_lea.vmem [#allocation2], 72
        %vm672 = vcmask 523520
        %673 = vst.msk [vmem:[%s671] sm:$0xff] %vm672, %v669
        %v674 = vsel %vm653, %v616, 0.0
        %v675 = vsel %vm665, %v640, 0.0
        %s676 = smul.u32 1, 2
        %s677 = smul.addr %s676, 8
        %s678 = scalar_lea.vmem [#allocation4], %s677
        %v679 = vld [vmem:[%s678] sm:$0xff]
        %s680 = smul.u32 8, 2
        %s681 = smul.addr %s680, 8
        %s682 = scalar_lea.vmem [#allocation4], %s681
        %v683 = vld [vmem:[%s682 + $0x8] sm:$0xff]
        %v684 = vsel %vm659, %v657, %v669
        %v686 = vsel %vm264, %v684, 0
        %688 = vmatprep.subr.mxu0 %v500
        %689 = vmatpush1.msra.mxu0 %v499
        %690 = vmatprep.subr.mxu0 %v502
        %691 = vmatpush1.msra.mxu0 %v501
        %692 = vmatprep.subr.mxu0 %v504
        %693 = vmatpush1.msra.mxu0 %v503
        %694 = vmatprep.subr.mxu0 %v506
        %695 = vmatpush1.msra.mxu0 %v505
        %696 = vmatprep.subr.mxu0 %v508
        %697 = vmatpush1.msra.mxu0 %v507
        %698 = vmatprep.subr.mxu0 %v510
        %699 = vmatpush1.msra.mxu0 %v509
        %700 = vmatprep.subr.mxu0 %v512
        %701 = vmatpush1.msra.mxu0 %v511
        %702 = vmatprep.subr.mxu0 %v514
        %703 = vmatpush1.msra.mxu0 %v513
        %704 = vmatprep.subr.mxu0 0.0
        %705 = vmatpush1.msra.mxu0 0.0
        %706 = vmatprep.subr.mxu0 0.0
        %707 = vmatpush1.msra.mxu0 0.0
        %708 = vmatprep.subr.mxu0 0.0
        %709 = vmatpush1.msra.mxu0 0.0
        %710 = vmatprep.subr.mxu0 0.0
        %711 = vmatpush1.msra.mxu0 0.0
        %712 = vmatprep.subr.mxu0 0.0
        %713 = vmatpush1.msra.mxu0 0.0
        %714 = vmatprep.subr.mxu0 0.0
        %715 = vmatpush1.msra.mxu0 0.0
        %716 = vmatprep.subr.mxu0 0.0
        %717 = vmatpush1.msra.mxu0 0.0
        %718 = vmatprep.subr.mxu0 0.0
        %719 = vmatpush1.msra.mxu0 0.0
        %720 = vmatprep.subr.mxu0 0.0
        %721 = vmatpush1.msra.mxu0 0.0
        %722 = vmatprep.subr.mxu0 0.0
        %723 = vmatpush1.msra.mxu0 0.0
        %724 = vmatprep.subr.mxu0 0.0
        %725 = vmatpush1.msra.mxu0 0.0
        %726 = vmatprep.subr.mxu0 0.0
        %727 = vmatpush1.msra.mxu0 0.0
        %728 = vmatprep.subr.mxu0 0.0
        %729 = vmatpush1.msra.mxu0 0.0
        %730 = vmatprep.subr.mxu0 0.0
        %731 = vmatpush1.msra.mxu0 0.0
        %732 = vmatprep.subr.mxu0 0.0
        %733 = vmatpush1.msra.mxu0 0.0
        %734 = vmatprep.subr.mxu0 0.0
        %735 = vmatpush1.msra.mxu0 0.0
        %736 = vmatprep.subr.mxu0 0.0
        %737 = vmatpush1.msra.mxu0 0.0
        %738 = vmatprep.subr.mxu0 0.0
        %739 = vmatpush1.msra.mxu0 0.0
        %740 = vmatprep.subr.mxu0 0.0
        %741 = vmatpush1.msra.mxu0 0.0
        %742 = vmatprep.subr.mxu0 0.0
        %743 = vmatpush1.msra.mxu0 0.0
        %744 = vmatprep.subr.mxu0 0.0
        %745 = vmatpush1.msra.mxu0 0.0
        %746 = vmatprep.subr.mxu0 0.0
        %747 = vmatpush1.msra.mxu0 0.0
        %748 = vmatprep.subr.mxu0 0.0
        %749 = vmatpush1.msra.mxu0 0.0
        %750 = vmatprep.subr.mxu0 0.0
        %751 = vmatpush1.msra.mxu0 0.0
        %752 = vmatprep.mubr.f32.mxu0 0.0
        %753 = vmatmul.mubr.f32.gmra.mrb[0].mxu0 %v686
        %v754 = vpop.f32.mrb[0].mxu0
        %v755 = vadd.f32 0.0, %v754
        %v756 = vpop.f32.mrb[0].mxu0
        %v757 = vadd.f32 0.0, %v756
        %758 = vdwg.mxu0
        %v759 = vadd.f32 %v679, %v755
        %v760 = vadd.f32 %v683, %v757
        %v761 = vxor.u32 %v759, 2147483648
        %v762 = vmul.f32 %v761, 1.442695
        %v763 = vpow.pop %v762
        %v764 = vadd.f32 %v763, 1.0
        %v765 = vrcp.pop %v764
        %v766 = vmul.f32 1.0, %v765
        %v767 = vtanh.pop %v759
        %v768 = vmul.f32 %v766, %v674
        %770 = vrot.lane.b32.xlu0 %v767, 64
        %v771 = vpop.permute.xlu0 %770
        %v773 = vmul.f32 %v766, %v771
        %775 = vrot.lane.b32.xlu0 %v773, 32
        %v776 = vpop.permute.xlu0 %775
        %v778 = vadd.f32 %v768, %v776
        %v779 = vtanh.pop %v778
        %781 = vrot.lane.b32.xlu0 %v779, 64
        %v782 = vpop.permute.xlu0 %781
        %v784 = vmul.f32 %v766, %v782
        %v785 = vxor.u32 %v760, 2147483648
        %v786 = vmul.f32 %v785, 1.442695
        %v787 = vpow.pop %v786
        %v788 = vadd.f32 %v787, 1.0
        %v789 = vrcp.pop %v788
        %v790 = vmul.f32 1.0, %v789
        %v791 = vtanh.pop %v760
        %v792 = vmul.f32 %v790, %v675
        %794 = vrot.lane.b32.xlu0 %v791, 64
        %v795 = vpop.permute.xlu0 %794
        %v797 = vmul.f32 %v790, %v795
        %799 = vrot.lane.b32.xlu0 %v797, 32
        %v800 = vpop.permute.xlu0 %799
        %v802 = vadd.f32 %v792, %v800
        %v803 = vtanh.pop %v802
        %805 = vrot.lane.b32.xlu0 %v803, 64
        %v806 = vpop.permute.xlu0 %805
        %v808 = vmul.f32 %v790, %v806
        %vm809 = vcmp.gt.s32.totalorder %v498, 1
        %vm810 = vcmp.gt.s32.totalorder %v498, 8
        %v811 = vsel %vm809, 1, 0
        %812 = vset.pattern.permute.xlu0 0
        %813 = vperm.xlu0 %812, %v811
        %v814 = vpop.permute.xlu0 %813
        %vm815 = vcmp.eq.s32.totalorder %v814, 1
        %v816 = vsel %vm815, %v784, 0.0
        %818 = vrot.lane.b32.xlu0 %v816, 32
        %v819 = vpop.permute.xlu0 %818
        %s821 = scalar_lea.vmem [#allocation2], 8
        %822 = vst.msk [vmem:[%s821] sm:$0xff] %vm659, %v819
        %v823 = vsel %vm810, 1, 0
        %824 = vset.pattern.permute.xlu0 0
        %825 = vperm.xlu0 %824, %v823
        %v826 = vpop.permute.xlu0 %825
        %vm827 = vcmp.eq.s32.totalorder %v826, 1
        %v828 = vsel %vm827, %v808, 0.0
        %830 = vrot.lane.b32.xlu0 %v828, 64
        %v831 = vpop.permute.xlu0 %830
        %s833 = scalar_lea.vmem [#allocation2], 64
        %834 = vst.msk [vmem:[%s833] sm:$0xff] %vm672, %v831
        %v835 = vsel %vm815, %v784, %v654
        %v836 = vsel %vm815, %v778, %v674
        %v837 = vsel %vm827, %v808, %v666
        %v838 = vsel %vm827, %v802, %v675
        %s839 = smul.u32 2, 2
        %s840 = smul.addr %s839, 8
        %s841 = scalar_lea.vmem [#allocation4], %s840
        %v842 = vld [vmem:[%s841] sm:$0xff]
        %s843 = smul.u32 7, 2
        %s844 = smul.addr %s843, 8
        %s845 = scalar_lea.vmem [#allocation4], %s844
        %v846 = vld [vmem:[%s845 + $0x8] sm:$0xff]
        %848 = vrot.lane.b32.xlu0 %v835, 32
        %v849 = vpop.permute.xlu0 %848
        %852 = vrot.lane.b32.xlu0 %v837, 64
        %v853 = vpop.permute.xlu0 %852
        %v855 = vsel %vm659, %v849, %v853
        %v857 = vsel %vm264, %v855, 0
        %859 = vmatprep.subr.mxu0 %v500
        %860 = vmatpush1.msra.mxu0 %v499
        %861 = vmatprep.subr.mxu0 %v502
        %862 = vmatpush1.msra.mxu0 %v501
        %863 = vmatprep.subr.mxu0 %v504
        %864 = vmatpush1.msra.mxu0 %v503
        %865 = vmatprep.subr.mxu0 %v506
        %866 = vmatpush1.msra.mxu0 %v505
        %867 = vmatprep.subr.mxu0 %v508
        %868 = vmatpush1.msra.mxu0 %v507
        %869 = vmatprep.subr.mxu0 %v510
        %870 = vmatpush1.msra.mxu0 %v509
        %871 = vmatprep.subr.mxu0 %v512
        %872 = vmatpush1.msra.mxu0 %v511
        %873 = vmatprep.subr.mxu0 %v514
        %874 = vmatpush1.msra.mxu0 %v513
        %875 = vmatprep.subr.mxu0 0.0
        %876 = vmatpush1.msra.mxu0 0.0
        %877 = vmatprep.subr.mxu0 0.0
        %878 = vmatpush1.msra.mxu0 0.0
        %879 = vmatprep.subr.mxu0 0.0
        %880 = vmatpush1.msra.mxu0 0.0
        %881 = vmatprep.subr.mxu0 0.0
        %882 = vmatpush1.msra.mxu0 0.0
        %883 = vmatprep.subr.mxu0 0.0
        %884 = vmatpush1.msra.mxu0 0.0
        %885 = vmatprep.subr.mxu0 0.0
        %886 = vmatpush1.msra.mxu0 0.0
        %887 = vmatprep.subr.mxu0 0.0
        %888 = vmatpush1.msra.mxu0 0.0
        %889 = vmatprep.subr.mxu0 0.0
        %890 = vmatpush1.msra.mxu0 0.0
        %891 = vmatprep.subr.mxu0 0.0
        %892 = vmatpush1.msra.mxu0 0.0
        %893 = vmatprep.subr.mxu0 0.0
        %894 = vmatpush1.msra.mxu0 0.0
        %895 = vmatprep.subr.mxu0 0.0
        %896 = vmatpush1.msra.mxu0 0.0
        %897 = vmatprep.subr.mxu0 0.0
        %898 = vmatpush1.msra.mxu0 0.0
        %899 = vmatprep.subr.mxu0 0.0
        %900 = vmatpush1.msra.mxu0 0.0
        %901 = vmatprep.subr.mxu0 0.0
        %902 = vmatpush1.msra.mxu0 0.0
        %903 = vmatprep.subr.mxu0 0.0
        %904 = vmatpush1.msra.mxu0 0.0
        %905 = vmatprep.subr.mxu0 0.0
        %906 = vmatpush1.msra.mxu0 0.0
        %907 = vmatprep.subr.mxu0 0.0
        %908 = vmatpush1.msra.mxu0 0.0
        %909 = vmatprep.subr.mxu0 0.0
        %910 = vmatpush1.msra.mxu0 0.0
        %911 = vmatprep.subr.mxu0 0.0
        %912 = vmatpush1.msra.mxu0 0.0
        %913 = vmatprep.subr.mxu0 0.0
        %914 = vmatpush1.msra.mxu0 0.0
        %915 = vmatprep.subr.mxu0 0.0
        %916 = vmatpush1.msra.mxu0 0.0
        %917 = vmatprep.subr.mxu0 0.0
        %918 = vmatpush1.msra.mxu0 0.0
        %919 = vmatprep.subr.mxu0 0.0
        %920 = vmatpush1.msra.mxu0 0.0
        %921 = vmatprep.subr.mxu0 0.0
        %922 = vmatpush1.msra.mxu0 0.0
        %923 = vmatprep.mubr.f32.mxu0 0.0
        %924 = vmatmul.mubr.f32.gmra.mrb[0].mxu0 %v857
        %v925 = vpop.f32.mrb[0].mxu0
        %v926 = vadd.f32 0.0, %v925
        %v927 = vpop.f32.mrb[0].mxu0
        %v928 = vadd.f32 0.0, %v927
        %929 = vdwg.mxu0
        %v930 = vadd.f32 %v842, %v926
        %v931 = vadd.f32 %v846, %v928
        %v932 = vxor.u32 %v930, 2147483648
        %v933 = vmul.f32 %v932, 1.442695
        %v934 = vpow.pop %v933
        %v935 = vadd.f32 %v934, 1.0
        %v936 = vrcp.pop %v935
        %v937 = vmul.f32 1.0, %v936
        %v938 = vtanh.pop %v930
        %v939 = vmul.f32 %v937, %v836
        %941 = vrot.lane.b32.xlu0 %v938, 64
        %v942 = vpop.permute.xlu0 %941
        %v944 = vmul.f32 %v937, %v942
        %946 = vrot.lane.b32.xlu0 %v944, 32
        %v947 = vpop.permute.xlu0 %946
        %v949 = vadd.f32 %v939, %v947
        %v950 = vtanh.pop %v949
        %952 = vrot.lane.b32.xlu0 %v950, 64
        %v953 = vpop.permute.xlu0 %952
        %v955 = vmul.f32 %v937, %v953
        %v956 = vxor.u32 %v931, 2147483648
        %v957 = vmul.f32 %v956, 1.442695
        %v958 = vpow.pop %v957
        %v959 = vadd.f32 %v958, 1.0
        %v960 = vrcp.pop %v959
        %v961 = vmul.f32 1.0, %v960
        %v962 = vtanh.pop %v931
        %v963 = vmul.f32 %v961, %v838
        %965 = vrot.lane.b32.xlu0 %v962, 64
        %v966 = vpop.permute.xlu0 %965
        %v968 = vmul.f32 %v961, %v966
        %970 = vrot.lane.b32.xlu0 %v968, 32
        %v971 = vpop.permute.xlu0 %970
        %v973 = vadd.f32 %v963, %v971
        %v974 = vtanh.pop %v973
        %976 = vrot.lane.b32.xlu0 %v974, 64
        %v977 = vpop.permute.xlu0 %976
        %v979 = vmul.f32 %v961, %v977
        %vm980 = vcmp.gt.s32.totalorder %v498, 2
        %vm981 = vcmp.gt.s32.totalorder %v498, 7
        %v982 = vsel %vm980, 1, 0
        %983 = vset.pattern.permute.xlu0 0
        %984 = vperm.xlu0 %983, %v982
        %v985 = vpop.permute.xlu0 %984
        %vm986 = vcmp.eq.s32.totalorder %v985, 1
        %v987 = vsel %vm986, %v955, 0.0
        %989 = vrot.lane.b32.xlu0 %v987, 32
        %v990 = vpop.permute.xlu0 %989
        %s992 = scalar_lea.vmem [#allocation2], 16
        %993 = vst.msk [vmem:[%s992] sm:$0xff] %vm659, %v990
        %v994 = vsel %vm981, 1, 0
        %995 = vset.pattern.permute.xlu0 0
        %996 = vperm.xlu0 %995, %v994
        %v997 = vpop.permute.xlu0 %996
        %vm998 = vcmp.eq.s32.totalorder %v997, 1
        %v999 = vsel %vm998, %v979, 0.0
        %1001 = vrot.lane.b32.xlu0 %v999, 64
        %v1002 = vpop.permute.xlu0 %1001
        %s1004 = scalar_lea.vmem [#allocation2], 56
        %1005 = vst.msk [vmem:[%s1004] sm:$0xff] %vm672, %v1002
        %v1006 = vsel %vm986, %v955, %v835
        %v1007 = vsel %vm986, %v949, %v836
        %v1008 = vsel %vm998, %v979, %v837
        %v1009 = vsel %vm998, %v973, %v838
        %s1010 = smul.u32 3, 2
        %s1011 = smul.addr %s1010, 8
        %s1012 = scalar_lea.vmem [#allocation4], %s1011
        %v1013 = vld [vmem:[%s1012] sm:$0xff]
        %s1014 = smul.u32 6, 2
        %s1015 = smul.addr %s1014, 8
        %s1016 = scalar_lea.vmem [#allocation4], %s1015
        %v1017 = vld [vmem:[%s1016 + $0x8] sm:$0xff]
        %1019 = vrot.lane.b32.xlu0 %v1006, 32
        %v1020 = vpop.permute.xlu0 %1019
        %1023 = vrot.lane.b32.xlu0 %v1008, 64
        %v1024 = vpop.permute.xlu0 %1023
        %v1026 = vsel %vm659, %v1020, %v1024
        %v1028 = vsel %vm264, %v1026, 0
        %1030 = vmatprep.subr.mxu0 %v500
        %1031 = vmatpush1.msra.mxu0 %v499
        %1032 = vmatprep.subr.mxu0 %v502
        %1033 = vmatpush1.msra.mxu0 %v501
        %1034 = vmatprep.subr.mxu0 %v504
        %1035 = vmatpush1.msra.mxu0 %v503
        %1036 = vmatprep.subr.mxu0 %v506
        %1037 = vmatpush1.msra.mxu0 %v505
        %1038 = vmatprep.subr.mxu0 %v508
        %1039 = vmatpush1.msra.mxu0 %v507
        %1040 = vmatprep.subr.mxu0 %v510
        %1041 = vmatpush1.msra.mxu0 %v509
        %1042 = vmatprep.subr.mxu0 %v512
        %1043 = vmatpush1.msra.mxu0 %v511
        %1044 = vmatprep.subr.mxu0 %v514
        %1045 = vmatpush1.msra.mxu0 %v513
        %1046 = vmatprep.subr.mxu0 0.0
        %1047 = vmatpush1.msra.mxu0 0.0
        %1048 = vmatprep.subr.mxu0 0.0
        %1049 = vmatpush1.msra.mxu0 0.0
        %1050 = vmatprep.subr.mxu0 0.0
        %1051 = vmatpush1.msra.mxu0 0.0
        %1052 = vmatprep.subr.mxu0 0.0
        %1053 = vmatpush1.msra.mxu0 0.0
        %1054 = vmatprep.subr.mxu0 0.0
        %1055 = vmatpush1.msra.mxu0 0.0
        %1056 = vmatprep.subr.mxu0 0.0
        %1057 = vmatpush1.msra.mxu0 0.0
        %1058 = vmatprep.subr.mxu0 0.0
        %1059 = vmatpush1.msra.mxu0 0.0
        %1060 = vmatprep.subr.mxu0 0.0
        %1061 = vmatpush1.msra.mxu0 0.0
        %1062 = vmatprep.subr.mxu0 0.0
        %1063 = vmatpush1.msra.mxu0 0.0
        %1064 = vmatprep.subr.mxu0 0.0
        %1065 = vmatpush1.msra.mxu0 0.0
        %1066 = vmatprep.subr.mxu0 0.0
        %1067 = vmatpush1.msra.mxu0 0.0
        %1068 = vmatprep.subr.mxu0 0.0
        %1069 = vmatpush1.msra.mxu0 0.0
        %1070 = vmatprep.subr.mxu0 0.0
        %1071 = vmatpush1.msra.mxu0 0.0
        %1072 = vmatprep.subr.mxu0 0.0
        %1073 = vmatpush1.msra.mxu0 0.0
        %1074 = vmatprep.subr.mxu0 0.0
        %1075 = vmatpush1.msra.mxu0 0.0
        %1076 = vmatprep.subr.mxu0 0.0
        %1077 = vmatpush1.msra.mxu0 0.0
        %1078 = vmatprep.subr.mxu0 0.0
        %1079 = vmatpush1.msra.mxu0 0.0
        %1080 = vmatprep.subr.mxu0 0.0
        %1081 = vmatpush1.msra.mxu0 0.0
        %1082 = vmatprep.subr.mxu0 0.0
        %1083 = vmatpush1.msra.mxu0 0.0
        %1084 = vmatprep.subr.mxu0 0.0
        %1085 = vmatpush1.msra.mxu0 0.0
        %1086 = vmatprep.subr.mxu0 0.0
        %1087 = vmatpush1.msra.mxu0 0.0
        %1088 = vmatprep.subr.mxu0 0.0
        %1089 = vmatpush1.msra.mxu0 0.0
        %1090 = vmatprep.subr.mxu0 0.0
        %1091 = vmatpush1.msra.mxu0 0.0
        %1092 = vmatprep.subr.mxu0 0.0
        %1093 = vmatpush1.msra.mxu0 0.0
        %1094 = vmatprep.mubr.f32.mxu0 0.0
        %1095 = vmatmul.mubr.f32.gmra.mrb[0].mxu0 %v1028
        %v1096 = vpop.f32.mrb[0].mxu0
        %v1097 = vadd.f32 0.0, %v1096
        %v1098 = vpop.f32.mrb[0].mxu0
        %v1099 = vadd.f32 0.0, %v1098
        %1100 = vdwg.mxu0
        %v1101 = vadd.f32 %v1013, %v1097
        %v1102 = vadd.f32 %v1017, %v1099
        %v1103 = vxor.u32 %v1101, 2147483648
        %v1104 = vmul.f32 %v1103, 1.442695
        %v1105 = vpow.pop %v1104
        %v1106 = vadd.f32 %v1105, 1.0
        %v1107 = vrcp.pop %v1106
        %v1108 = vmul.f32 1.0, %v1107
        %v1109 = vtanh.pop %v1101
        %v1110 = vmul.f32 %v1108, %v1007
        %1112 = vrot.lane.b32.xlu0 %v1109, 64
        %v1113 = vpop.permute.xlu0 %1112
        %v1115 = vmul.f32 %v1108, %v1113
        %1117 = vrot.lane.b32.xlu0 %v1115, 32
        %v1118 = vpop.permute.xlu0 %1117
        %v1120 = vadd.f32 %v1110, %v1118
        %v1121 = vtanh.pop %v1120
        %1123 = vrot.lane.b32.xlu0 %v1121, 64
        %v1124 = vpop.permute.xlu0 %1123
        %v1126 = vmul.f32 %v1108, %v1124
        %v1127 = vxor.u32 %v1102, 2147483648
        %v1128 = vmul.f32 %v1127, 1.442695
        %v1129 = vpow.pop %v1128
        %v1130 = vadd.f32 %v1129, 1.0
        %v1131 = vrcp.pop %v1130
        %v1132 = vmul.f32 1.0, %v1131
        %v1133 = vtanh.pop %v1102
        %v1134 = vmul.f32 %v1132, %v1009
        %1136 = vrot.lane.b32.xlu0 %v1133, 64
        %v1137 = vpop.permute.xlu0 %1136
        %v1139 = vmul.f32 %v1132, %v1137
        %1141 = vrot.lane.b32.xlu0 %v1139, 32
        %v1142 = vpop.permute.xlu0 %1141
        %v1144 = vadd.f32 %v1134, %v1142
        %v1145 = vtanh.pop %v1144
        %1147 = vrot.lane.b32.xlu0 %v1145, 64
        %v1148 = vpop.permute.xlu0 %1147
        %v1150 = vmul.f32 %v1132, %v1148
        %vm1151 = vcmp.gt.s32.totalorder %v498, 3
        %vm1152 = vcmp.gt.s32.totalorder %v498, 6
        %v1153 = vsel %vm1151, 1, 0
        %1154 = vset.pattern.permute.xlu0 0
        %1155 = vperm.xlu0 %1154, %v1153
        %v1156 = vpop.permute.xlu0 %1155
        %vm1157 = vcmp.eq.s32.totalorder %v1156, 1
        %v1158 = vsel %vm1157, %v1126, 0.0
        %1160 = vrot.lane.b32.xlu0 %v1158, 32
        %v1161 = vpop.permute.xlu0 %1160
        %s1163 = scalar_lea.vmem [#allocation2], 24
        %1164 = vst.msk [vmem:[%s1163] sm:$0xff] %vm659, %v1161
        %v1165 = vsel %vm1152, 1, 0
        %1166 = vset.pattern.permute.xlu0 0
        %1167 = vperm.xlu0 %1166, %v1165
        %v1168 = vpop.permute.xlu0 %1167
        %vm1169 = vcmp.eq.s32.totalorder %v1168, 1
        %v1170 = vsel %vm1169, %v1150, 0.0
        %1172 = vrot.lane.b32.xlu0 %v1170, 64
        %v1173 = vpop.permute.xlu0 %1172
        %s1175 = scalar_lea.vmem [#allocation2], 48
        %1176 = vst.msk [vmem:[%s1175] sm:$0xff] %vm672, %v1173
        %v1177 = vsel %vm1157, %v1126, %v1006
        %v1178 = vsel %vm1157, %v1120, %v1007
        %v1179 = vsel %vm1169, %v1150, %v1008
        %v1180 = vsel %vm1169, %v1144, %v1009
        %s1181 = smul.u32 4, 2
        %s1182 = smul.addr %s1181, 8
        %s1183 = scalar_lea.vmem [#allocation4], %s1182
        %v1184 = vld [vmem:[%s1183] sm:$0xff]
        %s1185 = smul.u32 5, 2
        %s1186 = smul.addr %s1185, 8
        %s1187 = scalar_lea.vmem [#allocation4], %s1186
        %v1188 = vld [vmem:[%s1187 + $0x8] sm:$0xff]
        %1190 = vrot.lane.b32.xlu0 %v1177, 32
        %v1191 = vpop.permute.xlu0 %1190
        %1194 = vrot.lane.b32.xlu0 %v1179, 64
        %v1195 = vpop.permute.xlu0 %1194
        %v1197 = vsel %vm659, %v1191, %v1195
        %v1199 = vsel %vm264, %v1197, 0
        %1201 = vmatprep.subr.mxu0 %v500
        %1202 = vmatpush1.msra.mxu0 %v499
        %1203 = vmatprep.subr.mxu0 %v502
        %1204 = vmatpush1.msra.mxu0 %v501
        %1205 = vmatprep.subr.mxu0 %v504
        %1206 = vmatpush1.msra.mxu0 %v503
        %1207 = vmatprep.subr.mxu0 %v506
        %1208 = vmatpush1.msra.mxu0 %v505
        %1209 = vmatprep.subr.mxu0 %v508
        %1210 = vmatpush1.msra.mxu0 %v507
        %1211 = vmatprep.subr.mxu0 %v510
        %1212 = vmatpush1.msra.mxu0 %v509
        %1213 = vmatprep.subr.mxu0 %v512
        %1214 = vmatpush1.msra.mxu0 %v511
        %1215 = vmatprep.subr.mxu0 %v514
        %1216 = vmatpush1.msra.mxu0 %v513
        %1217 = vmatprep.subr.mxu0 0.0
        %1218 = vmatpush1.msra.mxu0 0.0
        %1219 = vmatprep.subr.mxu0 0.0
        %1220 = vmatpush1.msra.mxu0 0.0
        %1221 = vmatprep.subr.mxu0 0.0
        %1222 = vmatpush1.msra.mxu0 0.0
        %1223 = vmatprep.subr.mxu0 0.0
        %1224 = vmatpush1.msra.mxu0 0.0
        %1225 = vmatprep.subr.mxu0 0.0
        %1226 = vmatpush1.msra.mxu0 0.0
        %1227 = vmatprep.subr.mxu0 0.0
        %1228 = vmatpush1.msra.mxu0 0.0
        %1229 = vmatprep.subr.mxu0 0.0
        %1230 = vmatpush1.msra.mxu0 0.0
        %1231 = vmatprep.subr.mxu0 0.0
        %1232 = vmatpush1.msra.mxu0 0.0
        %1233 = vmatprep.subr.mxu0 0.0
        %1234 = vmatpush1.msra.mxu0 0.0
        %1235 = vmatprep.subr.mxu0 0.0
        %1236 = vmatpush1.msra.mxu0 0.0
        %1237 = vmatprep.subr.mxu0 0.0
        %1238 = vmatpush1.msra.mxu0 0.0
        %1239 = vmatprep.subr.mxu0 0.0
        %1240 = vmatpush1.msra.mxu0 0.0
        %1241 = vmatprep.subr.mxu0 0.0
        %1242 = vmatpush1.msra.mxu0 0.0
        %1243 = vmatprep.subr.mxu0 0.0
        %1244 = vmatpush1.msra.mxu0 0.0
        %1245 = vmatprep.subr.mxu0 0.0
        %1246 = vmatpush1.msra.mxu0 0.0
        %1247 = vmatprep.subr.mxu0 0.0
        %1248 = vmatpush1.msra.mxu0 0.0
        %1249 = vmatprep.subr.mxu0 0.0
        %1250 = vmatpush1.msra.mxu0 0.0
        %1251 = vmatprep.subr.mxu0 0.0
        %1252 = vmatpush1.msra.mxu0 0.0
        %1253 = vmatprep.subr.mxu0 0.0
        %1254 = vmatpush1.msra.mxu0 0.0
        %1255 = vmatprep.subr.mxu0 0.0
        %1256 = vmatpush1.msra.mxu0 0.0
        %1257 = vmatprep.subr.mxu0 0.0
        %1258 = vmatpush1.msra.mxu0 0.0
        %1259 = vmatprep.subr.mxu0 0.0
        %1260 = vmatpush1.msra.mxu0 0.0
        %1261 = vmatprep.subr.mxu0 0.0
        %1262 = vmatpush1.msra.mxu0 0.0
        %1263 = vmatprep.subr.mxu0 0.0
        %1264 = vmatpush1.msra.mxu0 0.0
        %1265 = vmatprep.mubr.f32.mxu0 0.0
        %1266 = vmatmul.mubr.f32.gmra.mrb[0].mxu0 %v1199
        %v1267 = vpop.f32.mrb[0].mxu0
        %v1268 = vadd.f32 0.0, %v1267
        %v1269 = vpop.f32.mrb[0].mxu0
        %v1270 = vadd.f32 0.0, %v1269
        %1271 = vdwg.mxu0
        %v1272 = vadd.f32 %v1184, %v1268
        %v1273 = vadd.f32 %v1188, %v1270
        %v1274 = vxor.u32 %v1272, 2147483648
        %v1275 = vmul.f32 %v1274, 1.442695
        %v1276 = vpow.pop %v1275
        %v1277 = vadd.f32 %v1276, 1.0
        %v1278 = vrcp.pop %v1277
        %v1279 = vmul.f32 1.0, %v1278
        %v1280 = vtanh.pop %v1272
        %v1281 = vmul.f32 %v1279, %v1178
        %1283 = vrot.lane.b32.xlu0 %v1280, 64
        %v1284 = vpop.permute.xlu0 %1283
        %v1286 = vmul.f32 %v1279, %v1284
        %1288 = vrot.lane.b32.xlu0 %v1286, 32
        %v1289 = vpop.permute.xlu0 %1288
        %v1291 = vadd.f32 %v1281, %v1289
        %v1292 = vtanh.pop %v1291
        %1294 = vrot.lane.b32.xlu0 %v1292, 64
        %v1295 = vpop.permute.xlu0 %1294
        %v1297 = vmul.f32 %v1279, %v1295
        %v1298 = vxor.u32 %v1273, 2147483648
        %v1299 = vmul.f32 %v1298, 1.442695
        %v1300 = vpow.pop %v1299
        %v1301 = vadd.f32 %v1300, 1.0
        %v1302 = vrcp.pop %v1301
        %v1303 = vmul.f32 1.0, %v1302
        %v1304 = vtanh.pop %v1273
        %v1305 = vmul.f32 %v1303, %v1180
        %1307 = vrot.lane.b32.xlu0 %v1304, 64
        %v1308 = vpop.permute.xlu0 %1307
        %v1310 = vmul.f32 %v1303, %v1308
        %1312 = vrot.lane.b32.xlu0 %v1310, 32
        %v1313 = vpop.permute.xlu0 %1312
        %v1315 = vadd.f32 %v1305, %v1313
        %v1316 = vtanh.pop %v1315
        %1318 = vrot.lane.b32.xlu0 %v1316, 64
        %v1319 = vpop.permute.xlu0 %1318
        %v1321 = vmul.f32 %v1303, %v1319
        %vm1322 = vcmp.gt.s32.totalorder %v498, 4
        %vm1323 = vcmp.gt.s32.totalorder %v498, 5
        %v1324 = vsel %vm1322, 1, 0
        %1325 = vset.pattern.permute.xlu0 0
        %1326 = vperm.xlu0 %1325, %v1324
        %v1327 = vpop.permute.xlu0 %1326
        %vm1328 = vcmp.eq.s32.totalorder %v1327, 1
        %v1329 = vsel %vm1328, %v1297, 0.0
        %1331 = vrot.lane.b32.xlu0 %v1329, 32
        %v1332 = vpop.permute.xlu0 %1331
        %s1334 = scalar_lea.vmem [#allocation2], 32
        %1335 = vst.msk [vmem:[%s1334] sm:$0xff] %vm659, %v1332
        %v1336 = vsel %vm1323, 1, 0
        %1337 = vset.pattern.permute.xlu0 0
        %1338 = vperm.xlu0 %1337, %v1336
        %v1339 = vpop.permute.xlu0 %1338
        %vm1340 = vcmp.eq.s32.totalorder %v1339, 1
        %v1341 = vsel %vm1340, %v1321, 0.0
        %1343 = vrot.lane.b32.xlu0 %v1341, 64
        %v1344 = vpop.permute.xlu0 %1343
        %s1346 = scalar_lea.vmem [#allocation2], 40
        %1347 = vst.msk [vmem:[%s1346] sm:$0xff] %vm672, %v1344
        %v1348 = vsel %vm1328, %v1297, %v1177
        %v1349 = vsel %vm1328, %v1291, %v1178
        %v1350 = vsel %vm1340, %v1321, %v1179
        %v1351 = vsel %vm1340, %v1315, %v1180
        %v1352 = vld [vmem:[%s1187] sm:$0xff]
        %v1353 = vld [vmem:[%s1183 + $0x8] sm:$0xff]
        %1355 = vrot.lane.b32.xlu0 %v1348, 32
        %v1356 = vpop.permute.xlu0 %1355
        %1359 = vrot.lane.b32.xlu0 %v1350, 64
        %v1360 = vpop.permute.xlu0 %1359
        %v1362 = vsel %vm659, %v1356, %v1360
        %v1364 = vsel %vm264, %v1362, 0
        %1366 = vmatprep.subr.mxu0 %v500
        %1367 = vmatpush1.msra.mxu0 %v499
        %1368 = vmatprep.subr.mxu0 %v502
        %1369 = vmatpush1.msra.mxu0 %v501
        %1370 = vmatprep.subr.mxu0 %v504
        %1371 = vmatpush1.msra.mxu0 %v503
        %1372 = vmatprep.subr.mxu0 %v506
        %1373 = vmatpush1.msra.mxu0 %v505
        %1374 = vmatprep.subr.mxu0 %v508
        %1375 = vmatpush1.msra.mxu0 %v507
        %1376 = vmatprep.subr.mxu0 %v510
        %1377 = vmatpush1.msra.mxu0 %v509
        %1378 = vmatprep.subr.mxu0 %v512
        %1379 = vmatpush1.msra.mxu0 %v511
        %1380 = vmatprep.subr.mxu0 %v514
        %1381 = vmatpush1.msra.mxu0 %v513
        %1382 = vmatprep.subr.mxu0 0.0
        %1383 = vmatpush1.msra.mxu0 0.0
        %1384 = vmatprep.subr.mxu0 0.0
        %1385 = vmatpush1.msra.mxu0 0.0
        %1386 = vmatprep.subr.mxu0 0.0
        %1387 = vmatpush1.msra.mxu0 0.0
        %1388 = vmatprep.subr.mxu0 0.0
        %1389 = vmatpush1.msra.mxu0 0.0
        %1390 = vmatprep.subr.mxu0 0.0
        %1391 = vmatpush1.msra.mxu0 0.0
        %1392 = vmatprep.subr.mxu0 0.0
        %1393 = vmatpush1.msra.mxu0 0.0
        %1394 = vmatprep.subr.mxu0 0.0
        %1395 = vmatpush1.msra.mxu0 0.0
        %1396 = vmatprep.subr.mxu0 0.0
        %1397 = vmatpush1.msra.mxu0 0.0
        %1398 = vmatprep.subr.mxu0 0.0
        %1399 = vmatpush1.msra.mxu0 0.0
        %1400 = vmatprep.subr.mxu0 0.0
        %1401 = vmatpush1.msra.mxu0 0.0
        %1402 = vmatprep.subr.mxu0 0.0
        %1403 = vmatpush1.msra.mxu0 0.0
        %1404 = vmatprep.subr.mxu0 0.0
        %1405 = vmatpush1.msra.mxu0 0.0
        %1406 = vmatprep.subr.mxu0 0.0
        %1407 = vmatpush1.msra.mxu0 0.0
        %1408 = vmatprep.subr.mxu0 0.0
        %1409 = vmatpush1.msra.mxu0 0.0
        %1410 = vmatprep.subr.mxu0 0.0
        %1411 = vmatpush1.msra.mxu0 0.0
        %1412 = vmatprep.subr.mxu0 0.0
        %1413 = vmatpush1.msra.mxu0 0.0
        %1414 = vmatprep.subr.mxu0 0.0
        %1415 = vmatpush1.msra.mxu0 0.0
        %1416 = vmatprep.subr.mxu0 0.0
        %1417 = vmatpush1.msra.mxu0 0.0
        %1418 = vmatprep.subr.mxu0 0.0
        %1419 = vmatpush1.msra.mxu0 0.0
        %1420 = vmatprep.subr.mxu0 0.0
        %1421 = vmatpush1.msra.mxu0 0.0
        %1422 = vmatprep.subr.mxu0 0.0
        %1423 = vmatpush1.msra.mxu0 0.0
        %1424 = vmatprep.subr.mxu0 0.0
        %1425 = vmatpush1.msra.mxu0 0.0
        %1426 = vmatprep.subr.mxu0 0.0
        %1427 = vmatpush1.msra.mxu0 0.0
        %1428 = vmatprep.subr.mxu0 0.0
        %1429 = vmatpush1.msra.mxu0 0.0
        %1430 = vmatprep.mubr.f32.mxu0 0.0
        %1431 = vmatmul.mubr.f32.gmra.mrb[0].mxu0 %v1364
        %v1432 = vpop.f32.mrb[0].mxu0
        %v1433 = vadd.f32 0.0, %v1432
        %v1434 = vpop.f32.mrb[0].mxu0
        %v1435 = vadd.f32 0.0, %v1434
        %1436 = vdwg.mxu0
        %v1437 = vadd.f32 %v1352, %v1433
        %v1438 = vadd.f32 %v1353, %v1435
        %v1439 = vxor.u32 %v1437, 2147483648
        %v1440 = vmul.f32 %v1439, 1.442695
        %v1441 = vpow.pop %v1440
        %v1442 = vadd.f32 %v1441, 1.0
        %v1443 = vrcp.pop %v1442
        %v1444 = vmul.f32 1.0, %v1443
        %v1445 = vtanh.pop %v1437
        %v1446 = vmul.f32 %v1444, %v1349
        %1448 = vrot.lane.b32.xlu0 %v1445, 64
        %v1449 = vpop.permute.xlu0 %1448
        %v1451 = vmul.f32 %v1444, %v1449
        %1453 = vrot.lane.b32.xlu0 %v1451, 32
        %v1454 = vpop.permute.xlu0 %1453
        %v1456 = vadd.f32 %v1446, %v1454
        %v1457 = vtanh.pop %v1456
        %1459 = vrot.lane.b32.xlu0 %v1457, 64
        %v1460 = vpop.permute.xlu0 %1459
        %v1462 = vmul.f32 %v1444, %v1460
        %v1463 = vxor.u32 %v1438, 2147483648
        %v1464 = vmul.f32 %v1463, 1.442695
        %v1465 = vpow.pop %v1464
        %v1466 = vadd.f32 %v1465, 1.0
        %v1467 = vrcp.pop %v1466
        %v1468 = vmul.f32 1.0, %v1467
        %v1469 = vtanh.pop %v1438
        %v1470 = vmul.f32 %v1468, %v1351
        %1472 = vrot.lane.b32.xlu0 %v1469, 64
        %v1473 = vpop.permute.xlu0 %1472
        %v1475 = vmul.f32 %v1468, %v1473
        %1477 = vrot.lane.b32.xlu0 %v1475, 32
        %v1478 = vpop.permute.xlu0 %1477
        %v1480 = vadd.f32 %v1470, %v1478
        %v1481 = vtanh.pop %v1480
        %1483 = vrot.lane.b32.xlu0 %v1481, 64
        %v1484 = vpop.permute.xlu0 %1483
        %v1486 = vmul.f32 %v1468, %v1484
        %v1487 = vsel %vm1340, %v1462, 0.0
        %1489 = vrot.lane.b32.xlu0 %v1487, 32
        %v1490 = vpop.permute.xlu0 %1489
        %1492 = vst.msk [vmem:[%s1346] sm:$0xff] %vm659, %v1490
        %v1493 = vsel %vm1328, %v1486, 0.0
        %1495 = vrot.lane.b32.xlu0 %v1493, 64
        %v1496 = vpop.permute.xlu0 %1495
        %1498 = vst.msk [vmem:[%s1334] sm:$0xff] %vm672, %v1496
        %v1499 = vsel %vm1340, %v1462, %v1348
        %v1500 = vsel %vm1340, %v1456, %v1349
        %v1501 = vsel %vm1328, %v1486, %v1350
        %v1502 = vsel %vm1328, %v1480, %v1351
        %v1503 = vld [vmem:[%s1016] sm:$0xff]
        %v1504 = vld [vmem:[%s1012 + $0x8] sm:$0xff]
        %1506 = vrot.lane.b32.xlu0 %v1499, 32
        %v1507 = vpop.permute.xlu0 %1506
        %1510 = vrot.lane.b32.xlu0 %v1501, 64
        %v1511 = vpop.permute.xlu0 %1510
        %v1513 = vsel %vm659, %v1507, %v1511
        %v1515 = vsel %vm264, %v1513, 0
        %1517 = vmatprep.subr.mxu0 %v500
        %1518 = vmatpush1.msra.mxu0 %v499
        %1519 = vmatprep.subr.mxu0 %v502
        %1520 = vmatpush1.msra.mxu0 %v501
        %1521 = vmatprep.subr.mxu0 %v504
        %1522 = vmatpush1.msra.mxu0 %v503
        %1523 = vmatprep.subr.mxu0 %v506
        %1524 = vmatpush1.msra.mxu0 %v505
        %1525 = vmatprep.subr.mxu0 %v508
        %1526 = vmatpush1.msra.mxu0 %v507
        %1527 = vmatprep.subr.mxu0 %v510
        %1528 = vmatpush1.msra.mxu0 %v509
        %1529 = vmatprep.subr.mxu0 %v512
        %1530 = vmatpush1.msra.mxu0 %v511
        %1531 = vmatprep.subr.mxu0 %v514
        %1532 = vmatpush1.msra.mxu0 %v513
        %1533 = vmatprep.subr.mxu0 0.0
        %1534 = vmatpush1.msra.mxu0 0.0
        %1535 = vmatprep.subr.mxu0 0.0
        %1536 = vmatpush1.msra.mxu0 0.0
        %1537 = vmatprep.subr.mxu0 0.0
        %1538 = vmatpush1.msra.mxu0 0.0
        %1539 = vmatprep.subr.mxu0 0.0
        %1540 = vmatpush1.msra.mxu0 0.0
        %1541 = vmatprep.subr.mxu0 0.0
        %1542 = vmatpush1.msra.mxu0 0.0
        %1543 = vmatprep.subr.mxu0 0.0
        %1544 = vmatpush1.msra.mxu0 0.0
        %1545 = vmatprep.subr.mxu0 0.0
        %1546 = vmatpush1.msra.mxu0 0.0
        %1547 = vmatprep.subr.mxu0 0.0
        %1548 = vmatpush1.msra.mxu0 0.0
        %1549 = vmatprep.subr.mxu0 0.0
        %1550 = vmatpush1.msra.mxu0 0.0
        %1551 = vmatprep.subr.mxu0 0.0
        %1552 = vmatpush1.msra.mxu0 0.0
        %1553 = vmatprep.subr.mxu0 0.0
        %1554 = vmatpush1.msra.mxu0 0.0
        %1555 = vmatprep.subr.mxu0 0.0
        %1556 = vmatpush1.msra.mxu0 0.0
        %1557 = vmatprep.subr.mxu0 0.0
        %1558 = vmatpush1.msra.mxu0 0.0
        %1559 = vmatprep.subr.mxu0 0.0
        %1560 = vmatpush1.msra.mxu0 0.0
        %1561 = vmatprep.subr.mxu0 0.0
        %1562 = vmatpush1.msra.mxu0 0.0
        %1563 = vmatprep.subr.mxu0 0.0
        %1564 = vmatpush1.msra.mxu0 0.0
        %1565 = vmatprep.subr.mxu0 0.0
        %1566 = vmatpush1.msra.mxu0 0.0
        %1567 = vmatprep.subr.mxu0 0.0
        %1568 = vmatpush1.msra.mxu0 0.0
        %1569 = vmatprep.subr.mxu0 0.0
        %1570 = vmatpush1.msra.mxu0 0.0
        %1571 = vmatprep.subr.mxu0 0.0
        %1572 = vmatpush1.msra.mxu0 0.0
        %1573 = vmatprep.subr.mxu0 0.0
        %1574 = vmatpush1.msra.mxu0 0.0
        %1575 = vmatprep.subr.mxu0 0.0
        %1576 = vmatpush1.msra.mxu0 0.0
        %1577 = vmatprep.subr.mxu0 0.0
        %1578 = vmatpush1.msra.mxu0 0.0
        %1579 = vmatprep.subr.mxu0 0.0
        %1580 = vmatpush1.msra.mxu0 0.0
        %1581 = vmatprep.mubr.f32.mxu0 0.0
        %1582 = vmatmul.mubr.f32.gmra.mrb[0].mxu0 %v1515
        %v1583 = vpop.f32.mrb[0].mxu0
        %v1584 = vadd.f32 0.0, %v1583
        %v1585 = vpop.f32.mrb[0].mxu0
        %v1586 = vadd.f32 0.0, %v1585
        %1587 = vdwg.mxu0
        %v1588 = vadd.f32 %v1503, %v1584
        %v1589 = vadd.f32 %v1504, %v1586
        %v1590 = vxor.u32 %v1588, 2147483648
        %v1591 = vmul.f32 %v1590, 1.442695
        %v1592 = vpow.pop %v1591
        %v1593 = vadd.f32 %v1592, 1.0
        %v1594 = vrcp.pop %v1593
        %v1595 = vmul.f32 1.0, %v1594
        %v1596 = vtanh.pop %v1588
        %v1597 = vmul.f32 %v1595, %v1500
        %1599 = vrot.lane.b32.xlu0 %v1596, 64
        %v1600 = vpop.permute.xlu0 %1599
        %v1602 = vmul.f32 %v1595, %v1600
        %1604 = vrot.lane.b32.xlu0 %v1602, 32
        %v1605 = vpop.permute.xlu0 %1604
        %v1607 = vadd.f32 %v1597, %v1605
        %v1608 = vtanh.pop %v1607
        %1610 = vrot.lane.b32.xlu0 %v1608, 64
        %v1611 = vpop.permute.xlu0 %1610
        %v1613 = vmul.f32 %v1595, %v1611
        %v1614 = vxor.u32 %v1589, 2147483648
        %v1615 = vmul.f32 %v1614, 1.442695
        %v1616 = vpow.pop %v1615
        %v1617 = vadd.f32 %v1616, 1.0
        %v1618 = vrcp.pop %v1617
        %v1619 = vmul.f32 1.0, %v1618
        %v1620 = vtanh.pop %v1589
        %v1621 = vmul.f32 %v1619, %v1502
        %1623 = vrot.lane.b32.xlu0 %v1620, 64
        %v1624 = vpop.permute.xlu0 %1623
        %v1626 = vmul.f32 %v1619, %v1624
        %1628 = vrot.lane.b32.xlu0 %v1626, 32
        %v1629 = vpop.permute.xlu0 %1628
        %v1631 = vadd.f32 %v1621, %v1629
        %v1632 = vtanh.pop %v1631
        %1634 = vrot.lane.b32.xlu0 %v1632, 64
        %v1635 = vpop.permute.xlu0 %1634
        %v1637 = vmul.f32 %v1619, %v1635
        %v1638 = vsel %vm1169, %v1613, 0.0
        %1640 = vrot.lane.b32.xlu0 %v1638, 32
        %v1641 = vpop.permute.xlu0 %1640
        %1643 = vst.msk [vmem:[%s1175] sm:$0xff] %vm659, %v1641
        %v1644 = vsel %vm1157, %v1637, 0.0
        %1646 = vrot.lane.b32.xlu0 %v1644, 64
        %v1647 = vpop.permute.xlu0 %1646
        %1649 = vst.msk [vmem:[%s1163] sm:$0xff] %vm672, %v1647
        %v1650 = vsel %vm1169, %v1613, %v1499
        %v1651 = vsel %vm1169, %v1607, %v1500
        %v1652 = vsel %vm1157, %v1637, %v1501
        %v1653 = vsel %vm1157, %v1631, %v1502
        %v1654 = vld [vmem:[%s845] sm:$0xff]
        %v1655 = vld [vmem:[%s841 + $0x8] sm:$0xff]
        %1657 = vrot.lane.b32.xlu0 %v1650, 32
        %v1658 = vpop.permute.xlu0 %1657
        %1661 = vrot.lane.b32.xlu0 %v1652, 64
        %v1662 = vpop.permute.xlu0 %1661
        %v1664 = vsel %vm659, %v1658, %v1662
        %v1666 = vsel %vm264, %v1664, 0
        %1668 = vmatprep.subr.mxu0 %v500
        %1669 = vmatpush1.msra.mxu0 %v499
        %1670 = vmatprep.subr.mxu0 %v502
        %1671 = vmatpush1.msra.mxu0 %v501
        %1672 = vmatprep.subr.mxu0 %v504
        %1673 = vmatpush1.msra.mxu0 %v503
        %1674 = vmatprep.subr.mxu0 %v506
        %1675 = vmatpush1.msra.mxu0 %v505
        %1676 = vmatprep.subr.mxu0 %v508
        %1677 = vmatpush1.msra.mxu0 %v507
        %1678 = vmatprep.subr.mxu0 %v510
        %1679 = vmatpush1.msra.mxu0 %v509
        %1680 = vmatprep.subr.mxu0 %v512
        %1681 = vmatpush1.msra.mxu0 %v511
        %1682 = vmatprep.subr.mxu0 %v514
        %1683 = vmatpush1.msra.mxu0 %v513
        %1684 = vmatprep.subr.mxu0 0.0
        %1685 = vmatpush1.msra.mxu0 0.0
        %1686 = vmatprep.subr.mxu0 0.0
        %1687 = vmatpush1.msra.mxu0 0.0
        %1688 = vmatprep.subr.mxu0 0.0
        %1689 = vmatpush1.msra.mxu0 0.0
        %1690 = vmatprep.subr.mxu0 0.0
        %1691 = vmatpush1.msra.mxu0 0.0
        %1692 = vmatprep.subr.mxu0 0.0
        %1693 = vmatpush1.msra.mxu0 0.0
        %1694 = vmatprep.subr.mxu0 0.0
        %1695 = vmatpush1.msra.mxu0 0.0
        %1696 = vmatprep.subr.mxu0 0.0
        %1697 = vmatpush1.msra.mxu0 0.0
        %1698 = vmatprep.subr.mxu0 0.0
        %1699 = vmatpush1.msra.mxu0 0.0
        %1700 = vmatprep.subr.mxu0 0.0
        %1701 = vmatpush1.msra.mxu0 0.0
        %1702 = vmatprep.subr.mxu0 0.0
        %1703 = vmatpush1.msra.mxu0 0.0
        %1704 = vmatprep.subr.mxu0 0.0
        %1705 = vmatpush1.msra.mxu0 0.0
        %1706 = vmatprep.subr.mxu0 0.0
        %1707 = vmatpush1.msra.mxu0 0.0
        %1708 = vmatprep.subr.mxu0 0.0
        %1709 = vmatpush1.msra.mxu0 0.0
        %1710 = vmatprep.subr.mxu0 0.0
        %1711 = vmatpush1.msra.mxu0 0.0
        %1712 = vmatprep.subr.mxu0 0.0
        %1713 = vmatpush1.msra.mxu0 0.0
        %1714 = vmatprep.subr.mxu0 0.0
        %1715 = vmatpush1.msra.mxu0 0.0
        %1716 = vmatprep.subr.mxu0 0.0
        %1717 = vmatpush1.msra.mxu0 0.0
        %1718 = vmatprep.subr.mxu0 0.0
        %1719 = vmatpush1.msra.mxu0 0.0
        %1720 = vmatprep.subr.mxu0 0.0
        %1721 = vmatpush1.msra.mxu0 0.0
        %1722 = vmatprep.subr.mxu0 0.0
        %1723 = vmatpush1.msra.mxu0 0.0
        %1724 = vmatprep.subr.mxu0 0.0
        %1725 = vmatpush1.msra.mxu0 0.0
        %1726 = vmatprep.subr.mxu0 0.0
        %1727 = vmatpush1.msra.mxu0 0.0
        %1728 = vmatprep.subr.mxu0 0.0
        %1729 = vmatpush1.msra.mxu0 0.0
        %1730 = vmatprep.subr.mxu0 0.0
        %1731 = vmatpush1.msra.mxu0 0.0
        %1732 = vmatprep.mubr.f32.mxu0 0.0
        %1733 = vmatmul.mubr.f32.gmra.mrb[0].mxu0 %v1666
        %v1734 = vpop.f32.mrb[0].mxu0
        %v1735 = vadd.f32 0.0, %v1734
        %v1736 = vpop.f32.mrb[0].mxu0
        %v1737 = vadd.f32 0.0, %v1736
        %1738 = vdwg.mxu0
        %v1739 = vadd.f32 %v1654, %v1735
        %v1740 = vadd.f32 %v1655, %v1737
        %v1741 = vxor.u32 %v1739, 2147483648
        %v1742 = vmul.f32 %v1741, 1.442695
        %v1743 = vpow.pop %v1742
        %v1744 = vadd.f32 %v1743, 1.0
        %v1745 = vrcp.pop %v1744
        %v1746 = vmul.f32 1.0, %v1745
        %v1747 = vtanh.pop %v1739
        %v1748 = vmul.f32 %v1746, %v1651
        %1750 = vrot.lane.b32.xlu0 %v1747, 64
        %v1751 = vpop.permute.xlu0 %1750
        %v1753 = vmul.f32 %v1746, %v1751
        %1755 = vrot.lane.b32.xlu0 %v1753, 32
        %v1756 = vpop.permute.xlu0 %1755
        %v1758 = vadd.f32 %v1748, %v1756
        %v1759 = vtanh.pop %v1758
        %1761 = vrot.lane.b32.xlu0 %v1759, 64
        %v1762 = vpop.permute.xlu0 %1761
        %v1764 = vmul.f32 %v1746, %v1762
        %v1765 = vxor.u32 %v1740, 2147483648
        %v1766 = vmul.f32 %v1765, 1.442695
        %v1767 = vpow.pop %v1766
        %v1768 = vadd.f32 %v1767, 1.0
        %v1769 = vrcp.pop %v1768
        %v1770 = vmul.f32 1.0, %v1769
        %v1771 = vtanh.pop %v1740
        %v1772 = vmul.f32 %v1770, %v1653
        %1774 = vrot.lane.b32.xlu0 %v1771, 64
        %v1775 = vpop.permute.xlu0 %1774
        %v1777 = vmul.f32 %v1770, %v1775
        %1779 = vrot.lane.b32.xlu0 %v1777, 32
        %v1780 = vpop.permute.xlu0 %1779
        %v1782 = vadd.f32 %v1772, %v1780
        %v1783 = vtanh.pop %v1782
        %1785 = vrot.lane.b32.xlu0 %v1783, 64
        %v1786 = vpop.permute.xlu0 %1785
        %v1788 = vmul.f32 %v1770, %v1786
        %v1789 = vsel %vm998, %v1764, 0.0
        %1791 = vrot.lane.b32.xlu0 %v1789, 32
        %v1792 = vpop.permute.xlu0 %1791
        %1794 = vst.msk [vmem:[%s1004] sm:$0xff] %vm659, %v1792
        %v1795 = vsel %vm986, %v1788, 0.0
        %1797 = vrot.lane.b32.xlu0 %v1795, 64
        %v1798 = vpop.permute.xlu0 %1797
        %1800 = vst.msk [vmem:[%s992] sm:$0xff] %vm672, %v1798
        %v1801 = vsel %vm998, %v1764, %v1650
        %v1802 = vsel %vm998, %v1758, %v1651
        %v1803 = vsel %vm986, %v1788, %v1652
        %v1804 = vsel %vm986, %v1782, %v1653
        %v1805 = vld [vmem:[%s682] sm:$0xff]
        %v1806 = vld [vmem:[%s678 + $0x8] sm:$0xff]
        %1808 = vrot.lane.b32.xlu0 %v1801, 32
        %v1809 = vpop.permute.xlu0 %1808
        %1812 = vrot.lane.b32.xlu0 %v1803, 64
        %v1813 = vpop.permute.xlu0 %1812
        %v1815 = vsel %vm659, %v1809, %v1813
        %v1817 = vsel %vm264, %v1815, 0
        %1819 = vmatprep.subr.mxu0 %v500
        %1820 = vmatpush1.msra.mxu0 %v499
        %1821 = vmatprep.subr.mxu0 %v502
        %1822 = vmatpush1.msra.mxu0 %v501
        %1823 = vmatprep.subr.mxu0 %v504
        %1824 = vmatpush1.msra.mxu0 %v503
        %1825 = vmatprep.subr.mxu0 %v506
        %1826 = vmatpush1.msra.mxu0 %v505
        %1827 = vmatprep.subr.mxu0 %v508
        %1828 = vmatpush1.msra.mxu0 %v507
        %1829 = vmatprep.subr.mxu0 %v510
        %1830 = vmatpush1.msra.mxu0 %v509
        %1831 = vmatprep.subr.mxu0 %v512
        %1832 = vmatpush1.msra.mxu0 %v511
        %1833 = vmatprep.subr.mxu0 %v514
        %1834 = vmatpush1.msra.mxu0 %v513
        %1835 = vmatprep.subr.mxu0 0.0
        %1836 = vmatpush1.msra.mxu0 0.0
        %1837 = vmatprep.subr.mxu0 0.0
        %1838 = vmatpush1.msra.mxu0 0.0
        %1839 = vmatprep.subr.mxu0 0.0
        %1840 = vmatpush1.msra.mxu0 0.0
        %1841 = vmatprep.subr.mxu0 0.0
        %1842 = vmatpush1.msra.mxu0 0.0
        %1843 = vmatprep.subr.mxu0 0.0
        %1844 = vmatpush1.msra.mxu0 0.0
        %1845 = vmatprep.subr.mxu0 0.0
        %1846 = vmatpush1.msra.mxu0 0.0
        %1847 = vmatprep.subr.mxu0 0.0
        %1848 = vmatpush1.msra.mxu0 0.0
        %1849 = vmatprep.subr.mxu0 0.0
        %1850 = vmatpush1.msra.mxu0 0.0
        %1851 = vmatprep.subr.mxu0 0.0
        %1852 = vmatpush1.msra.mxu0 0.0
        %1853 = vmatprep.subr.mxu0 0.0
        %1854 = vmatpush1.msra.mxu0 0.0
        %1855 = vmatprep.subr.mxu0 0.0
        %1856 = vmatpush1.msra.mxu0 0.0
        %1857 = vmatprep.subr.mxu0 0.0
        %1858 = vmatpush1.msra.mxu0 0.0
        %1859 = vmatprep.subr.mxu0 0.0
        %1860 = vmatpush1.msra.mxu0 0.0
        %1861 = vmatprep.subr.mxu0 0.0
        %1862 = vmatpush1.msra.mxu0 0.0
        %1863 = vmatprep.subr.mxu0 0.0
        %1864 = vmatpush1.msra.mxu0 0.0
        %1865 = vmatprep.subr.mxu0 0.0
        %1866 = vmatpush1.msra.mxu0 0.0
        %1867 = vmatprep.subr.mxu0 0.0
        %1868 = vmatpush1.msra.mxu0 0.0
        %1869 = vmatprep.subr.mxu0 0.0
        %1870 = vmatpush1.msra.mxu0 0.0
        %1871 = vmatprep.subr.mxu0 0.0
        %1872 = vmatpush1.msra.mxu0 0.0
        %1873 = vmatprep.subr.mxu0 0.0
        %1874 = vmatpush1.msra.mxu0 0.0
        %1875 = vmatprep.subr.mxu0 0.0
        %1876 = vmatpush1.msra.mxu0 0.0
        %1877 = vmatprep.subr.mxu0 0.0
        %1878 = vmatpush1.msra.mxu0 0.0
        %1879 = vmatprep.subr.mxu0 0.0
        %1880 = vmatpush1.msra.mxu0 0.0
        %1881 = vmatprep.subr.mxu0 0.0
        %1882 = vmatpush1.msra.mxu0 0.0
        %1883 = vmatprep.mubr.f32.mxu0 0.0
        %1884 = vmatmul.mubr.f32.gmra.mrb[0].mxu0 %v1817
        %v1885 = vpop.f32.mrb[0].mxu0
        %v1886 = vadd.f32 0.0, %v1885
        %v1887 = vpop.f32.mrb[0].mxu0
        %v1888 = vadd.f32 0.0, %v1887
        %1889 = vdwg.mxu0
        %v1890 = vadd.f32 %v1805, %v1886
        %v1891 = vadd.f32 %v1806, %v1888
        %v1892 = vxor.u32 %v1890, 2147483648
        %v1893 = vmul.f32 %v1892, 1.442695
        %v1894 = vpow.pop %v1893
        %v1895 = vadd.f32 %v1894, 1.0
        %v1896 = vrcp.pop %v1895
        %v1897 = vmul.f32 1.0, %v1896
        %v1898 = vtanh.pop %v1890
        %v1899 = vmul.f32 %v1897, %v1802
        %1901 = vrot.lane.b32.xlu0 %v1898, 64
        %v1902 = vpop.permute.xlu0 %1901
        %v1904 = vmul.f32 %v1897, %v1902
        %1906 = vrot.lane.b32.xlu0 %v1904, 32
        %v1907 = vpop.permute.xlu0 %1906
        %v1909 = vadd.f32 %v1899, %v1907
        %v1910 = vtanh.pop %v1909
        %1912 = vrot.lane.b32.xlu0 %v1910, 64
        %v1913 = vpop.permute.xlu0 %1912
        %v1915 = vmul.f32 %v1897, %v1913
        %v1916 = vxor.u32 %v1891, 2147483648
        %v1917 = vmul.f32 %v1916, 1.442695
        %v1918 = vpow.pop %v1917
        %v1919 = vadd.f32 %v1918, 1.0
        %v1920 = vrcp.pop %v1919
        %v1921 = vmul.f32 1.0, %v1920
        %v1922 = vtanh.pop %v1891
        %v1923 = vmul.f32 %v1921, %v1804
        %1925 = vrot.lane.b32.xlu0 %v1922, 64
        %v1926 = vpop.permute.xlu0 %1925
        %v1928 = vmul.f32 %v1921, %v1926
        %1930 = vrot.lane.b32.xlu0 %v1928, 32
        %v1931 = vpop.permute.xlu0 %1930
        %v1933 = vadd.f32 %v1923, %v1931
        %v1934 = vtanh.pop %v1933
        %1936 = vrot.lane.b32.xlu0 %v1934, 64
        %v1937 = vpop.permute.xlu0 %1936
        %v1939 = vmul.f32 %v1921, %v1937
        %v1940 = vsel %vm827, %v1915, 0.0
        %1942 = vrot.lane.b32.xlu0 %v1940, 32
        %v1943 = vpop.permute.xlu0 %1942
        %1945 = vst.msk [vmem:[%s833] sm:$0xff] %vm659, %v1943
        %v1946 = vsel %vm815, %v1939, 0.0
        %1948 = vrot.lane.b32.xlu0 %v1946, 64
        %v1949 = vpop.permute.xlu0 %1948
        %1951 = vst.msk [vmem:[%s821] sm:$0xff] %vm672, %v1949
        %v1952 = vsel %vm827, %v1915, %v1801
        %v1953 = vsel %vm827, %v1909, %v1802
        %v1954 = vsel %vm815, %v1939, %v1803
        %v1955 = vsel %vm815, %v1933, %v1804
        %v1956 = vld [vmem:[%s521] sm:$0xff]
        %v1957 = vld [vmem:[%s517 + $0x8] sm:$0xff]
        %1959 = vrot.lane.b32.xlu0 %v1952, 32
        %v1960 = vpop.permute.xlu0 %1959
        %1963 = vrot.lane.b32.xlu0 %v1954, 64
        %v1964 = vpop.permute.xlu0 %1963
        %v1966 = vsel %vm659, %v1960, %v1964
        %v1968 = vsel %vm264, %v1966, 0
        %1970 = vmatprep.subr.mxu0 %v500
        %1971 = vmatpush1.msra.mxu0 %v499
        %1972 = vmatprep.subr.mxu0 %v502
        %1973 = vmatpush1.msra.mxu0 %v501
        %1974 = vmatprep.subr.mxu0 %v504
        %1975 = vmatpush1.msra.mxu0 %v503
        %1976 = vmatprep.subr.mxu0 %v506
        %1977 = vmatpush1.msra.mxu0 %v505
        %1978 = vmatprep.subr.mxu0 %v508
        %1979 = vmatpush1.msra.mxu0 %v507
        %1980 = vmatprep.subr.mxu0 %v510
        %1981 = vmatpush1.msra.mxu0 %v509
        %1982 = vmatprep.subr.mxu0 %v512
        %1983 = vmatpush1.msra.mxu0 %v511
        %1984 = vmatprep.subr.mxu0 %v514
        %1985 = vmatpush1.msra.mxu0 %v513
        %1986 = vmatprep.subr.mxu0 0.0
        %1987 = vmatpush1.msra.mxu0 0.0
        %1988 = vmatprep.subr.mxu0 0.0
        %1989 = vmatpush1.msra.mxu0 0.0
        %1990 = vmatprep.subr.mxu0 0.0
        %1991 = vmatpush1.msra.mxu0 0.0
        %1992 = vmatprep.subr.mxu0 0.0
        %1993 = vmatpush1.msra.mxu0 0.0
        %1994 = vmatprep.subr.mxu0 0.0
        %1995 = vmatpush1.msra.mxu0 0.0
        %1996 = vmatprep.subr.mxu0 0.0
        %1997 = vmatpush1.msra.mxu0 0.0
        %1998 = vmatprep.subr.mxu0 0.0
        %1999 = vmatpush1.msra.mxu0 0.0
        %2000 = vmatprep.subr.mxu0 0.0
        %2001 = vmatpush1.msra.mxu0 0.0
        %2002 = vmatprep.subr.mxu0 0.0
        %2003 = vmatpush1.msra.mxu0 0.0
        %2004 = vmatprep.subr.mxu0 0.0
        %2005 = vmatpush1.msra.mxu0 0.0
        %2006 = vmatprep.subr.mxu0 0.0
        %2007 = vmatpush1.msra.mxu0 0.0
        %2008 = vmatprep.subr.mxu0 0.0
        %2009 = vmatpush1.msra.mxu0 0.0
        %2010 = vmatprep.subr.mxu0 0.0
        %2011 = vmatpush1.msra.mxu0 0.0
        %2012 = vmatprep.subr.mxu0 0.0
        %2013 = vmatpush1.msra.mxu0 0.0
        %2014 = vmatprep.subr.mxu0 0.0
        %2015 = vmatpush1.msra.mxu0 0.0
        %2016 = vmatprep.subr.mxu0 0.0
        %2017 = vmatpush1.msra.mxu0 0.0
        %2018 = vmatprep.subr.mxu0 0.0
        %2019 = vmatpush1.msra.mxu0 0.0
        %2020 = vmatprep.subr.mxu0 0.0
        %2021 = vmatpush1.msra.mxu0 0.0
        %2022 = vmatprep.subr.mxu0 0.0
        %2023 = vmatpush1.msra.mxu0 0.0
        %2024 = vmatprep.subr.mxu0 0.0
        %2025 = vmatpush1.msra.mxu0 0.0
        %2026 = vmatprep.subr.mxu0 0.0
        %2027 = vmatpush1.msra.mxu0 0.0
        %2028 = vmatprep.subr.mxu0 0.0
        %2029 = vmatpush1.msra.mxu0 0.0
        %2030 = vmatprep.subr.mxu0 0.0
        %2031 = vmatpush1.msra.mxu0 0.0
        %2032 = vmatprep.subr.mxu0 0.0
        %2033 = vmatpush1.msra.mxu0 0.0
        %2034 = vmatprep.mubr.f32.mxu0 0.0
        %2035 = vmatmul.mubr.f32.gmra.mrb[0].mxu0 %v1968
        %v2036 = vpop.f32.mrb[0].mxu0
        %v2037 = vadd.f32 0.0, %v2036
        %v2038 = vpop.f32.mrb[0].mxu0
        %v2039 = vadd.f32 0.0, %v2038
        %2040 = vdwg.mxu0
        %v2041 = vadd.f32 %v1956, %v2037
        %v2042 = vadd.f32 %v1957, %v2039
        %v2043 = vxor.u32 %v2041, 2147483648
        %v2044 = vmul.f32 %v2043, 1.442695
        %v2045 = vpow.pop %v2044
        %v2046 = vadd.f32 %v2045, 1.0
        %v2047 = vrcp.pop %v2046
        %v2048 = vmul.f32 1.0, %v2047
        %v2049 = vtanh.pop %v2041
        %v2050 = vmul.f32 %v2048, %v1953
        %2052 = vrot.lane.b32.xlu0 %v2049, 64
        %v2053 = vpop.permute.xlu0 %2052
        %v2055 = vmul.f32 %v2048, %v2053
        %2057 = vrot.lane.b32.xlu0 %v2055, 32
        %v2058 = vpop.permute.xlu0 %2057
        %v2060 = vadd.f32 %v2050, %v2058
        %v2061 = vtanh.pop %v2060
        %2063 = vrot.lane.b32.xlu0 %v2061, 64
        %v2064 = vpop.permute.xlu0 %2063
        %v2066 = vmul.f32 %v2048, %v2064
        %v2067 = vxor.u32 %v2042, 2147483648
        %v2068 = vmul.f32 %v2067, 1.442695
        %v2069 = vpow.pop %v2068
        %v2070 = vadd.f32 %v2069, 1.0
        %v2071 = vrcp.pop %v2070
        %v2072 = vmul.f32 1.0, %v2071
        %v2073 = vtanh.pop %v2042
        %v2074 = vmul.f32 %v2072, %v1955
        %2076 = vrot.lane.b32.xlu0 %v2073, 64
        %v2077 = vpop.permute.xlu0 %2076
        %v2079 = vmul.f32 %v2072, %v2077
        %2081 = vrot.lane.b32.xlu0 %v2079, 32
        %v2082 = vpop.permute.xlu0 %2081
        %v2084 = vadd.f32 %v2074, %v2082
        %v2085 = vtanh.pop %v2084
        %2087 = vrot.lane.b32.xlu0 %v2085, 64
        %v2088 = vpop.permute.xlu0 %2087
        %v2090 = vmul.f32 %v2072, %v2088
        %v2091 = vsel %vm665, %v2066, 0.0
        %2093 = vrot.lane.b32.xlu0 %v2091, 32
        %v2094 = vpop.permute.xlu0 %2093
        %2096 = vst.msk [vmem:[%s671] sm:$0xff] %vm659, %v2094
        %v2097 = vsel %vm653, %v2090, 0.0
        %2099 = vrot.lane.b32.xlu0 %v2097, 64
        %v2100 = vpop.permute.xlu0 %2099
        %2102 = vst.msk [vmem:[#allocation2] sm:$0xff] %vm672, %v2100
        %v2103 = vsel %vm665, %v2066, %v1952
        %v2104 = vsel %vm653, %v2090, %v1954
        %2106 = vrot.lane.b32.xlu0 %v2103, 32
        %v2107 = vpop.permute.xlu0 %2106
        %2110 = vrot.lane.b32.xlu0 %v2104, 64
        %v2111 = vpop.permute.xlu0 %2110
        %v2113 = vsel %vm659, %v2107, %v2111
        %2114 = vst.msk [vmem:[%s5] sm:$0xff] %vm264, %v2113
      $region44: #{model_forward_pallas.1} parent=39 // pred_fallthru
        _
      %p2115 = scmp.gt.s32.totalorder %s16, 0
      %p2116 = pnand %p2115, %p259
      %p2117 = pneg %p2116
      // Predicated region
      $region45: #{model_forward_pallas.1} parent=39 // pred_check
        _
      $region46: #{model_forward_pallas.1} parent=39 // pred_check_branch
        %2119 = sbr.rel (%p2116) target = $region48
      $region47: #{model_forward_pallas.1} parent=39 // pred_region
        %v2120 = vld [vmem:[#allocation2] sm:$0xff]
        %v2121 = vld [vmem:[#allocation2 + $0x8] sm:$0xff]
        %v2122 = vld [vmem:[#allocation2 + $0x10] sm:$0xff]
        %v2123 = vld [vmem:[#allocation2 + $0x18] sm:$0xff]
        %v2124 = vld [vmem:[#allocation2 + $0x20] sm:$0xff]
        %v2125 = vld [vmem:[#allocation2 + $0x28] sm:$0xff]
        %v2126 = vld [vmem:[#allocation2 + $0x30] sm:$0xff]
        %v2127 = vld [vmem:[#allocation2 + $0x38] sm:$0xff]
        %v2128 = vld [vmem:[#allocation2 + $0x40] sm:$0xff]
        %v2129 = vld [vmem:[#allocation2 + $0x48] sm:$0xff]
        %v2130 = vld [vmem:[%s237] sm:$0xff]
        %v2131 = vld [vmem:[%s237 + $0x8] sm:$0xff]
        %v2132 = vld [vmem:[%s237 + $0x10] sm:$0xff]
        %v2133 = vld [vmem:[%s237 + $0x18] sm:$0xff]
        %v2134 = vld [vmem:[%s237 + $0x20] sm:$0xff]
        %v2135 = vld [vmem:[%s237 + $0x28] sm:$0xff]
        %v2136 = vld [vmem:[%s237 + $0x30] sm:$0xff]
        %v2137 = vld [vmem:[%s237 + $0x38] sm:$0xff]
        %v2138 = vld [vmem:[%s237 + $0x40] sm:$0xff]
        %v2139 = vld [vmem:[%s237 + $0x48] sm:$0xff]
        %v2140 = vld [vmem:[%s237 + $0x50] sm:$0xff]
        %v2141 = vld [vmem:[%s237 + $0x58] sm:$0xff]
        %v2142 = vld [vmem:[%s237 + $0x60] sm:$0xff]
        %v2143 = vld [vmem:[%s237 + $0x68] sm:$0xff]
        %v2144 = vld [vmem:[%s237 + $0x70] sm:$0xff]
        %v2145 = vld [vmem:[%s237 + $0x78] sm:$0xff]
        %v2146 = vld [vmem:[%s246] sm:$0x3]
        %v2148 = vlaneseq
        %v2149 = vshrl.u32 %v2148, 7
        %v2150 = vsub.s32 0, %v2149
        %v2151 = vrot.slane %v2146, %v2150
        %v2152 = vlaneseq
        %v2153 = vshrl.u32 %v2152, 7
        %v2154 = vsub.s32 1, %v2153
        %v2155 = vrot.slane %v2146, %v2154
        %vm2158 = vcmask 523264
        %v2160 = vsel %vm2158, %v2120, 0
        %v2163 = vsel %vm2158, %v2121, 0
        %v2166 = vsel %vm2158, %v2122, 0
        %v2169 = vsel %vm2158, %v2123, 0
        %v2172 = vsel %vm2158, %v2124, 0
        %v2175 = vsel %vm2158, %v2125, 0
        %v2178 = vsel %vm2158, %v2126, 0
        %v2181 = vsel %vm2158, %v2127, 0
        %v2184 = vsel %vm2158, %v2128, 0
        %v2187 = vsel %vm2158, %v2129, 0
        %2189 = vmatprep.subr.mxu0 %v2131
        %2190 = vmatpush1.msra.mxu0 %v2130
        %2191 = vmatprep.subr.mxu0 %v2133
        %2192 = vmatpush1.msra.mxu0 %v2132
        %2193 = vmatprep.subr.mxu0 %v2135
        %2194 = vmatpush1.msra.mxu0 %v2134
        %2195 = vmatprep.subr.mxu0 %v2137
        %2196 = vmatpush1.msra.mxu0 %v2136
        %2197 = vmatprep.subr.mxu0 %v2139
        %2198 = vmatpush1.msra.mxu0 %v2138
        %2199 = vmatprep.subr.mxu0 %v2141
        %2200 = vmatpush1.msra.mxu0 %v2140
        %2201 = vmatprep.subr.mxu0 %v2143
        %2202 = vmatpush1.msra.mxu0 %v2142
        %2203 = vmatprep.subr.mxu0 %v2145
        %2204 = vmatpush1.msra.mxu0 %v2144
        %2205 = vmatprep.subr.mxu0 0.0
        %2206 = vmatpush1.msra.mxu0 0.0
        %2207 = vmatprep.subr.mxu0 0.0
        %2208 = vmatpush1.msra.mxu0 0.0
        %2209 = vmatprep.subr.mxu0 0.0
        %2210 = vmatpush1.msra.mxu0 0.0
        %2211 = vmatprep.subr.mxu0 0.0
        %2212 = vmatpush1.msra.mxu0 0.0
        %2213 = vmatprep.subr.mxu0 0.0
        %2214 = vmatpush1.msra.mxu0 0.0
        %2215 = vmatprep.subr.mxu0 0.0
        %2216 = vmatpush1.msra.mxu0 0.0
        %2217 = vmatprep.subr.mxu0 0.0
        %2218 = vmatpush1.msra.mxu0 0.0
        %2219 = vmatprep.subr.mxu0 0.0
        %2220 = vmatpush1.msra.mxu0 0.0
        %2221 = vmatprep.subr.mxu0 0.0
        %2222 = vmatpush1.msra.mxu0 0.0
        %2223 = vmatprep.subr.mxu0 0.0
        %2224 = vmatpush1.msra.mxu0 0.0
        %2225 = vmatprep.subr.mxu0 0.0
        %2226 = vmatpush1.msra.mxu0 0.0
        %2227 = vmatprep.subr.mxu0 0.0
        %2228 = vmatpush1.msra.mxu0 0.0
        %2229 = vmatprep.subr.mxu0 0.0
        %2230 = vmatpush1.msra.mxu0 0.0
        %2231 = vmatprep.subr.mxu0 0.0
        %2232 = vmatpush1.msra.mxu0 0.0
        %2233 = vmatprep.subr.mxu0 0.0
        %2234 = vmatpush1.msra.mxu0 0.0
        %2235 = vmatprep.subr.mxu0 0.0
        %2236 = vmatpush1.msra.mxu0 0.0
        %2237 = vmatprep.subr.mxu0 0.0
        %2238 = vmatpush1.msra.mxu0 0.0
        %2239 = vmatprep.subr.mxu0 0.0
        %2240 = vmatpush1.msra.mxu0 0.0
        %2241 = vmatprep.subr.mxu0 0.0
        %2242 = vmatpush1.msra.mxu0 0.0
        %2243 = vmatprep.subr.mxu0 0.0
        %2244 = vmatpush1.msra.mxu0 0.0
        %2245 = vmatprep.subr.mxu0 0.0
        %2246 = vmatpush1.msra.mxu0 0.0
        %2247 = vmatprep.subr.mxu0 0.0
        %2248 = vmatpush1.msra.mxu0 0.0
        %2249 = vmatprep.subr.mxu0 0.0
        %2250 = vmatpush1.msra.mxu0 0.0
        %2251 = vmatprep.subr.mxu0 0.0
        %2252 = vmatpush1.msra.mxu0 0.0
        %2253 = vmatprep.mubr.f32.mxu0 0.0
        %2254 = vmatmul.mubr.f32.gmra.mrb[0].mxu0 %v2160
        %v2255 = vpop.f32.mrb[0].mxu0
        %v2256 = vadd.f32 %v2151, %v2255
        %v2257 = vpop.f32.mrb[0].mxu0
        %v2258 = vadd.f32 %v2155, %v2257
        %2259 = vmatprep.mubr.f32.mxu0 0.0
        %2260 = vmatmul.mubr.f32.gmra.mrb[0].mxu0 %v2163
        %v2261 = vpop.f32.mrb[0].mxu0
        %v2262 = vadd.f32 %v2151, %v2261
        %v2263 = vpop.f32.mrb[0].mxu0
        %v2264 = vadd.f32 %v2155, %v2263
        %2265 = vmatprep.mubr.f32.mxu0 0.0
        %2266 = vmatmul.mubr.f32.gmra.mrb[0].mxu0 %v2166
        %v2267 = vpop.f32.mrb[0].mxu0
        %v2268 = vadd.f32 %v2151, %v2267
        %v2269 = vpop.f32.mrb[0].mxu0
        %v2270 = vadd.f32 %v2155, %v2269
        %2271 = vmatprep.mubr.f32.mxu0 0.0
        %2272 = vmatmul.mubr.f32.gmra.mrb[0].mxu0 %v2169
        %v2273 = vpop.f32.mrb[0].mxu0
        %v2274 = vadd.f32 %v2151, %v2273
        %v2275 = vpop.f32.mrb[0].mxu0
        %v2276 = vadd.f32 %v2155, %v2275
        %2277 = vmatprep.mubr.f32.mxu0 0.0
        %2278 = vmatmul.mubr.f32.gmra.mrb[0].mxu0 %v2172
        %v2279 = vpop.f32.mrb[0].mxu0
        %v2280 = vadd.f32 %v2151, %v2279
        %v2281 = vpop.f32.mrb[0].mxu0
        %v2282 = vadd.f32 %v2155, %v2281
        %2283 = vmatprep.mubr.f32.mxu0 0.0
        %2284 = vmatmul.mubr.f32.gmra.mrb[0].mxu0 %v2175
        %v2285 = vpop.f32.mrb[0].mxu0
        %v2286 = vadd.f32 %v2151, %v2285
        %v2287 = vpop.f32.mrb[0].mxu0
        %v2288 = vadd.f32 %v2155, %v2287
        %2289 = vmatprep.mubr.f32.mxu0 0.0
        %2290 = vmatmul.mubr.f32.gmra.mrb[0].mxu0 %v2178
        %v2291 = vpop.f32.mrb[0].mxu0
        %v2292 = vadd.f32 %v2151, %v2291
        %v2293 = vpop.f32.mrb[0].mxu0
        %v2294 = vadd.f32 %v2155, %v2293
        %2295 = vmatprep.mubr.f32.mxu0 0.0
        %2296 = vmatmul.mubr.f32.gmra.mrb[0].mxu0 %v2181
        %v2297 = vpop.f32.mrb[0].mxu0
        %v2298 = vadd.f32 %v2151, %v2297
        %v2299 = vpop.f32.mrb[0].mxu0
        %v2300 = vadd.f32 %v2155, %v2299
        %2301 = vmatprep.mubr.f32.mxu0 0.0
        %2302 = vmatmul.mubr.f32.gmra.mrb[0].mxu0 %v2184
        %v2303 = vpop.f32.mrb[0].mxu0
        %v2304 = vadd.f32 %v2151, %v2303
        %v2305 = vpop.f32.mrb[0].mxu0
        %v2306 = vadd.f32 %v2155, %v2305
        %2307 = vmatprep.mubr.f32.mxu0 0.0
        %2308 = vmatmul.mubr.f32.gmra.mrb[0].mxu0 %v2187
        %v2309 = vpop.f32.mrb[0].mxu0
        %v2310 = vadd.f32 %v2151, %v2309
        %v2311 = vpop.f32.mrb[0].mxu0
        %v2312 = vadd.f32 %v2155, %v2311
        %2313 = vdwg.mxu0
        %2314 = vst [vmem:[#allocation4] sm:$0xff] %v2256
        %2315 = vst [vmem:[#allocation4 + $0x8] sm:$0xff] %v2258
        %2316 = vst [vmem:[#allocation4 + $0x10] sm:$0xff] %v2262
        %2317 = vst [vmem:[#allocation4 + $0x18] sm:$0xff] %v2264
        %2318 = vst [vmem:[#allocation4 + $0x20] sm:$0xff] %v2268
        %2319 = vst [vmem:[#allocation4 + $0x28] sm:$0xff] %v2270
        %2320 = vst [vmem:[#allocation4 + $0x30] sm:$0xff] %v2274
        %2321 = vst [vmem:[#allocation4 + $0x38] sm:$0xff] %v2276
        %2322 = vst [vmem:[#allocation4 + $0x40] sm:$0xff] %v2280
        %2323 = vst [vmem:[#allocation4 + $0x48] sm:$0xff] %v2282
        %2324 = vst [vmem:[#allocation4 + $0x50] sm:$0xff] %v2286
        %2325 = vst [vmem:[#allocation4 + $0x58] sm:$0xff] %v2288
        %2326 = vst [vmem:[#allocation4 + $0x60] sm:$0xff] %v2292
        %2327 = vst [vmem:[#allocation4 + $0x68] sm:$0xff] %v2294
        %2328 = vst [vmem:[#allocation4 + $0x70] sm:$0xff] %v2298
        %2329 = vst [vmem:[#allocation4 + $0x78] sm:$0xff] %v2300
        %2330 = vst [vmem:[#allocation4 + $0x80] sm:$0xff] %v2304
        %2331 = vst [vmem:[#allocation4 + $0x88] sm:$0xff] %v2306
        %2332 = vst [vmem:[#allocation4 + $0x90] sm:$0xff] %v2310
        %2333 = vst [vmem:[#allocation4 + $0x98] sm:$0xff] %v2312
        %v2334 = vld [vmem:[%s4] sm:$0xff]
        %v2335 = vld [vmem:[%s242] sm:$0xff]
        %v2336 = vld [vmem:[%s242 + $0x8] sm:$0xff]
        %v2337 = vld [vmem:[%s242 + $0x10] sm:$0xff]
        %v2338 = vld [vmem:[%s242 + $0x18] sm:$0xff]
        %v2339 = vld [vmem:[%s242 + $0x20] sm:$0xff]
        %v2340 = vld [vmem:[%s242 + $0x28] sm:$0xff]
        %v2341 = vld [vmem:[%s242 + $0x30] sm:$0xff]
        %v2342 = vld [vmem:[%s242 + $0x38] sm:$0xff]
        %v2343 = vld [vmem:[%s242 + $0x40] sm:$0xff]
        %v2344 = vld [vmem:[%s242 + $0x48] sm:$0xff]
        %v2345 = vld [vmem:[%s242 + $0x50] sm:$0xff]
        %v2346 = vld [vmem:[%s242 + $0x58] sm:$0xff]
        %v2347 = vld [vmem:[%s242 + $0x60] sm:$0xff]
        %v2348 = vld [vmem:[%s242 + $0x68] sm:$0xff]
        %v2349 = vld [vmem:[%s242 + $0x70] sm:$0xff]
        %v2350 = vld [vmem:[%s242 + $0x78] sm:$0xff]
        %s2351 = smul.u32 0, 2
        %s2352 = smul.addr %s2351, 8
        %s2353 = scalar_lea.vmem [#allocation4], %s2352
        %v2354 = vld [vmem:[%s2353] sm:$0xff]
        %s2355 = smul.u32 9, 2
        %s2356 = smul.addr %s2355, 8
        %s2357 = scalar_lea.vmem [#allocation4], %s2356
        %v2358 = vld [vmem:[%s2357 + $0x8] sm:$0xff]
        %v2360 = vsel %vm2158, 0.0, 0
        %2362 = vmatprep.subr.mxu0 %v2336
        %2363 = vmatpush1.msra.mxu0 %v2335
        %2364 = vmatprep.subr.mxu0 %v2338
        %2365 = vmatpush1.msra.mxu0 %v2337
        %2366 = vmatprep.subr.mxu0 %v2340
        %2367 = vmatpush1.msra.mxu0 %v2339
        %2368 = vmatprep.subr.mxu0 %v2342
        %2369 = vmatpush1.msra.mxu0 %v2341
        %2370 = vmatprep.subr.mxu0 %v2344
        %2371 = vmatpush1.msra.mxu0 %v2343
        %2372 = vmatprep.subr.mxu0 %v2346
        %2373 = vmatpush1.msra.mxu0 %v2345
        %2374 = vmatprep.subr.mxu0 %v2348
        %2375 = vmatpush1.msra.mxu0 %v2347
        %2376 = vmatprep.subr.mxu0 %v2350
        %2377 = vmatpush1.msra.mxu0 %v2349
        %2378 = vmatprep.subr.mxu0 0.0
        %2379 = vmatpush1.msra.mxu0 0.0
        %2380 = vmatprep.subr.mxu0 0.0
        %2381 = vmatpush1.msra.mxu0 0.0
        %2382 = vmatprep.subr.mxu0 0.0
        %2383 = vmatpush1.msra.mxu0 0.0
        %2384 = vmatprep.subr.mxu0 0.0
        %2385 = vmatpush1.msra.mxu0 0.0
        %2386 = vmatprep.subr.mxu0 0.0
        %2387 = vmatpush1.msra.mxu0 0.0
        %2388 = vmatprep.subr.mxu0 0.0
        %2389 = vmatpush1.msra.mxu0 0.0
        %2390 = vmatprep.subr.mxu0 0.0
        %2391 = vmatpush1.msra.mxu0 0.0
        %2392 = vmatprep.subr.mxu0 0.0
        %2393 = vmatpush1.msra.mxu0 0.0
        %2394 = vmatprep.subr.mxu0 0.0
        %2395 = vmatpush1.msra.mxu0 0.0
        %2396 = vmatprep.subr.mxu0 0.0
        %2397 = vmatpush1.msra.mxu0 0.0
        %2398 = vmatprep.subr.mxu0 0.0
        %2399 = vmatpush1.msra.mxu0 0.0
        %2400 = vmatprep.subr.mxu0 0.0
        %2401 = vmatpush1.msra.mxu0 0.0
        %2402 = vmatprep.subr.mxu0 0.0
        %2403 = vmatpush1.msra.mxu0 0.0
        %2404 = vmatprep.subr.mxu0 0.0
        %2405 = vmatpush1.msra.mxu0 0.0
        %2406 = vmatprep.subr.mxu0 0.0
        %2407 = vmatpush1.msra.mxu0 0.0
        %2408 = vmatprep.subr.mxu0 0.0
        %2409 = vmatpush1.msra.mxu0 0.0
        %2410 = vmatprep.subr.mxu0 0.0
        %2411 = vmatpush1.msra.mxu0 0.0
        %2412 = vmatprep.subr.mxu0 0.0
        %2413 = vmatpush1.msra.mxu0 0.0
        %2414 = vmatprep.subr.mxu0 0.0
        %2415 = vmatpush1.msra.mxu0 0.0
        %2416 = vmatprep.subr.mxu0 0.0
        %2417 = vmatpush1.msra.mxu0 0.0
        %2418 = vmatprep.subr.mxu0 0.0
        %2419 = vmatpush1.msra.mxu0 0.0
        %2420 = vmatprep.subr.mxu0 0.0
        %2421 = vmatpush1.msra.mxu0 0.0
        %2422 = vmatprep.subr.mxu0 0.0
        %2423 = vmatpush1.msra.mxu0 0.0
        %2424 = vmatprep.subr.mxu0 0.0
        %2425 = vmatpush1.msra.mxu0 0.0
        %2426 = vmatprep.mubr.f32.mxu0 0.0
        %2427 = vmatmul.mubr.f32.gmra.mrb[0].mxu0 %v2360
        %v2428 = vpop.f32.mrb[0].mxu0
        %v2429 = vadd.f32 0.0, %v2428
        %v2430 = vpop.f32.mrb[0].mxu0
        %v2431 = vadd.f32 0.0, %v2430
        %2432 = vdwg.mxu0
        %v2433 = vadd.f32 %v2354, %v2429
        %v2434 = vadd.f32 %v2358, %v2431
        %v2435 = vxor.u32 %v2433, 2147483648
        %v2436 = vmul.f32 %v2435, 1.442695
        %v2437 = vpow.pop %v2436
        %v2438 = vadd.f32 %v2437, 1.0
        %v2439 = vrcp.pop %v2438
        %v2440 = vmul.f32 1.0, %v2439
        %v2441 = vtanh.pop %v2433
        %v2442 = vmul.f32 %v2440, 0.0
        %2444 = vrot.lane.b32.xlu0 %v2441, 64
        %v2445 = vpop.permute.xlu0 %2444
        %v2447 = vmul.f32 %v2440, %v2445
        %2449 = vrot.lane.b32.xlu0 %v2447, 32
        %v2450 = vpop.permute.xlu0 %2449
        %v2452 = vadd.f32 %v2442, %v2450
        %v2453 = vtanh.pop %v2452
        %2455 = vrot.lane.b32.xlu0 %v2453, 64
        %v2456 = vpop.permute.xlu0 %2455
        %v2458 = vmul.f32 %v2440, %v2456
        %v2459 = vxor.u32 %v2434, 2147483648
        %v2460 = vmul.f32 %v2459, 1.442695
        %v2461 = vpow.pop %v2460
        %v2462 = vadd.f32 %v2461, 1.0
        %v2463 = vrcp.pop %v2462
        %v2464 = vmul.f32 1.0, %v2463
        %v2465 = vtanh.pop %v2434
        %v2466 = vmul.f32 %v2464, 0.0
        %2468 = vrot.lane.b32.xlu0 %v2465, 64
        %v2469 = vpop.permute.xlu0 %2468
        %v2471 = vmul.f32 %v2464, %v2469
        %2473 = vrot.lane.b32.xlu0 %v2471, 32
        %v2474 = vpop.permute.xlu0 %2473
        %v2476 = vadd.f32 %v2466, %v2474
        %v2477 = vtanh.pop %v2476
        %2479 = vrot.lane.b32.xlu0 %v2477, 64
        %v2480 = vpop.permute.xlu0 %2479
        %v2482 = vmul.f32 %v2464, %v2480
        %vm2483 = vcmp.gt.s32.totalorder %v2334, 0
        %vm2484 = vcmp.gt.s32.totalorder %v2334, 9
        %v2485 = vsel %vm2483, 1, 0
        %2486 = vset.pattern.permute.xlu0 0
        %2487 = vperm.xlu0 %2486, %v2485
        %v2488 = vpop.permute.xlu0 %2487
        %vm2489 = vcmp.eq.s32.totalorder %v2488, 1
        %v2490 = vsel %vm2489, %v2458, 0.0
        %2492 = vrot.lane.b32.xlu0 %v2490, 32
        %v2493 = vpop.permute.xlu0 %2492
        %vm2495 = vcmask 261120
        %2496 = vst.msk [vmem:[#allocation3] sm:$0xff] %vm2495, %v2493
        %v2497 = vsel %vm2484, 1, 0
        %2498 = vset.pattern.permute.xlu0 0
        %2499 = vperm.xlu0 %2498, %v2497
        %v2500 = vpop.permute.xlu0 %2499
        %vm2501 = vcmp.eq.s32.totalorder %v2500, 1
        %v2502 = vsel %vm2501, %v2482, 0.0
        %2504 = vrot.lane.b32.xlu0 %v2502, 64
        %v2505 = vpop.permute.xlu0 %2504
        %s2507 = scalar_lea.vmem [#allocation3], 72
        %vm2508 = vcmask 523520
        %2509 = vst.msk [vmem:[%s2507] sm:$0xff] %vm2508, %v2505
        %v2510 = vsel %vm2489, %v2452, 0.0
        %v2511 = vsel %vm2501, %v2476, 0.0
        %s2512 = smul.u32 1, 2
        %s2513 = smul.addr %s2512, 8
        %s2514 = scalar_lea.vmem [#allocation4], %s2513
        %v2515 = vld [vmem:[%s2514] sm:$0xff]
        %s2516 = smul.u32 8, 2
        %s2517 = smul.addr %s2516, 8
        %s2518 = scalar_lea.vmem [#allocation4], %s2517
        %v2519 = vld [vmem:[%s2518 + $0x8] sm:$0xff]
        %v2520 = vsel %vm2495, %v2493, %v2505
        %v2522 = vsel %vm2158, %v2520, 0
        %2524 = vmatprep.subr.mxu0 %v2336
        %2525 = vmatpush1.msra.mxu0 %v2335
        %2526 = vmatprep.subr.mxu0 %v2338
        %2527 = vmatpush1.msra.mxu0 %v2337
        %2528 = vmatprep.subr.mxu0 %v2340
        %2529 = vmatpush1.msra.mxu0 %v2339
        %2530 = vmatprep.subr.mxu0 %v2342
        %2531 = vmatpush1.msra.mxu0 %v2341
        %2532 = vmatprep.subr.mxu0 %v2344
        %2533 = vmatpush1.msra.mxu0 %v2343
        %2534 = vmatprep.subr.mxu0 %v2346
        %2535 = vmatpush1.msra.mxu0 %v2345
        %2536 = vmatprep.subr.mxu0 %v2348
        %2537 = vmatpush1.msra.mxu0 %v2347
        %2538 = vmatprep.subr.mxu0 %v2350
        %2539 = vmatpush1.msra.mxu0 %v2349
        %2540 = vmatprep.subr.mxu0 0.0
        %2541 = vmatpush1.msra.mxu0 0.0
        %2542 = vmatprep.subr.mxu0 0.0
        %2543 = vmatpush1.msra.mxu0 0.0
        %2544 = vmatprep.subr.mxu0 0.0
        %2545 = vmatpush1.msra.mxu0 0.0
        %2546 = vmatprep.subr.mxu0 0.0
        %2547 = vmatpush1.msra.mxu0 0.0
        %2548 = vmatprep.subr.mxu0 0.0
        %2549 = vmatpush1.msra.mxu0 0.0
        %2550 = vmatprep.subr.mxu0 0.0
        %2551 = vmatpush1.msra.mxu0 0.0
        %2552 = vmatprep.subr.mxu0 0.0
        %2553 = vmatpush1.msra.mxu0 0.0
        %2554 = vmatprep.subr.mxu0 0.0
        %2555 = vmatpush1.msra.mxu0 0.0
        %2556 = vmatprep.subr.mxu0 0.0
        %2557 = vmatpush1.msra.mxu0 0.0
        %2558 = vmatprep.subr.mxu0 0.0
        %2559 = vmatpush1.msra.mxu0 0.0
        %2560 = vmatprep.subr.mxu0 0.0
        %2561 = vmatpush1.msra.mxu0 0.0
        %2562 = vmatprep.subr.mxu0 0.0
        %2563 = vmatpush1.msra.mxu0 0.0
        %2564 = vmatprep.subr.mxu0 0.0
        %2565 = vmatpush1.msra.mxu0 0.0
        %2566 = vmatprep.subr.mxu0 0.0
        %2567 = vmatpush1.msra.mxu0 0.0
        %2568 = vmatprep.subr.mxu0 0.0
        %2569 = vmatpush1.msra.mxu0 0.0
        %2570 = vmatprep.subr.mxu0 0.0
        %2571 = vmatpush1.msra.mxu0 0.0
        %2572 = vmatprep.subr.mxu0 0.0
        %2573 = vmatpush1.msra.mxu0 0.0
        %2574 = vmatprep.subr.mxu0 0.0
        %2575 = vmatpush1.msra.mxu0 0.0
        %2576 = vmatprep.subr.mxu0 0.0
        %2577 = vmatpush1.msra.mxu0 0.0
        %2578 = vmatprep.subr.mxu0 0.0
        %2579 = vmatpush1.msra.mxu0 0.0
        %2580 = vmatprep.subr.mxu0 0.0
        %2581 = vmatpush1.msra.mxu0 0.0
        %2582 = vmatprep.subr.mxu0 0.0
        %2583 = vmatpush1.msra.mxu0 0.0
        %2584 = vmatprep.subr.mxu0 0.0
        %2585 = vmatpush1.msra.mxu0 0.0
        %2586 = vmatprep.subr.mxu0 0.0
        %2587 = vmatpush1.msra.mxu0 0.0
        %2588 = vmatprep.mubr.f32.mxu0 0.0
        %2589 = vmatmul.mubr.f32.gmra.mrb[0].mxu0 %v2522
        %v2590 = vpop.f32.mrb[0].mxu0
        %v2591 = vadd.f32 0.0, %v2590
        %v2592 = vpop.f32.mrb[0].mxu0
        %v2593 = vadd.f32 0.0, %v2592
        %2594 = vdwg.mxu0
        %v2595 = vadd.f32 %v2515, %v2591
        %v2596 = vadd.f32 %v2519, %v2593
        %v2597 = vxor.u32 %v2595, 2147483648
        %v2598 = vmul.f32 %v2597, 1.442695
        %v2599 = vpow.pop %v2598
        %v2600 = vadd.f32 %v2599, 1.0
        %v2601 = vrcp.pop %v2600
        %v2602 = vmul.f32 1.0, %v2601
        %v2603 = vtanh.pop %v2595
        %v2604 = vmul.f32 %v2602, %v2510
        %2606 = vrot.lane.b32.xlu0 %v2603, 64
        %v2607 = vpop.permute.xlu0 %2606
        %v2609 = vmul.f32 %v2602, %v2607
        %2611 = vrot.lane.b32.xlu0 %v2609, 32
        %v2612 = vpop.permute.xlu0 %2611
        %v2614 = vadd.f32 %v2604, %v2612
        %v2615 = vtanh.pop %v2614
        %2617 = vrot.lane.b32.xlu0 %v2615, 64
        %v2618 = vpop.permute.xlu0 %2617
        %v2620 = vmul.f32 %v2602, %v2618
        %v2621 = vxor.u32 %v2596, 2147483648
        %v2622 = vmul.f32 %v2621, 1.442695
        %v2623 = vpow.pop %v2622
        %v2624 = vadd.f32 %v2623, 1.0
        %v2625 = vrcp.pop %v2624
        %v2626 = vmul.f32 1.0, %v2625
        %v2627 = vtanh.pop %v2596
        %v2628 = vmul.f32 %v2626, %v2511
        %2630 = vrot.lane.b32.xlu0 %v2627, 64
        %v2631 = vpop.permute.xlu0 %2630
        %v2633 = vmul.f32 %v2626, %v2631
        %2635 = vrot.lane.b32.xlu0 %v2633, 32
        %v2636 = vpop.permute.xlu0 %2635
        %v2638 = vadd.f32 %v2628, %v2636
        %v2639 = vtanh.pop %v2638
        %2641 = vrot.lane.b32.xlu0 %v2639, 64
        %v2642 = vpop.permute.xlu0 %2641
        %v2644 = vmul.f32 %v2626, %v2642
        %vm2645 = vcmp.gt.s32.totalorder %v2334, 1
        %vm2646 = vcmp.gt.s32.totalorder %v2334, 8
        %v2647 = vsel %vm2645, 1, 0
        %2648 = vset.pattern.permute.xlu0 0
        %2649 = vperm.xlu0 %2648, %v2647
        %v2650 = vpop.permute.xlu0 %2649
        %vm2651 = vcmp.eq.s32.totalorder %v2650, 1
        %v2652 = vsel %vm2651, %v2620, 0.0
        %2654 = vrot.lane.b32.xlu0 %v2652, 32
        %v2655 = vpop.permute.xlu0 %2654
        %s2657 = scalar_lea.vmem [#allocation3], 8
        %2658 = vst.msk [vmem:[%s2657] sm:$0xff] %vm2495, %v2655
        %v2659 = vsel %vm2646, 1, 0
        %2660 = vset.pattern.permute.xlu0 0
        %2661 = vperm.xlu0 %2660, %v2659
        %v2662 = vpop.permute.xlu0 %2661
        %vm2663 = vcmp.eq.s32.totalorder %v2662, 1
        %v2664 = vsel %vm2663, %v2644, 0.0
        %2666 = vrot.lane.b32.xlu0 %v2664, 64
        %v2667 = vpop.permute.xlu0 %2666
        %s2669 = scalar_lea.vmem [#allocation3], 64
        %2670 = vst.msk [vmem:[%s2669] sm:$0xff] %vm2508, %v2667
        %v2671 = vsel %vm2651, %v2620, %v2490
        %v2672 = vsel %vm2651, %v2614, %v2510
        %v2673 = vsel %vm2663, %v2644, %v2502
        %v2674 = vsel %vm2663, %v2638, %v2511
        %s2675 = smul.u32 2, 2
        %s2676 = smul.addr %s2675, 8
        %s2677 = scalar_lea.vmem [#allocation4], %s2676
        %v2678 = vld [vmem:[%s2677] sm:$0xff]
        %s2679 = smul.u32 7, 2
        %s2680 = smul.addr %s2679, 8
        %s2681 = scalar_lea.vmem [#allocation4], %s2680
        %v2682 = vld [vmem:[%s2681 + $0x8] sm:$0xff]
        %2684 = vrot.lane.b32.xlu0 %v2671, 32
        %v2685 = vpop.permute.xlu0 %2684
        %2688 = vrot.lane.b32.xlu0 %v2673, 64
        %v2689 = vpop.permute.xlu0 %2688
        %v2691 = vsel %vm2495, %v2685, %v2689
        %v2693 = vsel %vm2158, %v2691, 0
        %2695 = vmatprep.subr.mxu0 %v2336
        %2696 = vmatpush1.msra.mxu0 %v2335
        %2697 = vmatprep.subr.mxu0 %v2338
        %2698 = vmatpush1.msra.mxu0 %v2337
        %2699 = vmatprep.subr.mxu0 %v2340
        %2700 = vmatpush1.msra.mxu0 %v2339
        %2701 = vmatprep.subr.mxu0 %v2342
        %2702 = vmatpush1.msra.mxu0 %v2341
        %2703 = vmatprep.subr.mxu0 %v2344
        %2704 = vmatpush1.msra.mxu0 %v2343
        %2705 = vmatprep.subr.mxu0 %v2346
        %2706 = vmatpush1.msra.mxu0 %v2345
        %2707 = vmatprep.subr.mxu0 %v2348
        %2708 = vmatpush1.msra.mxu0 %v2347
        %2709 = vmatprep.subr.mxu0 %v2350
        %2710 = vmatpush1.msra.mxu0 %v2349
        %2711 = vmatprep.subr.mxu0 0.0
        %2712 = vmatpush1.msra.mxu0 0.0
        %2713 = vmatprep.subr.mxu0 0.0
        %2714 = vmatpush1.msra.mxu0 0.0
        %2715 = vmatprep.subr.mxu0 0.0
        %2716 = vmatpush1.msra.mxu0 0.0
        %2717 = vmatprep.subr.mxu0 0.0
        %2718 = vmatpush1.msra.mxu0 0.0
        %2719 = vmatprep.subr.mxu0 0.0
        %2720 = vmatpush1.msra.mxu0 0.0
        %2721 = vmatprep.subr.mxu0 0.0
        %2722 = vmatpush1.msra.mxu0 0.0
        %2723 = vmatprep.subr.mxu0 0.0
        %2724 = vmatpush1.msra.mxu0 0.0
        %2725 = vmatprep.subr.mxu0 0.0
        %2726 = vmatpush1.msra.mxu0 0.0
        %2727 = vmatprep.subr.mxu0 0.0
        %2728 = vmatpush1.msra.mxu0 0.0
        %2729 = vmatprep.subr.mxu0 0.0
        %2730 = vmatpush1.msra.mxu0 0.0
        %2731 = vmatprep.subr.mxu0 0.0
        %2732 = vmatpush1.msra.mxu0 0.0
        %2733 = vmatprep.subr.mxu0 0.0
        %2734 = vmatpush1.msra.mxu0 0.0
        %2735 = vmatprep.subr.mxu0 0.0
        %2736 = vmatpush1.msra.mxu0 0.0
        %2737 = vmatprep.subr.mxu0 0.0
        %2738 = vmatpush1.msra.mxu0 0.0
        %2739 = vmatprep.subr.mxu0 0.0
        %2740 = vmatpush1.msra.mxu0 0.0
        %2741 = vmatprep.subr.mxu0 0.0
        %2742 = vmatpush1.msra.mxu0 0.0
        %2743 = vmatprep.subr.mxu0 0.0
        %2744 = vmatpush1.msra.mxu0 0.0
        %2745 = vmatprep.subr.mxu0 0.0
        %2746 = vmatpush1.msra.mxu0 0.0
        %2747 = vmatprep.subr.mxu0 0.0
        %2748 = vmatpush1.msra.mxu0 0.0
        %2749 = vmatprep.subr.mxu0 0.0
        %2750 = vmatpush1.msra.mxu0 0.0
        %2751 = vmatprep.subr.mxu0 0.0
        %2752 = vmatpush1.msra.mxu0 0.0
        %2753 = vmatprep.subr.mxu0 0.0
        %2754 = vmatpush1.msra.mxu0 0.0
        %2755 = vmatprep.subr.mxu0 0.0
        %2756 = vmatpush1.msra.mxu0 0.0
        %2757 = vmatprep.subr.mxu0 0.0
        %2758 = vmatpush1.msra.mxu0 0.0
        %2759 = vmatprep.mubr.f32.mxu0 0.0
        %2760 = vmatmul.mubr.f32.gmra.mrb[0].mxu0 %v2693
        %v2761 = vpop.f32.mrb[0].mxu0
        %v2762 = vadd.f32 0.0, %v2761
        %v2763 = vpop.f32.mrb[0].mxu0
        %v2764 = vadd.f32 0.0, %v2763
        %2765 = vdwg.mxu0
        %v2766 = vadd.f32 %v2678, %v2762
        %v2767 = vadd.f32 %v2682, %v2764
        %v2768 = vxor.u32 %v2766, 2147483648
        %v2769 = vmul.f32 %v2768, 1.442695
        %v2770 = vpow.pop %v2769
        %v2771 = vadd.f32 %v2770, 1.0
        %v2772 = vrcp.pop %v2771
        %v2773 = vmul.f32 1.0, %v2772
        %v2774 = vtanh.pop %v2766
        %v2775 = vmul.f32 %v2773, %v2672
        %2777 = vrot.lane.b32.xlu0 %v2774, 64
        %v2778 = vpop.permute.xlu0 %2777
        %v2780 = vmul.f32 %v2773, %v2778
        %2782 = vrot.lane.b32.xlu0 %v2780, 32
        %v2783 = vpop.permute.xlu0 %2782
        %v2785 = vadd.f32 %v2775, %v2783
        %v2786 = vtanh.pop %v2785
        %2788 = vrot.lane.b32.xlu0 %v2786, 64
        %v2789 = vpop.permute.xlu0 %2788
        %v2791 = vmul.f32 %v2773, %v2789
        %v2792 = vxor.u32 %v2767, 2147483648
        %v2793 = vmul.f32 %v2792, 1.442695
        %v2794 = vpow.pop %v2793
        %v2795 = vadd.f32 %v2794, 1.0
        %v2796 = vrcp.pop %v2795
        %v2797 = vmul.f32 1.0, %v2796
        %v2798 = vtanh.pop %v2767
        %v2799 = vmul.f32 %v2797, %v2674
        %2801 = vrot.lane.b32.xlu0 %v2798, 64
        %v2802 = vpop.permute.xlu0 %2801
        %v2804 = vmul.f32 %v2797, %v2802
        %2806 = vrot.lane.b32.xlu0 %v2804, 32
        %v2807 = vpop.permute.xlu0 %2806
        %v2809 = vadd.f32 %v2799, %v2807
        %v2810 = vtanh.pop %v2809
        %2812 = vrot.lane.b32.xlu0 %v2810, 64
        %v2813 = vpop.permute.xlu0 %2812
        %v2815 = vmul.f32 %v2797, %v2813
        %vm2816 = vcmp.gt.s32.totalorder %v2334, 2
        %vm2817 = vcmp.gt.s32.totalorder %v2334, 7
        %v2818 = vsel %vm2816, 1, 0
        %2819 = vset.pattern.permute.xlu0 0
        %2820 = vperm.xlu0 %2819, %v2818
        %v2821 = vpop.permute.xlu0 %2820
        %vm2822 = vcmp.eq.s32.totalorder %v2821, 1
        %v2823 = vsel %vm2822, %v2791, 0.0
        %2825 = vrot.lane.b32.xlu0 %v2823, 32
        %v2826 = vpop.permute.xlu0 %2825
        %s2828 = scalar_lea.vmem [#allocation3], 16
        %2829 = vst.msk [vmem:[%s2828] sm:$0xff] %vm2495, %v2826
        %v2830 = vsel %vm2817, 1, 0
        %2831 = vset.pattern.permute.xlu0 0
        %2832 = vperm.xlu0 %2831, %v2830
        %v2833 = vpop.permute.xlu0 %2832
        %vm2834 = vcmp.eq.s32.totalorder %v2833, 1
        %v2835 = vsel %vm2834, %v2815, 0.0
        %2837 = vrot.lane.b32.xlu0 %v2835, 64
        %v2838 = vpop.permute.xlu0 %2837
        %s2840 = scalar_lea.vmem [#allocation3], 56
        %2841 = vst.msk [vmem:[%s2840] sm:$0xff] %vm2508, %v2838
        %v2842 = vsel %vm2822, %v2791, %v2671
        %v2843 = vsel %vm2822, %v2785, %v2672
        %v2844 = vsel %vm2834, %v2815, %v2673
        %v2845 = vsel %vm2834, %v2809, %v2674
        %s2846 = smul.u32 3, 2
        %s2847 = smul.addr %s2846, 8
        %s2848 = scalar_lea.vmem [#allocation4], %s2847
        %v2849 = vld [vmem:[%s2848] sm:$0xff]
        %s2850 = smul.u32 6, 2
        %s2851 = smul.addr %s2850, 8
        %s2852 = scalar_lea.vmem [#allocation4], %s2851
        %v2853 = vld [vmem:[%s2852 + $0x8] sm:$0xff]
        %2855 = vrot.lane.b32.xlu0 %v2842, 32
        %v2856 = vpop.permute.xlu0 %2855
        %2859 = vrot.lane.b32.xlu0 %v2844, 64
        %v2860 = vpop.permute.xlu0 %2859
        %v2862 = vsel %vm2495, %v2856, %v2860
        %v2864 = vsel %vm2158, %v2862, 0
        %2866 = vmatprep.subr.mxu0 %v2336
        %2867 = vmatpush1.msra.mxu0 %v2335
        %2868 = vmatprep.subr.mxu0 %v2338
        %2869 = vmatpush1.msra.mxu0 %v2337
        %2870 = vmatprep.subr.mxu0 %v2340
        %2871 = vmatpush1.msra.mxu0 %v2339
        %2872 = vmatprep.subr.mxu0 %v2342
        %2873 = vmatpush1.msra.mxu0 %v2341
        %2874 = vmatprep.subr.mxu0 %v2344
        %2875 = vmatpush1.msra.mxu0 %v2343
        %2876 = vmatprep.subr.mxu0 %v2346
        %2877 = vmatpush1.msra.mxu0 %v2345
        %2878 = vmatprep.subr.mxu0 %v2348
        %2879 = vmatpush1.msra.mxu0 %v2347
        %2880 = vmatprep.subr.mxu0 %v2350
        %2881 = vmatpush1.msra.mxu0 %v2349
        %2882 = vmatprep.subr.mxu0 0.0
        %2883 = vmatpush1.msra.mxu0 0.0
        %2884 = vmatprep.subr.mxu0 0.0
        %2885 = vmatpush1.msra.mxu0 0.0
        %2886 = vmatprep.subr.mxu0 0.0
        %2887 = vmatpush1.msra.mxu0 0.0
        %2888 = vmatprep.subr.mxu0 0.0
        %2889 = vmatpush1.msra.mxu0 0.0
        %2890 = vmatprep.subr.mxu0 0.0
        %2891 = vmatpush1.msra.mxu0 0.0
        %2892 = vmatprep.subr.mxu0 0.0
        %2893 = vmatpush1.msra.mxu0 0.0
        %2894 = vmatprep.subr.mxu0 0.0
        %2895 = vmatpush1.msra.mxu0 0.0
        %2896 = vmatprep.subr.mxu0 0.0
        %2897 = vmatpush1.msra.mxu0 0.0
        %2898 = vmatprep.subr.mxu0 0.0
        %2899 = vmatpush1.msra.mxu0 0.0
        %2900 = vmatprep.subr.mxu0 0.0
        %2901 = vmatpush1.msra.mxu0 0.0
        %2902 = vmatprep.subr.mxu0 0.0
        %2903 = vmatpush1.msra.mxu0 0.0
        %2904 = vmatprep.subr.mxu0 0.0
        %2905 = vmatpush1.msra.mxu0 0.0
        %2906 = vmatprep.subr.mxu0 0.0
        %2907 = vmatpush1.msra.mxu0 0.0
        %2908 = vmatprep.subr.mxu0 0.0
        %2909 = vmatpush1.msra.mxu0 0.0
        %2910 = vmatprep.subr.mxu0 0.0
        %2911 = vmatpush1.msra.mxu0 0.0
        %2912 = vmatprep.subr.mxu0 0.0
        %2913 = vmatpush1.msra.mxu0 0.0
        %2914 = vmatprep.subr.mxu0 0.0
        %2915 = vmatpush1.msra.mxu0 0.0
        %2916 = vmatprep.subr.mxu0 0.0
        %2917 = vmatpush1.msra.mxu0 0.0
        %2918 = vmatprep.subr.mxu0 0.0
        %2919 = vmatpush1.msra.mxu0 0.0
        %2920 = vmatprep.subr.mxu0 0.0
        %2921 = vmatpush1.msra.mxu0 0.0
        %2922 = vmatprep.subr.mxu0 0.0
        %2923 = vmatpush1.msra.mxu0 0.0
        %2924 = vmatprep.subr.mxu0 0.0
        %2925 = vmatpush1.msra.mxu0 0.0
        %2926 = vmatprep.subr.mxu0 0.0
        %2927 = vmatpush1.msra.mxu0 0.0
        %2928 = vmatprep.subr.mxu0 0.0
        %2929 = vmatpush1.msra.mxu0 0.0
        %2930 = vmatprep.mubr.f32.mxu0 0.0
        %2931 = vmatmul.mubr.f32.gmra.mrb[0].mxu0 %v2864
        %v2932 = vpop.f32.mrb[0].mxu0
        %v2933 = vadd.f32 0.0, %v2932
        %v2934 = vpop.f32.mrb[0].mxu0
        %v2935 = vadd.f32 0.0, %v2934
        %2936 = vdwg.mxu0
        %v2937 = vadd.f32 %v2849, %v2933
        %v2938 = vadd.f32 %v2853, %v2935
        %v2939 = vxor.u32 %v2937, 2147483648
        %v2940 = vmul.f32 %v2939, 1.442695
        %v2941 = vpow.pop %v2940
        %v2942 = vadd.f32 %v2941, 1.0
        %v2943 = vrcp.pop %v2942
        %v2944 = vmul.f32 1.0, %v2943
        %v2945 = vtanh.pop %v2937
        %v2946 = vmul.f32 %v2944, %v2843
        %2948 = vrot.lane.b32.xlu0 %v2945, 64
        %v2949 = vpop.permute.xlu0 %2948
        %v2951 = vmul.f32 %v2944, %v2949
        %2953 = vrot.lane.b32.xlu0 %v2951, 32
        %v2954 = vpop.permute.xlu0 %2953
        %v2956 = vadd.f32 %v2946, %v2954
        %v2957 = vtanh.pop %v2956
        %2959 = vrot.lane.b32.xlu0 %v2957, 64
        %v2960 = vpop.permute.xlu0 %2959
        %v2962 = vmul.f32 %v2944, %v2960
        %v2963 = vxor.u32 %v2938, 2147483648
        %v2964 = vmul.f32 %v2963, 1.442695
        %v2965 = vpow.pop %v2964
        %v2966 = vadd.f32 %v2965, 1.0
        %v2967 = vrcp.pop %v2966
        %v2968 = vmul.f32 1.0, %v2967
        %v2969 = vtanh.pop %v2938
        %v2970 = vmul.f32 %v2968, %v2845
        %2972 = vrot.lane.b32.xlu0 %v2969, 64
        %v2973 = vpop.permute.xlu0 %2972
        %v2975 = vmul.f32 %v2968, %v2973
        %2977 = vrot.lane.b32.xlu0 %v2975, 32
        %v2978 = vpop.permute.xlu0 %2977
        %v2980 = vadd.f32 %v2970, %v2978
        %v2981 = vtanh.pop %v2980
        %2983 = vrot.lane.b32.xlu0 %v2981, 64
        %v2984 = vpop.permute.xlu0 %2983
        %v2986 = vmul.f32 %v2968, %v2984
        %vm2987 = vcmp.gt.s32.totalorder %v2334, 3
        %vm2988 = vcmp.gt.s32.totalorder %v2334, 6
        %v2989 = vsel %vm2987, 1, 0
        %2990 = vset.pattern.permute.xlu0 0
        %2991 = vperm.xlu0 %2990, %v2989
        %v2992 = vpop.permute.xlu0 %2991
        %vm2993 = vcmp.eq.s32.totalorder %v2992, 1
        %v2994 = vsel %vm2993, %v2962, 0.0
        %2996 = vrot.lane.b32.xlu0 %v2994, 32
        %v2997 = vpop.permute.xlu0 %2996
        %s2999 = scalar_lea.vmem [#allocation3], 24
        %3000 = vst.msk [vmem:[%s2999] sm:$0xff] %vm2495, %v2997
        %v3001 = vsel %vm2988, 1, 0
        %3002 = vset.pattern.permute.xlu0 0
        %3003 = vperm.xlu0 %3002, %v3001
        %v3004 = vpop.permute.xlu0 %3003
        %vm3005 = vcmp.eq.s32.totalorder %v3004, 1
        %v3006 = vsel %vm3005, %v2986, 0.0
        %3008 = vrot.lane.b32.xlu0 %v3006, 64
        %v3009 = vpop.permute.xlu0 %3008
        %s3011 = scalar_lea.vmem [#allocation3], 48
        %3012 = vst.msk [vmem:[%s3011] sm:$0xff] %vm2508, %v3009
        %v3013 = vsel %vm2993, %v2962, %v2842
        %v3014 = vsel %vm2993, %v2956, %v2843
        %v3015 = vsel %vm3005, %v2986, %v2844
        %v3016 = vsel %vm3005, %v2980, %v2845
        %s3017 = smul.u32 4, 2
        %s3018 = smul.addr %s3017, 8
        %s3019 = scalar_lea.vmem [#allocation4], %s3018
        %v3020 = vld [vmem:[%s3019] sm:$0xff]
        %s3021 = smul.u32 5, 2
        %s3022 = smul.addr %s3021, 8
        %s3023 = scalar_lea.vmem [#allocation4], %s3022
        %v3024 = vld [vmem:[%s3023 + $0x8] sm:$0xff]
        %3026 = vrot.lane.b32.xlu0 %v3013, 32
        %v3027 = vpop.permute.xlu0 %3026
        %3030 = vrot.lane.b32.xlu0 %v3015, 64
        %v3031 = vpop.permute.xlu0 %3030
        %v3033 = vsel %vm2495, %v3027, %v3031
        %v3035 = vsel %vm2158, %v3033, 0
        %3037 = vmatprep.subr.mxu0 %v2336
        %3038 = vmatpush1.msra.mxu0 %v2335
        %3039 = vmatprep.subr.mxu0 %v2338
        %3040 = vmatpush1.msra.mxu0 %v2337
        %3041 = vmatprep.subr.mxu0 %v2340
        %3042 = vmatpush1.msra.mxu0 %v2339
        %3043 = vmatprep.subr.mxu0 %v2342
        %3044 = vmatpush1.msra.mxu0 %v2341
        %3045 = vmatprep.subr.mxu0 %v2344
        %3046 = vmatpush1.msra.mxu0 %v2343
        %3047 = vmatprep.subr.mxu0 %v2346
        %3048 = vmatpush1.msra.mxu0 %v2345
        %3049 = vmatprep.subr.mxu0 %v2348
        %3050 = vmatpush1.msra.mxu0 %v2347
        %3051 = vmatprep.subr.mxu0 %v2350
        %3052 = vmatpush1.msra.mxu0 %v2349
        %3053 = vmatprep.subr.mxu0 0.0
        %3054 = vmatpush1.msra.mxu0 0.0
        %3055 = vmatprep.subr.mxu0 0.0
        %3056 = vmatpush1.msra.mxu0 0.0
        %3057 = vmatprep.subr.mxu0 0.0
        %3058 = vmatpush1.msra.mxu0 0.0
        %3059 = vmatprep.subr.mxu0 0.0
        %3060 = vmatpush1.msra.mxu0 0.0
        %3061 = vmatprep.subr.mxu0 0.0
        %3062 = vmatpush1.msra.mxu0 0.0
        %3063 = vmatprep.subr.mxu0 0.0
        %3064 = vmatpush1.msra.mxu0 0.0
        %3065 = vmatprep.subr.mxu0 0.0
        %3066 = vmatpush1.msra.mxu0 0.0
        %3067 = vmatprep.subr.mxu0 0.0
        %3068 = vmatpush1.msra.mxu0 0.0
        %3069 = vmatprep.subr.mxu0 0.0
        %3070 = vmatpush1.msra.mxu0 0.0
        %3071 = vmatprep.subr.mxu0 0.0
        %3072 = vmatpush1.msra.mxu0 0.0
        %3073 = vmatprep.subr.mxu0 0.0
        %3074 = vmatpush1.msra.mxu0 0.0
        %3075 = vmatprep.subr.mxu0 0.0
        %3076 = vmatpush1.msra.mxu0 0.0
        %3077 = vmatprep.subr.mxu0 0.0
        %3078 = vmatpush1.msra.mxu0 0.0
        %3079 = vmatprep.subr.mxu0 0.0
        %3080 = vmatpush1.msra.mxu0 0.0
        %3081 = vmatprep.subr.mxu0 0.0
        %3082 = vmatpush1.msra.mxu0 0.0
        %3083 = vmatprep.subr.mxu0 0.0
        %3084 = vmatpush1.msra.mxu0 0.0
        %3085 = vmatprep.subr.mxu0 0.0
        %3086 = vmatpush1.msra.mxu0 0.0
        %3087 = vmatprep.subr.mxu0 0.0
        %3088 = vmatpush1.msra.mxu0 0.0
        %3089 = vmatprep.subr.mxu0 0.0
        %3090 = vmatpush1.msra.mxu0 0.0
        %3091 = vmatprep.subr.mxu0 0.0
        %3092 = vmatpush1.msra.mxu0 0.0
        %3093 = vmatprep.subr.mxu0 0.0
        %3094 = vmatpush1.msra.mxu0 0.0
        %3095 = vmatprep.subr.mxu0 0.0
        %3096 = vmatpush1.msra.mxu0 0.0
        %3097 = vmatprep.subr.mxu0 0.0
        %3098 = vmatpush1.msra.mxu0 0.0
        %3099 = vmatprep.subr.mxu0 0.0
        %3100 = vmatpush1.msra.mxu0 0.0
        %3101 = vmatprep.mubr.f32.mxu0 0.0
        %3102 = vmatmul.mubr.f32.gmra.mrb[0].mxu0 %v3035
        %v3103 = vpop.f32.mrb[0].mxu0
        %v3104 = vadd.f32 0.0, %v3103
        %v3105 = vpop.f32.mrb[0].mxu0
        %v3106 = vadd.f32 0.0, %v3105
        %3107 = vdwg.mxu0
        %v3108 = vadd.f32 %v3020, %v3104
        %v3109 = vadd.f32 %v3024, %v3106
        %v3110 = vxor.u32 %v3108, 2147483648
        %v3111 = vmul.f32 %v3110, 1.442695
        %v3112 = vpow.pop %v3111
        %v3113 = vadd.f32 %v3112, 1.0
        %v3114 = vrcp.pop %v3113
        %v3115 = vmul.f32 1.0, %v3114
        %v3116 = vtanh.pop %v3108
        %v3117 = vmul.f32 %v3115, %v3014
        %3119 = vrot.lane.b32.xlu0 %v3116, 64
        %v3120 = vpop.permute.xlu0 %3119
        %v3122 = vmul.f32 %v3115, %v3120
        %3124 = vrot.lane.b32.xlu0 %v3122, 32
        %v3125 = vpop.permute.xlu0 %3124
        %v3127 = vadd.f32 %v3117, %v3125
        %v3128 = vtanh.pop %v3127
        %3130 = vrot.lane.b32.xlu0 %v3128, 64
        %v3131 = vpop.permute.xlu0 %3130
        %v3133 = vmul.f32 %v3115, %v3131
        %v3134 = vxor.u32 %v3109, 2147483648
        %v3135 = vmul.f32 %v3134, 1.442695
        %v3136 = vpow.pop %v3135
        %v3137 = vadd.f32 %v3136, 1.0
        %v3138 = vrcp.pop %v3137
        %v3139 = vmul.f32 1.0, %v3138
        %v3140 = vtanh.pop %v3109
        %v3141 = vmul.f32 %v3139, %v3016
        %3143 = vrot.lane.b32.xlu0 %v3140, 64
        %v3144 = vpop.permute.xlu0 %3143
        %v3146 = vmul.f32 %v3139, %v3144
        %3148 = vrot.lane.b32.xlu0 %v3146, 32
        %v3149 = vpop.permute.xlu0 %3148
        %v3151 = vadd.f32 %v3141, %v3149
        %v3152 = vtanh.pop %v3151
        %3154 = vrot.lane.b32.xlu0 %v3152, 64
        %v3155 = vpop.permute.xlu0 %3154
        %v3157 = vmul.f32 %v3139, %v3155
        %vm3158 = vcmp.gt.s32.totalorder %v2334, 4
        %vm3159 = vcmp.gt.s32.totalorder %v2334, 5
        %v3160 = vsel %vm3158, 1, 0
        %3161 = vset.pattern.permute.xlu0 0
        %3162 = vperm.xlu0 %3161, %v3160
        %v3163 = vpop.permute.xlu0 %3162
        %vm3164 = vcmp.eq.s32.totalorder %v3163, 1
        %v3165 = vsel %vm3164, %v3133, 0.0
        %3167 = vrot.lane.b32.xlu0 %v3165, 32
        %v3168 = vpop.permute.xlu0 %3167
        %s3170 = scalar_lea.vmem [#allocation3], 32
        %3171 = vst.msk [vmem:[%s3170] sm:$0xff] %vm2495, %v3168
        %v3172 = vsel %vm3159, 1, 0
        %3173 = vset.pattern.permute.xlu0 0
        %3174 = vperm.xlu0 %3173, %v3172
        %v3175 = vpop.permute.xlu0 %3174
        %vm3176 = vcmp.eq.s32.totalorder %v3175, 1
        %v3177 = vsel %vm3176, %v3157, 0.0
        %3179 = vrot.lane.b32.xlu0 %v3177, 64
        %v3180 = vpop.permute.xlu0 %3179
        %s3182 = scalar_lea.vmem [#allocation3], 40
        %3183 = vst.msk [vmem:[%s3182] sm:$0xff] %vm2508, %v3180
        %v3184 = vsel %vm3164, %v3133, %v3013
        %v3185 = vsel %vm3164, %v3127, %v3014
        %v3186 = vsel %vm3176, %v3157, %v3015
        %v3187 = vsel %vm3176, %v3151, %v3016
        %v3188 = vld [vmem:[%s3023] sm:$0xff]
        %v3189 = vld [vmem:[%s3019 + $0x8] sm:$0xff]
        %3191 = vrot.lane.b32.xlu0 %v3184, 32
        %v3192 = vpop.permute.xlu0 %3191
        %3195 = vrot.lane.b32.xlu0 %v3186, 64
        %v3196 = vpop.permute.xlu0 %3195
        %v3198 = vsel %vm2495, %v3192, %v3196
        %v3200 = vsel %vm2158, %v3198, 0
        %3202 = vmatprep.subr.mxu0 %v2336
        %3203 = vmatpush1.msra.mxu0 %v2335
        %3204 = vmatprep.subr.mxu0 %v2338
        %3205 = vmatpush1.msra.mxu0 %v2337
        %3206 = vmatprep.subr.mxu0 %v2340
        %3207 = vmatpush1.msra.mxu0 %v2339
        %3208 = vmatprep.subr.mxu0 %v2342
        %3209 = vmatpush1.msra.mxu0 %v2341
        %3210 = vmatprep.subr.mxu0 %v2344
        %3211 = vmatpush1.msra.mxu0 %v2343
        %3212 = vmatprep.subr.mxu0 %v2346
        %3213 = vmatpush1.msra.mxu0 %v2345
        %3214 = vmatprep.subr.mxu0 %v2348
        %3215 = vmatpush1.msra.mxu0 %v2347
        %3216 = vmatprep.subr.mxu0 %v2350
        %3217 = vmatpush1.msra.mxu0 %v2349
        %3218 = vmatprep.subr.mxu0 0.0
        %3219 = vmatpush1.msra.mxu0 0.0
        %3220 = vmatprep.subr.mxu0 0.0
        %3221 = vmatpush1.msra.mxu0 0.0
        %3222 = vmatprep.subr.mxu0 0.0
        %3223 = vmatpush1.msra.mxu0 0.0
        %3224 = vmatprep.subr.mxu0 0.0
        %3225 = vmatpush1.msra.mxu0 0.0
        %3226 = vmatprep.subr.mxu0 0.0
        %3227 = vmatpush1.msra.mxu0 0.0
        %3228 = vmatprep.subr.mxu0 0.0
        %3229 = vmatpush1.msra.mxu0 0.0
        %3230 = vmatprep.subr.mxu0 0.0
        %3231 = vmatpush1.msra.mxu0 0.0
        %3232 = vmatprep.subr.mxu0 0.0
        %3233 = vmatpush1.msra.mxu0 0.0
        %3234 = vmatprep.subr.mxu0 0.0
        %3235 = vmatpush1.msra.mxu0 0.0
        %3236 = vmatprep.subr.mxu0 0.0
        %3237 = vmatpush1.msra.mxu0 0.0
        %3238 = vmatprep.subr.mxu0 0.0
        %3239 = vmatpush1.msra.mxu0 0.0
        %3240 = vmatprep.subr.mxu0 0.0
        %3241 = vmatpush1.msra.mxu0 0.0
        %3242 = vmatprep.subr.mxu0 0.0
        %3243 = vmatpush1.msra.mxu0 0.0
        %3244 = vmatprep.subr.mxu0 0.0
        %3245 = vmatpush1.msra.mxu0 0.0
        %3246 = vmatprep.subr.mxu0 0.0
        %3247 = vmatpush1.msra.mxu0 0.0
        %3248 = vmatprep.subr.mxu0 0.0
        %3249 = vmatpush1.msra.mxu0 0.0
        %3250 = vmatprep.subr.mxu0 0.0
        %3251 = vmatpush1.msra.mxu0 0.0
        %3252 = vmatprep.subr.mxu0 0.0
        %3253 = vmatpush1.msra.mxu0 0.0
        %3254 = vmatprep.subr.mxu0 0.0
        %3255 = vmatpush1.msra.mxu0 0.0
        %3256 = vmatprep.subr.mxu0 0.0
        %3257 = vmatpush1.msra.mxu0 0.0
        %3258 = vmatprep.subr.mxu0 0.0
        %3259 = vmatpush1.msra.mxu0 0.0
        %3260 = vmatprep.subr.mxu0 0.0
        %3261 = vmatpush1.msra.mxu0 0.0
        %3262 = vmatprep.subr.mxu0 0.0
        %3263 = vmatpush1.msra.mxu0 0.0
        %3264 = vmatprep.subr.mxu0 0.0
        %3265 = vmatpush1.msra.mxu0 0.0
        %3266 = vmatprep.mubr.f32.mxu0 0.0
        %3267 = vmatmul.mubr.f32.gmra.mrb[0].mxu0 %v3200
        %v3268 = vpop.f32.mrb[0].mxu0
        %v3269 = vadd.f32 0.0, %v3268
        %v3270 = vpop.f32.mrb[0].mxu0
        %v3271 = vadd.f32 0.0, %v3270
        %3272 = vdwg.mxu0
        %v3273 = vadd.f32 %v3188, %v3269
        %v3274 = vadd.f32 %v3189, %v3271
        %v3275 = vxor.u32 %v3273, 2147483648
        %v3276 = vmul.f32 %v3275, 1.442695
        %v3277 = vpow.pop %v3276
        %v3278 = vadd.f32 %v3277, 1.0
        %v3279 = vrcp.pop %v3278
        %v3280 = vmul.f32 1.0, %v3279
        %v3281 = vtanh.pop %v3273
        %v3282 = vmul.f32 %v3280, %v3185
        %3284 = vrot.lane.b32.xlu0 %v3281, 64
        %v3285 = vpop.permute.xlu0 %3284
        %v3287 = vmul.f32 %v3280, %v3285
        %3289 = vrot.lane.b32.xlu0 %v3287, 32
        %v3290 = vpop.permute.xlu0 %3289
        %v3292 = vadd.f32 %v3282, %v3290
        %v3293 = vtanh.pop %v3292
        %3295 = vrot.lane.b32.xlu0 %v3293, 64
        %v3296 = vpop.permute.xlu0 %3295
        %v3298 = vmul.f32 %v3280, %v3296
        %v3299 = vxor.u32 %v3274, 2147483648
        %v3300 = vmul.f32 %v3299, 1.442695
        %v3301 = vpow.pop %v3300
        %v3302 = vadd.f32 %v3301, 1.0
        %v3303 = vrcp.pop %v3302
        %v3304 = vmul.f32 1.0, %v3303
        %v3305 = vtanh.pop %v3274
        %v3306 = vmul.f32 %v3304, %v3187
        %3308 = vrot.lane.b32.xlu0 %v3305, 64
        %v3309 = vpop.permute.xlu0 %3308
        %v3311 = vmul.f32 %v3304, %v3309
        %3313 = vrot.lane.b32.xlu0 %v3311, 32
        %v3314 = vpop.permute.xlu0 %3313
        %v3316 = vadd.f32 %v3306, %v3314
        %v3317 = vtanh.pop %v3316
        %3319 = vrot.lane.b32.xlu0 %v3317, 64
        %v3320 = vpop.permute.xlu0 %3319
        %v3322 = vmul.f32 %v3304, %v3320
        %v3323 = vsel %vm3176, %v3298, 0.0
        %3325 = vrot.lane.b32.xlu0 %v3323, 32
        %v3326 = vpop.permute.xlu0 %3325
        %3328 = vst.msk [vmem:[%s3182] sm:$0xff] %vm2495, %v3326
        %v3329 = vsel %vm3164, %v3322, 0.0
        %3331 = vrot.lane.b32.xlu0 %v3329, 64
        %v3332 = vpop.permute.xlu0 %3331
        %3334 = vst.msk [vmem:[%s3170] sm:$0xff] %vm2508, %v3332
        %v3335 = vsel %vm3176, %v3298, %v3184
        %v3336 = vsel %vm3176, %v3292, %v3185
        %v3337 = vsel %vm3164, %v3322, %v3186
        %v3338 = vsel %vm3164, %v3316, %v3187
        %v3339 = vld [vmem:[%s2852] sm:$0xff]
        %v3340 = vld [vmem:[%s2848 + $0x8] sm:$0xff]
        %3342 = vrot.lane.b32.xlu0 %v3335, 32
        %v3343 = vpop.permute.xlu0 %3342
        %3346 = vrot.lane.b32.xlu0 %v3337, 64
        %v3347 = vpop.permute.xlu0 %3346
        %v3349 = vsel %vm2495, %v3343, %v3347
        %v3351 = vsel %vm2158, %v3349, 0
        %3353 = vmatprep.subr.mxu0 %v2336
        %3354 = vmatpush1.msra.mxu0 %v2335
        %3355 = vmatprep.subr.mxu0 %v2338
        %3356 = vmatpush1.msra.mxu0 %v2337
        %3357 = vmatprep.subr.mxu0 %v2340
        %3358 = vmatpush1.msra.mxu0 %v2339
        %3359 = vmatprep.subr.mxu0 %v2342
        %3360 = vmatpush1.msra.mxu0 %v2341
        %3361 = vmatprep.subr.mxu0 %v2344
        %3362 = vmatpush1.msra.mxu0 %v2343
        %3363 = vmatprep.subr.mxu0 %v2346
        %3364 = vmatpush1.msra.mxu0 %v2345
        %3365 = vmatprep.subr.mxu0 %v2348
        %3366 = vmatpush1.msra.mxu0 %v2347
        %3367 = vmatprep.subr.mxu0 %v2350
        %3368 = vmatpush1.msra.mxu0 %v2349
        %3369 = vmatprep.subr.mxu0 0.0
        %3370 = vmatpush1.msra.mxu0 0.0
        %3371 = vmatprep.subr.mxu0 0.0
        %3372 = vmatpush1.msra.mxu0 0.0
        %3373 = vmatprep.subr.mxu0 0.0
        %3374 = vmatpush1.msra.mxu0 0.0
        %3375 = vmatprep.subr.mxu0 0.0
        %3376 = vmatpush1.msra.mxu0 0.0
        %3377 = vmatprep.subr.mxu0 0.0
        %3378 = vmatpush1.msra.mxu0 0.0
        %3379 = vmatprep.subr.mxu0 0.0
        %3380 = vmatpush1.msra.mxu0 0.0
        %3381 = vmatprep.subr.mxu0 0.0
        %3382 = vmatpush1.msra.mxu0 0.0
        %3383 = vmatprep.subr.mxu0 0.0
        %3384 = vmatpush1.msra.mxu0 0.0
        %3385 = vmatprep.subr.mxu0 0.0
        %3386 = vmatpush1.msra.mxu0 0.0
        %3387 = vmatprep.subr.mxu0 0.0
        %3388 = vmatpush1.msra.mxu0 0.0
        %3389 = vmatprep.subr.mxu0 0.0
        %3390 = vmatpush1.msra.mxu0 0.0
        %3391 = vmatprep.subr.mxu0 0.0
        %3392 = vmatpush1.msra.mxu0 0.0
        %3393 = vmatprep.subr.mxu0 0.0
        %3394 = vmatpush1.msra.mxu0 0.0
        %3395 = vmatprep.subr.mxu0 0.0
        %3396 = vmatpush1.msra.mxu0 0.0
        %3397 = vmatprep.subr.mxu0 0.0
        %3398 = vmatpush1.msra.mxu0 0.0
        %3399 = vmatprep.subr.mxu0 0.0
        %3400 = vmatpush1.msra.mxu0 0.0
        %3401 = vmatprep.subr.mxu0 0.0
        %3402 = vmatpush1.msra.mxu0 0.0
        %3403 = vmatprep.subr.mxu0 0.0
        %3404 = vmatpush1.msra.mxu0 0.0
        %3405 = vmatprep.subr.mxu0 0.0
        %3406 = vmatpush1.msra.mxu0 0.0
        %3407 = vmatprep.subr.mxu0 0.0
        %3408 = vmatpush1.msra.mxu0 0.0
        %3409 = vmatprep.subr.mxu0 0.0
        %3410 = vmatpush1.msra.mxu0 0.0
        %3411 = vmatprep.subr.mxu0 0.0
        %3412 = vmatpush1.msra.mxu0 0.0
        %3413 = vmatprep.subr.mxu0 0.0
        %3414 = vmatpush1.msra.mxu0 0.0
        %3415 = vmatprep.subr.mxu0 0.0
        %3416 = vmatpush1.msra.mxu0 0.0
        %3417 = vmatprep.mubr.f32.mxu0 0.0
        %3418 = vmatmul.mubr.f32.gmra.mrb[0].mxu0 %v3351
        %v3419 = vpop.f32.mrb[0].mxu0
        %v3420 = vadd.f32 0.0, %v3419
        %v3421 = vpop.f32.mrb[0].mxu0
        %v3422 = vadd.f32 0.0, %v3421
        %3423 = vdwg.mxu0
        %v3424 = vadd.f32 %v3339, %v3420
        %v3425 = vadd.f32 %v3340, %v3422
        %v3426 = vxor.u32 %v3424, 2147483648
        %v3427 = vmul.f32 %v3426, 1.442695
        %v3428 = vpow.pop %v3427
        %v3429 = vadd.f32 %v3428, 1.0
        %v3430 = vrcp.pop %v3429
        %v3431 = vmul.f32 1.0, %v3430
        %v3432 = vtanh.pop %v3424
        %v3433 = vmul.f32 %v3431, %v3336
        %3435 = vrot.lane.b32.xlu0 %v3432, 64
        %v3436 = vpop.permute.xlu0 %3435
        %v3438 = vmul.f32 %v3431, %v3436
        %3440 = vrot.lane.b32.xlu0 %v3438, 32
        %v3441 = vpop.permute.xlu0 %3440
        %v3443 = vadd.f32 %v3433, %v3441
        %v3444 = vtanh.pop %v3443
        %3446 = vrot.lane.b32.xlu0 %v3444, 64
        %v3447 = vpop.permute.xlu0 %3446
        %v3449 = vmul.f32 %v3431, %v3447
        %v3450 = vxor.u32 %v3425, 2147483648
        %v3451 = vmul.f32 %v3450, 1.442695
        %v3452 = vpow.pop %v3451
        %v3453 = vadd.f32 %v3452, 1.0
        %v3454 = vrcp.pop %v3453
        %v3455 = vmul.f32 1.0, %v3454
        %v3456 = vtanh.pop %v3425
        %v3457 = vmul.f32 %v3455, %v3338
        %3459 = vrot.lane.b32.xlu0 %v3456, 64
        %v3460 = vpop.permute.xlu0 %3459
        %v3462 = vmul.f32 %v3455, %v3460
        %3464 = vrot.lane.b32.xlu0 %v3462, 32
        %v3465 = vpop.permute.xlu0 %3464
        %v3467 = vadd.f32 %v3457, %v3465
        %v3468 = vtanh.pop %v3467
        %3470 = vrot.lane.b32.xlu0 %v3468, 64
        %v3471 = vpop.permute.xlu0 %3470
        %v3473 = vmul.f32 %v3455, %v3471
        %v3474 = vsel %vm3005, %v3449, 0.0
        %3476 = vrot.lane.b32.xlu0 %v3474, 32
        %v3477 = vpop.permute.xlu0 %3476
        %3479 = vst.msk [vmem:[%s3011] sm:$0xff] %vm2495, %v3477
        %v3480 = vsel %vm2993, %v3473, 0.0
        %3482 = vrot.lane.b32.xlu0 %v3480, 64
        %v3483 = vpop.permute.xlu0 %3482
        %3485 = vst.msk [vmem:[%s2999] sm:$0xff] %vm2508, %v3483
        %v3486 = vsel %vm3005, %v3449, %v3335
        %v3487 = vsel %vm3005, %v3443, %v3336
        %v3488 = vsel %vm2993, %v3473, %v3337
        %v3489 = vsel %vm2993, %v3467, %v3338
        %v3490 = vld [vmem:[%s2681] sm:$0xff]
        %v3491 = vld [vmem:[%s2677 + $0x8] sm:$0xff]
        %3493 = vrot.lane.b32.xlu0 %v3486, 32
        %v3494 = vpop.permute.xlu0 %3493
        %3497 = vrot.lane.b32.xlu0 %v3488, 64
        %v3498 = vpop.permute.xlu0 %3497
        %v3500 = vsel %vm2495, %v3494, %v3498
        %v3502 = vsel %vm2158, %v3500, 0
        %3504 = vmatprep.subr.mxu0 %v2336
        %3505 = vmatpush1.msra.mxu0 %v2335
        %3506 = vmatprep.subr.mxu0 %v2338
        %3507 = vmatpush1.msra.mxu0 %v2337
        %3508 = vmatprep.subr.mxu0 %v2340
        %3509 = vmatpush1.msra.mxu0 %v2339
        %3510 = vmatprep.subr.mxu0 %v2342
        %3511 = vmatpush1.msra.mxu0 %v2341
        %3512 = vmatprep.subr.mxu0 %v2344
        %3513 = vmatpush1.msra.mxu0 %v2343
        %3514 = vmatprep.subr.mxu0 %v2346
        %3515 = vmatpush1.msra.mxu0 %v2345
        %3516 = vmatprep.subr.mxu0 %v2348
        %3517 = vmatpush1.msra.mxu0 %v2347
        %3518 = vmatprep.subr.mxu0 %v2350
        %3519 = vmatpush1.msra.mxu0 %v2349
        %3520 = vmatprep.subr.mxu0 0.0
        %3521 = vmatpush1.msra.mxu0 0.0
        %3522 = vmatprep.subr.mxu0 0.0
        %3523 = vmatpush1.msra.mxu0 0.0
        %3524 = vmatprep.subr.mxu0 0.0
        %3525 = vmatpush1.msra.mxu0 0.0
        %3526 = vmatprep.subr.mxu0 0.0
        %3527 = vmatpush1.msra.mxu0 0.0
        %3528 = vmatprep.subr.mxu0 0.0
        %3529 = vmatpush1.msra.mxu0 0.0
        %3530 = vmatprep.subr.mxu0 0.0
        %3531 = vmatpush1.msra.mxu0 0.0
        %3532 = vmatprep.subr.mxu0 0.0
        %3533 = vmatpush1.msra.mxu0 0.0
        %3534 = vmatprep.subr.mxu0 0.0
        %3535 = vmatpush1.msra.mxu0 0.0
        %3536 = vmatprep.subr.mxu0 0.0
        %3537 = vmatpush1.msra.mxu0 0.0
        %3538 = vmatprep.subr.mxu0 0.0
        %3539 = vmatpush1.msra.mxu0 0.0
        %3540 = vmatprep.subr.mxu0 0.0
        %3541 = vmatpush1.msra.mxu0 0.0
        %3542 = vmatprep.subr.mxu0 0.0
        %3543 = vmatpush1.msra.mxu0 0.0
        %3544 = vmatprep.subr.mxu0 0.0
        %3545 = vmatpush1.msra.mxu0 0.0
        %3546 = vmatprep.subr.mxu0 0.0
        %3547 = vmatpush1.msra.mxu0 0.0
        %3548 = vmatprep.subr.mxu0 0.0
        %3549 = vmatpush1.msra.mxu0 0.0
        %3550 = vmatprep.subr.mxu0 0.0
        %3551 = vmatpush1.msra.mxu0 0.0
        %3552 = vmatprep.subr.mxu0 0.0
        %3553 = vmatpush1.msra.mxu0 0.0
        %3554 = vmatprep.subr.mxu0 0.0
        %3555 = vmatpush1.msra.mxu0 0.0
        %3556 = vmatprep.subr.mxu0 0.0
        %3557 = vmatpush1.msra.mxu0 0.0
        %3558 = vmatprep.subr.mxu0 0.0
        %3559 = vmatpush1.msra.mxu0 0.0
        %3560 = vmatprep.subr.mxu0 0.0
        %3561 = vmatpush1.msra.mxu0 0.0
        %3562 = vmatprep.subr.mxu0 0.0
        %3563 = vmatpush1.msra.mxu0 0.0
        %3564 = vmatprep.subr.mxu0 0.0
        %3565 = vmatpush1.msra.mxu0 0.0
        %3566 = vmatprep.subr.mxu0 0.0
        %3567 = vmatpush1.msra.mxu0 0.0
        %3568 = vmatprep.mubr.f32.mxu0 0.0
        %3569 = vmatmul.mubr.f32.gmra.mrb[0].mxu0 %v3502
        %v3570 = vpop.f32.mrb[0].mxu0
        %v3571 = vadd.f32 0.0, %v3570
        %v3572 = vpop.f32.mrb[0].mxu0
        %v3573 = vadd.f32 0.0, %v3572
        %3574 = vdwg.mxu0
        %v3575 = vadd.f32 %v3490, %v3571
        %v3576 = vadd.f32 %v3491, %v3573
        %v3577 = vxor.u32 %v3575, 2147483648
        %v3578 = vmul.f32 %v3577, 1.442695
        %v3579 = vpow.pop %v3578
        %v3580 = vadd.f32 %v3579, 1.0
        %v3581 = vrcp.pop %v3580
        %v3582 = vmul.f32 1.0, %v3581
        %v3583 = vtanh.pop %v3575
        %v3584 = vmul.f32 %v3582, %v3487
        %3586 = vrot.lane.b32.xlu0 %v3583, 64
        %v3587 = vpop.permute.xlu0 %3586
        %v3589 = vmul.f32 %v3582, %v3587
        %3591 = vrot.lane.b32.xlu0 %v3589, 32
        %v3592 = vpop.permute.xlu0 %3591
        %v3594 = vadd.f32 %v3584, %v3592
        %v3595 = vtanh.pop %v3594
        %3597 = vrot.lane.b32.xlu0 %v3595, 64
        %v3598 = vpop.permute.xlu0 %3597
        %v3600 = vmul.f32 %v3582, %v3598
        %v3601 = vxor.u32 %v3576, 2147483648
        %v3602 = vmul.f32 %v3601, 1.442695
        %v3603 = vpow.pop %v3602
        %v3604 = vadd.f32 %v3603, 1.0
        %v3605 = vrcp.pop %v3604
        %v3606 = vmul.f32 1.0, %v3605
        %v3607 = vtanh.pop %v3576
        %v3608 = vmul.f32 %v3606, %v3489
        %3610 = vrot.lane.b32.xlu0 %v3607, 64
        %v3611 = vpop.permute.xlu0 %3610
        %v3613 = vmul.f32 %v3606, %v3611
        %3615 = vrot.lane.b32.xlu0 %v3613, 32
        %v3616 = vpop.permute.xlu0 %3615
        %v3618 = vadd.f32 %v3608, %v3616
        %v3619 = vtanh.pop %v3618
        %3621 = vrot.lane.b32.xlu0 %v3619, 64
        %v3622 = vpop.permute.xlu0 %3621
        %v3624 = vmul.f32 %v3606, %v3622
        %v3625 = vsel %vm2834, %v3600, 0.0
        %3627 = vrot.lane.b32.xlu0 %v3625, 32
        %v3628 = vpop.permute.xlu0 %3627
        %3630 = vst.msk [vmem:[%s2840] sm:$0xff] %vm2495, %v3628
        %v3631 = vsel %vm2822, %v3624, 0.0
        %3633 = vrot.lane.b32.xlu0 %v3631, 64
        %v3634 = vpop.permute.xlu0 %3633
        %3636 = vst.msk [vmem:[%s2828] sm:$0xff] %vm2508, %v3634
        %v3637 = vsel %vm2834, %v3600, %v3486
        %v3638 = vsel %vm2834, %v3594, %v3487
        %v3639 = vsel %vm2822, %v3624, %v3488
        %v3640 = vsel %vm2822, %v3618, %v3489
        %v3641 = vld [vmem:[%s2518] sm:$0xff]
        %v3642 = vld [vmem:[%s2514 + $0x8] sm:$0xff]
        %3644 = vrot.lane.b32.xlu0 %v3637, 32
        %v3645 = vpop.permute.xlu0 %3644
        %3648 = vrot.lane.b32.xlu0 %v3639, 64
        %v3649 = vpop.permute.xlu0 %3648
        %v3651 = vsel %vm2495, %v3645, %v3649
        %v3653 = vsel %vm2158, %v3651, 0
        %3655 = vmatprep.subr.mxu0 %v2336
        %3656 = vmatpush1.msra.mxu0 %v2335
        %3657 = vmatprep.subr.mxu0 %v2338
        %3658 = vmatpush1.msra.mxu0 %v2337
        %3659 = vmatprep.subr.mxu0 %v2340
        %3660 = vmatpush1.msra.mxu0 %v2339
        %3661 = vmatprep.subr.mxu0 %v2342
        %3662 = vmatpush1.msra.mxu0 %v2341
        %3663 = vmatprep.subr.mxu0 %v2344
        %3664 = vmatpush1.msra.mxu0 %v2343
        %3665 = vmatprep.subr.mxu0 %v2346
        %3666 = vmatpush1.msra.mxu0 %v2345
        %3667 = vmatprep.subr.mxu0 %v2348
        %3668 = vmatpush1.msra.mxu0 %v2347
        %3669 = vmatprep.subr.mxu0 %v2350
        %3670 = vmatpush1.msra.mxu0 %v2349
        %3671 = vmatprep.subr.mxu0 0.0
        %3672 = vmatpush1.msra.mxu0 0.0
        %3673 = vmatprep.subr.mxu0 0.0
        %3674 = vmatpush1.msra.mxu0 0.0
        %3675 = vmatprep.subr.mxu0 0.0
        %3676 = vmatpush1.msra.mxu0 0.0
        %3677 = vmatprep.subr.mxu0 0.0
        %3678 = vmatpush1.msra.mxu0 0.0
        %3679 = vmatprep.subr.mxu0 0.0
        %3680 = vmatpush1.msra.mxu0 0.0
        %3681 = vmatprep.subr.mxu0 0.0
        %3682 = vmatpush1.msra.mxu0 0.0
        %3683 = vmatprep.subr.mxu0 0.0
        %3684 = vmatpush1.msra.mxu0 0.0
        %3685 = vmatprep.subr.mxu0 0.0
        %3686 = vmatpush1.msra.mxu0 0.0
        %3687 = vmatprep.subr.mxu0 0.0
        %3688 = vmatpush1.msra.mxu0 0.0
        %3689 = vmatprep.subr.mxu0 0.0
        %3690 = vmatpush1.msra.mxu0 0.0
        %3691 = vmatprep.subr.mxu0 0.0
        %3692 = vmatpush1.msra.mxu0 0.0
        %3693 = vmatprep.subr.mxu0 0.0
        %3694 = vmatpush1.msra.mxu0 0.0
        %3695 = vmatprep.subr.mxu0 0.0
        %3696 = vmatpush1.msra.mxu0 0.0
        %3697 = vmatprep.subr.mxu0 0.0
        %3698 = vmatpush1.msra.mxu0 0.0
        %3699 = vmatprep.subr.mxu0 0.0
        %3700 = vmatpush1.msra.mxu0 0.0
        %3701 = vmatprep.subr.mxu0 0.0
        %3702 = vmatpush1.msra.mxu0 0.0
        %3703 = vmatprep.subr.mxu0 0.0
        %3704 = vmatpush1.msra.mxu0 0.0
        %3705 = vmatprep.subr.mxu0 0.0
        %3706 = vmatpush1.msra.mxu0 0.0
        %3707 = vmatprep.subr.mxu0 0.0
        %3708 = vmatpush1.msra.mxu0 0.0
        %3709 = vmatprep.subr.mxu0 0.0
        %3710 = vmatpush1.msra.mxu0 0.0
        %3711 = vmatprep.subr.mxu0 0.0
        %3712 = vmatpush1.msra.mxu0 0.0
        %3713 = vmatprep.subr.mxu0 0.0
        %3714 = vmatpush1.msra.mxu0 0.0
        %3715 = vmatprep.subr.mxu0 0.0
        %3716 = vmatpush1.msra.mxu0 0.0
        %3717 = vmatprep.subr.mxu0 0.0
        %3718 = vmatpush1.msra.mxu0 0.0
        %3719 = vmatprep.mubr.f32.mxu0 0.0
        %3720 = vmatmul.mubr.f32.gmra.mrb[0].mxu0 %v3653
        %v3721 = vpop.f32.mrb[0].mxu0
        %v3722 = vadd.f32 0.0, %v3721
        %v3723 = vpop.f32.mrb[0].mxu0
        %v3724 = vadd.f32 0.0, %v3723
        %3725 = vdwg.mxu0
        %v3726 = vadd.f32 %v3641, %v3722
        %v3727 = vadd.f32 %v3642, %v3724
        %v3728 = vxor.u32 %v3726, 2147483648
        %v3729 = vmul.f32 %v3728, 1.442695
        %v3730 = vpow.pop %v3729
        %v3731 = vadd.f32 %v3730, 1.0
        %v3732 = vrcp.pop %v3731
        %v3733 = vmul.f32 1.0, %v3732
        %v3734 = vtanh.pop %v3726
        %v3735 = vmul.f32 %v3733, %v3638
        %3737 = vrot.lane.b32.xlu0 %v3734, 64
        %v3738 = vpop.permute.xlu0 %3737
        %v3740 = vmul.f32 %v3733, %v3738
        %3742 = vrot.lane.b32.xlu0 %v3740, 32
        %v3743 = vpop.permute.xlu0 %3742
        %v3745 = vadd.f32 %v3735, %v3743
        %v3746 = vtanh.pop %v3745
        %3748 = vrot.lane.b32.xlu0 %v3746, 64
        %v3749 = vpop.permute.xlu0 %3748
        %v3751 = vmul.f32 %v3733, %v3749
        %v3752 = vxor.u32 %v3727, 2147483648
        %v3753 = vmul.f32 %v3752, 1.442695
        %v3754 = vpow.pop %v3753
        %v3755 = vadd.f32 %v3754, 1.0
        %v3756 = vrcp.pop %v3755
        %v3757 = vmul.f32 1.0, %v3756
        %v3758 = vtanh.pop %v3727
        %v3759 = vmul.f32 %v3757, %v3640
        %3761 = vrot.lane.b32.xlu0 %v3758, 64
        %v3762 = vpop.permute.xlu0 %3761
        %v3764 = vmul.f32 %v3757, %v3762
        %3766 = vrot.lane.b32.xlu0 %v3764, 32
        %v3767 = vpop.permute.xlu0 %3766
        %v3769 = vadd.f32 %v3759, %v3767
        %v3770 = vtanh.pop %v3769
        %3772 = vrot.lane.b32.xlu0 %v3770, 64
        %v3773 = vpop.permute.xlu0 %3772
        %v3775 = vmul.f32 %v3757, %v3773
        %v3776 = vsel %vm2663, %v3751, 0.0
        %3778 = vrot.lane.b32.xlu0 %v3776, 32
        %v3779 = vpop.permute.xlu0 %3778
        %3781 = vst.msk [vmem:[%s2669] sm:$0xff] %vm2495, %v3779
        %v3782 = vsel %vm2651, %v3775, 0.0
        %3784 = vrot.lane.b32.xlu0 %v3782, 64
        %v3785 = vpop.permute.xlu0 %3784
        %3787 = vst.msk [vmem:[%s2657] sm:$0xff] %vm2508, %v3785
        %v3788 = vsel %vm2663, %v3751, %v3637
        %v3789 = vsel %vm2663, %v3745, %v3638
        %v3790 = vsel %vm2651, %v3775, %v3639
        %v3791 = vsel %vm2651, %v3769, %v3640
        %v3792 = vld [vmem:[%s2357] sm:$0xff]
        %v3793 = vld [vmem:[%s2353 + $0x8] sm:$0xff]
        %3795 = vrot.lane.b32.xlu0 %v3788, 32
        %v3796 = vpop.permute.xlu0 %3795
        %3799 = vrot.lane.b32.xlu0 %v3790, 64
        %v3800 = vpop.permute.xlu0 %3799
        %v3802 = vsel %vm2495, %v3796, %v3800
        %v3804 = vsel %vm2158, %v3802, 0
        %3806 = vmatprep.subr.mxu0 %v2336
        %3807 = vmatpush1.msra.mxu0 %v2335
        %3808 = vmatprep.subr.mxu0 %v2338
        %3809 = vmatpush1.msra.mxu0 %v2337
        %3810 = vmatprep.subr.mxu0 %v2340
        %3811 = vmatpush1.msra.mxu0 %v2339
        %3812 = vmatprep.subr.mxu0 %v2342
        %3813 = vmatpush1.msra.mxu0 %v2341
        %3814 = vmatprep.subr.mxu0 %v2344
        %3815 = vmatpush1.msra.mxu0 %v2343
        %3816 = vmatprep.subr.mxu0 %v2346
        %3817 = vmatpush1.msra.mxu0 %v2345
        %3818 = vmatprep.subr.mxu0 %v2348
        %3819 = vmatpush1.msra.mxu0 %v2347
        %3820 = vmatprep.subr.mxu0 %v2350
        %3821 = vmatpush1.msra.mxu0 %v2349
        %3822 = vmatprep.subr.mxu0 0.0
        %3823 = vmatpush1.msra.mxu0 0.0
        %3824 = vmatprep.subr.mxu0 0.0
        %3825 = vmatpush1.msra.mxu0 0.0
        %3826 = vmatprep.subr.mxu0 0.0
        %3827 = vmatpush1.msra.mxu0 0.0
        %3828 = vmatprep.subr.mxu0 0.0
        %3829 = vmatpush1.msra.mxu0 0.0
        %3830 = vmatprep.subr.mxu0 0.0
        %3831 = vmatpush1.msra.mxu0 0.0
        %3832 = vmatprep.subr.mxu0 0.0
        %3833 = vmatpush1.msra.mxu0 0.0
        %3834 = vmatprep.subr.mxu0 0.0
        %3835 = vmatpush1.msra.mxu0 0.0
        %3836 = vmatprep.subr.mxu0 0.0
        %3837 = vmatpush1.msra.mxu0 0.0
        %3838 = vmatprep.subr.mxu0 0.0
        %3839 = vmatpush1.msra.mxu0 0.0
        %3840 = vmatprep.subr.mxu0 0.0
        %3841 = vmatpush1.msra.mxu0 0.0
        %3842 = vmatprep.subr.mxu0 0.0
        %3843 = vmatpush1.msra.mxu0 0.0
        %3844 = vmatprep.subr.mxu0 0.0
        %3845 = vmatpush1.msra.mxu0 0.0
        %3846 = vmatprep.subr.mxu0 0.0
        %3847 = vmatpush1.msra.mxu0 0.0
        %3848 = vmatprep.subr.mxu0 0.0
        %3849 = vmatpush1.msra.mxu0 0.0
        %3850 = vmatprep.subr.mxu0 0.0
        %3851 = vmatpush1.msra.mxu0 0.0
        %3852 = vmatprep.subr.mxu0 0.0
        %3853 = vmatpush1.msra.mxu0 0.0
        %3854 = vmatprep.subr.mxu0 0.0
        %3855 = vmatpush1.msra.mxu0 0.0
        %3856 = vmatprep.subr.mxu0 0.0
        %3857 = vmatpush1.msra.mxu0 0.0
        %3858 = vmatprep.subr.mxu0 0.0
        %3859 = vmatpush1.msra.mxu0 0.0
        %3860 = vmatprep.subr.mxu0 0.0
        %3861 = vmatpush1.msra.mxu0 0.0
        %3862 = vmatprep.subr.mxu0 0.0
        %3863 = vmatpush1.msra.mxu0 0.0
        %3864 = vmatprep.subr.mxu0 0.0
        %3865 = vmatpush1.msra.mxu0 0.0
        %3866 = vmatprep.subr.mxu0 0.0
        %3867 = vmatpush1.msra.mxu0 0.0
        %3868 = vmatprep.subr.mxu0 0.0
        %3869 = vmatpush1.msra.mxu0 0.0
        %3870 = vmatprep.mubr.f32.mxu0 0.0
        %3871 = vmatmul.mubr.f32.gmra.mrb[0].mxu0 %v3804
        %v3872 = vpop.f32.mrb[0].mxu0
        %v3873 = vadd.f32 0.0, %v3872
        %v3874 = vpop.f32.mrb[0].mxu0
        %v3875 = vadd.f32 0.0, %v3874
        %3876 = vdwg.mxu0
        %v3877 = vadd.f32 %v3792, %v3873
        %v3878 = vadd.f32 %v3793, %v3875
        %v3879 = vxor.u32 %v3877, 2147483648
        %v3880 = vmul.f32 %v3879, 1.442695
        %v3881 = vpow.pop %v3880
        %v3882 = vadd.f32 %v3881, 1.0
        %v3883 = vrcp.pop %v3882
        %v3884 = vmul.f32 1.0, %v3883
        %v3885 = vtanh.pop %v3877
        %v3886 = vmul.f32 %v3884, %v3789
        %3888 = vrot.lane.b32.xlu0 %v3885, 64
        %v3889 = vpop.permute.xlu0 %3888
        %v3891 = vmul.f32 %v3884, %v3889
        %3893 = vrot.lane.b32.xlu0 %v3891, 32
        %v3894 = vpop.permute.xlu0 %3893
        %v3896 = vadd.f32 %v3886, %v3894
        %v3897 = vtanh.pop %v3896
        %3899 = vrot.lane.b32.xlu0 %v3897, 64
        %v3900 = vpop.permute.xlu0 %3899
        %v3902 = vmul.f32 %v3884, %v3900
        %v3903 = vxor.u32 %v3878, 2147483648
        %v3904 = vmul.f32 %v3903, 1.442695
        %v3905 = vpow.pop %v3904
        %v3906 = vadd.f32 %v3905, 1.0
        %v3907 = vrcp.pop %v3906
        %v3908 = vmul.f32 1.0, %v3907
        %v3909 = vtanh.pop %v3878
        %v3910 = vmul.f32 %v3908, %v3791
        %3912 = vrot.lane.b32.xlu0 %v3909, 64
        %v3913 = vpop.permute.xlu0 %3912
        %v3915 = vmul.f32 %v3908, %v3913
        %3917 = vrot.lane.b32.xlu0 %v3915, 32
        %v3918 = vpop.permute.xlu0 %3917
        %v3920 = vadd.f32 %v3910, %v3918
        %v3921 = vtanh.pop %v3920
        %3923 = vrot.lane.b32.xlu0 %v3921, 64
        %v3924 = vpop.permute.xlu0 %3923
        %v3926 = vmul.f32 %v3908, %v3924
        %v3927 = vsel %vm2501, %v3902, 0.0
        %3929 = vrot.lane.b32.xlu0 %v3927, 32
        %v3930 = vpop.permute.xlu0 %3929
        %3932 = vst.msk [vmem:[%s2507] sm:$0xff] %vm2495, %v3930
        %v3933 = vsel %vm2489, %v3926, 0.0
        %3935 = vrot.lane.b32.xlu0 %v3933, 64
        %v3936 = vpop.permute.xlu0 %3935
        %3938 = vst.msk [vmem:[#allocation3] sm:$0xff] %vm2508, %v3936
        %v3939 = vsel %vm2501, %v3902, %v3788
        %v3940 = vsel %vm2489, %v3926, %v3790
        %3942 = vrot.lane.b32.xlu0 %v3939, 32
        %v3943 = vpop.permute.xlu0 %3942
        %3946 = vrot.lane.b32.xlu0 %v3940, 64
        %v3947 = vpop.permute.xlu0 %3946
        %v3949 = vsel %vm2495, %v3943, %v3947
        %3950 = vst.msk [vmem:[%s5] sm:$0xff] %vm2158, %v3949
      $region48: #{model_forward_pallas.1} parent=39 // pred_fallthru
        _
      %p3951 = scmp.ne.s32.totalorder %s258, 1
      %p3952 = pnand %p2115, %p3951
      %p3953 = pneg %p3952
      // Predicated region
      $region49: #{model_forward_pallas.1} parent=39 // pred_check
        _
      $region50: #{model_forward_pallas.1} parent=39 // pred_check_branch
        %3955 = sbr.rel (%p3952) target = $region52
      $region51: #{model_forward_pallas.1} parent=39 // pred_region
        %v3956 = vld [vmem:[#allocation3] sm:$0xff]
        %v3957 = vld [vmem:[#allocation3 + $0x8] sm:$0xff]
        %v3958 = vld [vmem:[#allocation3 + $0x10] sm:$0xff]
        %v3959 = vld [vmem:[#allocation3 + $0x18] sm:$0xff]
        %v3960 = vld [vmem:[#allocation3 + $0x20] sm:$0xff]
        %v3961 = vld [vmem:[#allocation3 + $0x28] sm:$0xff]
        %v3962 = vld [vmem:[#allocation3 + $0x30] sm:$0xff]
        %v3963 = vld [vmem:[#allocation3 + $0x38] sm:$0xff]
        %v3964 = vld [vmem:[#allocation3 + $0x40] sm:$0xff]
        %v3965 = vld [vmem:[#allocation3 + $0x48] sm:$0xff]
        %v3966 = vld [vmem:[%s237] sm:$0xff]
        %v3967 = vld [vmem:[%s237 + $0x8] sm:$0xff]
        %v3968 = vld [vmem:[%s237 + $0x10] sm:$0xff]
        %v3969 = vld [vmem:[%s237 + $0x18] sm:$0xff]
        %v3970 = vld [vmem:[%s237 + $0x20] sm:$0xff]
        %v3971 = vld [vmem:[%s237 + $0x28] sm:$0xff]
        %v3972 = vld [vmem:[%s237 + $0x30] sm:$0xff]
        %v3973 = vld [vmem:[%s237 + $0x38] sm:$0xff]
        %v3974 = vld [vmem:[%s237 + $0x40] sm:$0xff]
        %v3975 = vld [vmem:[%s237 + $0x48] sm:$0xff]
        %v3976 = vld [vmem:[%s237 + $0x50] sm:$0xff]
        %v3977 = vld [vmem:[%s237 + $0x58] sm:$0xff]
        %v3978 = vld [vmem:[%s237 + $0x60] sm:$0xff]
        %v3979 = vld [vmem:[%s237 + $0x68] sm:$0xff]
        %v3980 = vld [vmem:[%s237 + $0x70] sm:$0xff]
        %v3981 = vld [vmem:[%s237 + $0x78] sm:$0xff]
        %v3982 = vld [vmem:[%s246] sm:$0x3]
        %v3984 = vlaneseq
        %v3985 = vshrl.u32 %v3984, 7
        %v3986 = vsub.s32 0, %v3985
        %v3987 = vrot.slane %v3982, %v3986
        %v3988 = vlaneseq
        %v3989 = vshrl.u32 %v3988, 7
        %v3990 = vsub.s32 1, %v3989
        %v3991 = vrot.slane %v3982, %v3990
        %vm3994 = vcmask 523264
        %v3996 = vsel %vm3994, %v3956, 0
        %v3999 = vsel %vm3994, %v3957, 0
        %v4002 = vsel %vm3994, %v3958, 0
        %v4005 = vsel %vm3994, %v3959, 0
        %v4008 = vsel %vm3994, %v3960, 0
        %v4011 = vsel %vm3994, %v3961, 0
        %v4014 = vsel %vm3994, %v3962, 0
        %v4017 = vsel %vm3994, %v3963, 0
        %v4020 = vsel %vm3994, %v3964, 0
        %v4023 = vsel %vm3994, %v3965, 0
        %4025 = vmatprep.subr.mxu0 %v3967
        %4026 = vmatpush1.msra.mxu0 %v3966
        %4027 = vmatprep.subr.mxu0 %v3969
        %4028 = vmatpush1.msra.mxu0 %v3968
        %4029 = vmatprep.subr.mxu0 %v3971
        %4030 = vmatpush1.msra.mxu0 %v3970
        %4031 = vmatprep.subr.mxu0 %v3973
        %4032 = vmatpush1.msra.mxu0 %v3972
        %4033 = vmatprep.subr.mxu0 %v3975
        %4034 = vmatpush1.msra.mxu0 %v3974
        %4035 = vmatprep.subr.mxu0 %v3977
        %4036 = vmatpush1.msra.mxu0 %v3976
        %4037 = vmatprep.subr.mxu0 %v3979
        %4038 = vmatpush1.msra.mxu0 %v3978
        %4039 = vmatprep.subr.mxu0 %v3981
        %4040 = vmatpush1.msra.mxu0 %v3980
        %4041 = vmatprep.subr.mxu0 0.0
        %4042 = vmatpush1.msra.mxu0 0.0
        %4043 = vmatprep.subr.mxu0 0.0
        %4044 = vmatpush1.msra.mxu0 0.0
        %4045 = vmatprep.subr.mxu0 0.0
        %4046 = vmatpush1.msra.mxu0 0.0
        %4047 = vmatprep.subr.mxu0 0.0
        %4048 = vmatpush1.msra.mxu0 0.0
        %4049 = vmatprep.subr.mxu0 0.0
        %4050 = vmatpush1.msra.mxu0 0.0
        %4051 = vmatprep.subr.mxu0 0.0
        %4052 = vmatpush1.msra.mxu0 0.0
        %4053 = vmatprep.subr.mxu0 0.0
        %4054 = vmatpush1.msra.mxu0 0.0
        %4055 = vmatprep.subr.mxu0 0.0
        %4056 = vmatpush1.msra.mxu0 0.0
        %4057 = vmatprep.subr.mxu0 0.0
        %4058 = vmatpush1.msra.mxu0 0.0
        %4059 = vmatprep.subr.mxu0 0.0
        %4060 = vmatpush1.msra.mxu0 0.0
        %4061 = vmatprep.subr.mxu0 0.0
        %4062 = vmatpush1.msra.mxu0 0.0
        %4063 = vmatprep.subr.mxu0 0.0
        %4064 = vmatpush1.msra.mxu0 0.0
        %4065 = vmatprep.subr.mxu0 0.0
        %4066 = vmatpush1.msra.mxu0 0.0
        %4067 = vmatprep.subr.mxu0 0.0
        %4068 = vmatpush1.msra.mxu0 0.0
        %4069 = vmatprep.subr.mxu0 0.0
        %4070 = vmatpush1.msra.mxu0 0.0
        %4071 = vmatprep.subr.mxu0 0.0
        %4072 = vmatpush1.msra.mxu0 0.0
        %4073 = vmatprep.subr.mxu0 0.0
        %4074 = vmatpush1.msra.mxu0 0.0
        %4075 = vmatprep.subr.mxu0 0.0
        %4076 = vmatpush1.msra.mxu0 0.0
        %4077 = vmatprep.subr.mxu0 0.0
        %4078 = vmatpush1.msra.mxu0 0.0
        %4079 = vmatprep.subr.mxu0 0.0
        %4080 = vmatpush1.msra.mxu0 0.0
        %4081 = vmatprep.subr.mxu0 0.0
        %4082 = vmatpush1.msra.mxu0 0.0
        %4083 = vmatprep.subr.mxu0 0.0
        %4084 = vmatpush1.msra.mxu0 0.0
        %4085 = vmatprep.subr.mxu0 0.0
        %4086 = vmatpush1.msra.mxu0 0.0
        %4087 = vmatprep.subr.mxu0 0.0
        %4088 = vmatpush1.msra.mxu0 0.0
        %4089 = vmatprep.mubr.f32.mxu0 0.0
        %4090 = vmatmul.mubr.f32.gmra.mrb[0].mxu0 %v3996
        %v4091 = vpop.f32.mrb[0].mxu0
        %v4092 = vadd.f32 %v3987, %v4091
        %v4093 = vpop.f32.mrb[0].mxu0
        %v4094 = vadd.f32 %v3991, %v4093
        %4095 = vmatprep.mubr.f32.mxu0 0.0
        %4096 = vmatmul.mubr.f32.gmra.mrb[0].mxu0 %v3999
        %v4097 = vpop.f32.mrb[0].mxu0
        %v4098 = vadd.f32 %v3987, %v4097
        %v4099 = vpop.f32.mrb[0].mxu0
        %v4100 = vadd.f32 %v3991, %v4099
        %4101 = vmatprep.mubr.f32.mxu0 0.0
        %4102 = vmatmul.mubr.f32.gmra.mrb[0].mxu0 %v4002
        %v4103 = vpop.f32.mrb[0].mxu0
        %v4104 = vadd.f32 %v3987, %v4103
        %v4105 = vpop.f32.mrb[0].mxu0
        %v4106 = vadd.f32 %v3991, %v4105
        %4107 = vmatprep.mubr.f32.mxu0 0.0
        %4108 = vmatmul.mubr.f32.gmra.mrb[0].mxu0 %v4005
        %v4109 = vpop.f32.mrb[0].mxu0
        %v4110 = vadd.f32 %v3987, %v4109
        %v4111 = vpop.f32.mrb[0].mxu0
        %v4112 = vadd.f32 %v3991, %v4111
        %4113 = vmatprep.mubr.f32.mxu0 0.0
        %4114 = vmatmul.mubr.f32.gmra.mrb[0].mxu0 %v4008
        %v4115 = vpop.f32.mrb[0].mxu0
        %v4116 = vadd.f32 %v3987, %v4115
        %v4117 = vpop.f32.mrb[0].mxu0
        %v4118 = vadd.f32 %v3991, %v4117
        %4119 = vmatprep.mubr.f32.mxu0 0.0
        %4120 = vmatmul.mubr.f32.gmra.mrb[0].mxu0 %v4011
        %v4121 = vpop.f32.mrb[0].mxu0
        %v4122 = vadd.f32 %v3987, %v4121
        %v4123 = vpop.f32.mrb[0].mxu0
        %v4124 = vadd.f32 %v3991, %v4123
        %4125 = vmatprep.mubr.f32.mxu0 0.0
        %4126 = vmatmul.mubr.f32.gmra.mrb[0].mxu0 %v4014
        %v4127 = vpop.f32.mrb[0].mxu0
        %v4128 = vadd.f32 %v3987, %v4127
        %v4129 = vpop.f32.mrb[0].mxu0
        %v4130 = vadd.f32 %v3991, %v4129
        %4131 = vmatprep.mubr.f32.mxu0 0.0
        %4132 = vmatmul.mubr.f32.gmra.mrb[0].mxu0 %v4017
        %v4133 = vpop.f32.mrb[0].mxu0
        %v4134 = vadd.f32 %v3987, %v4133
        %v4135 = vpop.f32.mrb[0].mxu0
        %v4136 = vadd.f32 %v3991, %v4135
        %4137 = vmatprep.mubr.f32.mxu0 0.0
        %4138 = vmatmul.mubr.f32.gmra.mrb[0].mxu0 %v4020
        %v4139 = vpop.f32.mrb[0].mxu0
        %v4140 = vadd.f32 %v3987, %v4139
        %v4141 = vpop.f32.mrb[0].mxu0
        %v4142 = vadd.f32 %v3991, %v4141
        %4143 = vmatprep.mubr.f32.mxu0 0.0
        %4144 = vmatmul.mubr.f32.gmra.mrb[0].mxu0 %v4023
        %v4145 = vpop.f32.mrb[0].mxu0
        %v4146 = vadd.f32 %v3987, %v4145
        %v4147 = vpop.f32.mrb[0].mxu0
        %v4148 = vadd.f32 %v3991, %v4147
        %4149 = vdwg.mxu0
        %4150 = vst [vmem:[#allocation4] sm:$0xff] %v4092
        %4151 = vst [vmem:[#allocation4 + $0x8] sm:$0xff] %v4094
        %4152 = vst [vmem:[#allocation4 + $0x10] sm:$0xff] %v4098
        %4153 = vst [vmem:[#allocation4 + $0x18] sm:$0xff] %v4100
        %4154 = vst [vmem:[#allocation4 + $0x20] sm:$0xff] %v4104
        %4155 = vst [vmem:[#allocation4 + $0x28] sm:$0xff] %v4106
        %4156 = vst [vmem:[#allocation4 + $0x30] sm:$0xff] %v4110
        %4157 = vst [vmem:[#allocation4 + $0x38] sm:$0xff] %v4112
        %4158 = vst [vmem:[#allocation4 + $0x40] sm:$0xff] %v4116
        %4159 = vst [vmem:[#allocation4 + $0x48] sm:$0xff] %v4118
        %4160 = vst [vmem:[#allocation4 + $0x50] sm:$0xff] %v4122
        %4161 = vst [vmem:[#allocation4 + $0x58] sm:$0xff] %v4124
        %4162 = vst [vmem:[#allocation4 + $0x60] sm:$0xff] %v4128
        %4163 = vst [vmem:[#allocation4 + $0x68] sm:$0xff] %v4130
        %4164 = vst [vmem:[#allocation4 + $0x70] sm:$0xff] %v4134
        %4165 = vst [vmem:[#allocation4 + $0x78] sm:$0xff] %v4136
        %4166 = vst [vmem:[#allocation4 + $0x80] sm:$0xff] %v4140
        %4167 = vst [vmem:[#allocation4 + $0x88] sm:$0xff] %v4142
        %4168 = vst [vmem:[#allocation4 + $0x90] sm:$0xff] %v4146
        %4169 = vst [vmem:[#allocation4 + $0x98] sm:$0xff] %v4148
        %v4170 = vld [vmem:[%s4] sm:$0xff]
        %v4171 = vld [vmem:[%s242] sm:$0xff]
        %v4172 = vld [vmem:[%s242 + $0x8] sm:$0xff]
        %v4173 = vld [vmem:[%s242 + $0x10] sm:$0xff]
        %v4174 = vld [vmem:[%s242 + $0x18] sm:$0xff]
        %v4175 = vld [vmem:[%s242 + $0x20] sm:$0xff]
        %v4176 = vld [vmem:[%s242 + $0x28] sm:$0xff]
        %v4177 = vld [vmem:[%s242 + $0x30] sm:$0xff]
        %v4178 = vld [vmem:[%s242 + $0x38] sm:$0xff]
        %v4179 = vld [vmem:[%s242 + $0x40] sm:$0xff]
        %v4180 = vld [vmem:[%s242 + $0x48] sm:$0xff]
        %v4181 = vld [vmem:[%s242 + $0x50] sm:$0xff]
        %v4182 = vld [vmem:[%s242 + $0x58] sm:$0xff]
        %v4183 = vld [vmem:[%s242 + $0x60] sm:$0xff]
        %v4184 = vld [vmem:[%s242 + $0x68] sm:$0xff]
        %v4185 = vld [vmem:[%s242 + $0x70] sm:$0xff]
        %v4186 = vld [vmem:[%s242 + $0x78] sm:$0xff]
        %s4187 = smul.u32 0, 2
        %s4188 = smul.addr %s4187, 8
        %s4189 = scalar_lea.vmem [#allocation4], %s4188
        %v4190 = vld [vmem:[%s4189] sm:$0xff]
        %s4191 = smul.u32 9, 2
        %s4192 = smul.addr %s4191, 8
        %s4193 = scalar_lea.vmem [#allocation4], %s4192
        %v4194 = vld [vmem:[%s4193 + $0x8] sm:$0xff]
        %v4196 = vsel %vm3994, 0.0, 0
        %4198 = vmatprep.subr.mxu0 %v4172
        %4199 = vmatpush1.msra.mxu0 %v4171
        %4200 = vmatprep.subr.mxu0 %v4174
        %4201 = vmatpush1.msra.mxu0 %v4173
        %4202 = vmatprep.subr.mxu0 %v4176
        %4203 = vmatpush1.msra.mxu0 %v4175
        %4204 = vmatprep.subr.mxu0 %v4178
        %4205 = vmatpush1.msra.mxu0 %v4177
        %4206 = vmatprep.subr.mxu0 %v4180
        %4207 = vmatpush1.msra.mxu0 %v4179
        %4208 = vmatprep.subr.mxu0 %v4182
        %4209 = vmatpush1.msra.mxu0 %v4181
        %4210 = vmatprep.subr.mxu0 %v4184
        %4211 = vmatpush1.msra.mxu0 %v4183
        %4212 = vmatprep.subr.mxu0 %v4186
        %4213 = vmatpush1.msra.mxu0 %v4185
        %4214 = vmatprep.subr.mxu0 0.0
        %4215 = vmatpush1.msra.mxu0 0.0
        %4216 = vmatprep.subr.mxu0 0.0
        %4217 = vmatpush1.msra.mxu0 0.0
        %4218 = vmatprep.subr.mxu0 0.0
        %4219 = vmatpush1.msra.mxu0 0.0
        %4220 = vmatprep.subr.mxu0 0.0
        %4221 = vmatpush1.msra.mxu0 0.0
        %4222 = vmatprep.subr.mxu0 0.0
        %4223 = vmatpush1.msra.mxu0 0.0
        %4224 = vmatprep.subr.mxu0 0.0
        %4225 = vmatpush1.msra.mxu0 0.0
        %4226 = vmatprep.subr.mxu0 0.0
        %4227 = vmatpush1.msra.mxu0 0.0
        %4228 = vmatprep.subr.mxu0 0.0
        %4229 = vmatpush1.msra.mxu0 0.0
        %4230 = vmatprep.subr.mxu0 0.0
        %4231 = vmatpush1.msra.mxu0 0.0
        %4232 = vmatprep.subr.mxu0 0.0
        %4233 = vmatpush1.msra.mxu0 0.0
        %4234 = vmatprep.subr.mxu0 0.0
        %4235 = vmatpush1.msra.mxu0 0.0
        %4236 = vmatprep.subr.mxu0 0.0
        %4237 = vmatpush1.msra.mxu0 0.0
        %4238 = vmatprep.subr.mxu0 0.0
        %4239 = vmatpush1.msra.mxu0 0.0
        %4240 = vmatprep.subr.mxu0 0.0
        %4241 = vmatpush1.msra.mxu0 0.0
        %4242 = vmatprep.subr.mxu0 0.0
        %4243 = vmatpush1.msra.mxu0 0.0
        %4244 = vmatprep.subr.mxu0 0.0
        %4245 = vmatpush1.msra.mxu0 0.0
        %4246 = vmatprep.subr.mxu0 0.0
        %4247 = vmatpush1.msra.mxu0 0.0
        %4248 = vmatprep.subr.mxu0 0.0
        %4249 = vmatpush1.msra.mxu0 0.0
        %4250 = vmatprep.subr.mxu0 0.0
        %4251 = vmatpush1.msra.mxu0 0.0
        %4252 = vmatprep.subr.mxu0 0.0
        %4253 = vmatpush1.msra.mxu0 0.0
        %4254 = vmatprep.subr.mxu0 0.0
        %4255 = vmatpush1.msra.mxu0 0.0
        %4256 = vmatprep.subr.mxu0 0.0
        %4257 = vmatpush1.msra.mxu0 0.0
        %4258 = vmatprep.subr.mxu0 0.0
        %4259 = vmatpush1.msra.mxu0 0.0
        %4260 = vmatprep.subr.mxu0 0.0
        %4261 = vmatpush1.msra.mxu0 0.0
        %4262 = vmatprep.mubr.f32.mxu0 0.0
        %4263 = vmatmul.mubr.f32.gmra.mrb[0].mxu0 %v4196
        %v4264 = vpop.f32.mrb[0].mxu0
        %v4265 = vadd.f32 0.0, %v4264
        %v4266 = vpop.f32.mrb[0].mxu0
        %v4267 = vadd.f32 0.0, %v4266
        %4268 = vdwg.mxu0
        %v4269 = vadd.f32 %v4190, %v4265
        %v4270 = vadd.f32 %v4194, %v4267
        %v4271 = vxor.u32 %v4269, 2147483648
        %v4272 = vmul.f32 %v4271, 1.442695
        %v4273 = vpow.pop %v4272
        %v4274 = vadd.f32 %v4273, 1.0
        %v4275 = vrcp.pop %v4274
        %v4276 = vmul.f32 1.0, %v4275
        %v4277 = vtanh.pop %v4269
        %v4278 = vmul.f32 %v4276, 0.0
        %4280 = vrot.lane.b32.xlu0 %v4277, 64
        %v4281 = vpop.permute.xlu0 %4280
        %v4283 = vmul.f32 %v4276, %v4281
        %4285 = vrot.lane.b32.xlu0 %v4283, 32
        %v4286 = vpop.permute.xlu0 %4285
        %v4288 = vadd.f32 %v4278, %v4286
        %v4289 = vtanh.pop %v4288
        %4291 = vrot.lane.b32.xlu0 %v4289, 64
        %v4292 = vpop.permute.xlu0 %4291
        %v4294 = vmul.f32 %v4276, %v4292
        %v4295 = vxor.u32 %v4270, 2147483648
        %v4296 = vmul.f32 %v4295, 1.442695
        %v4297 = vpow.pop %v4296
        %v4298 = vadd.f32 %v4297, 1.0
        %v4299 = vrcp.pop %v4298
        %v4300 = vmul.f32 1.0, %v4299
        %v4301 = vtanh.pop %v4270
        %v4302 = vmul.f32 %v4300, 0.0
        %4304 = vrot.lane.b32.xlu0 %v4301, 64
        %v4305 = vpop.permute.xlu0 %4304
        %v4307 = vmul.f32 %v4300, %v4305
        %4309 = vrot.lane.b32.xlu0 %v4307, 32
        %v4310 = vpop.permute.xlu0 %4309
        %v4312 = vadd.f32 %v4302, %v4310
        %v4313 = vtanh.pop %v4312
        %4315 = vrot.lane.b32.xlu0 %v4313, 64
        %v4316 = vpop.permute.xlu0 %4315
        %v4318 = vmul.f32 %v4300, %v4316
        %vm4319 = vcmp.gt.s32.totalorder %v4170, 0
        %vm4320 = vcmp.gt.s32.totalorder %v4170, 9
        %v4321 = vsel %vm4319, 1, 0
        %4322 = vset.pattern.permute.xlu0 0
        %4323 = vperm.xlu0 %4322, %v4321
        %v4324 = vpop.permute.xlu0 %4323
        %vm4325 = vcmp.eq.s32.totalorder %v4324, 1
        %v4326 = vsel %vm4325, %v4294, 0.0
        %4328 = vrot.lane.b32.xlu0 %v4326, 32
        %v4329 = vpop.permute.xlu0 %4328
        %vm4331 = vcmask 261120
        %4332 = vst.msk [vmem:[#allocation2] sm:$0xff] %vm4331, %v4329
        %v4333 = vsel %vm4320, 1, 0
        %4334 = vset.pattern.permute.xlu0 0
        %4335 = vperm.xlu0 %4334, %v4333
        %v4336 = vpop.permute.xlu0 %4335
        %vm4337 = vcmp.eq.s32.totalorder %v4336, 1
        %v4338 = vsel %vm4337, %v4318, 0.0
        %4340 = vrot.lane.b32.xlu0 %v4338, 64
        %v4341 = vpop.permute.xlu0 %4340
        %s4343 = scalar_lea.vmem [#allocation2], 72
        %vm4344 = vcmask 523520
        %4345 = vst.msk [vmem:[%s4343] sm:$0xff] %vm4344, %v4341
        %v4346 = vsel %vm4325, %v4288, 0.0
        %v4347 = vsel %vm4337, %v4312, 0.0
        %s4348 = smul.u32 1, 2
        %s4349 = smul.addr %s4348, 8
        %s4350 = scalar_lea.vmem [#allocation4], %s4349
        %v4351 = vld [vmem:[%s4350] sm:$0xff]
        %s4352 = smul.u32 8, 2
        %s4353 = smul.addr %s4352, 8
        %s4354 = scalar_lea.vmem [#allocation4], %s4353
        %v4355 = vld [vmem:[%s4354 + $0x8] sm:$0xff]
        %v4356 = vsel %vm4331, %v4329, %v4341
        %v4358 = vsel %vm3994, %v4356, 0
        %4360 = vmatprep.subr.mxu0 %v4172
        %4361 = vmatpush1.msra.mxu0 %v4171
        %4362 = vmatprep.subr.mxu0 %v4174
        %4363 = vmatpush1.msra.mxu0 %v4173
        %4364 = vmatprep.subr.mxu0 %v4176
        %4365 = vmatpush1.msra.mxu0 %v4175
        %4366 = vmatprep.subr.mxu0 %v4178
        %4367 = vmatpush1.msra.mxu0 %v4177
        %4368 = vmatprep.subr.mxu0 %v4180
        %4369 = vmatpush1.msra.mxu0 %v4179
        %4370 = vmatprep.subr.mxu0 %v4182
        %4371 = vmatpush1.msra.mxu0 %v4181
        %4372 = vmatprep.subr.mxu0 %v4184
        %4373 = vmatpush1.msra.mxu0 %v4183
        %4374 = vmatprep.subr.mxu0 %v4186
        %4375 = vmatpush1.msra.mxu0 %v4185
        %4376 = vmatprep.subr.mxu0 0.0
        %4377 = vmatpush1.msra.mxu0 0.0
        %4378 = vmatprep.subr.mxu0 0.0
        %4379 = vmatpush1.msra.mxu0 0.0
        %4380 = vmatprep.subr.mxu0 0.0
        %4381 = vmatpush1.msra.mxu0 0.0
        %4382 = vmatprep.subr.mxu0 0.0
        %4383 = vmatpush1.msra.mxu0 0.0
        %4384 = vmatprep.subr.mxu0 0.0
        %4385 = vmatpush1.msra.mxu0 0.0
        %4386 = vmatprep.subr.mxu0 0.0
        %4387 = vmatpush1.msra.mxu0 0.0
        %4388 = vmatprep.subr.mxu0 0.0
        %4389 = vmatpush1.msra.mxu0 0.0
        %4390 = vmatprep.subr.mxu0 0.0
        %4391 = vmatpush1.msra.mxu0 0.0
        %4392 = vmatprep.subr.mxu0 0.0
        %4393 = vmatpush1.msra.mxu0 0.0
        %4394 = vmatprep.subr.mxu0 0.0
        %4395 = vmatpush1.msra.mxu0 0.0
        %4396 = vmatprep.subr.mxu0 0.0
        %4397 = vmatpush1.msra.mxu0 0.0
        %4398 = vmatprep.subr.mxu0 0.0
        %4399 = vmatpush1.msra.mxu0 0.0
        %4400 = vmatprep.subr.mxu0 0.0
        %4401 = vmatpush1.msra.mxu0 0.0
        %4402 = vmatprep.subr.mxu0 0.0
        %4403 = vmatpush1.msra.mxu0 0.0
        %4404 = vmatprep.subr.mxu0 0.0
        %4405 = vmatpush1.msra.mxu0 0.0
        %4406 = vmatprep.subr.mxu0 0.0
        %4407 = vmatpush1.msra.mxu0 0.0
        %4408 = vmatprep.subr.mxu0 0.0
        %4409 = vmatpush1.msra.mxu0 0.0
        %4410 = vmatprep.subr.mxu0 0.0
        %4411 = vmatpush1.msra.mxu0 0.0
        %4412 = vmatprep.subr.mxu0 0.0
        %4413 = vmatpush1.msra.mxu0 0.0
        %4414 = vmatprep.subr.mxu0 0.0
        %4415 = vmatpush1.msra.mxu0 0.0
        %4416 = vmatprep.subr.mxu0 0.0
        %4417 = vmatpush1.msra.mxu0 0.0
        %4418 = vmatprep.subr.mxu0 0.0
        %4419 = vmatpush1.msra.mxu0 0.0
        %4420 = vmatprep.subr.mxu0 0.0
        %4421 = vmatpush1.msra.mxu0 0.0
        %4422 = vmatprep.subr.mxu0 0.0
        %4423 = vmatpush1.msra.mxu0 0.0
        %4424 = vmatprep.mubr.f32.mxu0 0.0
        %4425 = vmatmul.mubr.f32.gmra.mrb[0].mxu0 %v4358
        %v4426 = vpop.f32.mrb[0].mxu0
        %v4427 = vadd.f32 0.0, %v4426
        %v4428 = vpop.f32.mrb[0].mxu0
        %v4429 = vadd.f32 0.0, %v4428
        %4430 = vdwg.mxu0
        %v4431 = vadd.f32 %v4351, %v4427
        %v4432 = vadd.f32 %v4355, %v4429
        %v4433 = vxor.u32 %v4431, 2147483648
        %v4434 = vmul.f32 %v4433, 1.442695
        %v4435 = vpow.pop %v4434
        %v4436 = vadd.f32 %v4435, 1.0
        %v4437 = vrcp.pop %v4436
        %v4438 = vmul.f32 1.0, %v4437
        %v4439 = vtanh.pop %v4431
        %v4440 = vmul.f32 %v4438, %v4346
        %4442 = vrot.lane.b32.xlu0 %v4439, 64
        %v4443 = vpop.permute.xlu0 %4442
        %v4445 = vmul.f32 %v4438, %v4443
        %4447 = vrot.lane.b32.xlu0 %v4445, 32
        %v4448 = vpop.permute.xlu0 %4447
        %v4450 = vadd.f32 %v4440, %v4448
        %v4451 = vtanh.pop %v4450
        %4453 = vrot.lane.b32.xlu0 %v4451, 64
        %v4454 = vpop.permute.xlu0 %4453
        %v4456 = vmul.f32 %v4438, %v4454
        %v4457 = vxor.u32 %v4432, 2147483648
        %v4458 = vmul.f32 %v4457, 1.442695
        %v4459 = vpow.pop %v4458
        %v4460 = vadd.f32 %v4459, 1.0
        %v4461 = vrcp.pop %v4460
        %v4462 = vmul.f32 1.0, %v4461
        %v4463 = vtanh.pop %v4432
        %v4464 = vmul.f32 %v4462, %v4347
        %4466 = vrot.lane.b32.xlu0 %v4463, 64
        %v4467 = vpop.permute.xlu0 %4466
        %v4469 = vmul.f32 %v4462, %v4467
        %4471 = vrot.lane.b32.xlu0 %v4469, 32
        %v4472 = vpop.permute.xlu0 %4471
        %v4474 = vadd.f32 %v4464, %v4472
        %v4475 = vtanh.pop %v4474
        %4477 = vrot.lane.b32.xlu0 %v4475, 64
        %v4478 = vpop.permute.xlu0 %4477
        %v4480 = vmul.f32 %v4462, %v4478
        %vm4481 = vcmp.gt.s32.totalorder %v4170, 1
        %vm4482 = vcmp.gt.s32.totalorder %v4170, 8
        %v4483 = vsel %vm4481, 1, 0
        %4484 = vset.pattern.permute.xlu0 0
        %4485 = vperm.xlu0 %4484, %v4483
        %v4486 = vpop.permute.xlu0 %4485
        %vm4487 = vcmp.eq.s32.totalorder %v4486, 1
        %v4488 = vsel %vm4487, %v4456, 0.0
        %4490 = vrot.lane.b32.xlu0 %v4488, 32
        %v4491 = vpop.permute.xlu0 %4490
        %s4493 = scalar_lea.vmem [#allocation2], 8
        %4494 = vst.msk [vmem:[%s4493] sm:$0xff] %vm4331, %v4491
        %v4495 = vsel %vm4482, 1, 0
        %4496 = vset.pattern.permute.xlu0 0
        %4497 = vperm.xlu0 %4496, %v4495
        %v4498 = vpop.permute.xlu0 %4497
        %vm4499 = vcmp.eq.s32.totalorder %v4498, 1
        %v4500 = vsel %vm4499, %v4480, 0.0
        %4502 = vrot.lane.b32.xlu0 %v4500, 64
        %v4503 = vpop.permute.xlu0 %4502
        %s4505 = scalar_lea.vmem [#allocation2], 64
        %4506 = vst.msk [vmem:[%s4505] sm:$0xff] %vm4344, %v4503
        %v4507 = vsel %vm4487, %v4456, %v4326
        %v4508 = vsel %vm4487, %v4450, %v4346
        %v4509 = vsel %vm4499, %v4480, %v4338
        %v4510 = vsel %vm4499, %v4474, %v4347
        %s4511 = smul.u32 2, 2
        %s4512 = smul.addr %s4511, 8
        %s4513 = scalar_lea.vmem [#allocation4], %s4512
        %v4514 = vld [vmem:[%s4513] sm:$0xff]
        %s4515 = smul.u32 7, 2
        %s4516 = smul.addr %s4515, 8
        %s4517 = scalar_lea.vmem [#allocation4], %s4516
        %v4518 = vld [vmem:[%s4517 + $0x8] sm:$0xff]
        %4520 = vrot.lane.b32.xlu0 %v4507, 32
        %v4521 = vpop.permute.xlu0 %4520
        %4524 = vrot.lane.b32.xlu0 %v4509, 64
        %v4525 = vpop.permute.xlu0 %4524
        %v4527 = vsel %vm4331, %v4521, %v4525
        %v4529 = vsel %vm3994, %v4527, 0
        %4531 = vmatprep.subr.mxu0 %v4172
        %4532 = vmatpush1.msra.mxu0 %v4171
        %4533 = vmatprep.subr.mxu0 %v4174
        %4534 = vmatpush1.msra.mxu0 %v4173
        %4535 = vmatprep.subr.mxu0 %v4176
        %4536 = vmatpush1.msra.mxu0 %v4175
        %4537 = vmatprep.subr.mxu0 %v4178
        %4538 = vmatpush1.msra.mxu0 %v4177
        %4539 = vmatprep.subr.mxu0 %v4180
        %4540 = vmatpush1.msra.mxu0 %v4179
        %4541 = vmatprep.subr.mxu0 %v4182
        %4542 = vmatpush1.msra.mxu0 %v4181
        %4543 = vmatprep.subr.mxu0 %v4184
        %4544 = vmatpush1.msra.mxu0 %v4183
        %4545 = vmatprep.subr.mxu0 %v4186
        %4546 = vmatpush1.msra.mxu0 %v4185
        %4547 = vmatprep.subr.mxu0 0.0
        %4548 = vmatpush1.msra.mxu0 0.0
        %4549 = vmatprep.subr.mxu0 0.0
        %4550 = vmatpush1.msra.mxu0 0.0
        %4551 = vmatprep.subr.mxu0 0.0
        %4552 = vmatpush1.msra.mxu0 0.0
        %4553 = vmatprep.subr.mxu0 0.0
        %4554 = vmatpush1.msra.mxu0 0.0
        %4555 = vmatprep.subr.mxu0 0.0
        %4556 = vmatpush1.msra.mxu0 0.0
        %4557 = vmatprep.subr.mxu0 0.0
        %4558 = vmatpush1.msra.mxu0 0.0
        %4559 = vmatprep.subr.mxu0 0.0
        %4560 = vmatpush1.msra.mxu0 0.0
        %4561 = vmatprep.subr.mxu0 0.0
        %4562 = vmatpush1.msra.mxu0 0.0
        %4563 = vmatprep.subr.mxu0 0.0
        %4564 = vmatpush1.msra.mxu0 0.0
        %4565 = vmatprep.subr.mxu0 0.0
        %4566 = vmatpush1.msra.mxu0 0.0
        %4567 = vmatprep.subr.mxu0 0.0
        %4568 = vmatpush1.msra.mxu0 0.0
        %4569 = vmatprep.subr.mxu0 0.0
        %4570 = vmatpush1.msra.mxu0 0.0
        %4571 = vmatprep.subr.mxu0 0.0
        %4572 = vmatpush1.msra.mxu0 0.0
        %4573 = vmatprep.subr.mxu0 0.0
        %4574 = vmatpush1.msra.mxu0 0.0
        %4575 = vmatprep.subr.mxu0 0.0
        %4576 = vmatpush1.msra.mxu0 0.0
        %4577 = vmatprep.subr.mxu0 0.0
        %4578 = vmatpush1.msra.mxu0 0.0
        %4579 = vmatprep.subr.mxu0 0.0
        %4580 = vmatpush1.msra.mxu0 0.0
        %4581 = vmatprep.subr.mxu0 0.0
        %4582 = vmatpush1.msra.mxu0 0.0
        %4583 = vmatprep.subr.mxu0 0.0
        %4584 = vmatpush1.msra.mxu0 0.0
        %4585 = vmatprep.subr.mxu0 0.0
        %4586 = vmatpush1.msra.mxu0 0.0
        %4587 = vmatprep.subr.mxu0 0.0
        %4588 = vmatpush1.msra.mxu0 0.0
        %4589 = vmatprep.subr.mxu0 0.0
        %4590 = vmatpush1.msra.mxu0 0.0
        %4591 = vmatprep.subr.mxu0 0.0
        %4592 = vmatpush1.msra.mxu0 0.0
        %4593 = vmatprep.subr.mxu0 0.0
        %4594 = vmatpush1.msra.mxu0 0.0
        %4595 = vmatprep.mubr.f32.mxu0 0.0
        %4596 = vmatmul.mubr.f32.gmra.mrb[0].mxu0 %v4529
        %v4597 = vpop.f32.mrb[0].mxu0
        %v4598 = vadd.f32 0.0, %v4597
        %v4599 = vpop.f32.mrb[0].mxu0
        %v4600 = vadd.f32 0.0, %v4599
        %4601 = vdwg.mxu0
        %v4602 = vadd.f32 %v4514, %v4598
        %v4603 = vadd.f32 %v4518, %v4600
        %v4604 = vxor.u32 %v4602, 2147483648
        %v4605 = vmul.f32 %v4604, 1.442695
        %v4606 = vpow.pop %v4605
        %v4607 = vadd.f32 %v4606, 1.0
        %v4608 = vrcp.pop %v4607
        %v4609 = vmul.f32 1.0, %v4608
        %v4610 = vtanh.pop %v4602
        %v4611 = vmul.f32 %v4609, %v4508
        %4613 = vrot.lane.b32.xlu0 %v4610, 64
        %v4614 = vpop.permute.xlu0 %4613
        %v4616 = vmul.f32 %v4609, %v4614
        %4618 = vrot.lane.b32.xlu0 %v4616, 32
        %v4619 = vpop.permute.xlu0 %4618
        %v4621 = vadd.f32 %v4611, %v4619
        %v4622 = vtanh.pop %v4621
        %4624 = vrot.lane.b32.xlu0 %v4622, 64
        %v4625 = vpop.permute.xlu0 %4624
        %v4627 = vmul.f32 %v4609, %v4625
        %v4628 = vxor.u32 %v4603, 2147483648
        %v4629 = vmul.f32 %v4628, 1.442695
        %v4630 = vpow.pop %v4629
        %v4631 = vadd.f32 %v4630, 1.0
        %v4632 = vrcp.pop %v4631
        %v4633 = vmul.f32 1.0, %v4632
        %v4634 = vtanh.pop %v4603
        %v4635 = vmul.f32 %v4633, %v4510
        %4637 = vrot.lane.b32.xlu0 %v4634, 64
        %v4638 = vpop.permute.xlu0 %4637
        %v4640 = vmul.f32 %v4633, %v4638
        %4642 = vrot.lane.b32.xlu0 %v4640, 32
        %v4643 = vpop.permute.xlu0 %4642
        %v4645 = vadd.f32 %v4635, %v4643
        %v4646 = vtanh.pop %v4645
        %4648 = vrot.lane.b32.xlu0 %v4646, 64
        %v4649 = vpop.permute.xlu0 %4648
        %v4651 = vmul.f32 %v4633, %v4649
        %vm4652 = vcmp.gt.s32.totalorder %v4170, 2
        %vm4653 = vcmp.gt.s32.totalorder %v4170, 7
        %v4654 = vsel %vm4652, 1, 0
        %4655 = vset.pattern.permute.xlu0 0
        %4656 = vperm.xlu0 %4655, %v4654
        %v4657 = vpop.permute.xlu0 %4656
        %vm4658 = vcmp.eq.s32.totalorder %v4657, 1
        %v4659 = vsel %vm4658, %v4627, 0.0
        %4661 = vrot.lane.b32.xlu0 %v4659, 32
        %v4662 = vpop.permute.xlu0 %4661
        %s4664 = scalar_lea.vmem [#allocation2], 16
        %4665 = vst.msk [vmem:[%s4664] sm:$0xff] %vm4331, %v4662
        %v4666 = vsel %vm4653, 1, 0
        %4667 = vset.pattern.permute.xlu0 0
        %4668 = vperm.xlu0 %4667, %v4666
        %v4669 = vpop.permute.xlu0 %4668
        %vm4670 = vcmp.eq.s32.totalorder %v4669, 1
        %v4671 = vsel %vm4670, %v4651, 0.0
        %4673 = vrot.lane.b32.xlu0 %v4671, 64
        %v4674 = vpop.permute.xlu0 %4673
        %s4676 = scalar_lea.vmem [#allocation2], 56
        %4677 = vst.msk [vmem:[%s4676] sm:$0xff] %vm4344, %v4674
        %v4678 = vsel %vm4658, %v4627, %v4507
        %v4679 = vsel %vm4658, %v4621, %v4508
        %v4680 = vsel %vm4670, %v4651, %v4509
        %v4681 = vsel %vm4670, %v4645, %v4510
        %s4682 = smul.u32 3, 2
        %s4683 = smul.addr %s4682, 8
        %s4684 = scalar_lea.vmem [#allocation4], %s4683
        %v4685 = vld [vmem:[%s4684] sm:$0xff]
        %s4686 = smul.u32 6, 2
        %s4687 = smul.addr %s4686, 8
        %s4688 = scalar_lea.vmem [#allocation4], %s4687
        %v4689 = vld [vmem:[%s4688 + $0x8] sm:$0xff]
        %4691 = vrot.lane.b32.xlu0 %v4678, 32
        %v4692 = vpop.permute.xlu0 %4691
        %4695 = vrot.lane.b32.xlu0 %v4680, 64
        %v4696 = vpop.permute.xlu0 %4695
        %v4698 = vsel %vm4331, %v4692, %v4696
        %v4700 = vsel %vm3994, %v4698, 0
        %4702 = vmatprep.subr.mxu0 %v4172
        %4703 = vmatpush1.msra.mxu0 %v4171
        %4704 = vmatprep.subr.mxu0 %v4174
        %4705 = vmatpush1.msra.mxu0 %v4173
        %4706 = vmatprep.subr.mxu0 %v4176
        %4707 = vmatpush1.msra.mxu0 %v4175
        %4708 = vmatprep.subr.mxu0 %v4178
        %4709 = vmatpush1.msra.mxu0 %v4177
        %4710 = vmatprep.subr.mxu0 %v4180
        %4711 = vmatpush1.msra.mxu0 %v4179
        %4712 = vmatprep.subr.mxu0 %v4182
        %4713 = vmatpush1.msra.mxu0 %v4181
        %4714 = vmatprep.subr.mxu0 %v4184
        %4715 = vmatpush1.msra.mxu0 %v4183
        %4716 = vmatprep.subr.mxu0 %v4186
        %4717 = vmatpush1.msra.mxu0 %v4185
        %4718 = vmatprep.subr.mxu0 0.0
        %4719 = vmatpush1.msra.mxu0 0.0
        %4720 = vmatprep.subr.mxu0 0.0
        %4721 = vmatpush1.msra.mxu0 0.0
        %4722 = vmatprep.subr.mxu0 0.0
        %4723 = vmatpush1.msra.mxu0 0.0
        %4724 = vmatprep.subr.mxu0 0.0
        %4725 = vmatpush1.msra.mxu0 0.0
        %4726 = vmatprep.subr.mxu0 0.0
        %4727 = vmatpush1.msra.mxu0 0.0
        %4728 = vmatprep.subr.mxu0 0.0
        %4729 = vmatpush1.msra.mxu0 0.0
        %4730 = vmatprep.subr.mxu0 0.0
        %4731 = vmatpush1.msra.mxu0 0.0
        %4732 = vmatprep.subr.mxu0 0.0
        %4733 = vmatpush1.msra.mxu0 0.0
        %4734 = vmatprep.subr.mxu0 0.0
        %4735 = vmatpush1.msra.mxu0 0.0
        %4736 = vmatprep.subr.mxu0 0.0
        %4737 = vmatpush1.msra.mxu0 0.0
        %4738 = vmatprep.subr.mxu0 0.0
        %4739 = vmatpush1.msra.mxu0 0.0
        %4740 = vmatprep.subr.mxu0 0.0
        %4741 = vmatpush1.msra.mxu0 0.0
        %4742 = vmatprep.subr.mxu0 0.0
        %4743 = vmatpush1.msra.mxu0 0.0
        %4744 = vmatprep.subr.mxu0 0.0
        %4745 = vmatpush1.msra.mxu0 0.0
        %4746 = vmatprep.subr.mxu0 0.0
        %4747 = vmatpush1.msra.mxu0 0.0
        %4748 = vmatprep.subr.mxu0 0.0
        %4749 = vmatpush1.msra.mxu0 0.0
        %4750 = vmatprep.subr.mxu0 0.0
        %4751 = vmatpush1.msra.mxu0 0.0
        %4752 = vmatprep.subr.mxu0 0.0
        %4753 = vmatpush1.msra.mxu0 0.0
        %4754 = vmatprep.subr.mxu0 0.0
        %4755 = vmatpush1.msra.mxu0 0.0
        %4756 = vmatprep.subr.mxu0 0.0
        %4757 = vmatpush1.msra.mxu0 0.0
        %4758 = vmatprep.subr.mxu0 0.0
        %4759 = vmatpush1.msra.mxu0 0.0
        %4760 = vmatprep.subr.mxu0 0.0
        %4761 = vmatpush1.msra.mxu0 0.0
        %4762 = vmatprep.subr.mxu0 0.0
        %4763 = vmatpush1.msra.mxu0 0.0
        %4764 = vmatprep.subr.mxu0 0.0
        %4765 = vmatpush1.msra.mxu0 0.0
        %4766 = vmatprep.mubr.f32.mxu0 0.0
        %4767 = vmatmul.mubr.f32.gmra.mrb[0].mxu0 %v4700
        %v4768 = vpop.f32.mrb[0].mxu0
        %v4769 = vadd.f32 0.0, %v4768
        %v4770 = vpop.f32.mrb[0].mxu0
        %v4771 = vadd.f32 0.0, %v4770
        %4772 = vdwg.mxu0
        %v4773 = vadd.f32 %v4685, %v4769
        %v4774 = vadd.f32 %v4689, %v4771
        %v4775 = vxor.u32 %v4773, 2147483648
        %v4776 = vmul.f32 %v4775, 1.442695
        %v4777 = vpow.pop %v4776
        %v4778 = vadd.f32 %v4777, 1.0
        %v4779 = vrcp.pop %v4778
        %v4780 = vmul.f32 1.0, %v4779
        %v4781 = vtanh.pop %v4773
        %v4782 = vmul.f32 %v4780, %v4679
        %4784 = vrot.lane.b32.xlu0 %v4781, 64
        %v4785 = vpop.permute.xlu0 %4784
        %v4787 = vmul.f32 %v4780, %v4785
        %4789 = vrot.lane.b32.xlu0 %v4787, 32
        %v4790 = vpop.permute.xlu0 %4789
        %v4792 = vadd.f32 %v4782, %v4790
        %v4793 = vtanh.pop %v4792
        %4795 = vrot.lane.b32.xlu0 %v4793, 64
        %v4796 = vpop.permute.xlu0 %4795
        %v4798 = vmul.f32 %v4780, %v4796
        %v4799 = vxor.u32 %v4774, 2147483648
        %v4800 = vmul.f32 %v4799, 1.442695
        %v4801 = vpow.pop %v4800
        %v4802 = vadd.f32 %v4801, 1.0
        %v4803 = vrcp.pop %v4802
        %v4804 = vmul.f32 1.0, %v4803
        %v4805 = vtanh.pop %v4774
        %v4806 = vmul.f32 %v4804, %v4681
        %4808 = vrot.lane.b32.xlu0 %v4805, 64
        %v4809 = vpop.permute.xlu0 %4808
        %v4811 = vmul.f32 %v4804, %v4809
        %4813 = vrot.lane.b32.xlu0 %v4811, 32
        %v4814 = vpop.permute.xlu0 %4813
        %v4816 = vadd.f32 %v4806, %v4814
        %v4817 = vtanh.pop %v4816
        %4819 = vrot.lane.b32.xlu0 %v4817, 64
        %v4820 = vpop.permute.xlu0 %4819
        %v4822 = vmul.f32 %v4804, %v4820
        %vm4823 = vcmp.gt.s32.totalorder %v4170, 3
        %vm4824 = vcmp.gt.s32.totalorder %v4170, 6
        %v4825 = vsel %vm4823, 1, 0
        %4826 = vset.pattern.permute.xlu0 0
        %4827 = vperm.xlu0 %4826, %v4825
        %v4828 = vpop.permute.xlu0 %4827
        %vm4829 = vcmp.eq.s32.totalorder %v4828, 1
        %v4830 = vsel %vm4829, %v4798, 0.0
        %4832 = vrot.lane.b32.xlu0 %v4830, 32
        %v4833 = vpop.permute.xlu0 %4832
        %s4835 = scalar_lea.vmem [#allocation2], 24
        %4836 = vst.msk [vmem:[%s4835] sm:$0xff] %vm4331, %v4833
        %v4837 = vsel %vm4824, 1, 0
        %4838 = vset.pattern.permute.xlu0 0
        %4839 = vperm.xlu0 %4838, %v4837
        %v4840 = vpop.permute.xlu0 %4839
        %vm4841 = vcmp.eq.s32.totalorder %v4840, 1
        %v4842 = vsel %vm4841, %v4822, 0.0
        %4844 = vrot.lane.b32.xlu0 %v4842, 64
        %v4845 = vpop.permute.xlu0 %4844
        %s4847 = scalar_lea.vmem [#allocation2], 48
        %4848 = vst.msk [vmem:[%s4847] sm:$0xff] %vm4344, %v4845
        %v4849 = vsel %vm4829, %v4798, %v4678
        %v4850 = vsel %vm4829, %v4792, %v4679
        %v4851 = vsel %vm4841, %v4822, %v4680
        %v4852 = vsel %vm4841, %v4816, %v4681
        %s4853 = smul.u32 4, 2
        %s4854 = smul.addr %s4853, 8
        %s4855 = scalar_lea.vmem [#allocation4], %s4854
        %v4856 = vld [vmem:[%s4855] sm:$0xff]
        %s4857 = smul.u32 5, 2
        %s4858 = smul.addr %s4857, 8
        %s4859 = scalar_lea.vmem [#allocation4], %s4858
        %v4860 = vld [vmem:[%s4859 + $0x8] sm:$0xff]
        %4862 = vrot.lane.b32.xlu0 %v4849, 32
        %v4863 = vpop.permute.xlu0 %4862
        %4866 = vrot.lane.b32.xlu0 %v4851, 64
        %v4867 = vpop.permute.xlu0 %4866
        %v4869 = vsel %vm4331, %v4863, %v4867
        %v4871 = vsel %vm3994, %v4869, 0
        %4873 = vmatprep.subr.mxu0 %v4172
        %4874 = vmatpush1.msra.mxu0 %v4171
        %4875 = vmatprep.subr.mxu0 %v4174
        %4876 = vmatpush1.msra.mxu0 %v4173
        %4877 = vmatprep.subr.mxu0 %v4176
        %4878 = vmatpush1.msra.mxu0 %v4175
        %4879 = vmatprep.subr.mxu0 %v4178
        %4880 = vmatpush1.msra.mxu0 %v4177
        %4881 = vmatprep.subr.mxu0 %v4180
        %4882 = vmatpush1.msra.mxu0 %v4179
        %4883 = vmatprep.subr.mxu0 %v4182
        %4884 = vmatpush1.msra.mxu0 %v4181
        %4885 = vmatprep.subr.mxu0 %v4184
        %4886 = vmatpush1.msra.mxu0 %v4183
        %4887 = vmatprep.subr.mxu0 %v4186
        %4888 = vmatpush1.msra.mxu0 %v4185
        %4889 = vmatprep.subr.mxu0 0.0
        %4890 = vmatpush1.msra.mxu0 0.0
        %4891 = vmatprep.subr.mxu0 0.0
        %4892 = vmatpush1.msra.mxu0 0.0
        %4893 = vmatprep.subr.mxu0 0.0
        %4894 = vmatpush1.msra.mxu0 0.0
        %4895 = vmatprep.subr.mxu0 0.0
        %4896 = vmatpush1.msra.mxu0 0.0
        %4897 = vmatprep.subr.mxu0 0.0
        %4898 = vmatpush1.msra.mxu0 0.0
        %4899 = vmatprep.subr.mxu0 0.0
        %4900 = vmatpush1.msra.mxu0 0.0
        %4901 = vmatprep.subr.mxu0 0.0
        %4902 = vmatpush1.msra.mxu0 0.0
        %4903 = vmatprep.subr.mxu0 0.0
        %4904 = vmatpush1.msra.mxu0 0.0
        %4905 = vmatprep.subr.mxu0 0.0
        %4906 = vmatpush1.msra.mxu0 0.0
        %4907 = vmatprep.subr.mxu0 0.0
        %4908 = vmatpush1.msra.mxu0 0.0
        %4909 = vmatprep.subr.mxu0 0.0
        %4910 = vmatpush1.msra.mxu0 0.0
        %4911 = vmatprep.subr.mxu0 0.0
        %4912 = vmatpush1.msra.mxu0 0.0
        %4913 = vmatprep.subr.mxu0 0.0
        %4914 = vmatpush1.msra.mxu0 0.0
        %4915 = vmatprep.subr.mxu0 0.0
        %4916 = vmatpush1.msra.mxu0 0.0
        %4917 = vmatprep.subr.mxu0 0.0
        %4918 = vmatpush1.msra.mxu0 0.0
        %4919 = vmatprep.subr.mxu0 0.0
        %4920 = vmatpush1.msra.mxu0 0.0
        %4921 = vmatprep.subr.mxu0 0.0
        %4922 = vmatpush1.msra.mxu0 0.0
        %4923 = vmatprep.subr.mxu0 0.0
        %4924 = vmatpush1.msra.mxu0 0.0
        %4925 = vmatprep.subr.mxu0 0.0
        %4926 = vmatpush1.msra.mxu0 0.0
        %4927 = vmatprep.subr.mxu0 0.0
        %4928 = vmatpush1.msra.mxu0 0.0
        %4929 = vmatprep.subr.mxu0 0.0
        %4930 = vmatpush1.msra.mxu0 0.0
        %4931 = vmatprep.subr.mxu0 0.0
        %4932 = vmatpush1.msra.mxu0 0.0
        %4933 = vmatprep.subr.mxu0 0.0
        %4934 = vmatpush1.msra.mxu0 0.0
        %4935 = vmatprep.subr.mxu0 0.0
        %4936 = vmatpush1.msra.mxu0 0.0
        %4937 = vmatprep.mubr.f32.mxu0 0.0
        %4938 = vmatmul.mubr.f32.gmra.mrb[0].mxu0 %v4871
        %v4939 = vpop.f32.mrb[0].mxu0
        %v4940 = vadd.f32 0.0, %v4939
        %v4941 = vpop.f32.mrb[0].mxu0
        %v4942 = vadd.f32 0.0, %v4941
        %4943 = vdwg.mxu0
        %v4944 = vadd.f32 %v4856, %v4940
        %v4945 = vadd.f32 %v4860, %v4942
        %v4946 = vxor.u32 %v4944, 2147483648
        %v4947 = vmul.f32 %v4946, 1.442695
        %v4948 = vpow.pop %v4947
        %v4949 = vadd.f32 %v4948, 1.0
        %v4950 = vrcp.pop %v4949
        %v4951 = vmul.f32 1.0, %v4950
        %v4952 = vtanh.pop %v4944
        %v4953 = vmul.f32 %v4951, %v4850
        %4955 = vrot.lane.b32.xlu0 %v4952, 64
        %v4956 = vpop.permute.xlu0 %4955
        %v4958 = vmul.f32 %v4951, %v4956
        %4960 = vrot.lane.b32.xlu0 %v4958, 32
        %v4961 = vpop.permute.xlu0 %4960
        %v4963 = vadd.f32 %v4953, %v4961
        %v4964 = vtanh.pop %v4963
        %4966 = vrot.lane.b32.xlu0 %v4964, 64
        %v4967 = vpop.permute.xlu0 %4966
        %v4969 = vmul.f32 %v4951, %v4967
        %v4970 = vxor.u32 %v4945, 2147483648
        %v4971 = vmul.f32 %v4970, 1.442695
        %v4972 = vpow.pop %v4971
        %v4973 = vadd.f32 %v4972, 1.0
        %v4974 = vrcp.pop %v4973
        %v4975 = vmul.f32 1.0, %v4974
        %v4976 = vtanh.pop %v4945
        %v4977 = vmul.f32 %v4975, %v4852
        %4979 = vrot.lane.b32.xlu0 %v4976, 64
        %v4980 = vpop.permute.xlu0 %4979
        %v4982 = vmul.f32 %v4975, %v4980
        %4984 = vrot.lane.b32.xlu0 %v4982, 32
        %v4985 = vpop.permute.xlu0 %4984
        %v4987 = vadd.f32 %v4977, %v4985
        %v4988 = vtanh.pop %v4987
        %4990 = vrot.lane.b32.xlu0 %v4988, 64
        %v4991 = vpop.permute.xlu0 %4990
        %v4993 = vmul.f32 %v4975, %v4991
        %vm4994 = vcmp.gt.s32.totalorder %v4170, 4
        %vm4995 = vcmp.gt.s32.totalorder %v4170, 5
        %v4996 = vsel %vm4994, 1, 0
        %4997 = vset.pattern.permute.xlu0 0
        %4998 = vperm.xlu0 %4997, %v4996
        %v4999 = vpop.permute.xlu0 %4998
        %vm5000 = vcmp.eq.s32.totalorder %v4999, 1
        %v5001 = vsel %vm5000, %v4969, 0.0
        %5003 = vrot.lane.b32.xlu0 %v5001, 32
        %v5004 = vpop.permute.xlu0 %5003
        %s5006 = scalar_lea.vmem [#allocation2], 32
        %5007 = vst.msk [vmem:[%s5006] sm:$0xff] %vm4331, %v5004
        %v5008 = vsel %vm4995, 1, 0
        %5009 = vset.pattern.permute.xlu0 0
        %5010 = vperm.xlu0 %5009, %v5008
        %v5011 = vpop.permute.xlu0 %5010
        %vm5012 = vcmp.eq.s32.totalorder %v5011, 1
        %v5013 = vsel %vm5012, %v4993, 0.0
        %5015 = vrot.lane.b32.xlu0 %v5013, 64
        %v5016 = vpop.permute.xlu0 %5015
        %s5018 = scalar_lea.vmem [#allocation2], 40
        %5019 = vst.msk [vmem:[%s5018] sm:$0xff] %vm4344, %v5016
        %v5020 = vsel %vm5000, %v4969, %v4849
        %v5021 = vsel %vm5000, %v4963, %v4850
        %v5022 = vsel %vm5012, %v4993, %v4851
        %v5023 = vsel %vm5012, %v4987, %v4852
        %v5024 = vld [vmem:[%s4859] sm:$0xff]
        %v5025 = vld [vmem:[%s4855 + $0x8] sm:$0xff]
        %5027 = vrot.lane.b32.xlu0 %v5020, 32
        %v5028 = vpop.permute.xlu0 %5027
        %5031 = vrot.lane.b32.xlu0 %v5022, 64
        %v5032 = vpop.permute.xlu0 %5031
        %v5034 = vsel %vm4331, %v5028, %v5032
        %v5036 = vsel %vm3994, %v5034, 0
        %5038 = vmatprep.subr.mxu0 %v4172
        %5039 = vmatpush1.msra.mxu0 %v4171
        %5040 = vmatprep.subr.mxu0 %v4174
        %5041 = vmatpush1.msra.mxu0 %v4173
        %5042 = vmatprep.subr.mxu0 %v4176
        %5043 = vmatpush1.msra.mxu0 %v4175
        %5044 = vmatprep.subr.mxu0 %v4178
        %5045 = vmatpush1.msra.mxu0 %v4177
        %5046 = vmatprep.subr.mxu0 %v4180
        %5047 = vmatpush1.msra.mxu0 %v4179
        %5048 = vmatprep.subr.mxu0 %v4182
        %5049 = vmatpush1.msra.mxu0 %v4181
        %5050 = vmatprep.subr.mxu0 %v4184
        %5051 = vmatpush1.msra.mxu0 %v4183
        %5052 = vmatprep.subr.mxu0 %v4186
        %5053 = vmatpush1.msra.mxu0 %v4185
        %5054 = vmatprep.subr.mxu0 0.0
        %5055 = vmatpush1.msra.mxu0 0.0
        %5056 = vmatprep.subr.mxu0 0.0
        %5057 = vmatpush1.msra.mxu0 0.0
        %5058 = vmatprep.subr.mxu0 0.0
        %5059 = vmatpush1.msra.mxu0 0.0
        %5060 = vmatprep.subr.mxu0 0.0
        %5061 = vmatpush1.msra.mxu0 0.0
        %5062 = vmatprep.subr.mxu0 0.0
        %5063 = vmatpush1.msra.mxu0 0.0
        %5064 = vmatprep.subr.mxu0 0.0
        %5065 = vmatpush1.msra.mxu0 0.0
        %5066 = vmatprep.subr.mxu0 0.0
        %5067 = vmatpush1.msra.mxu0 0.0
        %5068 = vmatprep.subr.mxu0 0.0
        %5069 = vmatpush1.msra.mxu0 0.0
        %5070 = vmatprep.subr.mxu0 0.0
        %5071 = vmatpush1.msra.mxu0 0.0
        %5072 = vmatprep.subr.mxu0 0.0
        %5073 = vmatpush1.msra.mxu0 0.0
        %5074 = vmatprep.subr.mxu0 0.0
        %5075 = vmatpush1.msra.mxu0 0.0
        %5076 = vmatprep.subr.mxu0 0.0
        %5077 = vmatpush1.msra.mxu0 0.0
        %5078 = vmatprep.subr.mxu0 0.0
        %5079 = vmatpush1.msra.mxu0 0.0
        %5080 = vmatprep.subr.mxu0 0.0
        %5081 = vmatpush1.msra.mxu0 0.0
        %5082 = vmatprep.subr.mxu0 0.0
        %5083 = vmatpush1.msra.mxu0 0.0
        %5084 = vmatprep.subr.mxu0 0.0
        %5085 = vmatpush1.msra.mxu0 0.0
        %5086 = vmatprep.subr.mxu0 0.0
        %5087 = vmatpush1.msra.mxu0 0.0
        %5088 = vmatprep.subr.mxu0 0.0
        %5089 = vmatpush1.msra.mxu0 0.0
        %5090 = vmatprep.subr.mxu0 0.0
        %5091 = vmatpush1.msra.mxu0 0.0
        %5092 = vmatprep.subr.mxu0 0.0
        %5093 = vmatpush1.msra.mxu0 0.0
        %5094 = vmatprep.subr.mxu0 0.0
        %5095 = vmatpush1.msra.mxu0 0.0
        %5096 = vmatprep.subr.mxu0 0.0
        %5097 = vmatpush1.msra.mxu0 0.0
        %5098 = vmatprep.subr.mxu0 0.0
        %5099 = vmatpush1.msra.mxu0 0.0
        %5100 = vmatprep.subr.mxu0 0.0
        %5101 = vmatpush1.msra.mxu0 0.0
        %5102 = vmatprep.mubr.f32.mxu0 0.0
        %5103 = vmatmul.mubr.f32.gmra.mrb[0].mxu0 %v5036
        %v5104 = vpop.f32.mrb[0].mxu0
        %v5105 = vadd.f32 0.0, %v5104
        %v5106 = vpop.f32.mrb[0].mxu0
        %v5107 = vadd.f32 0.0, %v5106
        %5108 = vdwg.mxu0
        %v5109 = vadd.f32 %v5024, %v5105
        %v5110 = vadd.f32 %v5025, %v5107
        %v5111 = vxor.u32 %v5109, 2147483648
        %v5112 = vmul.f32 %v5111, 1.442695
        %v5113 = vpow.pop %v5112
        %v5114 = vadd.f32 %v5113, 1.0
        %v5115 = vrcp.pop %v5114
        %v5116 = vmul.f32 1.0, %v5115
        %v5117 = vtanh.pop %v5109
        %v5118 = vmul.f32 %v5116, %v5021
        %5120 = vrot.lane.b32.xlu0 %v5117, 64
        %v5121 = vpop.permute.xlu0 %5120
        %v5123 = vmul.f32 %v5116, %v5121
        %5125 = vrot.lane.b32.xlu0 %v5123, 32
        %v5126 = vpop.permute.xlu0 %5125
        %v5128 = vadd.f32 %v5118, %v5126
        %v5129 = vtanh.pop %v5128
        %5131 = vrot.lane.b32.xlu0 %v5129, 64
        %v5132 = vpop.permute.xlu0 %5131
        %v5134 = vmul.f32 %v5116, %v5132
        %v5135 = vxor.u32 %v5110, 2147483648
        %v5136 = vmul.f32 %v5135, 1.442695
        %v5137 = vpow.pop %v5136
        %v5138 = vadd.f32 %v5137, 1.0
        %v5139 = vrcp.pop %v5138
        %v5140 = vmul.f32 1.0, %v5139
        %v5141 = vtanh.pop %v5110
        %v5142 = vmul.f32 %v5140, %v5023
        %5144 = vrot.lane.b32.xlu0 %v5141, 64
        %v5145 = vpop.permute.xlu0 %5144
        %v5147 = vmul.f32 %v5140, %v5145
        %5149 = vrot.lane.b32.xlu0 %v5147, 32
        %v5150 = vpop.permute.xlu0 %5149
        %v5152 = vadd.f32 %v5142, %v5150
        %v5153 = vtanh.pop %v5152
        %5155 = vrot.lane.b32.xlu0 %v5153, 64
        %v5156 = vpop.permute.xlu0 %5155
        %v5158 = vmul.f32 %v5140, %v5156
        %v5159 = vsel %vm5012, %v5134, 0.0
        %5161 = vrot.lane.b32.xlu0 %v5159, 32
        %v5162 = vpop.permute.xlu0 %5161
        %5164 = vst.msk [vmem:[%s5018] sm:$0xff] %vm4331, %v5162
        %v5165 = vsel %vm5000, %v5158, 0.0
        %5167 = vrot.lane.b32.xlu0 %v5165, 64
        %v5168 = vpop.permute.xlu0 %5167
        %5170 = vst.msk [vmem:[%s5006] sm:$0xff] %vm4344, %v5168
        %v5171 = vsel %vm5012, %v5134, %v5020
        %v5172 = vsel %vm5012, %v5128, %v5021
        %v5173 = vsel %vm5000, %v5158, %v5022
        %v5174 = vsel %vm5000, %v5152, %v5023
        %v5175 = vld [vmem:[%s4688] sm:$0xff]
        %v5176 = vld [vmem:[%s4684 + $0x8] sm:$0xff]
        %5178 = vrot.lane.b32.xlu0 %v5171, 32
        %v5179 = vpop.permute.xlu0 %5178
        %5182 = vrot.lane.b32.xlu0 %v5173, 64
        %v5183 = vpop.permute.xlu0 %5182
        %v5185 = vsel %vm4331, %v5179, %v5183
        %v5187 = vsel %vm3994, %v5185, 0
        %5189 = vmatprep.subr.mxu0 %v4172
        %5190 = vmatpush1.msra.mxu0 %v4171
        %5191 = vmatprep.subr.mxu0 %v4174
        %5192 = vmatpush1.msra.mxu0 %v4173
        %5193 = vmatprep.subr.mxu0 %v4176
        %5194 = vmatpush1.msra.mxu0 %v4175
        %5195 = vmatprep.subr.mxu0 %v4178
        %5196 = vmatpush1.msra.mxu0 %v4177
        %5197 = vmatprep.subr.mxu0 %v4180
        %5198 = vmatpush1.msra.mxu0 %v4179
        %5199 = vmatprep.subr.mxu0 %v4182
        %5200 = vmatpush1.msra.mxu0 %v4181
        %5201 = vmatprep.subr.mxu0 %v4184
        %5202 = vmatpush1.msra.mxu0 %v4183
        %5203 = vmatprep.subr.mxu0 %v4186
        %5204 = vmatpush1.msra.mxu0 %v4185
        %5205 = vmatprep.subr.mxu0 0.0
        %5206 = vmatpush1.msra.mxu0 0.0
        %5207 = vmatprep.subr.mxu0 0.0
        %5208 = vmatpush1.msra.mxu0 0.0
        %5209 = vmatprep.subr.mxu0 0.0
        %5210 = vmatpush1.msra.mxu0 0.0
        %5211 = vmatprep.subr.mxu0 0.0
        %5212 = vmatpush1.msra.mxu0 0.0
        %5213 = vmatprep.subr.mxu0 0.0
        %5214 = vmatpush1.msra.mxu0 0.0
        %5215 = vmatprep.subr.mxu0 0.0
        %5216 = vmatpush1.msra.mxu0 0.0
        %5217 = vmatprep.subr.mxu0 0.0
        %5218 = vmatpush1.msra.mxu0 0.0
        %5219 = vmatprep.subr.mxu0 0.0
        %5220 = vmatpush1.msra.mxu0 0.0
        %5221 = vmatprep.subr.mxu0 0.0
        %5222 = vmatpush1.msra.mxu0 0.0
        %5223 = vmatprep.subr.mxu0 0.0
        %5224 = vmatpush1.msra.mxu0 0.0
        %5225 = vmatprep.subr.mxu0 0.0
        %5226 = vmatpush1.msra.mxu0 0.0
        %5227 = vmatprep.subr.mxu0 0.0
        %5228 = vmatpush1.msra.mxu0 0.0
        %5229 = vmatprep.subr.mxu0 0.0
        %5230 = vmatpush1.msra.mxu0 0.0
        %5231 = vmatprep.subr.mxu0 0.0
        %5232 = vmatpush1.msra.mxu0 0.0
        %5233 = vmatprep.subr.mxu0 0.0
        %5234 = vmatpush1.msra.mxu0 0.0
        %5235 = vmatprep.subr.mxu0 0.0
        %5236 = vmatpush1.msra.mxu0 0.0
        %5237 = vmatprep.subr.mxu0 0.0
        %5238 = vmatpush1.msra.mxu0 0.0
        %5239 = vmatprep.subr.mxu0 0.0
        %5240 = vmatpush1.msra.mxu0 0.0
        %5241 = vmatprep.subr.mxu0 0.0
        %5242 = vmatpush1.msra.mxu0 0.0
        %5243 = vmatprep.subr.mxu0 0.0
        %5244 = vmatpush1.msra.mxu0 0.0
        %5245 = vmatprep.subr.mxu0 0.0
        %5246 = vmatpush1.msra.mxu0 0.0
        %5247 = vmatprep.subr.mxu0 0.0
        %5248 = vmatpush1.msra.mxu0 0.0
        %5249 = vmatprep.subr.mxu0 0.0
        %5250 = vmatpush1.msra.mxu0 0.0
        %5251 = vmatprep.subr.mxu0 0.0
        %5252 = vmatpush1.msra.mxu0 0.0
        %5253 = vmatprep.mubr.f32.mxu0 0.0
        %5254 = vmatmul.mubr.f32.gmra.mrb[0].mxu0 %v5187
        %v5255 = vpop.f32.mrb[0].mxu0
        %v5256 = vadd.f32 0.0, %v5255
        %v5257 = vpop.f32.mrb[0].mxu0
        %v5258 = vadd.f32 0.0, %v5257
        %5259 = vdwg.mxu0
        %v5260 = vadd.f32 %v5175, %v5256
        %v5261 = vadd.f32 %v5176, %v5258
        %v5262 = vxor.u32 %v5260, 2147483648
        %v5263 = vmul.f32 %v5262, 1.442695
        %v5264 = vpow.pop %v5263
        %v5265 = vadd.f32 %v5264, 1.0
        %v5266 = vrcp.pop %v5265
        %v5267 = vmul.f32 1.0, %v5266
        %v5268 = vtanh.pop %v5260
        %v5269 = vmul.f32 %v5267, %v5172
        %5271 = vrot.lane.b32.xlu0 %v5268, 64
        %v5272 = vpop.permute.xlu0 %5271
        %v5274 = vmul.f32 %v5267, %v5272
        %5276 = vrot.lane.b32.xlu0 %v5274, 32
        %v5277 = vpop.permute.xlu0 %5276
        %v5279 = vadd.f32 %v5269, %v5277
        %v5280 = vtanh.pop %v5279
        %5282 = vrot.lane.b32.xlu0 %v5280, 64
        %v5283 = vpop.permute.xlu0 %5282
        %v5285 = vmul.f32 %v5267, %v5283
        %v5286 = vxor.u32 %v5261, 2147483648
        %v5287 = vmul.f32 %v5286, 1.442695
        %v5288 = vpow.pop %v5287
        %v5289 = vadd.f32 %v5288, 1.0
        %v5290 = vrcp.pop %v5289
        %v5291 = vmul.f32 1.0, %v5290
        %v5292 = vtanh.pop %v5261
        %v5293 = vmul.f32 %v5291, %v5174
        %5295 = vrot.lane.b32.xlu0 %v5292, 64
        %v5296 = vpop.permute.xlu0 %5295
        %v5298 = vmul.f32 %v5291, %v5296
        %5300 = vrot.lane.b32.xlu0 %v5298, 32
        %v5301 = vpop.permute.xlu0 %5300
        %v5303 = vadd.f32 %v5293, %v5301
        %v5304 = vtanh.pop %v5303
        %5306 = vrot.lane.b32.xlu0 %v5304, 64
        %v5307 = vpop.permute.xlu0 %5306
        %v5309 = vmul.f32 %v5291, %v5307
        %v5310 = vsel %vm4841, %v5285, 0.0
        %5312 = vrot.lane.b32.xlu0 %v5310, 32
        %v5313 = vpop.permute.xlu0 %5312
        %5315 = vst.msk [vmem:[%s4847] sm:$0xff] %vm4331, %v5313
        %v5316 = vsel %vm4829, %v5309, 0.0
        %5318 = vrot.lane.b32.xlu0 %v5316, 64
        %v5319 = vpop.permute.xlu0 %5318
        %5321 = vst.msk [vmem:[%s4835] sm:$0xff] %vm4344, %v5319
        %v5322 = vsel %vm4841, %v5285, %v5171
        %v5323 = vsel %vm4841, %v5279, %v5172
        %v5324 = vsel %vm4829, %v5309, %v5173
        %v5325 = vsel %vm4829, %v5303, %v5174
        %v5326 = vld [vmem:[%s4517] sm:$0xff]
        %v5327 = vld [vmem:[%s4513 + $0x8] sm:$0xff]
        %5329 = vrot.lane.b32.xlu0 %v5322, 32
        %v5330 = vpop.permute.xlu0 %5329
        %5333 = vrot.lane.b32.xlu0 %v5324, 64
        %v5334 = vpop.permute.xlu0 %5333
        %v5336 = vsel %vm4331, %v5330, %v5334
        %v5338 = vsel %vm3994, %v5336, 0
        %5340 = vmatprep.subr.mxu0 %v4172
        %5341 = vmatpush1.msra.mxu0 %v4171
        %5342 = vmatprep.subr.mxu0 %v4174
        %5343 = vmatpush1.msra.mxu0 %v4173
        %5344 = vmatprep.subr.mxu0 %v4176
        %5345 = vmatpush1.msra.mxu0 %v4175
        %5346 = vmatprep.subr.mxu0 %v4178
        %5347 = vmatpush1.msra.mxu0 %v4177
        %5348 = vmatprep.subr.mxu0 %v4180
        %5349 = vmatpush1.msra.mxu0 %v4179
        %5350 = vmatprep.subr.mxu0 %v4182
        %5351 = vmatpush1.msra.mxu0 %v4181
        %5352 = vmatprep.subr.mxu0 %v4184
        %5353 = vmatpush1.msra.mxu0 %v4183
        %5354 = vmatprep.subr.mxu0 %v4186
        %5355 = vmatpush1.msra.mxu0 %v4185
        %5356 = vmatprep.subr.mxu0 0.0
        %5357 = vmatpush1.msra.mxu0 0.0
        %5358 = vmatprep.subr.mxu0 0.0
        %5359 = vmatpush1.msra.mxu0 0.0
        %5360 = vmatprep.subr.mxu0 0.0
        %5361 = vmatpush1.msra.mxu0 0.0
        %5362 = vmatprep.subr.mxu0 0.0
        %5363 = vmatpush1.msra.mxu0 0.0
        %5364 = vmatprep.subr.mxu0 0.0
        %5365 = vmatpush1.msra.mxu0 0.0
        %5366 = vmatprep.subr.mxu0 0.0
        %5367 = vmatpush1.msra.mxu0 0.0
        %5368 = vmatprep.subr.mxu0 0.0
        %5369 = vmatpush1.msra.mxu0 0.0
        %5370 = vmatprep.subr.mxu0 0.0
        %5371 = vmatpush1.msra.mxu0 0.0
        %5372 = vmatprep.subr.mxu0 0.0
        %5373 = vmatpush1.msra.mxu0 0.0
        %5374 = vmatprep.subr.mxu0 0.0
        %5375 = vmatpush1.msra.mxu0 0.0
        %5376 = vmatprep.subr.mxu0 0.0
        %5377 = vmatpush1.msra.mxu0 0.0
        %5378 = vmatprep.subr.mxu0 0.0
        %5379 = vmatpush1.msra.mxu0 0.0
        %5380 = vmatprep.subr.mxu0 0.0
        %5381 = vmatpush1.msra.mxu0 0.0
        %5382 = vmatprep.subr.mxu0 0.0
        %5383 = vmatpush1.msra.mxu0 0.0
        %5384 = vmatprep.subr.mxu0 0.0
        %5385 = vmatpush1.msra.mxu0 0.0
        %5386 = vmatprep.subr.mxu0 0.0
        %5387 = vmatpush1.msra.mxu0 0.0
        %5388 = vmatprep.subr.mxu0 0.0
        %5389 = vmatpush1.msra.mxu0 0.0
        %5390 = vmatprep.subr.mxu0 0.0
        %5391 = vmatpush1.msra.mxu0 0.0
        %5392 = vmatprep.subr.mxu0 0.0
        %5393 = vmatpush1.msra.mxu0 0.0
        %5394 = vmatprep.subr.mxu0 0.0
        %5395 = vmatpush1.msra.mxu0 0.0
        %5396 = vmatprep.subr.mxu0 0.0
        %5397 = vmatpush1.msra.mxu0 0.0
        %5398 = vmatprep.subr.mxu0 0.0
        %5399 = vmatpush1.msra.mxu0 0.0
        %5400 = vmatprep.subr.mxu0 0.0
        %5401 = vmatpush1.msra.mxu0 0.0
        %5402 = vmatprep.subr.mxu0 0.0
        %5403 = vmatpush1.msra.mxu0 0.0
        %5404 = vmatprep.mubr.f32.mxu0 0.0
        %5405 = vmatmul.mubr.f32.gmra.mrb[0].mxu0 %v5338
        %v5406 = vpop.f32.mrb[0].mxu0
        %v5407 = vadd.f32 0.0, %v5406
        %v5408 = vpop.f32.mrb[0].mxu0
        %v5409 = vadd.f32 0.0, %v5408
        %5410 = vdwg.mxu0
        %v5411 = vadd.f32 %v5326, %v5407
        %v5412 = vadd.f32 %v5327, %v5409
        %v5413 = vxor.u32 %v5411, 2147483648
        %v5414 = vmul.f32 %v5413, 1.442695
        %v5415 = vpow.pop %v5414
        %v5416 = vadd.f32 %v5415, 1.0
        %v5417 = vrcp.pop %v5416
        %v5418 = vmul.f32 1.0, %v5417
        %v5419 = vtanh.pop %v5411
        %v5420 = vmul.f32 %v5418, %v5323
        %5422 = vrot.lane.b32.xlu0 %v5419, 64
        %v5423 = vpop.permute.xlu0 %5422
        %v5425 = vmul.f32 %v5418, %v5423
        %5427 = vrot.lane.b32.xlu0 %v5425, 32
        %v5428 = vpop.permute.xlu0 %5427
        %v5430 = vadd.f32 %v5420, %v5428
        %v5431 = vtanh.pop %v5430
        %5433 = vrot.lane.b32.xlu0 %v5431, 64
        %v5434 = vpop.permute.xlu0 %5433
        %v5436 = vmul.f32 %v5418, %v5434
        %v5437 = vxor.u32 %v5412, 2147483648
        %v5438 = vmul.f32 %v5437, 1.442695
        %v5439 = vpow.pop %v5438
        %v5440 = vadd.f32 %v5439, 1.0
        %v5441 = vrcp.pop %v5440
        %v5442 = vmul.f32 1.0, %v5441
        %v5443 = vtanh.pop %v5412
        %v5444 = vmul.f32 %v5442, %v5325
        %5446 = vrot.lane.b32.xlu0 %v5443, 64
        %v5447 = vpop.permute.xlu0 %5446
        %v5449 = vmul.f32 %v5442, %v5447
        %5451 = vrot.lane.b32.xlu0 %v5449, 32
        %v5452 = vpop.permute.xlu0 %5451
        %v5454 = vadd.f32 %v5444, %v5452
        %v5455 = vtanh.pop %v5454
        %5457 = vrot.lane.b32.xlu0 %v5455, 64
        %v5458 = vpop.permute.xlu0 %5457
        %v5460 = vmul.f32 %v5442, %v5458
        %v5461 = vsel %vm4670, %v5436, 0.0
        %5463 = vrot.lane.b32.xlu0 %v5461, 32
        %v5464 = vpop.permute.xlu0 %5463
        %5466 = vst.msk [vmem:[%s4676] sm:$0xff] %vm4331, %v5464
        %v5467 = vsel %vm4658, %v5460, 0.0
        %5469 = vrot.lane.b32.xlu0 %v5467, 64
        %v5470 = vpop.permute.xlu0 %5469
        %5472 = vst.msk [vmem:[%s4664] sm:$0xff] %vm4344, %v5470
        %v5473 = vsel %vm4670, %v5436, %v5322
        %v5474 = vsel %vm4670, %v5430, %v5323
        %v5475 = vsel %vm4658, %v5460, %v5324
        %v5476 = vsel %vm4658, %v5454, %v5325
        %v5477 = vld [vmem:[%s4354] sm:$0xff]
        %v5478 = vld [vmem:[%s4350 + $0x8] sm:$0xff]
        %5480 = vrot.lane.b32.xlu0 %v5473, 32
        %v5481 = vpop.permute.xlu0 %5480
        %5484 = vrot.lane.b32.xlu0 %v5475, 64
        %v5485 = vpop.permute.xlu0 %5484
        %v5487 = vsel %vm4331, %v5481, %v5485
        %v5489 = vsel %vm3994, %v5487, 0
        %5491 = vmatprep.subr.mxu0 %v4172
        %5492 = vmatpush1.msra.mxu0 %v4171
        %5493 = vmatprep.subr.mxu0 %v4174
        %5494 = vmatpush1.msra.mxu0 %v4173
        %5495 = vmatprep.subr.mxu0 %v4176
        %5496 = vmatpush1.msra.mxu0 %v4175
        %5497 = vmatprep.subr.mxu0 %v4178
        %5498 = vmatpush1.msra.mxu0 %v4177
        %5499 = vmatprep.subr.mxu0 %v4180
        %5500 = vmatpush1.msra.mxu0 %v4179
        %5501 = vmatprep.subr.mxu0 %v4182
        %5502 = vmatpush1.msra.mxu0 %v4181
        %5503 = vmatprep.subr.mxu0 %v4184
        %5504 = vmatpush1.msra.mxu0 %v4183
        %5505 = vmatprep.subr.mxu0 %v4186
        %5506 = vmatpush1.msra.mxu0 %v4185
        %5507 = vmatprep.subr.mxu0 0.0
        %5508 = vmatpush1.msra.mxu0 0.0
        %5509 = vmatprep.subr.mxu0 0.0
        %5510 = vmatpush1.msra.mxu0 0.0
        %5511 = vmatprep.subr.mxu0 0.0
        %5512 = vmatpush1.msra.mxu0 0.0
        %5513 = vmatprep.subr.mxu0 0.0
        %5514 = vmatpush1.msra.mxu0 0.0
        %5515 = vmatprep.subr.mxu0 0.0
        %5516 = vmatpush1.msra.mxu0 0.0
        %5517 = vmatprep.subr.mxu0 0.0
        %5518 = vmatpush1.msra.mxu0 0.0
        %5519 = vmatprep.subr.mxu0 0.0
        %5520 = vmatpush1.msra.mxu0 0.0
        %5521 = vmatprep.subr.mxu0 0.0
        %5522 = vmatpush1.msra.mxu0 0.0
        %5523 = vmatprep.subr.mxu0 0.0
        %5524 = vmatpush1.msra.mxu0 0.0
        %5525 = vmatprep.subr.mxu0 0.0
        %5526 = vmatpush1.msra.mxu0 0.0
        %5527 = vmatprep.subr.mxu0 0.0
        %5528 = vmatpush1.msra.mxu0 0.0
        %5529 = vmatprep.subr.mxu0 0.0
        %5530 = vmatpush1.msra.mxu0 0.0
        %5531 = vmatprep.subr.mxu0 0.0
        %5532 = vmatpush1.msra.mxu0 0.0
        %5533 = vmatprep.subr.mxu0 0.0
        %5534 = vmatpush1.msra.mxu0 0.0
        %5535 = vmatprep.subr.mxu0 0.0
        %5536 = vmatpush1.msra.mxu0 0.0
        %5537 = vmatprep.subr.mxu0 0.0
        %5538 = vmatpush1.msra.mxu0 0.0
        %5539 = vmatprep.subr.mxu0 0.0
        %5540 = vmatpush1.msra.mxu0 0.0
        %5541 = vmatprep.subr.mxu0 0.0
        %5542 = vmatpush1.msra.mxu0 0.0
        %5543 = vmatprep.subr.mxu0 0.0
        %5544 = vmatpush1.msra.mxu0 0.0
        %5545 = vmatprep.subr.mxu0 0.0
        %5546 = vmatpush1.msra.mxu0 0.0
        %5547 = vmatprep.subr.mxu0 0.0
        %5548 = vmatpush1.msra.mxu0 0.0
        %5549 = vmatprep.subr.mxu0 0.0
        %5550 = vmatpush1.msra.mxu0 0.0
        %5551 = vmatprep.subr.mxu0 0.0
        %5552 = vmatpush1.msra.mxu0 0.0
        %5553 = vmatprep.subr.mxu0 0.0
        %5554 = vmatpush1.msra.mxu0 0.0
        %5555 = vmatprep.mubr.f32.mxu0 0.0
        %5556 = vmatmul.mubr.f32.gmra.mrb[0].mxu0 %v5489
        %v5557 = vpop.f32.mrb[0].mxu0
        %v5558 = vadd.f32 0.0, %v5557
        %v5559 = vpop.f32.mrb[0].mxu0
        %v5560 = vadd.f32 0.0, %v5559
        %5561 = vdwg.mxu0
        %v5562 = vadd.f32 %v5477, %v5558
        %v5563 = vadd.f32 %v5478, %v5560
        %v5564 = vxor.u32 %v5562, 2147483648
        %v5565 = vmul.f32 %v5564, 1.442695
        %v5566 = vpow.pop %v5565
        %v5567 = vadd.f32 %v5566, 1.0
        %v5568 = vrcp.pop %v5567
        %v5569 = vmul.f32 1.0, %v5568
        %v5570 = vtanh.pop %v5562
        %v5571 = vmul.f32 %v5569, %v5474
        %5573 = vrot.lane.b32.xlu0 %v5570, 64
        %v5574 = vpop.permute.xlu0 %5573
        %v5576 = vmul.f32 %v5569, %v5574
        %5578 = vrot.lane.b32.xlu0 %v5576, 32
        %v5579 = vpop.permute.xlu0 %5578
        %v5581 = vadd.f32 %v5571, %v5579
        %v5582 = vtanh.pop %v5581
        %5584 = vrot.lane.b32.xlu0 %v5582, 64
        %v5585 = vpop.permute.xlu0 %5584
        %v5587 = vmul.f32 %v5569, %v5585
        %v5588 = vxor.u32 %v5563, 2147483648
        %v5589 = vmul.f32 %v5588, 1.442695
        %v5590 = vpow.pop %v5589
        %v5591 = vadd.f32 %v5590, 1.0
        %v5592 = vrcp.pop %v5591
        %v5593 = vmul.f32 1.0, %v5592
        %v5594 = vtanh.pop %v5563
        %v5595 = vmul.f32 %v5593, %v5476
        %5597 = vrot.lane.b32.xlu0 %v5594, 64
        %v5598 = vpop.permute.xlu0 %5597
        %v5600 = vmul.f32 %v5593, %v5598
        %5602 = vrot.lane.b32.xlu0 %v5600, 32
        %v5603 = vpop.permute.xlu0 %5602
        %v5605 = vadd.f32 %v5595, %v5603
        %v5606 = vtanh.pop %v5605
        %5608 = vrot.lane.b32.xlu0 %v5606, 64
        %v5609 = vpop.permute.xlu0 %5608
        %v5611 = vmul.f32 %v5593, %v5609
        %v5612 = vsel %vm4499, %v5587, 0.0
        %5614 = vrot.lane.b32.xlu0 %v5612, 32
        %v5615 = vpop.permute.xlu0 %5614
        %5617 = vst.msk [vmem:[%s4505] sm:$0xff] %vm4331, %v5615
        %v5618 = vsel %vm4487, %v5611, 0.0
        %5620 = vrot.lane.b32.xlu0 %v5618, 64
        %v5621 = vpop.permute.xlu0 %5620
        %5623 = vst.msk [vmem:[%s4493] sm:$0xff] %vm4344, %v5621
        %v5624 = vsel %vm4499, %v5587, %v5473
        %v5625 = vsel %vm4499, %v5581, %v5474
        %v5626 = vsel %vm4487, %v5611, %v5475
        %v5627 = vsel %vm4487, %v5605, %v5476
        %v5628 = vld [vmem:[%s4193] sm:$0xff]
        %v5629 = vld [vmem:[%s4189 + $0x8] sm:$0xff]
        %5631 = vrot.lane.b32.xlu0 %v5624, 32
        %v5632 = vpop.permute.xlu0 %5631
        %5635 = vrot.lane.b32.xlu0 %v5626, 64
        %v5636 = vpop.permute.xlu0 %5635
        %v5638 = vsel %vm4331, %v5632, %v5636
        %v5640 = vsel %vm3994, %v5638, 0
        %5642 = vmatprep.subr.mxu0 %v4172
        %5643 = vmatpush1.msra.mxu0 %v4171
        %5644 = vmatprep.subr.mxu0 %v4174
        %5645 = vmatpush1.msra.mxu0 %v4173
        %5646 = vmatprep.subr.mxu0 %v4176
        %5647 = vmatpush1.msra.mxu0 %v4175
        %5648 = vmatprep.subr.mxu0 %v4178
        %5649 = vmatpush1.msra.mxu0 %v4177
        %5650 = vmatprep.subr.mxu0 %v4180
        %5651 = vmatpush1.msra.mxu0 %v4179
        %5652 = vmatprep.subr.mxu0 %v4182
        %5653 = vmatpush1.msra.mxu0 %v4181
        %5654 = vmatprep.subr.mxu0 %v4184
        %5655 = vmatpush1.msra.mxu0 %v4183
        %5656 = vmatprep.subr.mxu0 %v4186
        %5657 = vmatpush1.msra.mxu0 %v4185
        %5658 = vmatprep.subr.mxu0 0.0
        %5659 = vmatpush1.msra.mxu0 0.0
        %5660 = vmatprep.subr.mxu0 0.0
        %5661 = vmatpush1.msra.mxu0 0.0
        %5662 = vmatprep.subr.mxu0 0.0
        %5663 = vmatpush1.msra.mxu0 0.0
        %5664 = vmatprep.subr.mxu0 0.0
        %5665 = vmatpush1.msra.mxu0 0.0
        %5666 = vmatprep.subr.mxu0 0.0
        %5667 = vmatpush1.msra.mxu0 0.0
        %5668 = vmatprep.subr.mxu0 0.0
        %5669 = vmatpush1.msra.mxu0 0.0
        %5670 = vmatprep.subr.mxu0 0.0
        %5671 = vmatpush1.msra.mxu0 0.0
        %5672 = vmatprep.subr.mxu0 0.0
        %5673 = vmatpush1.msra.mxu0 0.0
        %5674 = vmatprep.subr.mxu0 0.0
        %5675 = vmatpush1.msra.mxu0 0.0
        %5676 = vmatprep.subr.mxu0 0.0
        %5677 = vmatpush1.msra.mxu0 0.0
        %5678 = vmatprep.subr.mxu0 0.0
        %5679 = vmatpush1.msra.mxu0 0.0
        %5680 = vmatprep.subr.mxu0 0.0
        %5681 = vmatpush1.msra.mxu0 0.0
        %5682 = vmatprep.subr.mxu0 0.0
        %5683 = vmatpush1.msra.mxu0 0.0
        %5684 = vmatprep.subr.mxu0 0.0
        %5685 = vmatpush1.msra.mxu0 0.0
        %5686 = vmatprep.subr.mxu0 0.0
        %5687 = vmatpush1.msra.mxu0 0.0
        %5688 = vmatprep.subr.mxu0 0.0
        %5689 = vmatpush1.msra.mxu0 0.0
        %5690 = vmatprep.subr.mxu0 0.0
        %5691 = vmatpush1.msra.mxu0 0.0
        %5692 = vmatprep.subr.mxu0 0.0
        %5693 = vmatpush1.msra.mxu0 0.0
        %5694 = vmatprep.subr.mxu0 0.0
        %5695 = vmatpush1.msra.mxu0 0.0
        %5696 = vmatprep.subr.mxu0 0.0
        %5697 = vmatpush1.msra.mxu0 0.0
        %5698 = vmatprep.subr.mxu0 0.0
        %5699 = vmatpush1.msra.mxu0 0.0
        %5700 = vmatprep.subr.mxu0 0.0
        %5701 = vmatpush1.msra.mxu0 0.0
        %5702 = vmatprep.subr.mxu0 0.0
        %5703 = vmatpush1.msra.mxu0 0.0
        %5704 = vmatprep.subr.mxu0 0.0
        %5705 = vmatpush1.msra.mxu0 0.0
        %5706 = vmatprep.mubr.f32.mxu0 0.0
        %5707 = vmatmul.mubr.f32.gmra.mrb[0].mxu0 %v5640
        %v5708 = vpop.f32.mrb[0].mxu0
        %v5709 = vadd.f32 0.0, %v5708
        %v5710 = vpop.f32.mrb[0].mxu0
        %v5711 = vadd.f32 0.0, %v5710
        %5712 = vdwg.mxu0
        %v5713 = vadd.f32 %v5628, %v5709
        %v5714 = vadd.f32 %v5629, %v5711
        %v5715 = vxor.u32 %v5713, 2147483648
        %v5716 = vmul.f32 %v5715, 1.442695
        %v5717 = vpow.pop %v5716
        %v5718 = vadd.f32 %v5717, 1.0
        %v5719 = vrcp.pop %v5718
        %v5720 = vmul.f32 1.0, %v5719
        %v5721 = vtanh.pop %v5713
        %v5722 = vmul.f32 %v5720, %v5625
        %5724 = vrot.lane.b32.xlu0 %v5721, 64
        %v5725 = vpop.permute.xlu0 %5724
        %v5727 = vmul.f32 %v5720, %v5725
        %5729 = vrot.lane.b32.xlu0 %v5727, 32
        %v5730 = vpop.permute.xlu0 %5729
        %v5732 = vadd.f32 %v5722, %v5730
        %v5733 = vtanh.pop %v5732
        %5735 = vrot.lane.b32.xlu0 %v5733, 64
        %v5736 = vpop.permute.xlu0 %5735
        %v5738 = vmul.f32 %v5720, %v5736
        %v5739 = vxor.u32 %v5714, 2147483648
        %v5740 = vmul.f32 %v5739, 1.442695
        %v5741 = vpow.pop %v5740
        %v5742 = vadd.f32 %v5741, 1.0
        %v5743 = vrcp.pop %v5742
        %v5744 = vmul.f32 1.0, %v5743
        %v5745 = vtanh.pop %v5714
        %v5746 = vmul.f32 %v5744, %v5627
        %5748 = vrot.lane.b32.xlu0 %v5745, 64
        %v5749 = vpop.permute.xlu0 %5748
        %v5751 = vmul.f32 %v5744, %v5749
        %5753 = vrot.lane.b32.xlu0 %v5751, 32
        %v5754 = vpop.permute.xlu0 %5753
        %v5756 = vadd.f32 %v5746, %v5754
        %v5757 = vtanh.pop %v5756
        %5759 = vrot.lane.b32.xlu0 %v5757, 64
        %v5760 = vpop.permute.xlu0 %5759
        %v5762 = vmul.f32 %v5744, %v5760
        %v5763 = vsel %vm4337, %v5738, 0.0
        %5765 = vrot.lane.b32.xlu0 %v5763, 32
        %v5766 = vpop.permute.xlu0 %5765
        %5768 = vst.msk [vmem:[%s4343] sm:$0xff] %vm4331, %v5766
        %v5769 = vsel %vm4325, %v5762, 0.0
        %5771 = vrot.lane.b32.xlu0 %v5769, 64
        %v5772 = vpop.permute.xlu0 %5771
        %5774 = vst.msk [vmem:[#allocation2] sm:$0xff] %vm4344, %v5772
        %v5775 = vsel %vm4337, %v5738, %v5624
        %v5776 = vsel %vm4325, %v5762, %v5626
        %5778 = vrot.lane.b32.xlu0 %v5775, 32
        %v5779 = vpop.permute.xlu0 %5778
        %5782 = vrot.lane.b32.xlu0 %v5776, 64
        %v5783 = vpop.permute.xlu0 %5782
        %v5785 = vsel %vm4331, %v5779, %v5783
        %5786 = vst.msk [vmem:[%s5] sm:$0xff] %vm3994, %v5785
      $region52: #{model_forward_pallas.1} parent=39 // pred_fallthru
        _
      // Predicated region
      $region53: #{model_forward_pallas.1} parent=39 // pred_check
        %p5787 = pneg %p149
      $region54: #{model_forward_pallas.1} parent=39 // pred_check_branch
        %5789 = sbr.rel (%p5787) target = $region56
      $region55: #{model_forward_pallas.1} parent=39 // pred_region
        _
      $region56: #{model_forward_pallas.1} parent=39 // pred_fallthru
        _
      // Predicated region
      $region57: #{model_forward_pallas.1} parent=39 // pred_check
        %p5790 = pneg %p149
      $region58: #{model_forward_pallas.1} parent=39 // pred_check_branch
        %5792 = sbr.rel (%p5790) target = $region60
      $region59: #{model_forward_pallas.1} parent=39 // pred_region
        _
      $region60: #{model_forward_pallas.1} parent=39 // pred_fallthru
        _
    $region40: #{model_forward_pallas.1} parent=5 // pred_fallthru
      _
    %p5793 = scmp.le.s32.totalorder 2, %s11
    // Predicated region
    $region61: #{model_forward_pallas.1} parent=5 // pred_check
      %p5794 = pneg %p5793
    $region62: #{model_forward_pallas.1} parent=5 // pred_check_branch
      %5796 = sbr.rel (%p5794) target = $region64
    $region63: #{model_forward_pallas.1} parent=5 // pred_region
      %s5797 = ssub.s32 %s11, 2
    $region64: #{model_forward_pallas.1} parent=5 // pred_fallthru
      _
  $region6: #{model_forward_pallas.1} parent=0 // loop_footer
    %s15 = sadd.s32 1, %s11
  $region7: #{model_forward_pallas.1} parent=0 // loop_footer_branch
    %10 = sbr.rel target = $region3
  $region8: #{model_forward_pallas.1} parent=0 // loop_exit
    _

</llo_original>
